<compile_context>
chip_gen: v7x
topology: tpu7x:2x2x1
jax: 0.10.0
libtpu: 0.0.40
codegen_flags: <defaults>
</compile_context>

<pallas_src>
import jax
import jax.numpy as jnp
from jax.experimental import pallas as pl
from jax.experimental.pallas import tpu as pltpu

LANE = 128
HID = 512            # 500 hidden units padded to a lane multiple
NEG_INF = -1e30


def _cparams():
    return pltpu.CompilerParams(
        dimension_semantics=("parallel",),
        vmem_limit_bytes=32 * 1024 * 1024,
    )


# ---------------------------------------------------------------------------
# Pallas kernels
# ---------------------------------------------------------------------------
def _conv_pool_kernel(x_ref, w_ref, b_ref, o_ref):
    """Fused conv (as matmul) + bias + ReLU + 2x2 max pool.

    x_ref: (4, R, K) bf16 -- one im2col column group per pool-window member.
    w_ref: (K, N) bf16; b_ref: (1, N) f32; o_ref: (R, N) bf16 (pooled rows).
    relu(max_q(conv_q) + b) == maxpool(relu(conv + b)) since relu/max commute
    and the bias is uniform across the pooling window.
    """
    w = w_ref[...]
    acc = jnp.dot(x_ref[0], w, preferred_element_type=jnp.float32)
    for q in range(1, 4):
        acc = jnp.maximum(
            acc, jnp.dot(x_ref[q], w, preferred_element_type=jnp.float32))
    o_ref[...] = jnp.maximum(acc + b_ref[...], 0.0).astype(o_ref.dtype)


def _fc_head_kernel(x_ref, w1_ref, b1_ref, w2_ref, b2_ref, o_ref):
    """Fused fc1 + ReLU + fc2 + log_softmax; the hidden layer never leaves VMEM."""
    h = jnp.dot(x_ref[...], w1_ref[...], preferred_element_type=jnp.float32)
    h = jnp.maximum(h + b1_ref[...], 0.0).astype(jnp.bfloat16)
    logits = jnp.dot(h, w2_ref[...], preferred_element_type=jnp.float32)
    logits = logits + b2_ref[...]              # padded logit columns carry -1e30
    m = jnp.max(logits, axis=-1, keepdims=True)
    s = logits - m
    lse = jnp.log(jnp.sum(jnp.exp(s), axis=-1, keepdims=True))
    o_ref[...] = (s - lse).astype(o_ref.dtype)


# ---------------------------------------------------------------------------
# Tile-size helpers (divisors of the batch -> no activation padding, ever)
# ---------------------------------------------------------------------------
def _pick_rows(batch, unit, max_rows):
    """Rows per grid step for a (4, batch*unit, K) cols array.

    The block's second-minor dim must be a multiple of 8 (or the full extent),
    divide batch*unit, stay under max_rows, and leave >=2 grid steps when the
    batch allows it (v7x megacore / pipeline overlap)."""
    best = None
    for ipt in range(1, batch // 2 + 1):        # grid = batch // ipt >= 2
        if batch % ipt:
            continue
        rows = ipt * unit
        if rows % 8 == 0 and rows <= max_rows:
            best = rows
    return best if best is not None else batch * unit   # full extent, grid = 1


def _fc_rows(batch):
    best = None
    for t in range(8, batch // 2 + 1, 8):
        if batch % t == 0 and t <= 256:
            best = t
    return best if best is not None else batch


# ---------------------------------------------------------------------------
# Wrappers calling pallas_call
# ---------------------------------------------------------------------------
def conv_relu_pool(cols4, wmat, brow, rows):
    """cols4: (4, M, K) bf16; wmat: (K, N) bf16 (N % 128 == 0); brow: (1, N) f32."""
    _, M, K = cols4.shape
    N = wmat.shape[1]
    assert M % rows == 0 and N % LANE == 0
    return pl.pallas_call(
        _conv_pool_kernel,
        out_shape=jax.ShapeDtypeStruct((M, N), jnp.bfloat16),
        grid=(M // rows,),
        in_specs=[
            pl.BlockSpec((4, rows, K), lambda m: (0, m, 0)),
            pl.BlockSpec((K, N), lambda m: (0, 0)),
            pl.BlockSpec((1, N), lambda m: (0, 0)),
        ],
        out_specs=pl.BlockSpec((rows, N), lambda m: (m, 0)),
        compiler_params=_cparams(),
    )(cols4, wmat, brow)


def fc_head(x, w1, b1, w2, b2):
    """Fused fc1+relu+fc2+log_softmax.  x: (B, K1) bf16; weights bf16, padded."""
    B, K1 = x.shape
    Hd = w1.shape[1]
    N = w2.shape[1]
    tm = _fc_rows(B)
    return pl.pallas_call(
        _fc_head_kernel,
        out_shape=jax.ShapeDtypeStruct((B, N), jnp.float32),
        grid=(B // tm,),
        in_specs=[
            pl.BlockSpec((tm, K1), lambda i: (i, 0)),
            pl.BlockSpec((K1, Hd), lambda i: (0, 0)),
            pl.BlockSpec((1, Hd), lambda i: (0, 0)),
            pl.BlockSpec((Hd, N), lambda i: (0, 0)),
            pl.BlockSpec((1, N), lambda i: (0, 0)),
        ],
        out_specs=pl.BlockSpec((tm, N), lambda i: (i, 0)),
        compiler_params=_cparams(),
    )(x, w1, b1, w2, b2)


def _im2col_pool4(x, kh, kw):
    """NHWC -> 4 pool-member im2col groups: (4, B*PH*PW, kh*kw*C), bf16 input.

    Group (qh, qw) holds the patches for conv output positions
    (2*ph + qh, 2*pw + qw); maxing the 4 groups' conv results == 2x2 max pool.
    """
    B, H, W, C = x.shape
    PH, PW = (H - kh + 1) // 2, (W - kw + 1) // 2
    groups = []
    for qh in range(2):
        for qw in range(2):
            patches = [
                x[:, qh + i: qh + i + 2 * PH - 1: 2,
                     qw + j: qw + j + 2 * PW - 1: 2, :]
                for i in range(kh) for j in range(kw)
            ]
            g = jnp.concatenate(patches, axis=-1)          # (B, PH, PW, kh*kw*C)
            groups.append(g.reshape(B * PH * PW, kh * kw * C))
    return jnp.stack(groups, axis=0)


# ---------------------------------------------------------------------------
# Parameters: PyTorch-layout init + one-time kernel-ready prep (pad + bf16)
# ---------------------------------------------------------------------------
def init_params(key):
    def uniform(k, shape, fan_in):
        bound = 1.0 / jnp.sqrt(jnp.float32(fan_in))
        return jax.random.uniform(k, shape, jnp.float32, -bound, bound)

    ks = jax.random.split(key, 8)
    return {
        "conv1_w": uniform(ks[0], (40, 3, 5, 5), 3 * 5 * 5),
        "conv1_b": uniform(ks[1], (40,), 3 * 5 * 5),
        "conv2_w": uniform(ks[2], (60, 40, 5, 5), 40 * 5 * 5),
        "conv2_b": uniform(ks[3], (60,), 40 * 5 * 5),
        "fc1_w": uniform(ks[4], (5 * 5 * 60, 500), 5 * 5 * 60),   # (in, out)
        "fc1_b": uniform(ks[5], (500,), 5 * 5 * 60),
        "fc2_w": uniform(ks[6], (500, 10), 500),
        "fc2_b": uniform(ks[7], (10,), 500),
    }


def prepare_params(p):
    """Pad output dims to 128 lanes, convert matmul weights to bf16."""
    def conv_wmat(w):                       # (OC, IC, KH, KW) -> (KH*KW*IC, 128)
        oc, ic, kh, kw = w.shape
        m = jnp.transpose(w, (2, 3, 1, 0)).reshape(kh * kw * ic, oc)
        return jnp.pad(m, ((0, 0), (0, LANE - oc))).astype(jnp.bfloat16)

    def bias_row(b, n, fill=0.0):
        row = jnp.full((1, n), fill, jnp.float32)
        return row.at[0, :b.shape[0]].set(b.astype(jnp.float32))

    # fc1: PyTorch flatten index is c*25 + (h*5+w); our activation layout is
    # (h*5+w)*128 + c, so permute (and zero-pad) the weight rows once here.
    w1 = p["fc1_w"].reshape(60, 25, 500).transpose(1, 0, 2)        # (p, c, out)
    w1 = jnp.pad(w1, ((0, 0), (0, LANE - 60), (0, HID - 500)))
    w2 = jnp.pad(p["fc2_w"], ((0, HID - 500), (0, LANE - 10)))
    return {
        "c1_w": conv_wmat(p["conv1_w"]), "c1_b": bias_row(p["conv1_b"], LANE),
        "c2_w": conv_wmat(p["conv2_w"]), "c2_b": bias_row(p["conv2_b"], LANE),
        "fc1_w": w1.reshape(25 * LANE, HID).astype(jnp.bfloat16),
        "fc1_b": bias_row(p["fc1_b"], HID),
        "fc2_w": w2.astype(jnp.bfloat16),
        "fc2_b": bias_row(p["fc2_b"], LANE, NEG_INF),   # pad logits -> ignored
    }


# ---------------------------------------------------------------------------
# Forward passes
# ---------------------------------------------------------------------------
def hebbcnn_forward(kp, x_nchw):
    B = x_nchw.shape[0]
    x = jnp.transpose(x_nchw, (0, 2, 3, 1)).astype(jnp.bfloat16)     # NHWC bf16

    # conv1 (3->40, 5x5) + relu + pool  ->  (B*14*14, 128) bf16
    cols1 = _im2col_pool4(x, 5, 5)                                   # (4, B*196, 75)
    y1 = conv_relu_pool(cols1, kp["c1_w"], kp["c1_b"],
                        _pick_rows(B, 196, max_rows=1600))

    # conv2 (40->60, 5x5) + relu + pool  ->  (B*5*5, 128) bf16
    y1 = y1.reshape(B, 14, 14, LANE)[..., :40]                       # drop pad chans
    cols2 = _im2col_pool4(y1, 5, 5)                                  # (4, B*25, 1000)
    y2 = conv_relu_pool(cols2, kp["c2_w"], kp["c2_b"],
                        _pick_rows(B, 25, max_rows=400))

    # fc1 + relu + fc2 + log_softmax (flatten is free: fc1 weight is permuted)
    out = fc_head(y2.reshape(B, 25 * LANE), kp["fc1_w"], kp["fc1_b"],
                  kp["fc2_w"], kp["fc2_b"])
    return out[:, :10]


def reference_forward(p, x):
    """Plain-XLA f32 reference (independent of the Pallas path)."""
    def conv(y, w, b):
        y = jax.lax.conv_general_dilated(
            y, w, window_strides=(1, 1), padding="VALID",
            dimension_numbers=("NCHW", "OIHW", "NCHW"))
        return y + b[None, :, None, None]

    def pool(y):
        B, C, H, W = y.shape
        return y.reshape(B, C, H // 2, 2, W // 2, 2).max(axis=(3, 5))

    y = pool(jnp.maximum(conv(x, p["conv1_w"], p["conv1_b"]), 0.0))
    y = pool(jnp.maximum(conv(y, p["conv2_w"], p["conv2_b"]), 0.0))
    y = y.reshape(y.shape[0], -1)                                    # NCHW flatten
    y = jnp.maximum(y @ p["fc1_w"] + p["fc1_b"], 0.0)
    y = y @ p["fc2_w"] + p["fc2_b"]
    return jax.nn.log_softmax(y, axis=1)


if __name__ == "__main__":
    key = jax.random.PRNGKey(0)
    pkey, xkey = jax.random.split(key)
    params = init_params(pkey)
    kparams = prepare_params(params)
    # Forward implies 32x32 inputs (32 -conv5-> 28 -pool-> 14 -conv5-> 10 -pool-> 5)
    x = jax.random.normal(xkey, (2, 3, 32, 32), jnp.float32)

    fwd = jax.jit(hebbcnn_forward)
    out = jax.block_until_ready(fwd(kparams, x))

    assert out.shape == (2, 10)
    # log_softmax rows sum to ~1 in probability space
    assert bool(jnp.all(jnp.abs(jnp.sum(jnp.exp(out), axis=1) - 1.0) < 1e-4))
    # Cross-check against an independent plain-XLA f32 reference.  Tolerance is
    # widened (knowingly) vs. the f32 path because intermediates are now bf16.
    ref = jax.block_until_ready(jax.jit(reference_forward)(params, x))
    err = float(jnp.max(jnp.abs(out - ref)))
    assert err < 1e-1, f"max abs err vs reference: {err}"
    print("KERNEL_OK")
</pallas_src>

<mosaic_0001>
module attributes {stable_mosaic.version = 11 : i64} {
  func.func @_conv_pool_kernel(%arg0: i32, %arg1: memref<4x392x75xbf16, #tpu.memory_space<vmem>>, %arg2: memref<75x128xbf16, #tpu.memory_space<vmem>>, %arg3: memref<1x128xf32, #tpu.memory_space<vmem>>, %arg4: memref<392x128xbf16, #tpu.memory_space<vmem>>) attributes {dimension_semantics = [#tpu.dimension_semantics<parallel>], iteration_bounds = array<i64: 1>, scalar_prefetch = 0 : i64, scratch_operands = 0 : i64, tpu.core_type = #tpu.core_type<tc>, window_params = [{transform_indices = @transform_0, window_bounds = array<i64: 4, 392, 75>}, {pipeline_mode = #tpu.pipeline_mode<synchronous>, transform_indices = @transform_1, window_bounds = array<i64: 75, 128>}, {pipeline_mode = #tpu.pipeline_mode<synchronous>, transform_indices = @transform_2, window_bounds = array<i64: 1, 128>}, {transform_indices = @transform_3, window_bounds = array<i64: 392, 128>}]} {
    %c0 = arith.constant 0 : index
    %c0_0 = arith.constant 0 : index
    %0 = vector.load %arg2[%c0, %c0_0] : memref<75x128xbf16, #tpu.memory_space<vmem>>, vector<75x128xbf16>
    %c0_1 = arith.constant 0 : index
    %c0_2 = arith.constant 0 : index
    %c0_3 = arith.constant 0 : index
    %1 = vector.load %arg1[%c0_1, %c0_2, %c0_3] : memref<4x392x75xbf16, #tpu.memory_space<vmem>>, vector<1x392x75xbf16>
    %2 = vector.shape_cast %1 : vector<1x392x75xbf16> to vector<392x75xbf16>
    %cst = arith.constant dense<0.000000e+00> : vector<392x128xf32>
    %3 = tpu.matmul %2, %0, %cst {dimension_numbers = #tpu.dot_dimension_numbers<[1], [0], [0], [1], [0, 0, 1, 1], [], []>} : vector<392x75xbf16>, vector<75x128xbf16>, vector<392x128xf32> -> vector<392x128xf32>
    %c1 = arith.constant 1 : index
    %c0_4 = arith.constant 0 : index
    %c0_5 = arith.constant 0 : index
    %4 = vector.load %arg1[%c1, %c0_4, %c0_5] : memref<4x392x75xbf16, #tpu.memory_space<vmem>>, vector<1x392x75xbf16>
    %5 = vector.shape_cast %4 : vector<1x392x75xbf16> to vector<392x75xbf16>
    %cst_6 = arith.constant dense<0.000000e+00> : vector<392x128xf32>
    %6 = tpu.matmul %5, %0, %cst_6 {dimension_numbers = #tpu.dot_dimension_numbers<[1], [0], [0], [1], [0, 0, 1, 1], [], []>} : vector<392x75xbf16>, vector<75x128xbf16>, vector<392x128xf32> -> vector<392x128xf32>
    %7 = arith.maximumf %3, %6 : vector<392x128xf32>
    %c2 = arith.constant 2 : index
    %c0_7 = arith.constant 0 : index
    %c0_8 = arith.constant 0 : index
    %8 = vector.load %arg1[%c2, %c0_7, %c0_8] : memref<4x392x75xbf16, #tpu.memory_space<vmem>>, vector<1x392x75xbf16>
    %9 = vector.shape_cast %8 : vector<1x392x75xbf16> to vector<392x75xbf16>
    %cst_9 = arith.constant dense<0.000000e+00> : vector<392x128xf32>
    %10 = tpu.matmul %9, %0, %cst_9 {dimension_numbers = #tpu.dot_dimension_numbers<[1], [0], [0], [1], [0, 0, 1, 1], [], []>} : vector<392x75xbf16>, vector<75x128xbf16>, vector<392x128xf32> -> vector<392x128xf32>
    %11 = arith.maximumf %7, %10 : vector<392x128xf32>
    %c3 = arith.constant 3 : index
    %c0_10 = arith.constant 0 : index
    %c0_11 = arith.constant 0 : index
    %12 = vector.load %arg1[%c3, %c0_10, %c0_11] : memref<4x392x75xbf16, #tpu.memory_space<vmem>>, vector<1x392x75xbf16>
    %13 = vector.shape_cast %12 : vector<1x392x75xbf16> to vector<392x75xbf16>
    %cst_12 = arith.constant dense<0.000000e+00> : vector<392x128xf32>
    %14 = tpu.matmul %13, %0, %cst_12 {dimension_numbers = #tpu.dot_dimension_numbers<[1], [0], [0], [1], [0, 0, 1, 1], [], []>} : vector<392x75xbf16>, vector<75x128xbf16>, vector<392x128xf32> -> vector<392x128xf32>
    %15 = arith.maximumf %11, %14 : vector<392x128xf32>
    %c0_13 = arith.constant 0 : index
    %c0_14 = arith.constant 0 : index
    %16 = vector.load %arg3[%c0_13, %c0_14] : memref<1x128xf32, #tpu.memory_space<vmem>>, vector<1x128xf32>
    %17 = vector.broadcast %16 : vector<1x128xf32> to vector<392x128xf32>
    %18 = arith.addf %15, %17 : vector<392x128xf32>
    %cst_15 = arith.constant 0.000000e+00 : f32
    %19 = vector.broadcast %cst_15 : f32 to vector<392x128xf32>
    %20 = arith.maximumf %18, %19 : vector<392x128xf32>
    %21 = arith.truncf %20 : vector<392x128xf32> to vector<392x128xbf16>
    %c0_16 = arith.constant 0 : index
    %c0_17 = arith.constant 0 : index
    %22 = vector.load %arg4[%c0_16, %c0_17] : memref<392x128xbf16, #tpu.memory_space<vmem>>, vector<392x128xbf16>
    tpu.vector_store %arg4[%c0_16, %c0_17], %21 {strides = array<i32>} : memref<392x128xbf16, #tpu.memory_space<vmem>>, vector<392x128xbf16>,
    return
  }
  func.func @transform_0(%arg0: i32) -> (i32, i32, i32) {
    %c0_i32 = arith.constant 0 : i32
    %c0_i32_0 = arith.constant 0 : i32
    %c0_i32_1 = arith.constant 0 : i32
    return %c0_i32, %arg0, %c0_i32_0 : i32, i32, i32
  }
  func.func @transform_1(%arg0: i32) -> (i32, i32) {
    %c0_i32 = arith.constant 0 : i32
    %c0_i32_0 = arith.constant 0 : i32
    %c0_i32_1 = arith.constant 0 : i32
    return %c0_i32, %c0_i32_0 : i32, i32
  }
  func.func @transform_2(%arg0: i32) -> (i32, i32) {
    %c0_i32 = arith.constant 0 : i32
    %c0_i32_0 = arith.constant 0 : i32
    %c0_i32_1 = arith.constant 0 : i32
    return %c0_i32, %c0_i32_0 : i32, i32
  }
  func.func @transform_3(%arg0: i32) -> (i32, i32) {
    %c0_i32 = arith.constant 0 : i32
    %c0_i32_0 = arith.constant 0 : i32
    return %arg0, %c0_i32 : i32, i32
  }
}

module attributes {stable_mosaic.version = 11 : i64} {
  func.func @_conv_pool_kernel(%arg0: i32, %arg1: memref<4x50x1000xbf16, #tpu.memory_space<vmem>>, %arg2: memref<1000x128xbf16, #tpu.memory_space<vmem>>, %arg3: memref<1x128xf32, #tpu.memory_space<vmem>>, %arg4: memref<50x128xbf16, #tpu.memory_space<vmem>>) attributes {dimension_semantics = [#tpu.dimension_semantics<parallel>], iteration_bounds = array<i64: 1>, scalar_prefetch = 0 : i64, scratch_operands = 0 : i64, tpu.core_type = #tpu.core_type<tc>, window_params = [{transform_indices = @transform_0, window_bounds = array<i64: 4, 50, 1000>}, {pipeline_mode = #tpu.pipeline_mode<synchronous>, transform_indices = @transform_1, window_bounds = array<i64: 1000, 128>}, {pipeline_mode = #tpu.pipeline_mode<synchronous>, transform_indices = @transform_2, window_bounds = array<i64: 1, 128>}, {transform_indices = @transform_3, window_bounds = array<i64: 50, 128>}]} {
    %c0 = arith.constant 0 : index
    %c0_0 = arith.constant 0 : index
    %0 = vector.load %arg2[%c0, %c0_0] : memref<1000x128xbf16, #tpu.memory_space<vmem>>, vector<1000x128xbf16>
    %c0_1 = arith.constant 0 : index
    %c0_2 = arith.constant 0 : index
    %c0_3 = arith.constant 0 : index
    %1 = vector.load %arg1[%c0_1, %c0_2, %c0_3] : memref<4x50x1000xbf16, #tpu.memory_space<vmem>>, vector<1x50x1000xbf16>
    %2 = vector.shape_cast %1 : vector<1x50x1000xbf16> to vector<50x1000xbf16>
    %cst = arith.constant dense<0.000000e+00> : vector<50x128xf32>
    %3 = tpu.matmul %2, %0, %cst {dimension_numbers = #tpu.dot_dimension_numbers<[1], [0], [0], [1], [0, 0, 1, 1], [], []>} : vector<50x1000xbf16>, vector<1000x128xbf16>, vector<50x128xf32> -> vector<50x128xf32>
    %c1 = arith.constant 1 : index
    %c0_4 = arith.constant 0 : index
    %c0_5 = arith.constant 0 : index
    %4 = vector.load %arg1[%c1, %c0_4, %c0_5] : memref<4x50x1000xbf16, #tpu.memory_space<vmem>>, vector<1x50x1000xbf16>
    %5 = vector.shape_cast %4 : vector<1x50x1000xbf16> to vector<50x1000xbf16>
    %cst_6 = arith.constant dense<0.000000e+00> : vector<50x128xf32>
    %6 = tpu.matmul %5, %0, %cst_6 {dimension_numbers = #tpu.dot_dimension_numbers<[1], [0], [0], [1], [0, 0, 1, 1], [], []>} : vector<50x1000xbf16>, vector<1000x128xbf16>, vector<50x128xf32> -> vector<50x128xf32>
    %7 = arith.maximumf %3, %6 : vector<50x128xf32>
    %c2 = arith.constant 2 : index
    %c0_7 = arith.constant 0 : index
    %c0_8 = arith.constant 0 : index
    %8 = vector.load %arg1[%c2, %c0_7, %c0_8] : memref<4x50x1000xbf16, #tpu.memory_space<vmem>>, vector<1x50x1000xbf16>
    %9 = vector.shape_cast %8 : vector<1x50x1000xbf16> to vector<50x1000xbf16>
    %cst_9 = arith.constant dense<0.000000e+00> : vector<50x128xf32>
    %10 = tpu.matmul %9, %0, %cst_9 {dimension_numbers = #tpu.dot_dimension_numbers<[1], [0], [0], [1], [0, 0, 1, 1], [], []>} : vector<50x1000xbf16>, vector<1000x128xbf16>, vector<50x128xf32> -> vector<50x128xf32>
    %11 = arith.maximumf %7, %10 : vector<50x128xf32>
    %c3 = arith.constant 3 : index
    %c0_10 = arith.constant 0 : index
    %c0_11 = arith.constant 0 : index
    %12 = vector.load %arg1[%c3, %c0_10, %c0_11] : memref<4x50x1000xbf16, #tpu.memory_space<vmem>>, vector<1x50x1000xbf16>
    %13 = vector.shape_cast %12 : vector<1x50x1000xbf16> to vector<50x1000xbf16>
    %cst_12 = arith.constant dense<0.000000e+00> : vector<50x128xf32>
    %14 = tpu.matmul %13, %0, %cst_12 {dimension_numbers = #tpu.dot_dimension_numbers<[1], [0], [0], [1], [0, 0, 1, 1], [], []>} : vector<50x1000xbf16>, vector<1000x128xbf16>, vector<50x128xf32> -> vector<50x128xf32>
    %15 = arith.maximumf %11, %14 : vector<50x128xf32>
    %c0_13 = arith.constant 0 : index
    %c0_14 = arith.constant 0 : index
    %16 = vector.load %arg3[%c0_13, %c0_14] : memref<1x128xf32, #tpu.memory_space<vmem>>, vector<1x128xf32>
    %17 = vector.broadcast %16 : vector<1x128xf32> to vector<50x128xf32>
    %18 = arith.addf %15, %17 : vector<50x128xf32>
    %cst_15 = arith.constant 0.000000e+00 : f32
    %19 = vector.broadcast %cst_15 : f32 to vector<50x128xf32>
    %20 = arith.maximumf %18, %19 : vector<50x128xf32>
    %21 = arith.truncf %20 : vector<50x128xf32> to vector<50x128xbf16>
    %c0_16 = arith.constant 0 : index
    %c0_17 = arith.constant 0 : index
    %22 = vector.load %arg4[%c0_16, %c0_17] : memref<50x128xbf16, #tpu.memory_space<vmem>>, vector<50x128xbf16>
    tpu.vector_store %arg4[%c0_16, %c0_17], %21 {strides = array<i32>} : memref<50x128xbf16, #tpu.memory_space<vmem>>, vector<50x128xbf16>,
    return
  }
  func.func @transform_0(%arg0: i32) -> (i32, i32, i32) {
    %c0_i32 = arith.constant 0 : i32
    %c0_i32_0 = arith.constant 0 : i32
    %c0_i32_1 = arith.constant 0 : i32
    return %c0_i32, %arg0, %c0_i32_0 : i32, i32, i32
  }
  func.func @transform_1(%arg0: i32) -> (i32, i32) {
    %c0_i32 = arith.constant 0 : i32
    %c0_i32_0 = arith.constant 0 : i32
    %c0_i32_1 = arith.constant 0 : i32
    return %c0_i32, %c0_i32_0 : i32, i32
  }
  func.func @transform_2(%arg0: i32) -> (i32, i32) {
    %c0_i32 = arith.constant 0 : i32
    %c0_i32_0 = arith.constant 0 : i32
    %c0_i32_1 = arith.constant 0 : i32
    return %c0_i32, %c0_i32_0 : i32, i32
  }
  func.func @transform_3(%arg0: i32) -> (i32, i32) {
    %c0_i32 = arith.constant 0 : i32
    %c0_i32_0 = arith.constant 0 : i32
    return %arg0, %c0_i32 : i32, i32
  }
}

module attributes {stable_mosaic.version = 11 : i64} {
  func.func @_fc_head_kernel(%arg0: i32, %arg1: memref<2x3200xbf16, #tpu.memory_space<vmem>>, %arg2: memref<3200x512xbf16, #tpu.memory_space<vmem>>, %arg3: memref<1x512xf32, #tpu.memory_space<vmem>>, %arg4: memref<512x128xbf16, #tpu.memory_space<vmem>>, %arg5: memref<1x128xf32, #tpu.memory_space<vmem>>, %arg6: memref<2x128xf32, #tpu.memory_space<vmem>>) attributes {dimension_semantics = [#tpu.dimension_semantics<parallel>], iteration_bounds = array<i64: 1>, scalar_prefetch = 0 : i64, scratch_operands = 0 : i64, tpu.core_type = #tpu.core_type<tc>, window_params = [{transform_indices = @transform_0, window_bounds = array<i64: 2, 3200>}, {pipeline_mode = #tpu.pipeline_mode<synchronous>, transform_indices = @transform_1, window_bounds = array<i64: 3200, 512>}, {pipeline_mode = #tpu.pipeline_mode<synchronous>, transform_indices = @transform_2, window_bounds = array<i64: 1, 512>}, {pipeline_mode = #tpu.pipeline_mode<synchronous>, transform_indices = @transform_3, window_bounds = array<i64: 512, 128>}, {pipeline_mode = #tpu.pipeline_mode<synchronous>, transform_indices = @transform_4, window_bounds = array<i64: 1, 128>}, {transform_indices = @transform_5, window_bounds = array<i64: 2, 128>}]} {
    %c0 = arith.constant 0 : index
    %c0_0 = arith.constant 0 : index
    %0 = vector.load %arg1[%c0, %c0_0] : memref<2x3200xbf16, #tpu.memory_space<vmem>>, vector<2x3200xbf16>
    %c0_1 = arith.constant 0 : index
    %c0_2 = arith.constant 0 : index
    %1 = vector.load %arg2[%c0_1, %c0_2] : memref<3200x512xbf16, #tpu.memory_space<vmem>>, vector<3200x512xbf16>
    %cst = arith.constant dense<0.000000e+00> : vector<2x512xf32>
    %2 = tpu.matmul %0, %1, %cst {dimension_numbers = #tpu.dot_dimension_numbers<[1], [0], [0], [1], [0, 0, 1, 1], [], []>} : vector<2x3200xbf16>, vector<3200x512xbf16>, vector<2x512xf32> -> vector<2x512xf32>
    %c0_3 = arith.constant 0 : index
    %c0_4 = arith.constant 0 : index
    %3 = vector.load %arg3[%c0_3, %c0_4] : memref<1x512xf32, #tpu.memory_space<vmem>>, vector<1x512xf32>
    %4 = vector.broadcast %3 : vector<1x512xf32> to vector<2x512xf32>
    %5 = arith.addf %2, %4 : vector<2x512xf32>
    %cst_5 = arith.constant 0.000000e+00 : f32
    %6 = vector.broadcast %cst_5 : f32 to vector<2x512xf32>
    %7 = arith.maximumf %5, %6 : vector<2x512xf32>
    %8 = arith.truncf %7 : vector<2x512xf32> to vector<2x512xbf16>
    %c0_6 = arith.constant 0 : index
    %c0_7 = arith.constant 0 : index
    %9 = vector.load %arg4[%c0_6, %c0_7] : memref<512x128xbf16, #tpu.memory_space<vmem>>, vector<512x128xbf16>
    %cst_8 = arith.constant dense<0.000000e+00> : vector<2x128xf32>
    %10 = tpu.matmul %8, %9, %cst_8 {dimension_numbers = #tpu.dot_dimension_numbers<[1], [0], [0], [1], [0, 0, 1, 1], [], []>} : vector<2x512xbf16>, vector<512x128xbf16>, vector<2x128xf32> -> vector<2x128xf32>
    %c0_9 = arith.constant 0 : index
    %c0_10 = arith.constant 0 : index
    %11 = vector.load %arg5[%c0_9, %c0_10] : memref<1x128xf32, #tpu.memory_space<vmem>>, vector<1x128xf32>
    %12 = vector.broadcast %11 : vector<1x128xf32> to vector<2x128xf32>
    %13 = arith.addf %10, %12 : vector<2x128xf32>
    %cst_11 = arith.constant dense<0xFF800000> : vector<2xf32>
    %14 = vector.multi_reduction <maximumf>, %13, %cst_11 [1] : vector<2x128xf32> to vector<2xf32>
    %15 = vector.shape_cast %14 : vector<2xf32> to vector<2x1xf32>
    %16 = vector.broadcast %15 : vector<2x1xf32> to vector<2x128xf32>
    %17 = arith.subf %13, %16 : vector<2x128xf32>
    %18 = math.exp %17 : vector<2x128xf32>
    %cst_12 = arith.constant dense<0.000000e+00> : vector<2xf32>
    %19 = vector.multi_reduction <add>, %18, %cst_12 [1] : vector<2x128xf32> to vector<2xf32>
    %20 = vector.shape_cast %19 : vector<2xf32> to vector<2x1xf32>
    %21 = math.log %20 : vector<2x1xf32>
    %22 = vector.broadcast %21 : vector<2x1xf32> to vector<2x128xf32>
    %23 = arith.subf %17, %22 : vector<2x128xf32>
    %c0_13 = arith.constant 0 : index
    %c0_14 = arith.constant 0 : index
    %24 = vector.load %arg6[%c0_13, %c0_14] : memref<2x128xf32, #tpu.memory_space<vmem>>, vector<2x128xf32>
    tpu.vector_store %arg6[%c0_13, %c0_14], %23 {strides = array<i32>} : memref<2x128xf32, #tpu.memory_space<vmem>>, vector<2x128xf32>,
    return
  }
  func.func @transform_0(%arg0: i32) -> (i32, i32) {
    %c0_i32 = arith.constant 0 : i32
    %c0_i32_0 = arith.constant 0 : i32
    return %arg0, %c0_i32 : i32, i32
  }
  func.func @transform_1(%arg0: i32) -> (i32, i32) {
    %c0_i32 = arith.constant 0 : i32
    %c0_i32_0 = arith.constant 0 : i32
    %c0_i32_1 = arith.constant 0 : i32
    return %c0_i32, %c0_i32_0 : i32, i32
  }
  func.func @transform_2(%arg0: i32) -> (i32, i32) {
    %c0_i32 = arith.constant 0 : i32
    %c0_i32_0 = arith.constant 0 : i32
    %c0_i32_1 = arith.constant 0 : i32
    return %c0_i32, %c0_i32_0 : i32, i32
  }
  func.func @transform_3(%arg0: i32) -> (i32, i32) {
    %c0_i32 = arith.constant 0 : i32
    %c0_i32_0 = arith.constant 0 : i32
    %c0_i32_1 = arith.constant 0 : i32
    return %c0_i32, %c0_i32_0 : i32, i32
  }
  func.func @transform_4(%arg0: i32) -> (i32, i32) {
    %c0_i32 = arith.constant 0 : i32
    %c0_i32_0 = arith.constant 0 : i32
    %c0_i32_1 = arith.constant 0 : i32
    return %c0_i32, %c0_i32_0 : i32, i32
  }
  func.func @transform_5(%arg0: i32) -> (i32, i32) {
    %c0_i32 = arith.constant 0 : i32
    %c0_i32_0 = arith.constant 0 : i32
    return %arg0, %c0_i32 : i32, i32
  }
}

</mosaic_0001>

<llo_original>
// kernel: hebbcnn_forward.3
$region0: #{hebbcnn_forward.3}
  #allocation0 [shape = 'u32[]', space=smem, size = 0x4, offset = 0x4, fixed_abs, tag = 'smem constant byte address 0x4 - core index']
  #allocation1 [shape = 'u32[144,128]{1,0:T(1,128)}', space=vmem, size = 0x12000, scoped, tag = 'internal scratch']
  %s0 = inlined_call_operand.vmem [shape: bf16[4,392,75], index: 0, kind: input, shape index: {}]
  %s1 = inlined_call_operand.vmem [shape: bf16[75,128], index: 1, kind: input, shape index: {}]
  %s2 = inlined_call_operand.vmem [shape: f32[1,128], index: 2, kind: input, shape index: {}]
  %s3 = inlined_call_operand.vmem [shape: bf16[392,128], index: 3, kind: output, shape index: {}]
  %s4 = sld [smem:[#allocation0]]
  $region22: #{hebbcnn_forward.3} parent=0
    _
  %s6 = ssub.s32 1, %s4
  %s7 = scalar_select 0, %s6, %s4
  // Predicated region
  $region2: #{hebbcnn_forward.3} parent=0 // pred_check
    _
  $region3: #{hebbcnn_forward.3} parent=0 // pred_check_branch
    %9 = sbr.rel (0) target = $region5
  $region4: #{hebbcnn_forward.3} parent=0 // pred_region
    _
  $region5: #{hebbcnn_forward.3} parent=0 // pred_fallthru
    _
  // Predicated region
  $region6: #{hebbcnn_forward.3} parent=0 // pred_check
    _
  $region7: #{hebbcnn_forward.3} parent=0 // pred_check_branch
    %11 = sbr.rel (0) target = $region9
  $region8: #{hebbcnn_forward.3} parent=0 // pred_region
    _
  $region9: #{hebbcnn_forward.3} parent=0 // pred_fallthru
    _
  // Predicated region
  $region10: #{hebbcnn_forward.3} parent=0 // pred_check
    _
  $region11: #{hebbcnn_forward.3} parent=0 // pred_check_branch
    %13 = sbr.rel (0) target = $region13
  $region12: #{hebbcnn_forward.3} parent=0 // pred_region
    _
  $region13: #{hebbcnn_forward.3} parent=0 // pred_fallthru
    _
  %v15 = vld [vmem:[%s1] sm:$0xf]
  %v16 = vld [vmem:[%s1 + $0x4] sm:$0xf]
  %v17 = vld [vmem:[%s1 + $0x8] sm:$0xf]
  %v18 = vld [vmem:[%s1 + $0xc] sm:$0xf]
  %v19 = vld [vmem:[%s1 + $0x10] sm:$0xf]
  %v20 = vld [vmem:[%s1 + $0x14] sm:$0xf]
  %v21 = vld [vmem:[%s1 + $0x18] sm:$0xf]
  %v22 = vld [vmem:[%s1 + $0x1c] sm:$0xf]
  %v23 = vld [vmem:[%s1 + $0x20] sm:$0xf]
  %v24 = vld [vmem:[%s1 + $0x24] sm:$0x3]
  %v25 = vld [vmem:[%s0] sm:$0xf]
  %v26 = vld [vmem:[%s0 + $0x4] sm:$0xf]
  %v27 = vld [vmem:[%s0 + $0x8] sm:$0xf]
  %v28 = vld [vmem:[%s0 + $0xc] sm:$0xf]
  %v29 = vld [vmem:[%s0 + $0x10] sm:$0xf]
  %v30 = vld [vmem:[%s0 + $0x14] sm:$0xf]
  %v31 = vld [vmem:[%s0 + $0x18] sm:$0xf]
  %v32 = vld [vmem:[%s0 + $0x1c] sm:$0xf]
  %v33 = vld [vmem:[%s0 + $0x20] sm:$0xf]
  %v34 = vld [vmem:[%s0 + $0x24] sm:$0xf]
  %v35 = vld [vmem:[%s0 + $0x28] sm:$0xf]
  %v36 = vld [vmem:[%s0 + $0x2c] sm:$0xf]
  %v37 = vld [vmem:[%s0 + $0x30] sm:$0xf]
  %v38 = vld [vmem:[%s0 + $0x34] sm:$0xf]
  %v39 = vld [vmem:[%s0 + $0x38] sm:$0xf]
  %v40 = vld [vmem:[%s0 + $0x3c] sm:$0xf]
  %v41 = vld [vmem:[%s0 + $0x40] sm:$0xf]
  %v42 = vld [vmem:[%s0 + $0x44] sm:$0xf]
  %v43 = vld [vmem:[%s0 + $0x48] sm:$0xf]
  %v44 = vld [vmem:[%s0 + $0x4c] sm:$0xf]
  %v45 = vld [vmem:[%s0 + $0x50] sm:$0xf]
  %v46 = vld [vmem:[%s0 + $0x54] sm:$0xf]
  %v47 = vld [vmem:[%s0 + $0x58] sm:$0xf]
  %v48 = vld [vmem:[%s0 + $0x5c] sm:$0xf]
  %v49 = vld [vmem:[%s0 + $0x60] sm:$0xf]
  %v50 = vld [vmem:[%s0 + $0x64] sm:$0xf]
  %v51 = vld [vmem:[%s0 + $0x68] sm:$0xf]
  %v52 = vld [vmem:[%s0 + $0x6c] sm:$0xf]
  %v53 = vld [vmem:[%s0 + $0x70] sm:$0xf]
  %v54 = vld [vmem:[%s0 + $0x74] sm:$0xf]
  %v55 = vld [vmem:[%s0 + $0x78] sm:$0xf]
  %v56 = vld [vmem:[%s0 + $0x7c] sm:$0xf]
  %v57 = vld [vmem:[%s0 + $0x80] sm:$0xf]
  %v58 = vld [vmem:[%s0 + $0x84] sm:$0xf]
  %v59 = vld [vmem:[%s0 + $0x88] sm:$0xf]
  %v60 = vld [vmem:[%s0 + $0x8c] sm:$0xf]
  %v61 = vld [vmem:[%s0 + $0x90] sm:$0xf]
  %v62 = vld [vmem:[%s0 + $0x94] sm:$0xf]
  %v63 = vld [vmem:[%s0 + $0x98] sm:$0xf]
  %v64 = vld [vmem:[%s0 + $0x9c] sm:$0xf]
  %v65 = vld [vmem:[%s0 + $0xa0] sm:$0xf]
  %v66 = vld [vmem:[%s0 + $0xa4] sm:$0xf]
  %v67 = vld [vmem:[%s0 + $0xa8] sm:$0xf]
  %v68 = vld [vmem:[%s0 + $0xac] sm:$0xf]
  %v69 = vld [vmem:[%s0 + $0xb0] sm:$0xf]
  %v70 = vld [vmem:[%s0 + $0xb4] sm:$0xf]
  %v71 = vld [vmem:[%s0 + $0xb8] sm:$0xf]
  %v72 = vld [vmem:[%s0 + $0xbc] sm:$0xf]
  %v73 = vld [vmem:[%s0 + $0xc0] sm:$0xf]
  %v123 = vunpack.c.l.b16 %v25
  %v124 = vunpack.c.l.b16 %v26
  %v125 = vunpack.c.l.b16 %v27
  %v126 = vunpack.c.l.b16 %v28
  %v127 = vunpack.c.l.b16 %v29
  %v128 = vunpack.c.l.b16 %v30
  %v129 = vunpack.c.l.b16 %v31
  %v130 = vunpack.c.l.b16 %v32
  %v131 = vunpack.c.l.b16 %v33
  %v132 = vunpack.c.l.b16 %v34
  %v133 = vunpack.c.l.b16 %v35
  %v134 = vunpack.c.l.b16 %v36
  %v135 = vunpack.c.l.b16 %v37
  %v136 = vunpack.c.l.b16 %v38
  %v137 = vunpack.c.l.b16 %v39
  %v138 = vunpack.c.l.b16 %v40
  %v139 = vunpack.c.l.b16 %v41
  %v140 = vunpack.c.l.b16 %v42
  %v141 = vunpack.c.l.b16 %v43
  %v142 = vunpack.c.l.b16 %v44
  %v143 = vunpack.c.l.b16 %v45
  %v144 = vunpack.c.l.b16 %v46
  %v145 = vunpack.c.l.b16 %v47
  %v146 = vunpack.c.l.b16 %v48
  %v147 = vunpack.c.l.b16 %v49
  %v148 = vunpack.c.l.b16 %v50
  %v149 = vunpack.c.l.b16 %v51
  %v150 = vunpack.c.l.b16 %v52
  %v151 = vunpack.c.l.b16 %v53
  %v152 = vunpack.c.l.b16 %v54
  %v153 = vunpack.c.l.b16 %v55
  %v154 = vunpack.c.l.b16 %v56
  %v155 = vunpack.c.l.b16 %v57
  %v156 = vunpack.c.l.b16 %v58
  %v157 = vunpack.c.l.b16 %v59
  %v158 = vunpack.c.l.b16 %v60
  %v159 = vunpack.c.l.b16 %v61
  %v160 = vunpack.c.l.b16 %v62
  %v161 = vunpack.c.l.b16 %v63
  %v162 = vunpack.c.l.b16 %v64
  %v163 = vunpack.c.l.b16 %v65
  %v164 = vunpack.c.l.b16 %v66
  %v165 = vunpack.c.l.b16 %v67
  %v166 = vunpack.c.l.b16 %v68
  %v167 = vunpack.c.l.b16 %v69
  %v168 = vunpack.c.l.b16 %v70
  %v169 = vunpack.c.l.b16 %v71
  %v170 = vunpack.c.l.b16 %v72
  %v171 = vunpack.c.l.b16 %v73
  %v172 = vpack.c.b16 %v124, %v123
  %v173 = vpack.c.b16 %v126, %v125
  %v174 = vpack.c.b16 %v128, %v127
  %v175 = vpack.c.b16 %v130, %v129
  %v176 = vpack.c.b16 %v132, %v131
  %v177 = vpack.c.b16 %v134, %v133
  %v178 = vpack.c.b16 %v136, %v135
  %v179 = vpack.c.b16 %v138, %v137
  %v180 = vpack.c.b16 %v140, %v139
  %v181 = vpack.c.b16 %v142, %v141
  %v182 = vpack.c.b16 %v144, %v143
  %v183 = vpack.c.b16 %v146, %v145
  %v184 = vpack.c.b16 %v148, %v147
  %v185 = vpack.c.b16 %v150, %v149
  %v186 = vpack.c.b16 %v152, %v151
  %v187 = vpack.c.b16 %v154, %v153
  %v188 = vpack.c.b16 %v156, %v155
  %v189 = vpack.c.b16 %v158, %v157
  %v190 = vpack.c.b16 %v160, %v159
  %v191 = vpack.c.b16 %v162, %v161
  %v192 = vpack.c.b16 %v164, %v163
  %v193 = vpack.c.b16 %v166, %v165
  %v194 = vpack.c.b16 %v168, %v167
  %v195 = vpack.c.b16 %v170, %v169
  %v196 = vpack.c.b16 %v171, %v171
  %v207 = vunpack.c.l.b16 %v15
  %v208 = vunpack.c.l.b16 %v16
  %v209 = vunpack.c.l.b16 %v17
  %v210 = vunpack.c.l.b16 %v18
  %v211 = vunpack.c.l.b16 %v19
  %v212 = vunpack.c.l.b16 %v20
  %v213 = vunpack.c.l.b16 %v21
  %v214 = vunpack.c.l.b16 %v22
  %v215 = vunpack.c.l.b16 %v23
  %v216 = vunpack.c.l.b16 %v24
  %v217 = vpack.c.b16 %v208, %v207
  %v218 = vpack.c.b16 %v210, %v209
  %v219 = vpack.c.b16 %v212, %v211
  %v220 = vpack.c.b16 %v214, %v213
  %v221 = vpack.c.b16 %v216, %v215
  %vm226 = vcmask 613376
  %v228 = vsel %vm226, %v172, 0
  %v231 = vsel %vm226, %v173, 0
  %v234 = vsel %vm226, %v174, 0
  %v237 = vsel %vm226, %v175, 0
  %v240 = vsel %vm226, %v176, 0
  %v243 = vsel %vm226, %v177, 0
  %v246 = vsel %vm226, %v178, 0
  %v249 = vsel %vm226, %v179, 0
  %v252 = vsel %vm226, %v180, 0
  %v255 = vsel %vm226, %v181, 0
  %v258 = vsel %vm226, %v182, 0
  %v261 = vsel %vm226, %v183, 0
  %v264 = vsel %vm226, %v184, 0
  %v267 = vsel %vm226, %v185, 0
  %v270 = vsel %vm226, %v186, 0
  %v273 = vsel %vm226, %v187, 0
  %v276 = vsel %vm226, %v188, 0
  %v279 = vsel %vm226, %v189, 0
  %v282 = vsel %vm226, %v190, 0
  %v285 = vsel %vm226, %v191, 0
  %v288 = vsel %vm226, %v192, 0
  %v291 = vsel %vm226, %v193, 0
  %v294 = vsel %vm226, %v194, 0
  %v297 = vsel %vm226, %v195, 0
  %v300 = vsel %vm226, %v196, 0
  %vm302 = vcmask 1044480
  %vm303 = vcmask 1045504
  %v304 = vsel %vm302, 4294967295, 65535
  %v305 = vsel %vm303, %v304, 0
  %v307 = vand.u32 %v221, %v305
  %309 = vmatprep.subr.bf16.mxu0 0
  %310 = vmatpush1.bf16.msra.mxu0 %v217
  %311 = vmatprep.subr.bf16.mxu0 0
  %312 = vmatpush1.bf16.msra.mxu0 %v218
  %313 = vmatprep.subr.bf16.mxu0 0
  %314 = vmatpush1.bf16.msra.mxu0 %v219
  %315 = vmatprep.subr.bf16.mxu0 0
  %316 = vmatpush1.bf16.msra.mxu0 %v220
  %317 = vmatprep.subr.bf16.mxu0 0
  %318 = vmatpush1.bf16.msra.mxu0 %v307
  %319 = vmatprep.subr.bf16.mxu0 0
  %320 = vmatpush1.bf16.msra.mxu0 0
  %321 = vmatprep.subr.bf16.mxu0 0
  %322 = vmatpush1.bf16.msra.mxu0 0
  %323 = vmatprep.subr.bf16.mxu0 0
  %324 = vmatpush1.bf16.msra.mxu0 0
  %325 = vmatprep.subr.bf16.mxu0 0
  %326 = vmatpush1.bf16.msra.mxu0 0
  %327 = vmatprep.subr.bf16.mxu0 0
  %328 = vmatpush1.bf16.msra.mxu0 0
  %329 = vmatprep.subr.bf16.mxu0 0
  %330 = vmatpush1.bf16.msra.mxu0 0
  %331 = vmatprep.subr.bf16.mxu0 0
  %332 = vmatpush1.bf16.msra.mxu0 0
  %333 = vmatprep.subr.bf16.mxu0 0
  %334 = vmatpush1.bf16.msra.mxu0 0
  %335 = vmatprep.subr.bf16.mxu0 0
  %336 = vmatpush1.bf16.msra.mxu0 0
  %337 = vmatprep.subr.bf16.mxu0 0
  %338 = vmatpush1.bf16.msra.mxu0 0
  %339 = vmatprep.subr.bf16.mxu0 0
  %340 = vmatpush1.bf16.msra.mxu0 0
  %341 = vmatprep.mubr.bf16.mxu0 0
  %342 = vmatmul.mubr.bf16.gmra.mrb[0].mxu0 %v228
  %v343 = vpop.f32.mrb[0].mxu0
  %v344 = vadd.f32 0.0, %v343
  %v345 = vpop.f32.mrb[0].mxu0
  %v346 = vpop.f32.mrb[0].mxu0
  %v347 = vadd.f32 0.0, %v346
  %v348 = vpop.f32.mrb[0].mxu0
  %349 = vmatprep.mubr.bf16.mxu0 0
  %350 = vmatmul.mubr.bf16.gmra.mrb[0].mxu0 %v231
  %v351 = vpop.f32.mrb[0].mxu0
  %v352 = vadd.f32 0.0, %v351
  %v353 = vpop.f32.mrb[0].mxu0
  %v354 = vpop.f32.mrb[0].mxu0
  %v355 = vadd.f32 0.0, %v354
  %v356 = vpop.f32.mrb[0].mxu0
  %357 = vmatprep.mubr.bf16.mxu0 0
  %358 = vmatmul.mubr.bf16.gmra.mrb[0].mxu0 %v234
  %v359 = vpop.f32.mrb[0].mxu0
  %v360 = vadd.f32 0.0, %v359
  %v361 = vpop.f32.mrb[0].mxu0
  %v362 = vpop.f32.mrb[0].mxu0
  %v363 = vadd.f32 0.0, %v362
  %v364 = vpop.f32.mrb[0].mxu0
  %365 = vmatprep.mubr.bf16.mxu0 0
  %366 = vmatmul.mubr.bf16.gmra.mrb[0].mxu0 %v237
  %v367 = vpop.f32.mrb[0].mxu0
  %v368 = vadd.f32 0.0, %v367
  %v369 = vpop.f32.mrb[0].mxu0
  %v370 = vpop.f32.mrb[0].mxu0
  %v371 = vadd.f32 0.0, %v370
  %v372 = vpop.f32.mrb[0].mxu0
  %373 = vmatprep.mubr.bf16.mxu0 0
  %374 = vmatmul.mubr.bf16.gmra.mrb[0].mxu0 %v240
  %v375 = vpop.f32.mrb[0].mxu0
  %v376 = vadd.f32 0.0, %v375
  %v377 = vpop.f32.mrb[0].mxu0
  %v378 = vpop.f32.mrb[0].mxu0
  %v379 = vadd.f32 0.0, %v378
  %v380 = vpop.f32.mrb[0].mxu0
  %381 = vmatprep.mubr.bf16.mxu0 0
  %382 = vmatmul.mubr.bf16.gmra.mrb[0].mxu0 %v243
  %v383 = vpop.f32.mrb[0].mxu0
  %v384 = vadd.f32 0.0, %v383
  %v385 = vpop.f32.mrb[0].mxu0
  %v386 = vpop.f32.mrb[0].mxu0
  %v387 = vadd.f32 0.0, %v386
  %v388 = vpop.f32.mrb[0].mxu0
  %389 = vmatprep.mubr.bf16.mxu0 0
  %390 = vmatmul.mubr.bf16.gmra.mrb[0].mxu0 %v246
  %v391 = vpop.f32.mrb[0].mxu0
  %v392 = vadd.f32 0.0, %v391
  %v393 = vpop.f32.mrb[0].mxu0
  %v394 = vpop.f32.mrb[0].mxu0
  %v395 = vadd.f32 0.0, %v394
  %v396 = vpop.f32.mrb[0].mxu0
  %397 = vmatprep.mubr.bf16.mxu0 0
  %398 = vmatmul.mubr.bf16.gmra.mrb[0].mxu0 %v249
  %v399 = vpop.f32.mrb[0].mxu0
  %v400 = vadd.f32 0.0, %v399
  %v401 = vpop.f32.mrb[0].mxu0
  %v402 = vpop.f32.mrb[0].mxu0
  %v403 = vadd.f32 0.0, %v402
  %v404 = vpop.f32.mrb[0].mxu0
  %405 = vmatprep.mubr.bf16.mxu0 0
  %406 = vmatmul.mubr.bf16.gmra.mrb[0].mxu0 %v252
  %v407 = vpop.f32.mrb[0].mxu0
  %v408 = vadd.f32 0.0, %v407
  %v409 = vpop.f32.mrb[0].mxu0
  %v410 = vpop.f32.mrb[0].mxu0
  %v411 = vadd.f32 0.0, %v410
  %v412 = vpop.f32.mrb[0].mxu0
  %413 = vmatprep.mubr.bf16.mxu0 0
  %414 = vmatmul.mubr.bf16.gmra.mrb[0].mxu0 %v255
  %v415 = vpop.f32.mrb[0].mxu0
  %v416 = vadd.f32 0.0, %v415
  %v417 = vpop.f32.mrb[0].mxu0
  %v418 = vpop.f32.mrb[0].mxu0
  %v419 = vadd.f32 0.0, %v418
  %v420 = vpop.f32.mrb[0].mxu0
  %421 = vmatprep.mubr.bf16.mxu0 0
  %422 = vmatmul.mubr.bf16.gmra.mrb[0].mxu0 %v258
  %v423 = vpop.f32.mrb[0].mxu0
  %v424 = vadd.f32 0.0, %v423
  %v425 = vpop.f32.mrb[0].mxu0
  %v426 = vpop.f32.mrb[0].mxu0
  %v427 = vadd.f32 0.0, %v426
  %v428 = vpop.f32.mrb[0].mxu0
  %429 = vmatprep.mubr.bf16.mxu0 0
  %430 = vmatmul.mubr.bf16.gmra.mrb[0].mxu0 %v261
  %v431 = vpop.f32.mrb[0].mxu0
  %v432 = vadd.f32 0.0, %v431
  %v433 = vpop.f32.mrb[0].mxu0
  %v434 = vpop.f32.mrb[0].mxu0
  %v435 = vadd.f32 0.0, %v434
  %v436 = vpop.f32.mrb[0].mxu0
  %437 = vmatprep.mubr.bf16.mxu0 0
  %438 = vmatmul.mubr.bf16.gmra.mrb[0].mxu0 %v264
  %v439 = vpop.f32.mrb[0].mxu0
  %v440 = vadd.f32 0.0, %v439
  %v441 = vpop.f32.mrb[0].mxu0
  %v442 = vpop.f32.mrb[0].mxu0
  %v443 = vadd.f32 0.0, %v442
  %v444 = vpop.f32.mrb[0].mxu0
  %445 = vmatprep.mubr.bf16.mxu0 0
  %446 = vmatmul.mubr.bf16.gmra.mrb[0].mxu0 %v267
  %v447 = vpop.f32.mrb[0].mxu0
  %v448 = vadd.f32 0.0, %v447
  %v449 = vpop.f32.mrb[0].mxu0
  %v450 = vpop.f32.mrb[0].mxu0
  %v451 = vadd.f32 0.0, %v450
  %v452 = vpop.f32.mrb[0].mxu0
  %453 = vmatprep.mubr.bf16.mxu0 0
  %454 = vmatmul.mubr.bf16.gmra.mrb[0].mxu0 %v270
  %v455 = vpop.f32.mrb[0].mxu0
  %v456 = vadd.f32 0.0, %v455
  %v457 = vpop.f32.mrb[0].mxu0
  %v458 = vpop.f32.mrb[0].mxu0
  %v459 = vadd.f32 0.0, %v458
  %v460 = vpop.f32.mrb[0].mxu0
  %461 = vmatprep.mubr.bf16.mxu0 0
  %462 = vmatmul.mubr.bf16.gmra.mrb[0].mxu0 %v273
  %v463 = vpop.f32.mrb[0].mxu0
  %v464 = vadd.f32 0.0, %v463
  %v465 = vpop.f32.mrb[0].mxu0
  %v466 = vpop.f32.mrb[0].mxu0
  %v467 = vadd.f32 0.0, %v466
  %v468 = vpop.f32.mrb[0].mxu0
  %469 = vmatprep.mubr.bf16.mxu0 0
  %470 = vmatmul.mubr.bf16.gmra.mrb[0].mxu0 %v276
  %v471 = vpop.f32.mrb[0].mxu0
  %v472 = vadd.f32 0.0, %v471
  %v473 = vpop.f32.mrb[0].mxu0
  %v474 = vpop.f32.mrb[0].mxu0
  %v475 = vadd.f32 0.0, %v474
  %v476 = vpop.f32.mrb[0].mxu0
  %477 = vmatprep.mubr.bf16.mxu0 0
  %478 = vmatmul.mubr.bf16.gmra.mrb[0].mxu0 %v279
  %v479 = vpop.f32.mrb[0].mxu0
  %v480 = vadd.f32 0.0, %v479
  %v481 = vpop.f32.mrb[0].mxu0
  %v482 = vpop.f32.mrb[0].mxu0
  %v483 = vadd.f32 0.0, %v482
  %v484 = vpop.f32.mrb[0].mxu0
  %485 = vmatprep.mubr.bf16.mxu0 0
  %486 = vmatmul.mubr.bf16.gmra.mrb[0].mxu0 %v282
  %v487 = vpop.f32.mrb[0].mxu0
  %v488 = vadd.f32 0.0, %v487
  %v489 = vpop.f32.mrb[0].mxu0
  %v490 = vpop.f32.mrb[0].mxu0
  %v491 = vadd.f32 0.0, %v490
  %v492 = vpop.f32.mrb[0].mxu0
  %493 = vmatprep.mubr.bf16.mxu0 0
  %494 = vmatmul.mubr.bf16.gmra.mrb[0].mxu0 %v285
  %v495 = vpop.f32.mrb[0].mxu0
  %v496 = vadd.f32 0.0, %v495
  %v497 = vpop.f32.mrb[0].mxu0
  %v498 = vpop.f32.mrb[0].mxu0
  %v499 = vadd.f32 0.0, %v498
  %v500 = vpop.f32.mrb[0].mxu0
  %501 = vmatprep.mubr.bf16.mxu0 0
  %502 = vmatmul.mubr.bf16.gmra.mrb[0].mxu0 %v288
  %v503 = vpop.f32.mrb[0].mxu0
  %v504 = vadd.f32 0.0, %v503
  %v505 = vpop.f32.mrb[0].mxu0
  %v506 = vpop.f32.mrb[0].mxu0
  %v507 = vadd.f32 0.0, %v506
  %v508 = vpop.f32.mrb[0].mxu0
  %509 = vmatprep.mubr.bf16.mxu0 0
  %510 = vmatmul.mubr.bf16.gmra.mrb[0].mxu0 %v291
  %v511 = vpop.f32.mrb[0].mxu0
  %v512 = vadd.f32 0.0, %v511
  %v513 = vpop.f32.mrb[0].mxu0
  %v514 = vpop.f32.mrb[0].mxu0
  %v515 = vadd.f32 0.0, %v514
  %v516 = vpop.f32.mrb[0].mxu0
  %517 = vmatprep.mubr.bf16.mxu0 0
  %518 = vmatmul.mubr.bf16.gmra.mrb[0].mxu0 %v294
  %v519 = vpop.f32.mrb[0].mxu0
  %v520 = vadd.f32 0.0, %v519
  %v521 = vpop.f32.mrb[0].mxu0
  %v522 = vpop.f32.mrb[0].mxu0
  %v523 = vadd.f32 0.0, %v522
  %v524 = vpop.f32.mrb[0].mxu0
  %525 = vmatprep.mubr.bf16.mxu0 0
  %526 = vmatmul.mubr.bf16.gmra.mrb[0].mxu0 %v297
  %v527 = vpop.f32.mrb[0].mxu0
  %v528 = vadd.f32 0.0, %v527
  %v529 = vpop.f32.mrb[0].mxu0
  %v530 = vpop.f32.mrb[0].mxu0
  %v531 = vadd.f32 0.0, %v530
  %v532 = vpop.f32.mrb[0].mxu0
  %533 = vmatprep.mubr.bf16.mxu0 0
  %534 = vmatmul.mubr.bf16.gmra.mrb[0].mxu0 %v300
  %v535 = vpop.f32.mrb[0].mxu0
  %v536 = vadd.f32 0.0, %v535
  %v537 = vpop.f32.mrb[0].mxu0
  %v538 = vpop.f32.mrb[0].mxu0
  %v539 = vpop.f32.mrb[0].mxu0
  %540 = vdwg.mxu0
  %s541 = scalar_lea.vmem %s0, 196
  %v542 = vld [vmem:[%s541] sm:$0xf]
  %v543 = vld [vmem:[%s541 + $0x4] sm:$0xf]
  %v544 = vld [vmem:[%s541 + $0x8] sm:$0xf]
  %v545 = vld [vmem:[%s541 + $0xc] sm:$0xf]
  %v546 = vld [vmem:[%s541 + $0x10] sm:$0xf]
  %v547 = vld [vmem:[%s541 + $0x14] sm:$0xf]
  %v548 = vld [vmem:[%s541 + $0x18] sm:$0xf]
  %v549 = vld [vmem:[%s541 + $0x1c] sm:$0xf]
  %v550 = vld [vmem:[%s541 + $0x20] sm:$0xf]
  %v551 = vld [vmem:[%s541 + $0x24] sm:$0xf]
  %v552 = vld [vmem:[%s541 + $0x28] sm:$0xf]
  %v553 = vld [vmem:[%s541 + $0x2c] sm:$0xf]
  %v554 = vld [vmem:[%s541 + $0x30] sm:$0xf]
  %v555 = vld [vmem:[%s541 + $0x34] sm:$0xf]
  %v556 = vld [vmem:[%s541 + $0x38] sm:$0xf]
  %v557 = vld [vmem:[%s541 + $0x3c] sm:$0xf]
  %v558 = vld [vmem:[%s541 + $0x40] sm:$0xf]
  %v559 = vld [vmem:[%s541 + $0x44] sm:$0xf]
  %v560 = vld [vmem:[%s541 + $0x48] sm:$0xf]
  %v561 = vld [vmem:[%s541 + $0x4c] sm:$0xf]
  %v562 = vld [vmem:[%s541 + $0x50] sm:$0xf]
  %v563 = vld [vmem:[%s541 + $0x54] sm:$0xf]
  %v564 = vld [vmem:[%s541 + $0x58] sm:$0xf]
  %v565 = vld [vmem:[%s541 + $0x5c] sm:$0xf]
  %v566 = vld [vmem:[%s541 + $0x60] sm:$0xf]
  %v567 = vld [vmem:[%s541 + $0x64] sm:$0xf]
  %v568 = vld [vmem:[%s541 + $0x68] sm:$0xf]
  %v569 = vld [vmem:[%s541 + $0x6c] sm:$0xf]
  %v570 = vld [vmem:[%s541 + $0x70] sm:$0xf]
  %v571 = vld [vmem:[%s541 + $0x74] sm:$0xf]
  %v572 = vld [vmem:[%s541 + $0x78] sm:$0xf]
  %v573 = vld [vmem:[%s541 + $0x7c] sm:$0xf]
  %v574 = vld [vmem:[%s541 + $0x80] sm:$0xf]
  %v575 = vld [vmem:[%s541 + $0x84] sm:$0xf]
  %v576 = vld [vmem:[%s541 + $0x88] sm:$0xf]
  %v577 = vld [vmem:[%s541 + $0x8c] sm:$0xf]
  %v578 = vld [vmem:[%s541 + $0x90] sm:$0xf]
  %v579 = vld [vmem:[%s541 + $0x94] sm:$0xf]
  %v580 = vld [vmem:[%s541 + $0x98] sm:$0xf]
  %v581 = vld [vmem:[%s541 + $0x9c] sm:$0xf]
  %v582 = vld [vmem:[%s541 + $0xa0] sm:$0xf]
  %v583 = vld [vmem:[%s541 + $0xa4] sm:$0xf]
  %v584 = vld [vmem:[%s541 + $0xa8] sm:$0xf]
  %v585 = vld [vmem:[%s541 + $0xac] sm:$0xf]
  %v586 = vld [vmem:[%s541 + $0xb0] sm:$0xf]
  %v587 = vld [vmem:[%s541 + $0xb4] sm:$0xf]
  %v588 = vld [vmem:[%s541 + $0xb8] sm:$0xf]
  %v589 = vld [vmem:[%s541 + $0xbc] sm:$0xf]
  %v590 = vld [vmem:[%s541 + $0xc0] sm:$0xf]
  %v640 = vunpack.c.l.b16 %v542
  %v641 = vunpack.c.l.b16 %v543
  %v642 = vunpack.c.l.b16 %v544
  %v643 = vunpack.c.l.b16 %v545
  %v644 = vunpack.c.l.b16 %v546
  %v645 = vunpack.c.l.b16 %v547
  %v646 = vunpack.c.l.b16 %v548
  %v647 = vunpack.c.l.b16 %v549
  %v648 = vunpack.c.l.b16 %v550
  %v649 = vunpack.c.l.b16 %v551
  %v650 = vunpack.c.l.b16 %v552
  %v651 = vunpack.c.l.b16 %v553
  %v652 = vunpack.c.l.b16 %v554
  %v653 = vunpack.c.l.b16 %v555
  %v654 = vunpack.c.l.b16 %v556
  %v655 = vunpack.c.l.b16 %v557
  %v656 = vunpack.c.l.b16 %v558
  %v657 = vunpack.c.l.b16 %v559
  %v658 = vunpack.c.l.b16 %v560
  %v659 = vunpack.c.l.b16 %v561
  %v660 = vunpack.c.l.b16 %v562
  %v661 = vunpack.c.l.b16 %v563
  %v662 = vunpack.c.l.b16 %v564
  %v663 = vunpack.c.l.b16 %v565
  %v664 = vunpack.c.l.b16 %v566
  %v665 = vunpack.c.l.b16 %v567
  %v666 = vunpack.c.l.b16 %v568
  %v667 = vunpack.c.l.b16 %v569
  %v668 = vunpack.c.l.b16 %v570
  %v669 = vunpack.c.l.b16 %v571
  %v670 = vunpack.c.l.b16 %v572
  %v671 = vunpack.c.l.b16 %v573
  %v672 = vunpack.c.l.b16 %v574
  %v673 = vunpack.c.l.b16 %v575
  %v674 = vunpack.c.l.b16 %v576
  %v675 = vunpack.c.l.b16 %v577
  %v676 = vunpack.c.l.b16 %v578
  %v677 = vunpack.c.l.b16 %v579
  %v678 = vunpack.c.l.b16 %v580
  %v679 = vunpack.c.l.b16 %v581
  %v680 = vunpack.c.l.b16 %v582
  %v681 = vunpack.c.l.b16 %v583
  %v682 = vunpack.c.l.b16 %v584
  %v683 = vunpack.c.l.b16 %v585
  %v684 = vunpack.c.l.b16 %v586
  %v685 = vunpack.c.l.b16 %v587
  %v686 = vunpack.c.l.b16 %v588
  %v687 = vunpack.c.l.b16 %v589
  %v688 = vunpack.c.l.b16 %v590
  %v689 = vpack.c.b16 %v641, %v640
  %v690 = vpack.c.b16 %v643, %v642
  %v691 = vpack.c.b16 %v645, %v644
  %v692 = vpack.c.b16 %v647, %v646
  %v693 = vpack.c.b16 %v649, %v648
  %v694 = vpack.c.b16 %v651, %v650
  %v695 = vpack.c.b16 %v653, %v652
  %v696 = vpack.c.b16 %v655, %v654
  %v697 = vpack.c.b16 %v657, %v656
  %v698 = vpack.c.b16 %v659, %v658
  %v699 = vpack.c.b16 %v661, %v660
  %v700 = vpack.c.b16 %v663, %v662
  %v701 = vpack.c.b16 %v665, %v664
  %v702 = vpack.c.b16 %v667, %v666
  %v703 = vpack.c.b16 %v669, %v668
  %v704 = vpack.c.b16 %v671, %v670
  %v705 = vpack.c.b16 %v673, %v672
  %v706 = vpack.c.b16 %v675, %v674
  %v707 = vpack.c.b16 %v677, %v676
  %v708 = vpack.c.b16 %v679, %v678
  %v709 = vpack.c.b16 %v681, %v680
  %v710 = vpack.c.b16 %v683, %v682
  %v711 = vpack.c.b16 %v685, %v684
  %v712 = vpack.c.b16 %v687, %v686
  %v713 = vpack.c.b16 %v688, %v688
  %v715 = vsel %vm226, %v689, 0
  %v718 = vsel %vm226, %v690, 0
  %v721 = vsel %vm226, %v691, 0
  %v724 = vsel %vm226, %v692, 0
  %v727 = vsel %vm226, %v693, 0
  %v730 = vsel %vm226, %v694, 0
  %v733 = vsel %vm226, %v695, 0
  %v736 = vsel %vm226, %v696, 0
  %v739 = vsel %vm226, %v697, 0
  %v742 = vsel %vm226, %v698, 0
  %v745 = vsel %vm226, %v699, 0
  %v748 = vsel %vm226, %v700, 0
  %v751 = vsel %vm226, %v701, 0
  %v754 = vsel %vm226, %v702, 0
  %v757 = vsel %vm226, %v703, 0
  %v760 = vsel %vm226, %v704, 0
  %v763 = vsel %vm226, %v705, 0
  %v766 = vsel %vm226, %v706, 0
  %v769 = vsel %vm226, %v707, 0
  %v772 = vsel %vm226, %v708, 0
  %v775 = vsel %vm226, %v709, 0
  %v778 = vsel %vm226, %v710, 0
  %v781 = vsel %vm226, %v711, 0
  %v784 = vsel %vm226, %v712, 0
  %v787 = vsel %vm226, %v713, 0
  %789 = vmatprep.subr.bf16.mxu0 0
  %790 = vmatpush1.bf16.msra.mxu0 %v217
  %791 = vmatprep.subr.bf16.mxu0 0
  %792 = vmatpush1.bf16.msra.mxu0 %v218
  %793 = vmatprep.subr.bf16.mxu0 0
  %794 = vmatpush1.bf16.msra.mxu0 %v219
  %795 = vmatprep.subr.bf16.mxu0 0
  %796 = vmatpush1.bf16.msra.mxu0 %v220
  %797 = vmatprep.subr.bf16.mxu0 0
  %798 = vmatpush1.bf16.msra.mxu0 %v307
  %799 = vmatprep.subr.bf16.mxu0 0
  %800 = vmatpush1.bf16.msra.mxu0 0
  %801 = vmatprep.subr.bf16.mxu0 0
  %802 = vmatpush1.bf16.msra.mxu0 0
  %803 = vmatprep.subr.bf16.mxu0 0
  %804 = vmatpush1.bf16.msra.mxu0 0
  %805 = vmatprep.subr.bf16.mxu0 0
  %806 = vmatpush1.bf16.msra.mxu0 0
  %807 = vmatprep.subr.bf16.mxu0 0
  %808 = vmatpush1.bf16.msra.mxu0 0
  %809 = vmatprep.subr.bf16.mxu0 0
  %810 = vmatpush1.bf16.msra.mxu0 0
  %811 = vmatprep.subr.bf16.mxu0 0
  %812 = vmatpush1.bf16.msra.mxu0 0
  %813 = vmatprep.subr.bf16.mxu0 0
  %814 = vmatpush1.bf16.msra.mxu0 0
  %815 = vmatprep.subr.bf16.mxu0 0
  %816 = vmatpush1.bf16.msra.mxu0 0
  %817 = vmatprep.subr.bf16.mxu0 0
  %818 = vmatpush1.bf16.msra.mxu0 0
  %819 = vmatprep.subr.bf16.mxu0 0
  %820 = vmatpush1.bf16.msra.mxu0 0
  %821 = vmatprep.mubr.bf16.mxu0 0
  %822 = vmatmul.mubr.bf16.gmra.mrb[0].mxu0 %v715
  %v823 = vpop.f32.mrb[0].mxu0
  %v824 = vadd.f32 0.0, %v823
  %v825 = vpop.f32.mrb[0].mxu0
  %v826 = vpop.f32.mrb[0].mxu0
  %v827 = vadd.f32 0.0, %v826
  %v828 = vpop.f32.mrb[0].mxu0
  %829 = vmatprep.mubr.bf16.mxu0 0
  %830 = vmatmul.mubr.bf16.gmra.mrb[0].mxu0 %v718
  %v831 = vpop.f32.mrb[0].mxu0
  %v832 = vadd.f32 0.0, %v831
  %v833 = vpop.f32.mrb[0].mxu0
  %v834 = vpop.f32.mrb[0].mxu0
  %v835 = vadd.f32 0.0, %v834
  %v836 = vpop.f32.mrb[0].mxu0
  %837 = vmatprep.mubr.bf16.mxu0 0
  %838 = vmatmul.mubr.bf16.gmra.mrb[0].mxu0 %v721
  %v839 = vpop.f32.mrb[0].mxu0
  %v840 = vadd.f32 0.0, %v839
  %v841 = vpop.f32.mrb[0].mxu0
  %v842 = vpop.f32.mrb[0].mxu0
  %v843 = vadd.f32 0.0, %v842
  %v844 = vpop.f32.mrb[0].mxu0
  %845 = vmatprep.mubr.bf16.mxu0 0
  %846 = vmatmul.mubr.bf16.gmra.mrb[0].mxu0 %v724
  %v847 = vpop.f32.mrb[0].mxu0
  %v848 = vadd.f32 0.0, %v847
  %v849 = vpop.f32.mrb[0].mxu0
  %v850 = vpop.f32.mrb[0].mxu0
  %v851 = vadd.f32 0.0, %v850
  %v852 = vpop.f32.mrb[0].mxu0
  %853 = vmatprep.mubr.bf16.mxu0 0
  %854 = vmatmul.mubr.bf16.gmra.mrb[0].mxu0 %v727
  %v855 = vpop.f32.mrb[0].mxu0
  %v856 = vadd.f32 0.0, %v855
  %v857 = vpop.f32.mrb[0].mxu0
  %v858 = vpop.f32.mrb[0].mxu0
  %v859 = vadd.f32 0.0, %v858
  %v860 = vpop.f32.mrb[0].mxu0
  %861 = vmatprep.mubr.bf16.mxu0 0
  %862 = vmatmul.mubr.bf16.gmra.mrb[0].mxu0 %v730
  %v863 = vpop.f32.mrb[0].mxu0
  %v864 = vadd.f32 0.0, %v863
  %v865 = vpop.f32.mrb[0].mxu0
  %v866 = vpop.f32.mrb[0].mxu0
  %v867 = vadd.f32 0.0, %v866
  %v868 = vpop.f32.mrb[0].mxu0
  %869 = vmatprep.mubr.bf16.mxu0 0
  %870 = vmatmul.mubr.bf16.gmra.mrb[0].mxu0 %v733
  %v871 = vpop.f32.mrb[0].mxu0
  %v872 = vadd.f32 0.0, %v871
  %v873 = vpop.f32.mrb[0].mxu0
  %v874 = vpop.f32.mrb[0].mxu0
  %v875 = vadd.f32 0.0, %v874
  %v876 = vpop.f32.mrb[0].mxu0
  %877 = vmatprep.mubr.bf16.mxu0 0
  %878 = vmatmul.mubr.bf16.gmra.mrb[0].mxu0 %v736
  %v879 = vpop.f32.mrb[0].mxu0
  %v880 = vadd.f32 0.0, %v879
  %v881 = vpop.f32.mrb[0].mxu0
  %v882 = vpop.f32.mrb[0].mxu0
  %v883 = vadd.f32 0.0, %v882
  %v884 = vpop.f32.mrb[0].mxu0
  %885 = vmatprep.mubr.bf16.mxu0 0
  %886 = vmatmul.mubr.bf16.gmra.mrb[0].mxu0 %v739
  %v887 = vpop.f32.mrb[0].mxu0
  %v888 = vadd.f32 0.0, %v887
  %v889 = vpop.f32.mrb[0].mxu0
  %v890 = vpop.f32.mrb[0].mxu0
  %v891 = vadd.f32 0.0, %v890
  %v892 = vpop.f32.mrb[0].mxu0
  %893 = vmatprep.mubr.bf16.mxu0 0
  %894 = vmatmul.mubr.bf16.gmra.mrb[0].mxu0 %v742
  %v895 = vpop.f32.mrb[0].mxu0
  %v896 = vadd.f32 0.0, %v895
  %v897 = vpop.f32.mrb[0].mxu0
  %v898 = vpop.f32.mrb[0].mxu0
  %v899 = vadd.f32 0.0, %v898
  %v900 = vpop.f32.mrb[0].mxu0
  %901 = vmatprep.mubr.bf16.mxu0 0
  %902 = vmatmul.mubr.bf16.gmra.mrb[0].mxu0 %v745
  %v903 = vpop.f32.mrb[0].mxu0
  %v904 = vadd.f32 0.0, %v903
  %v905 = vpop.f32.mrb[0].mxu0
  %v906 = vpop.f32.mrb[0].mxu0
  %v907 = vadd.f32 0.0, %v906
  %v908 = vpop.f32.mrb[0].mxu0
  %909 = vmatprep.mubr.bf16.mxu0 0
  %910 = vmatmul.mubr.bf16.gmra.mrb[0].mxu0 %v748
  %v911 = vpop.f32.mrb[0].mxu0
  %v912 = vadd.f32 0.0, %v911
  %v913 = vpop.f32.mrb[0].mxu0
  %v914 = vpop.f32.mrb[0].mxu0
  %v915 = vadd.f32 0.0, %v914
  %v916 = vpop.f32.mrb[0].mxu0
  %917 = vmatprep.mubr.bf16.mxu0 0
  %918 = vmatmul.mubr.bf16.gmra.mrb[0].mxu0 %v751
  %v919 = vpop.f32.mrb[0].mxu0
  %v920 = vadd.f32 0.0, %v919
  %v921 = vpop.f32.mrb[0].mxu0
  %v922 = vpop.f32.mrb[0].mxu0
  %v923 = vadd.f32 0.0, %v922
  %v924 = vpop.f32.mrb[0].mxu0
  %925 = vmatprep.mubr.bf16.mxu0 0
  %926 = vmatmul.mubr.bf16.gmra.mrb[0].mxu0 %v754
  %v927 = vpop.f32.mrb[0].mxu0
  %v928 = vadd.f32 0.0, %v927
  %v929 = vpop.f32.mrb[0].mxu0
  %v930 = vpop.f32.mrb[0].mxu0
  %v931 = vadd.f32 0.0, %v930
  %v932 = vpop.f32.mrb[0].mxu0
  %933 = vmatprep.mubr.bf16.mxu0 0
  %934 = vmatmul.mubr.bf16.gmra.mrb[0].mxu0 %v757
  %v935 = vpop.f32.mrb[0].mxu0
  %v936 = vadd.f32 0.0, %v935
  %v937 = vpop.f32.mrb[0].mxu0
  %v938 = vpop.f32.mrb[0].mxu0
  %v939 = vadd.f32 0.0, %v938
  %v940 = vpop.f32.mrb[0].mxu0
  %941 = vmatprep.mubr.bf16.mxu0 0
  %942 = vmatmul.mubr.bf16.gmra.mrb[0].mxu0 %v760
  %v943 = vpop.f32.mrb[0].mxu0
  %v944 = vadd.f32 0.0, %v943
  %v945 = vpop.f32.mrb[0].mxu0
  %v946 = vpop.f32.mrb[0].mxu0
  %v947 = vadd.f32 0.0, %v946
  %v948 = vpop.f32.mrb[0].mxu0
  %949 = vmatprep.mubr.bf16.mxu0 0
  %950 = vmatmul.mubr.bf16.gmra.mrb[0].mxu0 %v763
  %v951 = vpop.f32.mrb[0].mxu0
  %v952 = vadd.f32 0.0, %v951
  %v953 = vpop.f32.mrb[0].mxu0
  %v954 = vpop.f32.mrb[0].mxu0
  %v955 = vadd.f32 0.0, %v954
  %v956 = vpop.f32.mrb[0].mxu0
  %957 = vmatprep.mubr.bf16.mxu0 0
  %958 = vmatmul.mubr.bf16.gmra.mrb[0].mxu0 %v766
  %v959 = vpop.f32.mrb[0].mxu0
  %v960 = vadd.f32 0.0, %v959
  %v961 = vpop.f32.mrb[0].mxu0
  %v962 = vpop.f32.mrb[0].mxu0
  %v963 = vadd.f32 0.0, %v962
  %v964 = vpop.f32.mrb[0].mxu0
  %965 = vmatprep.mubr.bf16.mxu0 0
  %966 = vmatmul.mubr.bf16.gmra.mrb[0].mxu0 %v769
  %v967 = vpop.f32.mrb[0].mxu0
  %v968 = vadd.f32 0.0, %v967
  %v969 = vpop.f32.mrb[0].mxu0
  %v970 = vpop.f32.mrb[0].mxu0
  %v971 = vadd.f32 0.0, %v970
  %v972 = vpop.f32.mrb[0].mxu0
  %973 = vmatprep.mubr.bf16.mxu0 0
  %974 = vmatmul.mubr.bf16.gmra.mrb[0].mxu0 %v772
  %v975 = vpop.f32.mrb[0].mxu0
  %v976 = vadd.f32 0.0, %v975
  %v977 = vpop.f32.mrb[0].mxu0
  %v978 = vpop.f32.mrb[0].mxu0
  %v979 = vadd.f32 0.0, %v978
  %v980 = vpop.f32.mrb[0].mxu0
  %981 = vmatprep.mubr.bf16.mxu0 0
  %982 = vmatmul.mubr.bf16.gmra.mrb[0].mxu0 %v775
  %v983 = vpop.f32.mrb[0].mxu0
  %v984 = vadd.f32 0.0, %v983
  %v985 = vpop.f32.mrb[0].mxu0
  %v986 = vpop.f32.mrb[0].mxu0
  %v987 = vadd.f32 0.0, %v986
  %v988 = vpop.f32.mrb[0].mxu0
  %989 = vmatprep.mubr.bf16.mxu0 0
  %990 = vmatmul.mubr.bf16.gmra.mrb[0].mxu0 %v778
  %v991 = vpop.f32.mrb[0].mxu0
  %v992 = vadd.f32 0.0, %v991
  %v993 = vpop.f32.mrb[0].mxu0
  %v994 = vpop.f32.mrb[0].mxu0
  %v995 = vadd.f32 0.0, %v994
  %v996 = vpop.f32.mrb[0].mxu0
  %997 = vmatprep.mubr.bf16.mxu0 0
  %998 = vmatmul.mubr.bf16.gmra.mrb[0].mxu0 %v781
  %v999 = vpop.f32.mrb[0].mxu0
  %v1000 = vadd.f32 0.0, %v999
  %v1001 = vpop.f32.mrb[0].mxu0
  %v1002 = vpop.f32.mrb[0].mxu0
  %v1003 = vadd.f32 0.0, %v1002
  %v1004 = vpop.f32.mrb[0].mxu0
  %1005 = vmatprep.mubr.bf16.mxu0 0
  %1006 = vmatmul.mubr.bf16.gmra.mrb[0].mxu0 %v784
  %v1007 = vpop.f32.mrb[0].mxu0
  %v1008 = vadd.f32 0.0, %v1007
  %v1009 = vpop.f32.mrb[0].mxu0
  %v1010 = vpop.f32.mrb[0].mxu0
  %v1011 = vadd.f32 0.0, %v1010
  %v1012 = vpop.f32.mrb[0].mxu0
  %1013 = vmatprep.mubr.bf16.mxu0 0
  %1014 = vmatmul.mubr.bf16.gmra.mrb[0].mxu0 %v787
  %v1015 = vpop.f32.mrb[0].mxu0
  %v1016 = vadd.f32 0.0, %v1015
  %v1017 = vpop.f32.mrb[0].mxu0
  %v1018 = vpop.f32.mrb[0].mxu0
  %v1019 = vpop.f32.mrb[0].mxu0
  %1020 = vdwg.mxu0
  %v1021 = vmax.f32 %v344, %v824
  %v1022 = vmax.f32 %v347, %v827
  %v1023 = vmax.f32 %v352, %v832
  %v1024 = vmax.f32 %v355, %v835
  %v1025 = vmax.f32 %v360, %v840
  %v1026 = vmax.f32 %v363, %v843
  %v1027 = vmax.f32 %v368, %v848
  %v1028 = vmax.f32 %v371, %v851
  %v1029 = vmax.f32 %v376, %v856
  %v1030 = vmax.f32 %v379, %v859
  %v1031 = vmax.f32 %v384, %v864
  %v1032 = vmax.f32 %v387, %v867
  %v1033 = vmax.f32 %v392, %v872
  %v1034 = vmax.f32 %v395, %v875
  %v1035 = vmax.f32 %v400, %v880
  %v1036 = vmax.f32 %v403, %v883
  %v1037 = vmax.f32 %v408, %v888
  %v1038 = vmax.f32 %v411, %v891
  %v1039 = vmax.f32 %v416, %v896
  %v1040 = vmax.f32 %v419, %v899
  %v1041 = vmax.f32 %v424, %v904
  %v1042 = vmax.f32 %v427, %v907
  %v1043 = vmax.f32 %v432, %v912
  %v1044 = vmax.f32 %v435, %v915
  %v1045 = vmax.f32 %v440, %v920
  %v1046 = vmax.f32 %v443, %v923
  %v1047 = vmax.f32 %v448, %v928
  %v1048 = vmax.f32 %v451, %v931
  %v1049 = vmax.f32 %v456, %v936
  %v1050 = vmax.f32 %v459, %v939
  %v1051 = vmax.f32 %v464, %v944
  %v1052 = vmax.f32 %v467, %v947
  %v1053 = vmax.f32 %v472, %v952
  %v1054 = vmax.f32 %v475, %v955
  %v1055 = vmax.f32 %v480, %v960
  %v1056 = vmax.f32 %v483, %v963
  %v1057 = vmax.f32 %v488, %v968
  %v1058 = vmax.f32 %v491, %v971
  %v1059 = vmax.f32 %v496, %v976
  %v1060 = vmax.f32 %v499, %v979
  %v1061 = vmax.f32 %v504, %v984
  %v1062 = vmax.f32 %v507, %v987
  %v1063 = vmax.f32 %v512, %v992
  %v1064 = vmax.f32 %v515, %v995
  %v1065 = vmax.f32 %v520, %v1000
  %v1066 = vmax.f32 %v523, %v1003
  %v1067 = vmax.f32 %v528, %v1008
  %v1068 = vmax.f32 %v531, %v1011
  %v1069 = vmax.f32 %v536, %v1016
  %s1070 = scalar_lea.vmem %s0, 392
  %v1071 = vld [vmem:[%s1070] sm:$0xf]
  %v1072 = vld [vmem:[%s1070 + $0x4] sm:$0xf]
  %v1073 = vld [vmem:[%s1070 + $0x8] sm:$0xf]
  %v1074 = vld [vmem:[%s1070 + $0xc] sm:$0xf]
  %v1075 = vld [vmem:[%s1070 + $0x10] sm:$0xf]
  %v1076 = vld [vmem:[%s1070 + $0x14] sm:$0xf]
  %v1077 = vld [vmem:[%s1070 + $0x18] sm:$0xf]
  %v1078 = vld [vmem:[%s1070 + $0x1c] sm:$0xf]
  %v1079 = vld [vmem:[%s1070 + $0x20] sm:$0xf]
  %v1080 = vld [vmem:[%s1070 + $0x24] sm:$0xf]
  %v1081 = vld [vmem:[%s1070 + $0x28] sm:$0xf]
  %v1082 = vld [vmem:[%s1070 + $0x2c] sm:$0xf]
  %v1083 = vld [vmem:[%s1070 + $0x30] sm:$0xf]
  %v1084 = vld [vmem:[%s1070 + $0x34] sm:$0xf]
  %v1085 = vld [vmem:[%s1070 + $0x38] sm:$0xf]
  %v1086 = vld [vmem:[%s1070 + $0x3c] sm:$0xf]
  %v1087 = vld [vmem:[%s1070 + $0x40] sm:$0xf]
  %v1088 = vld [vmem:[%s1070 + $0x44] sm:$0xf]
  %v1089 = vld [vmem:[%s1070 + $0x48] sm:$0xf]
  %v1090 = vld [vmem:[%s1070 + $0x4c] sm:$0xf]
  %v1091 = vld [vmem:[%s1070 + $0x50] sm:$0xf]
  %v1092 = vld [vmem:[%s1070 + $0x54] sm:$0xf]
  %v1093 = vld [vmem:[%s1070 + $0x58] sm:$0xf]
  %v1094 = vld [vmem:[%s1070 + $0x5c] sm:$0xf]
  %v1095 = vld [vmem:[%s1070 + $0x60] sm:$0xf]
  %v1096 = vld [vmem:[%s1070 + $0x64] sm:$0xf]
  %v1097 = vld [vmem:[%s1070 + $0x68] sm:$0xf]
  %v1098 = vld [vmem:[%s1070 + $0x6c] sm:$0xf]
  %v1099 = vld [vmem:[%s1070 + $0x70] sm:$0xf]
  %v1100 = vld [vmem:[%s1070 + $0x74] sm:$0xf]
  %v1101 = vld [vmem:[%s1070 + $0x78] sm:$0xf]
  %v1102 = vld [vmem:[%s1070 + $0x7c] sm:$0xf]
  %v1103 = vld [vmem:[%s1070 + $0x80] sm:$0xf]
  %v1104 = vld [vmem:[%s1070 + $0x84] sm:$0xf]
  %v1105 = vld [vmem:[%s1070 + $0x88] sm:$0xf]
  %v1106 = vld [vmem:[%s1070 + $0x8c] sm:$0xf]
  %v1107 = vld [vmem:[%s1070 + $0x90] sm:$0xf]
  %v1108 = vld [vmem:[%s1070 + $0x94] sm:$0xf]
  %v1109 = vld [vmem:[%s1070 + $0x98] sm:$0xf]
  %v1110 = vld [vmem:[%s1070 + $0x9c] sm:$0xf]
  %v1111 = vld [vmem:[%s1070 + $0xa0] sm:$0xf]
  %v1112 = vld [vmem:[%s1070 + $0xa4] sm:$0xf]
  %v1113 = vld [vmem:[%s1070 + $0xa8] sm:$0xf]
  %v1114 = vld [vmem:[%s1070 + $0xac] sm:$0xf]
  %v1115 = vld [vmem:[%s1070 + $0xb0] sm:$0xf]
  %v1116 = vld [vmem:[%s1070 + $0xb4] sm:$0xf]
  %v1117 = vld [vmem:[%s1070 + $0xb8] sm:$0xf]
  %v1118 = vld [vmem:[%s1070 + $0xbc] sm:$0xf]
  %v1119 = vld [vmem:[%s1070 + $0xc0] sm:$0xf]
  %v1169 = vunpack.c.l.b16 %v1071
  %v1170 = vunpack.c.l.b16 %v1072
  %v1171 = vunpack.c.l.b16 %v1073
  %v1172 = vunpack.c.l.b16 %v1074
  %v1173 = vunpack.c.l.b16 %v1075
  %v1174 = vunpack.c.l.b16 %v1076
  %v1175 = vunpack.c.l.b16 %v1077
  %v1176 = vunpack.c.l.b16 %v1078
  %v1177 = vunpack.c.l.b16 %v1079
  %v1178 = vunpack.c.l.b16 %v1080
  %v1179 = vunpack.c.l.b16 %v1081
  %v1180 = vunpack.c.l.b16 %v1082
  %v1181 = vunpack.c.l.b16 %v1083
  %v1182 = vunpack.c.l.b16 %v1084
  %v1183 = vunpack.c.l.b16 %v1085
  %v1184 = vunpack.c.l.b16 %v1086
  %v1185 = vunpack.c.l.b16 %v1087
  %v1186 = vunpack.c.l.b16 %v1088
  %v1187 = vunpack.c.l.b16 %v1089
  %v1188 = vunpack.c.l.b16 %v1090
  %v1189 = vunpack.c.l.b16 %v1091
  %v1190 = vunpack.c.l.b16 %v1092
  %v1191 = vunpack.c.l.b16 %v1093
  %v1192 = vunpack.c.l.b16 %v1094
  %v1193 = vunpack.c.l.b16 %v1095
  %v1194 = vunpack.c.l.b16 %v1096
  %v1195 = vunpack.c.l.b16 %v1097
  %v1196 = vunpack.c.l.b16 %v1098
  %v1197 = vunpack.c.l.b16 %v1099
  %v1198 = vunpack.c.l.b16 %v1100
  %v1199 = vunpack.c.l.b16 %v1101
  %v1200 = vunpack.c.l.b16 %v1102
  %v1201 = vunpack.c.l.b16 %v1103
  %v1202 = vunpack.c.l.b16 %v1104
  %v1203 = vunpack.c.l.b16 %v1105
  %v1204 = vunpack.c.l.b16 %v1106
  %v1205 = vunpack.c.l.b16 %v1107
  %v1206 = vunpack.c.l.b16 %v1108
  %v1207 = vunpack.c.l.b16 %v1109
  %v1208 = vunpack.c.l.b16 %v1110
  %v1209 = vunpack.c.l.b16 %v1111
  %v1210 = vunpack.c.l.b16 %v1112
  %v1211 = vunpack.c.l.b16 %v1113
  %v1212 = vunpack.c.l.b16 %v1114
  %v1213 = vunpack.c.l.b16 %v1115
  %v1214 = vunpack.c.l.b16 %v1116
  %v1215 = vunpack.c.l.b16 %v1117
  %v1216 = vunpack.c.l.b16 %v1118
  %v1217 = vunpack.c.l.b16 %v1119
  %v1218 = vpack.c.b16 %v1170, %v1169
  %v1219 = vpack.c.b16 %v1172, %v1171
  %v1220 = vpack.c.b16 %v1174, %v1173
  %v1221 = vpack.c.b16 %v1176, %v1175
  %v1222 = vpack.c.b16 %v1178, %v1177
  %v1223 = vpack.c.b16 %v1180, %v1179
  %v1224 = vpack.c.b16 %v1182, %v1181
  %v1225 = vpack.c.b16 %v1184, %v1183
  %v1226 = vpack.c.b16 %v1186, %v1185
  %v1227 = vpack.c.b16 %v1188, %v1187
  %v1228 = vpack.c.b16 %v1190, %v1189
  %v1229 = vpack.c.b16 %v1192, %v1191
  %v1230 = vpack.c.b16 %v1194, %v1193
  %v1231 = vpack.c.b16 %v1196, %v1195
  %v1232 = vpack.c.b16 %v1198, %v1197
  %v1233 = vpack.c.b16 %v1200, %v1199
  %v1234 = vpack.c.b16 %v1202, %v1201
  %v1235 = vpack.c.b16 %v1204, %v1203
  %v1236 = vpack.c.b16 %v1206, %v1205
  %v1237 = vpack.c.b16 %v1208, %v1207
  %v1238 = vpack.c.b16 %v1210, %v1209
  %v1239 = vpack.c.b16 %v1212, %v1211
  %v1240 = vpack.c.b16 %v1214, %v1213
  %v1241 = vpack.c.b16 %v1216, %v1215
  %v1242 = vpack.c.b16 %v1217, %v1217
  %v1244 = vsel %vm226, %v1218, 0
  %v1247 = vsel %vm226, %v1219, 0
  %v1250 = vsel %vm226, %v1220, 0
  %v1253 = vsel %vm226, %v1221, 0
  %v1256 = vsel %vm226, %v1222, 0
  %v1259 = vsel %vm226, %v1223, 0
  %v1262 = vsel %vm226, %v1224, 0
  %v1265 = vsel %vm226, %v1225, 0
  %v1268 = vsel %vm226, %v1226, 0
  %v1271 = vsel %vm226, %v1227, 0
  %v1274 = vsel %vm226, %v1228, 0
  %v1277 = vsel %vm226, %v1229, 0
  %v1280 = vsel %vm226, %v1230, 0
  %v1283 = vsel %vm226, %v1231, 0
  %v1286 = vsel %vm226, %v1232, 0
  %v1289 = vsel %vm226, %v1233, 0
  %v1292 = vsel %vm226, %v1234, 0
  %v1295 = vsel %vm226, %v1235, 0
  %v1298 = vsel %vm226, %v1236, 0
  %v1301 = vsel %vm226, %v1237, 0
  %v1304 = vsel %vm226, %v1238, 0
  %v1307 = vsel %vm226, %v1239, 0
  %v1310 = vsel %vm226, %v1240, 0
  %v1313 = vsel %vm226, %v1241, 0
  %v1316 = vsel %vm226, %v1242, 0
  %1318 = vmatprep.subr.bf16.mxu0 0
  %1319 = vmatpush1.bf16.msra.mxu0 %v217
  %1320 = vmatprep.subr.bf16.mxu0 0
  %1321 = vmatpush1.bf16.msra.mxu0 %v218
  %1322 = vmatprep.subr.bf16.mxu0 0
  %1323 = vmatpush1.bf16.msra.mxu0 %v219
  %1324 = vmatprep.subr.bf16.mxu0 0
  %1325 = vmatpush1.bf16.msra.mxu0 %v220
  %1326 = vmatprep.subr.bf16.mxu0 0
  %1327 = vmatpush1.bf16.msra.mxu0 %v307
  %1328 = vmatprep.subr.bf16.mxu0 0
  %1329 = vmatpush1.bf16.msra.mxu0 0
  %1330 = vmatprep.subr.bf16.mxu0 0
  %1331 = vmatpush1.bf16.msra.mxu0 0
  %1332 = vmatprep.subr.bf16.mxu0 0
  %1333 = vmatpush1.bf16.msra.mxu0 0
  %1334 = vmatprep.subr.bf16.mxu0 0
  %1335 = vmatpush1.bf16.msra.mxu0 0
  %1336 = vmatprep.subr.bf16.mxu0 0
  %1337 = vmatpush1.bf16.msra.mxu0 0
  %1338 = vmatprep.subr.bf16.mxu0 0
  %1339 = vmatpush1.bf16.msra.mxu0 0
  %1340 = vmatprep.subr.bf16.mxu0 0
  %1341 = vmatpush1.bf16.msra.mxu0 0
  %1342 = vmatprep.subr.bf16.mxu0 0
  %1343 = vmatpush1.bf16.msra.mxu0 0
  %1344 = vmatprep.subr.bf16.mxu0 0
  %1345 = vmatpush1.bf16.msra.mxu0 0
  %1346 = vmatprep.subr.bf16.mxu0 0
  %1347 = vmatpush1.bf16.msra.mxu0 0
  %1348 = vmatprep.subr.bf16.mxu0 0
  %1349 = vmatpush1.bf16.msra.mxu0 0
  %1350 = vmatprep.mubr.bf16.mxu0 0
  %1351 = vmatmul.mubr.bf16.gmra.mrb[0].mxu0 %v1244
  %v1352 = vpop.f32.mrb[0].mxu0
  %v1353 = vadd.f32 0.0, %v1352
  %v1354 = vpop.f32.mrb[0].mxu0
  %v1355 = vpop.f32.mrb[0].mxu0
  %v1356 = vadd.f32 0.0, %v1355
  %v1357 = vpop.f32.mrb[0].mxu0
  %1358 = vmatprep.mubr.bf16.mxu0 0
  %1359 = vmatmul.mubr.bf16.gmra.mrb[0].mxu0 %v1247
  %v1360 = vpop.f32.mrb[0].mxu0
  %v1361 = vadd.f32 0.0, %v1360
  %v1362 = vpop.f32.mrb[0].mxu0
  %v1363 = vpop.f32.mrb[0].mxu0
  %v1364 = vadd.f32 0.0, %v1363
  %v1365 = vpop.f32.mrb[0].mxu0
  %1366 = vmatprep.mubr.bf16.mxu0 0
  %1367 = vmatmul.mubr.bf16.gmra.mrb[0].mxu0 %v1250
  %v1368 = vpop.f32.mrb[0].mxu0
  %v1369 = vadd.f32 0.0, %v1368
  %v1370 = vpop.f32.mrb[0].mxu0
  %v1371 = vpop.f32.mrb[0].mxu0
  %v1372 = vadd.f32 0.0, %v1371
  %v1373 = vpop.f32.mrb[0].mxu0
  %1374 = vmatprep.mubr.bf16.mxu0 0
  %1375 = vmatmul.mubr.bf16.gmra.mrb[0].mxu0 %v1253
  %v1376 = vpop.f32.mrb[0].mxu0
  %v1377 = vadd.f32 0.0, %v1376
  %v1378 = vpop.f32.mrb[0].mxu0
  %v1379 = vpop.f32.mrb[0].mxu0
  %v1380 = vadd.f32 0.0, %v1379
  %v1381 = vpop.f32.mrb[0].mxu0
  %1382 = vmatprep.mubr.bf16.mxu0 0
  %1383 = vmatmul.mubr.bf16.gmra.mrb[0].mxu0 %v1256
  %v1384 = vpop.f32.mrb[0].mxu0
  %v1385 = vadd.f32 0.0, %v1384
  %v1386 = vpop.f32.mrb[0].mxu0
  %v1387 = vpop.f32.mrb[0].mxu0
  %v1388 = vadd.f32 0.0, %v1387
  %v1389 = vpop.f32.mrb[0].mxu0
  %1390 = vmatprep.mubr.bf16.mxu0 0
  %1391 = vmatmul.mubr.bf16.gmra.mrb[0].mxu0 %v1259
  %v1392 = vpop.f32.mrb[0].mxu0
  %v1393 = vadd.f32 0.0, %v1392
  %v1394 = vpop.f32.mrb[0].mxu0
  %v1395 = vpop.f32.mrb[0].mxu0
  %v1396 = vadd.f32 0.0, %v1395
  %v1397 = vpop.f32.mrb[0].mxu0
  %1398 = vmatprep.mubr.bf16.mxu0 0
  %1399 = vmatmul.mubr.bf16.gmra.mrb[0].mxu0 %v1262
  %v1400 = vpop.f32.mrb[0].mxu0
  %v1401 = vadd.f32 0.0, %v1400
  %v1402 = vpop.f32.mrb[0].mxu0
  %v1403 = vpop.f32.mrb[0].mxu0
  %v1404 = vadd.f32 0.0, %v1403
  %v1405 = vpop.f32.mrb[0].mxu0
  %1406 = vmatprep.mubr.bf16.mxu0 0
  %1407 = vmatmul.mubr.bf16.gmra.mrb[0].mxu0 %v1265
  %v1408 = vpop.f32.mrb[0].mxu0
  %v1409 = vadd.f32 0.0, %v1408
  %v1410 = vpop.f32.mrb[0].mxu0
  %v1411 = vpop.f32.mrb[0].mxu0
  %v1412 = vadd.f32 0.0, %v1411
  %v1413 = vpop.f32.mrb[0].mxu0
  %1414 = vmatprep.mubr.bf16.mxu0 0
  %1415 = vmatmul.mubr.bf16.gmra.mrb[0].mxu0 %v1268
  %v1416 = vpop.f32.mrb[0].mxu0
  %v1417 = vadd.f32 0.0, %v1416
  %v1418 = vpop.f32.mrb[0].mxu0
  %v1419 = vpop.f32.mrb[0].mxu0
  %v1420 = vadd.f32 0.0, %v1419
  %v1421 = vpop.f32.mrb[0].mxu0
  %1422 = vmatprep.mubr.bf16.mxu0 0
  %1423 = vmatmul.mubr.bf16.gmra.mrb[0].mxu0 %v1271
  %v1424 = vpop.f32.mrb[0].mxu0
  %v1425 = vadd.f32 0.0, %v1424
  %v1426 = vpop.f32.mrb[0].mxu0
  %v1427 = vpop.f32.mrb[0].mxu0
  %v1428 = vadd.f32 0.0, %v1427
  %v1429 = vpop.f32.mrb[0].mxu0
  %1430 = vmatprep.mubr.bf16.mxu0 0
  %1431 = vmatmul.mubr.bf16.gmra.mrb[0].mxu0 %v1274
  %v1432 = vpop.f32.mrb[0].mxu0
  %v1433 = vadd.f32 0.0, %v1432
  %v1434 = vpop.f32.mrb[0].mxu0
  %v1435 = vpop.f32.mrb[0].mxu0
  %v1436 = vadd.f32 0.0, %v1435
  %v1437 = vpop.f32.mrb[0].mxu0
  %1438 = vmatprep.mubr.bf16.mxu0 0
  %1439 = vmatmul.mubr.bf16.gmra.mrb[0].mxu0 %v1277
  %v1440 = vpop.f32.mrb[0].mxu0
  %v1441 = vadd.f32 0.0, %v1440
  %v1442 = vpop.f32.mrb[0].mxu0
  %v1443 = vpop.f32.mrb[0].mxu0
  %v1444 = vadd.f32 0.0, %v1443
  %v1445 = vpop.f32.mrb[0].mxu0
  %1446 = vmatprep.mubr.bf16.mxu0 0
  %1447 = vmatmul.mubr.bf16.gmra.mrb[0].mxu0 %v1280
  %v1448 = vpop.f32.mrb[0].mxu0
  %v1449 = vadd.f32 0.0, %v1448
  %v1450 = vpop.f32.mrb[0].mxu0
  %v1451 = vpop.f32.mrb[0].mxu0
  %v1452 = vadd.f32 0.0, %v1451
  %v1453 = vpop.f32.mrb[0].mxu0
  %1454 = vmatprep.mubr.bf16.mxu0 0
  %1455 = vmatmul.mubr.bf16.gmra.mrb[0].mxu0 %v1283
  %v1456 = vpop.f32.mrb[0].mxu0
  %v1457 = vadd.f32 0.0, %v1456
  %v1458 = vpop.f32.mrb[0].mxu0
  %v1459 = vpop.f32.mrb[0].mxu0
  %v1460 = vadd.f32 0.0, %v1459
  %v1461 = vpop.f32.mrb[0].mxu0
  %1462 = vmatprep.mubr.bf16.mxu0 0
  %1463 = vmatmul.mubr.bf16.gmra.mrb[0].mxu0 %v1286
  %v1464 = vpop.f32.mrb[0].mxu0
  %v1465 = vadd.f32 0.0, %v1464
  %v1466 = vpop.f32.mrb[0].mxu0
  %v1467 = vpop.f32.mrb[0].mxu0
  %v1468 = vadd.f32 0.0, %v1467
  %v1469 = vpop.f32.mrb[0].mxu0
  %1470 = vmatprep.mubr.bf16.mxu0 0
  %1471 = vmatmul.mubr.bf16.gmra.mrb[0].mxu0 %v1289
  %v1472 = vpop.f32.mrb[0].mxu0
  %v1473 = vadd.f32 0.0, %v1472
  %v1474 = vpop.f32.mrb[0].mxu0
  %v1475 = vpop.f32.mrb[0].mxu0
  %v1476 = vadd.f32 0.0, %v1475
  %v1477 = vpop.f32.mrb[0].mxu0
  %1478 = vmatprep.mubr.bf16.mxu0 0
  %1479 = vmatmul.mubr.bf16.gmra.mrb[0].mxu0 %v1292
  %v1480 = vpop.f32.mrb[0].mxu0
  %v1481 = vadd.f32 0.0, %v1480
  %v1482 = vpop.f32.mrb[0].mxu0
  %v1483 = vpop.f32.mrb[0].mxu0
  %v1484 = vadd.f32 0.0, %v1483
  %v1485 = vpop.f32.mrb[0].mxu0
  %1486 = vmatprep.mubr.bf16.mxu0 0
  %1487 = vmatmul.mubr.bf16.gmra.mrb[0].mxu0 %v1295
  %v1488 = vpop.f32.mrb[0].mxu0
  %v1489 = vadd.f32 0.0, %v1488
  %v1490 = vpop.f32.mrb[0].mxu0
  %v1491 = vpop.f32.mrb[0].mxu0
  %v1492 = vadd.f32 0.0, %v1491
  %v1493 = vpop.f32.mrb[0].mxu0
  %1494 = vmatprep.mubr.bf16.mxu0 0
  %1495 = vmatmul.mubr.bf16.gmra.mrb[0].mxu0 %v1298
  %v1496 = vpop.f32.mrb[0].mxu0
  %v1497 = vadd.f32 0.0, %v1496
  %v1498 = vpop.f32.mrb[0].mxu0
  %v1499 = vpop.f32.mrb[0].mxu0
  %v1500 = vadd.f32 0.0, %v1499
  %v1501 = vpop.f32.mrb[0].mxu0
  %1502 = vmatprep.mubr.bf16.mxu0 0
  %1503 = vmatmul.mubr.bf16.gmra.mrb[0].mxu0 %v1301
  %v1504 = vpop.f32.mrb[0].mxu0
  %v1505 = vadd.f32 0.0, %v1504
  %v1506 = vpop.f32.mrb[0].mxu0
  %v1507 = vpop.f32.mrb[0].mxu0
  %v1508 = vadd.f32 0.0, %v1507
  %v1509 = vpop.f32.mrb[0].mxu0
  %1510 = vmatprep.mubr.bf16.mxu0 0
  %1511 = vmatmul.mubr.bf16.gmra.mrb[0].mxu0 %v1304
  %v1512 = vpop.f32.mrb[0].mxu0
  %v1513 = vadd.f32 0.0, %v1512
  %v1514 = vpop.f32.mrb[0].mxu0
  %v1515 = vpop.f32.mrb[0].mxu0
  %v1516 = vadd.f32 0.0, %v1515
  %v1517 = vpop.f32.mrb[0].mxu0
  %1518 = vmatprep.mubr.bf16.mxu0 0
  %1519 = vmatmul.mubr.bf16.gmra.mrb[0].mxu0 %v1307
  %v1520 = vpop.f32.mrb[0].mxu0
  %v1521 = vadd.f32 0.0, %v1520
  %v1522 = vpop.f32.mrb[0].mxu0
  %v1523 = vpop.f32.mrb[0].mxu0
  %v1524 = vadd.f32 0.0, %v1523
  %v1525 = vpop.f32.mrb[0].mxu0
  %1526 = vmatprep.mubr.bf16.mxu0 0
  %1527 = vmatmul.mubr.bf16.gmra.mrb[0].mxu0 %v1310
  %v1528 = vpop.f32.mrb[0].mxu0
  %v1529 = vadd.f32 0.0, %v1528
  %v1530 = vpop.f32.mrb[0].mxu0
  %v1531 = vpop.f32.mrb[0].mxu0
  %v1532 = vadd.f32 0.0, %v1531
  %v1533 = vpop.f32.mrb[0].mxu0
  %1534 = vmatprep.mubr.bf16.mxu0 0
  %1535 = vmatmul.mubr.bf16.gmra.mrb[0].mxu0 %v1313
  %v1536 = vpop.f32.mrb[0].mxu0
  %v1537 = vadd.f32 0.0, %v1536
  %v1538 = vpop.f32.mrb[0].mxu0
  %v1539 = vpop.f32.mrb[0].mxu0
  %v1540 = vadd.f32 0.0, %v1539
  %v1541 = vpop.f32.mrb[0].mxu0
  %1542 = vmatprep.mubr.bf16.mxu0 0
  %1543 = vmatmul.mubr.bf16.gmra.mrb[0].mxu0 %v1316
  %v1544 = vpop.f32.mrb[0].mxu0
  %v1545 = vadd.f32 0.0, %v1544
  %v1546 = vpop.f32.mrb[0].mxu0
  %v1547 = vpop.f32.mrb[0].mxu0
  %v1548 = vpop.f32.mrb[0].mxu0
  %1549 = vdwg.mxu0
  %v1550 = vmax.f32 %v1021, %v1353
  %v1551 = vmax.f32 %v1022, %v1356
  %v1552 = vmax.f32 %v1023, %v1361
  %v1553 = vmax.f32 %v1024, %v1364
  %v1554 = vmax.f32 %v1025, %v1369
  %v1555 = vmax.f32 %v1026, %v1372
  %v1556 = vmax.f32 %v1027, %v1377
  %v1557 = vmax.f32 %v1028, %v1380
  %v1558 = vmax.f32 %v1029, %v1385
  %v1559 = vmax.f32 %v1030, %v1388
  %v1560 = vmax.f32 %v1031, %v1393
  %v1561 = vmax.f32 %v1032, %v1396
  %v1562 = vmax.f32 %v1033, %v1401
  %v1563 = vmax.f32 %v1034, %v1404
  %v1564 = vmax.f32 %v1035, %v1409
  %v1565 = vmax.f32 %v1036, %v1412
  %v1566 = vmax.f32 %v1037, %v1417
  %v1567 = vmax.f32 %v1038, %v1420
  %v1568 = vmax.f32 %v1039, %v1425
  %v1569 = vmax.f32 %v1040, %v1428
  %v1570 = vmax.f32 %v1041, %v1433
  %v1571 = vmax.f32 %v1042, %v1436
  %v1572 = vmax.f32 %v1043, %v1441
  %v1573 = vmax.f32 %v1044, %v1444
  %v1574 = vmax.f32 %v1045, %v1449
  %v1575 = vmax.f32 %v1046, %v1452
  %v1576 = vmax.f32 %v1047, %v1457
  %v1577 = vmax.f32 %v1048, %v1460
  %v1578 = vmax.f32 %v1049, %v1465
  %v1579 = vmax.f32 %v1050, %v1468
  %v1580 = vmax.f32 %v1051, %v1473
  %v1581 = vmax.f32 %v1052, %v1476
  %v1582 = vmax.f32 %v1053, %v1481
  %v1583 = vmax.f32 %v1054, %v1484
  %v1584 = vmax.f32 %v1055, %v1489
  %v1585 = vmax.f32 %v1056, %v1492
  %v1586 = vmax.f32 %v1057, %v1497
  %v1587 = vmax.f32 %v1058, %v1500
  %v1588 = vmax.f32 %v1059, %v1505
  %v1589 = vmax.f32 %v1060, %v1508
  %v1590 = vmax.f32 %v1061, %v1513
  %v1591 = vmax.f32 %v1062, %v1516
  %v1592 = vmax.f32 %v1063, %v1521
  %v1593 = vmax.f32 %v1064, %v1524
  %v1594 = vmax.f32 %v1065, %v1529
  %v1595 = vmax.f32 %v1066, %v1532
  %v1596 = vmax.f32 %v1067, %v1537
  %v1597 = vmax.f32 %v1068, %v1540
  %v1598 = vmax.f32 %v1069, %v1545
  %s1599 = scalar_lea.vmem %s0, 588
  %v1600 = vld [vmem:[%s1599] sm:$0xf]
  %v1601 = vld [vmem:[%s1599 + $0x4] sm:$0xf]
  %v1602 = vld [vmem:[%s1599 + $0x8] sm:$0xf]
  %v1603 = vld [vmem:[%s1599 + $0xc] sm:$0xf]
  %v1604 = vld [vmem:[%s1599 + $0x10] sm:$0xf]
  %v1605 = vld [vmem:[%s1599 + $0x14] sm:$0xf]
  %v1606 = vld [vmem:[%s1599 + $0x18] sm:$0xf]
  %v1607 = vld [vmem:[%s1599 + $0x1c] sm:$0xf]
  %v1608 = vld [vmem:[%s1599 + $0x20] sm:$0xf]
  %v1609 = vld [vmem:[%s1599 + $0x24] sm:$0xf]
  %v1610 = vld [vmem:[%s1599 + $0x28] sm:$0xf]
  %v1611 = vld [vmem:[%s1599 + $0x2c] sm:$0xf]
  %v1612 = vld [vmem:[%s1599 + $0x30] sm:$0xf]
  %v1613 = vld [vmem:[%s1599 + $0x34] sm:$0xf]
  %v1614 = vld [vmem:[%s1599 + $0x38] sm:$0xf]
  %v1615 = vld [vmem:[%s1599 + $0x3c] sm:$0xf]
  %v1616 = vld [vmem:[%s1599 + $0x40] sm:$0xf]
  %v1617 = vld [vmem:[%s1599 + $0x44] sm:$0xf]
  %v1618 = vld [vmem:[%s1599 + $0x48] sm:$0xf]
  %v1619 = vld [vmem:[%s1599 + $0x4c] sm:$0xf]
  %v1620 = vld [vmem:[%s1599 + $0x50] sm:$0xf]
  %v1621 = vld [vmem:[%s1599 + $0x54] sm:$0xf]
  %v1622 = vld [vmem:[%s1599 + $0x58] sm:$0xf]
  %v1623 = vld [vmem:[%s1599 + $0x5c] sm:$0xf]
  %v1624 = vld [vmem:[%s1599 + $0x60] sm:$0xf]
  %v1625 = vld [vmem:[%s1599 + $0x64] sm:$0xf]
  %v1626 = vld [vmem:[%s1599 + $0x68] sm:$0xf]
  %v1627 = vld [vmem:[%s1599 + $0x6c] sm:$0xf]
  %v1628 = vld [vmem:[%s1599 + $0x70] sm:$0xf]
  %v1629 = vld [vmem:[%s1599 + $0x74] sm:$0xf]
  %v1630 = vld [vmem:[%s1599 + $0x78] sm:$0xf]
  %v1631 = vld [vmem:[%s1599 + $0x7c] sm:$0xf]
  %v1632 = vld [vmem:[%s1599 + $0x80] sm:$0xf]
  %v1633 = vld [vmem:[%s1599 + $0x84] sm:$0xf]
  %v1634 = vld [vmem:[%s1599 + $0x88] sm:$0xf]
  %v1635 = vld [vmem:[%s1599 + $0x8c] sm:$0xf]
  %v1636 = vld [vmem:[%s1599 + $0x90] sm:$0xf]
  %v1637 = vld [vmem:[%s1599 + $0x94] sm:$0xf]
  %v1638 = vld [vmem:[%s1599 + $0x98] sm:$0xf]
  %v1639 = vld [vmem:[%s1599 + $0x9c] sm:$0xf]
  %v1640 = vld [vmem:[%s1599 + $0xa0] sm:$0xf]
  %v1641 = vld [vmem:[%s1599 + $0xa4] sm:$0xf]
  %v1642 = vld [vmem:[%s1599 + $0xa8] sm:$0xf]
  %v1643 = vld [vmem:[%s1599 + $0xac] sm:$0xf]
  %v1644 = vld [vmem:[%s1599 + $0xb0] sm:$0xf]
  %v1645 = vld [vmem:[%s1599 + $0xb4] sm:$0xf]
  %v1646 = vld [vmem:[%s1599 + $0xb8] sm:$0xf]
  %v1647 = vld [vmem:[%s1599 + $0xbc] sm:$0xf]
  %v1648 = vld [vmem:[%s1599 + $0xc0] sm:$0xf]
  %v1698 = vunpack.c.l.b16 %v1600
  %v1699 = vunpack.c.l.b16 %v1601
  %v1700 = vunpack.c.l.b16 %v1602
  %v1701 = vunpack.c.l.b16 %v1603
  %v1702 = vunpack.c.l.b16 %v1604
  %v1703 = vunpack.c.l.b16 %v1605
  %v1704 = vunpack.c.l.b16 %v1606
  %v1705 = vunpack.c.l.b16 %v1607
  %v1706 = vunpack.c.l.b16 %v1608
  %v1707 = vunpack.c.l.b16 %v1609
  %v1708 = vunpack.c.l.b16 %v1610
  %v1709 = vunpack.c.l.b16 %v1611
  %v1710 = vunpack.c.l.b16 %v1612
  %v1711 = vunpack.c.l.b16 %v1613
  %v1712 = vunpack.c.l.b16 %v1614
  %v1713 = vunpack.c.l.b16 %v1615
  %v1714 = vunpack.c.l.b16 %v1616
  %v1715 = vunpack.c.l.b16 %v1617
  %v1716 = vunpack.c.l.b16 %v1618
  %v1717 = vunpack.c.l.b16 %v1619
  %v1718 = vunpack.c.l.b16 %v1620
  %v1719 = vunpack.c.l.b16 %v1621
  %v1720 = vunpack.c.l.b16 %v1622
  %v1721 = vunpack.c.l.b16 %v1623
  %v1722 = vunpack.c.l.b16 %v1624
  %v1723 = vunpack.c.l.b16 %v1625
  %v1724 = vunpack.c.l.b16 %v1626
  %v1725 = vunpack.c.l.b16 %v1627
  %v1726 = vunpack.c.l.b16 %v1628
  %v1727 = vunpack.c.l.b16 %v1629
  %v1728 = vunpack.c.l.b16 %v1630
  %v1729 = vunpack.c.l.b16 %v1631
  %v1730 = vunpack.c.l.b16 %v1632
  %v1731 = vunpack.c.l.b16 %v1633
  %v1732 = vunpack.c.l.b16 %v1634
  %v1733 = vunpack.c.l.b16 %v1635
  %v1734 = vunpack.c.l.b16 %v1636
  %v1735 = vunpack.c.l.b16 %v1637
  %v1736 = vunpack.c.l.b16 %v1638
  %v1737 = vunpack.c.l.b16 %v1639
  %v1738 = vunpack.c.l.b16 %v1640
  %v1739 = vunpack.c.l.b16 %v1641
  %v1740 = vunpack.c.l.b16 %v1642
  %v1741 = vunpack.c.l.b16 %v1643
  %v1742 = vunpack.c.l.b16 %v1644
  %v1743 = vunpack.c.l.b16 %v1645
  %v1744 = vunpack.c.l.b16 %v1646
  %v1745 = vunpack.c.l.b16 %v1647
  %v1746 = vunpack.c.l.b16 %v1648
  %v1747 = vpack.c.b16 %v1699, %v1698
  %v1748 = vpack.c.b16 %v1701, %v1700
  %v1749 = vpack.c.b16 %v1703, %v1702
  %v1750 = vpack.c.b16 %v1705, %v1704
  %v1751 = vpack.c.b16 %v1707, %v1706
  %v1752 = vpack.c.b16 %v1709, %v1708
  %v1753 = vpack.c.b16 %v1711, %v1710
  %v1754 = vpack.c.b16 %v1713, %v1712
  %v1755 = vpack.c.b16 %v1715, %v1714
  %v1756 = vpack.c.b16 %v1717, %v1716
  %v1757 = vpack.c.b16 %v1719, %v1718
  %v1758 = vpack.c.b16 %v1721, %v1720
  %v1759 = vpack.c.b16 %v1723, %v1722
  %v1760 = vpack.c.b16 %v1725, %v1724
  %v1761 = vpack.c.b16 %v1727, %v1726
  %v1762 = vpack.c.b16 %v1729, %v1728
  %v1763 = vpack.c.b16 %v1731, %v1730
  %v1764 = vpack.c.b16 %v1733, %v1732
  %v1765 = vpack.c.b16 %v1735, %v1734
  %v1766 = vpack.c.b16 %v1737, %v1736
  %v1767 = vpack.c.b16 %v1739, %v1738
  %v1768 = vpack.c.b16 %v1741, %v1740
  %v1769 = vpack.c.b16 %v1743, %v1742
  %v1770 = vpack.c.b16 %v1745, %v1744
  %v1771 = vpack.c.b16 %v1746, %v1746
  %v1773 = vsel %vm226, %v1747, 0
  %v1776 = vsel %vm226, %v1748, 0
  %v1779 = vsel %vm226, %v1749, 0
  %v1782 = vsel %vm226, %v1750, 0
  %v1785 = vsel %vm226, %v1751, 0
  %v1788 = vsel %vm226, %v1752, 0
  %v1791 = vsel %vm226, %v1753, 0
  %v1794 = vsel %vm226, %v1754, 0
  %v1797 = vsel %vm226, %v1755, 0
  %v1800 = vsel %vm226, %v1756, 0
  %v1803 = vsel %vm226, %v1757, 0
  %v1806 = vsel %vm226, %v1758, 0
  %v1809 = vsel %vm226, %v1759, 0
  %v1812 = vsel %vm226, %v1760, 0
  %v1815 = vsel %vm226, %v1761, 0
  %v1818 = vsel %vm226, %v1762, 0
  %v1821 = vsel %vm226, %v1763, 0
  %v1824 = vsel %vm226, %v1764, 0
  %v1827 = vsel %vm226, %v1765, 0
  %v1830 = vsel %vm226, %v1766, 0
  %v1833 = vsel %vm226, %v1767, 0
  %v1836 = vsel %vm226, %v1768, 0
  %v1839 = vsel %vm226, %v1769, 0
  %v1842 = vsel %vm226, %v1770, 0
  %v1845 = vsel %vm226, %v1771, 0
  %1847 = vmatprep.subr.bf16.mxu0 0
  %1848 = vmatpush1.bf16.msra.mxu0 %v217
  %1849 = vmatprep.subr.bf16.mxu0 0
  %1850 = vmatpush1.bf16.msra.mxu0 %v218
  %1851 = vmatprep.subr.bf16.mxu0 0
  %1852 = vmatpush1.bf16.msra.mxu0 %v219
  %1853 = vmatprep.subr.bf16.mxu0 0
  %1854 = vmatpush1.bf16.msra.mxu0 %v220
  %1855 = vmatprep.subr.bf16.mxu0 0
  %1856 = vmatpush1.bf16.msra.mxu0 %v307
  %1857 = vmatprep.subr.bf16.mxu0 0
  %1858 = vmatpush1.bf16.msra.mxu0 0
  %1859 = vmatprep.subr.bf16.mxu0 0
  %1860 = vmatpush1.bf16.msra.mxu0 0
  %1861 = vmatprep.subr.bf16.mxu0 0
  %1862 = vmatpush1.bf16.msra.mxu0 0
  %1863 = vmatprep.subr.bf16.mxu0 0
  %1864 = vmatpush1.bf16.msra.mxu0 0
  %1865 = vmatprep.subr.bf16.mxu0 0
  %1866 = vmatpush1.bf16.msra.mxu0 0
  %1867 = vmatprep.subr.bf16.mxu0 0
  %1868 = vmatpush1.bf16.msra.mxu0 0
  %1869 = vmatprep.subr.bf16.mxu0 0
  %1870 = vmatpush1.bf16.msra.mxu0 0
  %1871 = vmatprep.subr.bf16.mxu0 0
  %1872 = vmatpush1.bf16.msra.mxu0 0
  %1873 = vmatprep.subr.bf16.mxu0 0
  %1874 = vmatpush1.bf16.msra.mxu0 0
  %1875 = vmatprep.subr.bf16.mxu0 0
  %1876 = vmatpush1.bf16.msra.mxu0 0
  %1877 = vmatprep.subr.bf16.mxu0 0
  %1878 = vmatpush1.bf16.msra.mxu0 0
  %1879 = vmatprep.mubr.bf16.mxu0 0
  %1880 = vmatmul.mubr.bf16.gmra.mrb[0].mxu0 %v1773
  %v1881 = vpop.f32.mrb[0].mxu0
  %v1882 = vadd.f32 0.0, %v1881
  %v1883 = vpop.f32.mrb[0].mxu0
  %v1884 = vpop.f32.mrb[0].mxu0
  %v1885 = vadd.f32 0.0, %v1884
  %v1886 = vpop.f32.mrb[0].mxu0
  %1887 = vmatprep.mubr.bf16.mxu0 0
  %1888 = vmatmul.mubr.bf16.gmra.mrb[0].mxu0 %v1776
  %v1889 = vpop.f32.mrb[0].mxu0
  %v1890 = vadd.f32 0.0, %v1889
  %v1891 = vpop.f32.mrb[0].mxu0
  %v1892 = vpop.f32.mrb[0].mxu0
  %v1893 = vadd.f32 0.0, %v1892
  %v1894 = vpop.f32.mrb[0].mxu0
  %1895 = vmatprep.mubr.bf16.mxu0 0
  %1896 = vmatmul.mubr.bf16.gmra.mrb[0].mxu0 %v1779
  %v1897 = vpop.f32.mrb[0].mxu0
  %v1898 = vadd.f32 0.0, %v1897
  %v1899 = vpop.f32.mrb[0].mxu0
  %v1900 = vpop.f32.mrb[0].mxu0
  %v1901 = vadd.f32 0.0, %v1900
  %v1902 = vpop.f32.mrb[0].mxu0
  %1903 = vmatprep.mubr.bf16.mxu0 0
  %1904 = vmatmul.mubr.bf16.gmra.mrb[0].mxu0 %v1782
  %v1905 = vpop.f32.mrb[0].mxu0
  %v1906 = vadd.f32 0.0, %v1905
  %v1907 = vpop.f32.mrb[0].mxu0
  %v1908 = vpop.f32.mrb[0].mxu0
  %v1909 = vadd.f32 0.0, %v1908
  %v1910 = vpop.f32.mrb[0].mxu0
  %1911 = vmatprep.mubr.bf16.mxu0 0
  %1912 = vmatmul.mubr.bf16.gmra.mrb[0].mxu0 %v1785
  %v1913 = vpop.f32.mrb[0].mxu0
  %v1914 = vadd.f32 0.0, %v1913
  %v1915 = vpop.f32.mrb[0].mxu0
  %v1916 = vpop.f32.mrb[0].mxu0
  %v1917 = vadd.f32 0.0, %v1916
  %v1918 = vpop.f32.mrb[0].mxu0
  %1919 = vmatprep.mubr.bf16.mxu0 0
  %1920 = vmatmul.mubr.bf16.gmra.mrb[0].mxu0 %v1788
  %v1921 = vpop.f32.mrb[0].mxu0
  %v1922 = vadd.f32 0.0, %v1921
  %v1923 = vpop.f32.mrb[0].mxu0
  %v1924 = vpop.f32.mrb[0].mxu0
  %v1925 = vadd.f32 0.0, %v1924
  %v1926 = vpop.f32.mrb[0].mxu0
  %1927 = vmatprep.mubr.bf16.mxu0 0
  %1928 = vmatmul.mubr.bf16.gmra.mrb[0].mxu0 %v1791
  %v1929 = vpop.f32.mrb[0].mxu0
  %v1930 = vadd.f32 0.0, %v1929
  %v1931 = vpop.f32.mrb[0].mxu0
  %v1932 = vpop.f32.mrb[0].mxu0
  %v1933 = vadd.f32 0.0, %v1932
  %v1934 = vpop.f32.mrb[0].mxu0
  %1935 = vmatprep.mubr.bf16.mxu0 0
  %1936 = vmatmul.mubr.bf16.gmra.mrb[0].mxu0 %v1794
  %v1937 = vpop.f32.mrb[0].mxu0
  %v1938 = vadd.f32 0.0, %v1937
  %v1939 = vpop.f32.mrb[0].mxu0
  %v1940 = vpop.f32.mrb[0].mxu0
  %v1941 = vadd.f32 0.0, %v1940
  %v1942 = vpop.f32.mrb[0].mxu0
  %1943 = vmatprep.mubr.bf16.mxu0 0
  %1944 = vmatmul.mubr.bf16.gmra.mrb[0].mxu0 %v1797
  %v1945 = vpop.f32.mrb[0].mxu0
  %v1946 = vadd.f32 0.0, %v1945
  %v1947 = vpop.f32.mrb[0].mxu0
  %v1948 = vpop.f32.mrb[0].mxu0
  %v1949 = vadd.f32 0.0, %v1948
  %v1950 = vpop.f32.mrb[0].mxu0
  %1951 = vmatprep.mubr.bf16.mxu0 0
  %1952 = vmatmul.mubr.bf16.gmra.mrb[0].mxu0 %v1800
  %v1953 = vpop.f32.mrb[0].mxu0
  %v1954 = vadd.f32 0.0, %v1953
  %v1955 = vpop.f32.mrb[0].mxu0
  %v1956 = vpop.f32.mrb[0].mxu0
  %v1957 = vadd.f32 0.0, %v1956
  %v1958 = vpop.f32.mrb[0].mxu0
  %1959 = vmatprep.mubr.bf16.mxu0 0
  %1960 = vmatmul.mubr.bf16.gmra.mrb[0].mxu0 %v1803
  %v1961 = vpop.f32.mrb[0].mxu0
  %v1962 = vadd.f32 0.0, %v1961
  %v1963 = vpop.f32.mrb[0].mxu0
  %v1964 = vpop.f32.mrb[0].mxu0
  %v1965 = vadd.f32 0.0, %v1964
  %v1966 = vpop.f32.mrb[0].mxu0
  %1967 = vmatprep.mubr.bf16.mxu0 0
  %1968 = vmatmul.mubr.bf16.gmra.mrb[0].mxu0 %v1806
  %v1969 = vpop.f32.mrb[0].mxu0
  %v1970 = vadd.f32 0.0, %v1969
  %v1971 = vpop.f32.mrb[0].mxu0
  %v1972 = vpop.f32.mrb[0].mxu0
  %v1973 = vadd.f32 0.0, %v1972
  %v1974 = vpop.f32.mrb[0].mxu0
  %1975 = vmatprep.mubr.bf16.mxu0 0
  %1976 = vmatmul.mubr.bf16.gmra.mrb[0].mxu0 %v1809
  %v1977 = vpop.f32.mrb[0].mxu0
  %v1978 = vadd.f32 0.0, %v1977
  %v1979 = vpop.f32.mrb[0].mxu0
  %v1980 = vpop.f32.mrb[0].mxu0
  %v1981 = vadd.f32 0.0, %v1980
  %v1982 = vpop.f32.mrb[0].mxu0
  %1983 = vmatprep.mubr.bf16.mxu0 0
  %1984 = vmatmul.mubr.bf16.gmra.mrb[0].mxu0 %v1812
  %v1985 = vpop.f32.mrb[0].mxu0
  %v1986 = vadd.f32 0.0, %v1985
  %v1987 = vpop.f32.mrb[0].mxu0
  %v1988 = vpop.f32.mrb[0].mxu0
  %v1989 = vadd.f32 0.0, %v1988
  %v1990 = vpop.f32.mrb[0].mxu0
  %1991 = vmatprep.mubr.bf16.mxu0 0
  %1992 = vmatmul.mubr.bf16.gmra.mrb[0].mxu0 %v1815
  %v1993 = vpop.f32.mrb[0].mxu0
  %v1994 = vadd.f32 0.0, %v1993
  %v1995 = vpop.f32.mrb[0].mxu0
  %v1996 = vpop.f32.mrb[0].mxu0
  %v1997 = vadd.f32 0.0, %v1996
  %v1998 = vpop.f32.mrb[0].mxu0
  %1999 = vmatprep.mubr.bf16.mxu0 0
  %2000 = vmatmul.mubr.bf16.gmra.mrb[0].mxu0 %v1818
  %v2001 = vpop.f32.mrb[0].mxu0
  %v2002 = vadd.f32 0.0, %v2001
  %v2003 = vpop.f32.mrb[0].mxu0
  %v2004 = vpop.f32.mrb[0].mxu0
  %v2005 = vadd.f32 0.0, %v2004
  %v2006 = vpop.f32.mrb[0].mxu0
  %2007 = vmatprep.mubr.bf16.mxu0 0
  %2008 = vmatmul.mubr.bf16.gmra.mrb[0].mxu0 %v1821
  %v2009 = vpop.f32.mrb[0].mxu0
  %v2010 = vadd.f32 0.0, %v2009
  %v2011 = vpop.f32.mrb[0].mxu0
  %v2012 = vpop.f32.mrb[0].mxu0
  %v2013 = vadd.f32 0.0, %v2012
  %v2014 = vpop.f32.mrb[0].mxu0
  %2015 = vmatprep.mubr.bf16.mxu0 0
  %2016 = vmatmul.mubr.bf16.gmra.mrb[0].mxu0 %v1824
  %v2017 = vpop.f32.mrb[0].mxu0
  %v2018 = vadd.f32 0.0, %v2017
  %v2019 = vpop.f32.mrb[0].mxu0
  %v2020 = vpop.f32.mrb[0].mxu0
  %v2021 = vadd.f32 0.0, %v2020
  %v2022 = vpop.f32.mrb[0].mxu0
  %2023 = vmatprep.mubr.bf16.mxu0 0
  %2024 = vmatmul.mubr.bf16.gmra.mrb[0].mxu0 %v1827
  %v2025 = vpop.f32.mrb[0].mxu0
  %v2026 = vadd.f32 0.0, %v2025
  %v2027 = vpop.f32.mrb[0].mxu0
  %v2028 = vpop.f32.mrb[0].mxu0
  %v2029 = vadd.f32 0.0, %v2028
  %v2030 = vpop.f32.mrb[0].mxu0
  %2031 = vmatprep.mubr.bf16.mxu0 0
  %2032 = vmatmul.mubr.bf16.gmra.mrb[0].mxu0 %v1830
  %v2033 = vpop.f32.mrb[0].mxu0
  %v2034 = vadd.f32 0.0, %v2033
  %v2035 = vpop.f32.mrb[0].mxu0
  %v2036 = vpop.f32.mrb[0].mxu0
  %v2037 = vadd.f32 0.0, %v2036
  %v2038 = vpop.f32.mrb[0].mxu0
  %2039 = vmatprep.mubr.bf16.mxu0 0
  %2040 = vmatmul.mubr.bf16.gmra.mrb[0].mxu0 %v1833
  %v2041 = vpop.f32.mrb[0].mxu0
  %v2042 = vadd.f32 0.0, %v2041
  %v2043 = vpop.f32.mrb[0].mxu0
  %v2044 = vpop.f32.mrb[0].mxu0
  %v2045 = vadd.f32 0.0, %v2044
  %v2046 = vpop.f32.mrb[0].mxu0
  %2047 = vmatprep.mubr.bf16.mxu0 0
  %2048 = vmatmul.mubr.bf16.gmra.mrb[0].mxu0 %v1836
  %v2049 = vpop.f32.mrb[0].mxu0
  %v2050 = vadd.f32 0.0, %v2049
  %v2051 = vpop.f32.mrb[0].mxu0
  %v2052 = vpop.f32.mrb[0].mxu0
  %v2053 = vadd.f32 0.0, %v2052
  %v2054 = vpop.f32.mrb[0].mxu0
  %2055 = vmatprep.mubr.bf16.mxu0 0
  %2056 = vmatmul.mubr.bf16.gmra.mrb[0].mxu0 %v1839
  %v2057 = vpop.f32.mrb[0].mxu0
  %v2058 = vadd.f32 0.0, %v2057
  %v2059 = vpop.f32.mrb[0].mxu0
  %v2060 = vpop.f32.mrb[0].mxu0
  %v2061 = vadd.f32 0.0, %v2060
  %v2062 = vpop.f32.mrb[0].mxu0
  %2063 = vmatprep.mubr.bf16.mxu0 0
  %2064 = vmatmul.mubr.bf16.gmra.mrb[0].mxu0 %v1842
  %v2065 = vpop.f32.mrb[0].mxu0
  %v2066 = vadd.f32 0.0, %v2065
  %v2067 = vpop.f32.mrb[0].mxu0
  %v2068 = vpop.f32.mrb[0].mxu0
  %v2069 = vadd.f32 0.0, %v2068
  %v2070 = vpop.f32.mrb[0].mxu0
  %2071 = vmatprep.mubr.bf16.mxu0 0
  %2072 = vmatmul.mubr.bf16.gmra.mrb[0].mxu0 %v1845
  %v2073 = vpop.f32.mrb[0].mxu0
  %v2074 = vadd.f32 0.0, %v2073
  %v2075 = vpop.f32.mrb[0].mxu0
  %v2076 = vpop.f32.mrb[0].mxu0
  %v2077 = vpop.f32.mrb[0].mxu0
  %2078 = vdwg.mxu0
  %v2079 = vmax.f32 %v1550, %v1882
  %v2080 = vmax.f32 %v1551, %v1885
  %v2081 = vmax.f32 %v1552, %v1890
  %v2082 = vmax.f32 %v1553, %v1893
  %v2083 = vmax.f32 %v1554, %v1898
  %v2084 = vmax.f32 %v1555, %v1901
  %v2085 = vmax.f32 %v1556, %v1906
  %v2086 = vmax.f32 %v1557, %v1909
  %v2087 = vmax.f32 %v1558, %v1914
  %v2088 = vmax.f32 %v1559, %v1917
  %v2089 = vmax.f32 %v1560, %v1922
  %v2090 = vmax.f32 %v1561, %v1925
  %v2091 = vmax.f32 %v1562, %v1930
  %v2092 = vmax.f32 %v1563, %v1933
  %v2093 = vmax.f32 %v1564, %v1938
  %v2094 = vmax.f32 %v1565, %v1941
  %v2095 = vmax.f32 %v1566, %v1946
  %v2096 = vmax.f32 %v1567, %v1949
  %v2097 = vmax.f32 %v1568, %v1954
  %v2098 = vmax.f32 %v1569, %v1957
  %v2099 = vmax.f32 %v1570, %v1962
  %v2100 = vmax.f32 %v1571, %v1965
  %v2101 = vmax.f32 %v1572, %v1970
  %v2102 = vmax.f32 %v1573, %v1973
  %v2103 = vmax.f32 %v1574, %v1978
  %v2104 = vmax.f32 %v1575, %v1981
  %v2105 = vmax.f32 %v1576, %v1986
  %v2106 = vmax.f32 %v1577, %v1989
  %v2107 = vmax.f32 %v1578, %v1994
  %v2108 = vmax.f32 %v1579, %v1997
  %v2109 = vmax.f32 %v1580, %v2002
  %v2110 = vmax.f32 %v1581, %v2005
  %v2111 = vmax.f32 %v1582, %v2010
  %v2112 = vmax.f32 %v1583, %v2013
  %v2113 = vmax.f32 %v1584, %v2018
  %v2114 = vmax.f32 %v1585, %v2021
  %v2115 = vmax.f32 %v1586, %v2026
  %v2116 = vmax.f32 %v1587, %v2029
  %v2117 = vmax.f32 %v1588, %v2034
  %v2118 = vmax.f32 %v1589, %v2037
  %v2119 = vmax.f32 %v1590, %v2042
  %v2120 = vmax.f32 %v1591, %v2045
  %v2121 = vmax.f32 %v1592, %v2050
  %v2122 = vmax.f32 %v1593, %v2053
  %v2123 = vmax.f32 %v1594, %v2058
  %v2124 = vmax.f32 %v1595, %v2061
  %v2125 = vmax.f32 %v1596, %v2066
  %v2126 = vmax.f32 %v1597, %v2069
  %v2127 = vmax.f32 %v1598, %v2074
  %v2128 = vld [vmem:[%s2] sm:$0x1]
  %v2130 = vlaneseq
  %v2131 = vshrl.u32 %v2130, 7
  %v2132 = vsub.s32 0, %v2131
  %v2133 = vrot.slane %v2128, %v2132
  %v2135 = vadd.f32 %v2079, %v2133
  %v2136 = vadd.f32 %v2080, %v2133
  %v2137 = vadd.f32 %v2081, %v2133
  %v2138 = vadd.f32 %v2082, %v2133
  %v2139 = vadd.f32 %v2083, %v2133
  %v2140 = vadd.f32 %v2084, %v2133
  %v2141 = vadd.f32 %v2085, %v2133
  %v2142 = vadd.f32 %v2086, %v2133
  %v2143 = vadd.f32 %v2087, %v2133
  %v2144 = vadd.f32 %v2088, %v2133
  %v2145 = vadd.f32 %v2089, %v2133
  %v2146 = vadd.f32 %v2090, %v2133
  %v2147 = vadd.f32 %v2091, %v2133
  %v2148 = vadd.f32 %v2092, %v2133
  %v2149 = vadd.f32 %v2093, %v2133
  %v2150 = vadd.f32 %v2094, %v2133
  %v2151 = vadd.f32 %v2095, %v2133
  %v2152 = vadd.f32 %v2096, %v2133
  %v2153 = vadd.f32 %v2097, %v2133
  %v2154 = vadd.f32 %v2098, %v2133
  %v2155 = vadd.f32 %v2099, %v2133
  %v2156 = vadd.f32 %v2100, %v2133
  %v2157 = vadd.f32 %v2101, %v2133
  %v2158 = vadd.f32 %v2102, %v2133
  %v2159 = vadd.f32 %v2103, %v2133
  %v2160 = vadd.f32 %v2104, %v2133
  %v2161 = vadd.f32 %v2105, %v2133
  %v2162 = vadd.f32 %v2106, %v2133
  %v2163 = vadd.f32 %v2107, %v2133
  %v2164 = vadd.f32 %v2108, %v2133
  %v2165 = vadd.f32 %v2109, %v2133
  %v2166 = vadd.f32 %v2110, %v2133
  %v2167 = vadd.f32 %v2111, %v2133
  %v2168 = vadd.f32 %v2112, %v2133
  %v2169 = vadd.f32 %v2113, %v2133
  %v2170 = vadd.f32 %v2114, %v2133
  %v2171 = vadd.f32 %v2115, %v2133
  %v2172 = vadd.f32 %v2116, %v2133
  %v2173 = vadd.f32 %v2117, %v2133
  %v2174 = vadd.f32 %v2118, %v2133
  %v2175 = vadd.f32 %v2119, %v2133
  %v2176 = vadd.f32 %v2120, %v2133
  %v2177 = vadd.f32 %v2121, %v2133
  %v2178 = vadd.f32 %v2122, %v2133
  %v2179 = vadd.f32 %v2123, %v2133
  %v2180 = vadd.f32 %v2124, %v2133
  %v2181 = vadd.f32 %v2125, %v2133
  %v2182 = vadd.f32 %v2126, %v2133
  %v2183 = vadd.f32 %v2127, %v2133
  %v2184 = vmax.f32 %v2135, 0.0
  %v2185 = vmax.f32 %v2136, 0.0
  %v2186 = vmax.f32 %v2137, 0.0
  %v2187 = vmax.f32 %v2138, 0.0
  %v2188 = vmax.f32 %v2139, 0.0
  %v2189 = vmax.f32 %v2140, 0.0
  %v2190 = vmax.f32 %v2141, 0.0
  %v2191 = vmax.f32 %v2142, 0.0
  %v2192 = vmax.f32 %v2143, 0.0
  %v2193 = vmax.f32 %v2144, 0.0
  %v2194 = vmax.f32 %v2145, 0.0
  %v2195 = vmax.f32 %v2146, 0.0
  %v2196 = vmax.f32 %v2147, 0.0
  %v2197 = vmax.f32 %v2148, 0.0
  %v2198 = vmax.f32 %v2149, 0.0
  %v2199 = vmax.f32 %v2150, 0.0
  %v2200 = vmax.f32 %v2151, 0.0
  %v2201 = vmax.f32 %v2152, 0.0
  %v2202 = vmax.f32 %v2153, 0.0
  %v2203 = vmax.f32 %v2154, 0.0
  %v2204 = vmax.f32 %v2155, 0.0
  %v2205 = vmax.f32 %v2156, 0.0
  %v2206 = vmax.f32 %v2157, 0.0
  %v2207 = vmax.f32 %v2158, 0.0
  %v2208 = vmax.f32 %v2159, 0.0
  %v2209 = vmax.f32 %v2160, 0.0
  %v2210 = vmax.f32 %v2161, 0.0
  %v2211 = vmax.f32 %v2162, 0.0
  %v2212 = vmax.f32 %v2163, 0.0
  %v2213 = vmax.f32 %v2164, 0.0
  %v2214 = vmax.f32 %v2165, 0.0
  %v2215 = vmax.f32 %v2166, 0.0
  %v2216 = vmax.f32 %v2167, 0.0
  %v2217 = vmax.f32 %v2168, 0.0
  %v2218 = vmax.f32 %v2169, 0.0
  %v2219 = vmax.f32 %v2170, 0.0
  %v2220 = vmax.f32 %v2171, 0.0
  %v2221 = vmax.f32 %v2172, 0.0
  %v2222 = vmax.f32 %v2173, 0.0
  %v2223 = vmax.f32 %v2174, 0.0
  %v2224 = vmax.f32 %v2175, 0.0
  %v2225 = vmax.f32 %v2176, 0.0
  %v2226 = vmax.f32 %v2177, 0.0
  %v2227 = vmax.f32 %v2178, 0.0
  %v2228 = vmax.f32 %v2179, 0.0
  %v2229 = vmax.f32 %v2180, 0.0
  %v2230 = vmax.f32 %v2181, 0.0
  %v2231 = vmax.f32 %v2182, 0.0
  %v2232 = vmax.f32 %v2183, 0.0
  %v2233 = vpack.c.bf16 %v2185, %v2184
  %v2234 = vpack.c.bf16 %v2187, %v2186
  %v2235 = vpack.c.bf16 %v2189, %v2188
  %v2236 = vpack.c.bf16 %v2191, %v2190
  %v2237 = vpack.c.bf16 %v2193, %v2192
  %v2238 = vpack.c.bf16 %v2195, %v2194
  %v2239 = vpack.c.bf16 %v2197, %v2196
  %v2240 = vpack.c.bf16 %v2199, %v2198
  %v2241 = vpack.c.bf16 %v2201, %v2200
  %v2242 = vpack.c.bf16 %v2203, %v2202
  %v2243 = vpack.c.bf16 %v2205, %v2204
  %v2244 = vpack.c.bf16 %v2207, %v2206
  %v2245 = vpack.c.bf16 %v2209, %v2208
  %v2246 = vpack.c.bf16 %v2211, %v2210
  %v2247 = vpack.c.bf16 %v2213, %v2212
  %v2248 = vpack.c.bf16 %v2215, %v2214
  %v2249 = vpack.c.bf16 %v2217, %v2216
  %v2250 = vpack.c.bf16 %v2219, %v2218
  %v2251 = vpack.c.bf16 %v2221, %v2220
  %v2252 = vpack.c.bf16 %v2223, %v2222
  %v2253 = vpack.c.bf16 %v2225, %v2224
  %v2254 = vpack.c.bf16 %v2227, %v2226
  %v2255 = vpack.c.bf16 %v2229, %v2228
  %v2256 = vpack.c.bf16 %v2231, %v2230
  %v2257 = vpack.c.bf16 %v2232, %v2232
  %v2283 = vunpack.c.l.b16 %v2233
  %v2284 = vunpack.c.h.b16 %v2233
  %v2285 = vunpack.c.l.b16 %v2234
  %v2286 = vunpack.c.h.b16 %v2234
  %v2287 = vunpack.c.l.b16 %v2235
  %v2288 = vunpack.c.h.b16 %v2235
  %v2289 = vunpack.c.l.b16 %v2236
  %v2290 = vunpack.c.h.b16 %v2236
  %v2291 = vunpack.c.l.b16 %v2237
  %v2292 = vunpack.c.h.b16 %v2237
  %v2293 = vunpack.c.l.b16 %v2238
  %v2294 = vunpack.c.h.b16 %v2238
  %v2295 = vunpack.c.l.b16 %v2239
  %v2296 = vunpack.c.h.b16 %v2239
  %v2297 = vunpack.c.l.b16 %v2240
  %v2298 = vunpack.c.h.b16 %v2240
  %v2299 = vunpack.c.l.b16 %v2241
  %v2300 = vunpack.c.h.b16 %v2241
  %v2301 = vunpack.c.l.b16 %v2242
  %v2302 = vunpack.c.h.b16 %v2242
  %v2303 = vunpack.c.l.b16 %v2243
  %v2304 = vunpack.c.h.b16 %v2243
  %v2305 = vunpack.c.l.b16 %v2244
  %v2306 = vunpack.c.h.b16 %v2244
  %v2307 = vunpack.c.l.b16 %v2245
  %v2308 = vunpack.c.h.b16 %v2245
  %v2309 = vunpack.c.l.b16 %v2246
  %v2310 = vunpack.c.h.b16 %v2246
  %v2311 = vunpack.c.l.b16 %v2247
  %v2312 = vunpack.c.h.b16 %v2247
  %v2313 = vunpack.c.l.b16 %v2248
  %v2314 = vunpack.c.h.b16 %v2248
  %v2315 = vunpack.c.l.b16 %v2249
  %v2316 = vunpack.c.h.b16 %v2249
  %v2317 = vunpack.c.l.b16 %v2250
  %v2318 = vunpack.c.h.b16 %v2250
  %v2319 = vunpack.c.l.b16 %v2251
  %v2320 = vunpack.c.h.b16 %v2251
  %v2321 = vunpack.c.l.b16 %v2252
  %v2322 = vunpack.c.h.b16 %v2252
  %v2323 = vunpack.c.l.b16 %v2253
  %v2324 = vunpack.c.h.b16 %v2253
  %v2325 = vunpack.c.l.b16 %v2254
  %v2326 = vunpack.c.h.b16 %v2254
  %v2327 = vunpack.c.l.b16 %v2255
  %v2328 = vunpack.c.h.b16 %v2255
  %v2329 = vunpack.c.l.b16 %v2256
  %v2330 = vunpack.c.h.b16 %v2256
  %v2331 = vunpack.c.l.b16 %v2257
  %v2332 = vpack.c.b16 %v2283, %v2283
  %v2333 = vpack.c.b16 %v2284, %v2284
  %v2334 = vpack.c.b16 %v2285, %v2285
  %v2335 = vpack.c.b16 %v2286, %v2286
  %v2336 = vpack.c.b16 %v2287, %v2287
  %v2337 = vpack.c.b16 %v2288, %v2288
  %v2338 = vpack.c.b16 %v2289, %v2289
  %v2339 = vpack.c.b16 %v2290, %v2290
  %v2340 = vpack.c.b16 %v2291, %v2291
  %v2341 = vpack.c.b16 %v2292, %v2292
  %v2342 = vpack.c.b16 %v2293, %v2293
  %v2343 = vpack.c.b16 %v2294, %v2294
  %v2344 = vpack.c.b16 %v2295, %v2295
  %v2345 = vpack.c.b16 %v2296, %v2296
  %v2346 = vpack.c.b16 %v2297, %v2297
  %v2347 = vpack.c.b16 %v2298, %v2298
  %v2348 = vpack.c.b16 %v2299, %v2299
  %v2349 = vpack.c.b16 %v2300, %v2300
  %v2350 = vpack.c.b16 %v2301, %v2301
  %v2351 = vpack.c.b16 %v2302, %v2302
  %v2352 = vpack.c.b16 %v2303, %v2303
  %v2353 = vpack.c.b16 %v2304, %v2304
  %v2354 = vpack.c.b16 %v2305, %v2305
  %v2355 = vpack.c.b16 %v2306, %v2306
  %v2356 = vpack.c.b16 %v2307, %v2307
  %v2357 = vpack.c.b16 %v2308, %v2308
  %v2358 = vpack.c.b16 %v2309, %v2309
  %v2359 = vpack.c.b16 %v2310, %v2310
  %v2360 = vpack.c.b16 %v2311, %v2311
  %v2361 = vpack.c.b16 %v2312, %v2312
  %v2362 = vpack.c.b16 %v2313, %v2313
  %v2363 = vpack.c.b16 %v2314, %v2314
  %v2364 = vpack.c.b16 %v2315, %v2315
  %v2365 = vpack.c.b16 %v2316, %v2316
  %v2366 = vpack.c.b16 %v2317, %v2317
  %v2367 = vpack.c.b16 %v2318, %v2318
  %v2368 = vpack.c.b16 %v2319, %v2319
  %v2369 = vpack.c.b16 %v2320, %v2320
  %v2370 = vpack.c.b16 %v2321, %v2321
  %v2371 = vpack.c.b16 %v2322, %v2322
  %v2372 = vpack.c.b16 %v2323, %v2323
  %v2373 = vpack.c.b16 %v2324, %v2324
  %v2374 = vpack.c.b16 %v2325, %v2325
  %v2375 = vpack.c.b16 %v2326, %v2326
  %v2376 = vpack.c.b16 %v2327, %v2327
  %v2377 = vpack.c.b16 %v2328, %v2328
  %v2378 = vpack.c.b16 %v2329, %v2329
  %v2379 = vpack.c.b16 %v2330, %v2330
  %v2380 = vpack.c.b16 %v2331, %v2331
  %2430 = vst [vmem:[%s3] sm:$0xf] %v2332
  %2431 = vst [vmem:[%s3 + $0x4] sm:$0xf] %v2333
  %2432 = vst [vmem:[%s3 + $0x8] sm:$0xf] %v2334
  %2433 = vst [vmem:[%s3 + $0xc] sm:$0xf] %v2335
  %2434 = vst [vmem:[%s3 + $0x10] sm:$0xf] %v2336
  %2435 = vst [vmem:[%s3 + $0x14] sm:$0xf] %v2337
  %2436 = vst [vmem:[%s3 + $0x18] sm:$0xf] %v2338
  %2437 = vst [vmem:[%s3 + $0x1c] sm:$0xf] %v2339
  %2438 = vst [vmem:[%s3 + $0x20] sm:$0xf] %v2340
  %2439 = vst [vmem:[%s3 + $0x24] sm:$0xf] %v2341
  %2440 = vst [vmem:[%s3 + $0x28] sm:$0xf] %v2342
  %2441 = vst [vmem:[%s3 + $0x2c] sm:$0xf] %v2343
  %2442 = vst [vmem:[%s3 + $0x30] sm:$0xf] %v2344
  %2443 = vst [vmem:[%s3 + $0x34] sm:$0xf] %v2345
  %2444 = vst [vmem:[%s3 + $0x38] sm:$0xf] %v2346
  %2445 = vst [vmem:[%s3 + $0x3c] sm:$0xf] %v2347
  %2446 = vst [vmem:[%s3 + $0x40] sm:$0xf] %v2348
  %2447 = vst [vmem:[%s3 + $0x44] sm:$0xf] %v2349
  %2448 = vst [vmem:[%s3 + $0x48] sm:$0xf] %v2350
  %2449 = vst [vmem:[%s3 + $0x4c] sm:$0xf] %v2351
  %2450 = vst [vmem:[%s3 + $0x50] sm:$0xf] %v2352
  %2451 = vst [vmem:[%s3 + $0x54] sm:$0xf] %v2353
  %2452 = vst [vmem:[%s3 + $0x58] sm:$0xf] %v2354
  %2453 = vst [vmem:[%s3 + $0x5c] sm:$0xf] %v2355
  %2454 = vst [vmem:[%s3 + $0x60] sm:$0xf] %v2356
  %2455 = vst [vmem:[%s3 + $0x64] sm:$0xf] %v2357
  %2456 = vst [vmem:[%s3 + $0x68] sm:$0xf] %v2358
  %2457 = vst [vmem:[%s3 + $0x6c] sm:$0xf] %v2359
  %2458 = vst [vmem:[%s3 + $0x70] sm:$0xf] %v2360
  %2459 = vst [vmem:[%s3 + $0x74] sm:$0xf] %v2361
  %2460 = vst [vmem:[%s3 + $0x78] sm:$0xf] %v2362
  %2461 = vst [vmem:[%s3 + $0x7c] sm:$0xf] %v2363
  %2462 = vst [vmem:[%s3 + $0x80] sm:$0xf] %v2364
  %2463 = vst [vmem:[%s3 + $0x84] sm:$0xf] %v2365
  %2464 = vst [vmem:[%s3 + $0x88] sm:$0xf] %v2366
  %2465 = vst [vmem:[%s3 + $0x8c] sm:$0xf] %v2367
  %2466 = vst [vmem:[%s3 + $0x90] sm:$0xf] %v2368
  %2467 = vst [vmem:[%s3 + $0x94] sm:$0xf] %v2369
  %2468 = vst [vmem:[%s3 + $0x98] sm:$0xf] %v2370
  %2469 = vst [vmem:[%s3 + $0x9c] sm:$0xf] %v2371
  %2470 = vst [vmem:[%s3 + $0xa0] sm:$0xf] %v2372
  %2471 = vst [vmem:[%s3 + $0xa4] sm:$0xf] %v2373
  %2472 = vst [vmem:[%s3 + $0xa8] sm:$0xf] %v2374
  %2473 = vst [vmem:[%s3 + $0xac] sm:$0xf] %v2375
  %2474 = vst [vmem:[%s3 + $0xb0] sm:$0xf] %v2376
  %2475 = vst [vmem:[%s3 + $0xb4] sm:$0xf] %v2377
  %2476 = vst [vmem:[%s3 + $0xb8] sm:$0xf] %v2378
  %2477 = vst [vmem:[%s3 + $0xbc] sm:$0xf] %v2379
  %2478 = vst [vmem:[%s3 + $0xc0] sm:$0xf] %v2380
  // Predicated region
  $region14: #{hebbcnn_forward.3} parent=0 // pred_check
    _
  $region15: #{hebbcnn_forward.3} parent=0 // pred_check_branch
    %2480 = sbr.rel (0) target = $region17
  $region16: #{hebbcnn_forward.3} parent=0 // pred_region
    _
  $region17: #{hebbcnn_forward.3} parent=0 // pred_fallthru
    _
  // Predicated region
  $region18: #{hebbcnn_forward.3} parent=0 // pred_check
    _
  $region19: #{hebbcnn_forward.3} parent=0 // pred_check_branch
    %2482 = sbr.rel (0) target = $region21
  $region20: #{hebbcnn_forward.3} parent=0 // pred_region
    _
  $region21: #{hebbcnn_forward.3} parent=0 // pred_fallthru
    _

// kernel: hebbcnn_forward.4
$region0: #{hebbcnn_forward.4}
  #allocation0 [shape = 'u32[]', space=smem, size = 0x4, offset = 0x4, fixed_abs, tag = 'smem constant byte address 0x4 - core index']
  #allocation1 [shape = 'u32[144,128]{1,0:T(1,128)}', space=vmem, size = 0x12000, scoped, tag = 'internal scratch']
  %s0 = inlined_call_operand.vmem [shape: bf16[4,50,1000], index: 0, kind: input, shape index: {}]
  %s1 = inlined_call_operand.vmem [shape: bf16[1000,128], index: 1, kind: input, shape index: {}]
  %s2 = inlined_call_operand.vmem [shape: f32[1,128], index: 2, kind: input, shape index: {}]
  %s3 = inlined_call_operand.vmem [shape: bf16[50,128], index: 3, kind: output, shape index: {}]
  %s4 = sld [smem:[#allocation0]]
  $region22: #{hebbcnn_forward.4} parent=0
    _
  %s6 = ssub.s32 1, %s4
  %s7 = scalar_select 0, %s6, %s4
  // Predicated region
  $region2: #{hebbcnn_forward.4} parent=0 // pred_check
    _
  $region3: #{hebbcnn_forward.4} parent=0 // pred_check_branch
    %9 = sbr.rel (0) target = $region5
  $region4: #{hebbcnn_forward.4} parent=0 // pred_region
    _
  $region5: #{hebbcnn_forward.4} parent=0 // pred_fallthru
    _
  // Predicated region
  $region6: #{hebbcnn_forward.4} parent=0 // pred_check
    _
  $region7: #{hebbcnn_forward.4} parent=0 // pred_check_branch
    %11 = sbr.rel (0) target = $region9
  $region8: #{hebbcnn_forward.4} parent=0 // pred_region
    _
  $region9: #{hebbcnn_forward.4} parent=0 // pred_fallthru
    _
  // Predicated region
  $region10: #{hebbcnn_forward.4} parent=0 // pred_check
    _
  $region11: #{hebbcnn_forward.4} parent=0 // pred_check_branch
    %13 = sbr.rel (0) target = $region13
  $region12: #{hebbcnn_forward.4} parent=0 // pred_region
    _
  $region13: #{hebbcnn_forward.4} parent=0 // pred_fallthru
    _
  %v15 = vld [vmem:[%s1] sm:$0xf]
  %v16 = vld [vmem:[%s1 + $0x4] sm:$0xf]
  %v17 = vld [vmem:[%s1 + $0x8] sm:$0xf]
  %v18 = vld [vmem:[%s1 + $0xc] sm:$0xf]
  %v19 = vld [vmem:[%s1 + $0x10] sm:$0xf]
  %v20 = vld [vmem:[%s1 + $0x14] sm:$0xf]
  %v21 = vld [vmem:[%s1 + $0x18] sm:$0xf]
  %v22 = vld [vmem:[%s1 + $0x1c] sm:$0xf]
  %v23 = vld [vmem:[%s1 + $0x20] sm:$0xf]
  %v24 = vld [vmem:[%s1 + $0x24] sm:$0xf]
  %v25 = vld [vmem:[%s1 + $0x28] sm:$0xf]
  %v26 = vld [vmem:[%s1 + $0x2c] sm:$0xf]
  %v27 = vld [vmem:[%s1 + $0x30] sm:$0xf]
  %v28 = vld [vmem:[%s1 + $0x34] sm:$0xf]
  %v29 = vld [vmem:[%s1 + $0x38] sm:$0xf]
  %v30 = vld [vmem:[%s1 + $0x3c] sm:$0xf]
  %v31 = vld [vmem:[%s1 + $0x40] sm:$0xf]
  %v32 = vld [vmem:[%s1 + $0x44] sm:$0xf]
  %v33 = vld [vmem:[%s1 + $0x48] sm:$0xf]
  %v34 = vld [vmem:[%s1 + $0x4c] sm:$0xf]
  %v35 = vld [vmem:[%s1 + $0x50] sm:$0xf]
  %v36 = vld [vmem:[%s1 + $0x54] sm:$0xf]
  %v37 = vld [vmem:[%s1 + $0x58] sm:$0xf]
  %v38 = vld [vmem:[%s1 + $0x5c] sm:$0xf]
  %v39 = vld [vmem:[%s1 + $0x60] sm:$0xf]
  %v40 = vld [vmem:[%s1 + $0x64] sm:$0xf]
  %v41 = vld [vmem:[%s1 + $0x68] sm:$0xf]
  %v42 = vld [vmem:[%s1 + $0x6c] sm:$0xf]
  %v43 = vld [vmem:[%s1 + $0x70] sm:$0xf]
  %v44 = vld [vmem:[%s1 + $0x74] sm:$0xf]
  %v45 = vld [vmem:[%s1 + $0x78] sm:$0xf]
  %v46 = vld [vmem:[%s1 + $0x7c] sm:$0xf]
  %v47 = vld [vmem:[%s1 + $0x80] sm:$0xf]
  %v48 = vld [vmem:[%s1 + $0x84] sm:$0xf]
  %v49 = vld [vmem:[%s1 + $0x88] sm:$0xf]
  %v50 = vld [vmem:[%s1 + $0x8c] sm:$0xf]
  %v51 = vld [vmem:[%s1 + $0x90] sm:$0xf]
  %v52 = vld [vmem:[%s1 + $0x94] sm:$0xf]
  %v53 = vld [vmem:[%s1 + $0x98] sm:$0xf]
  %v54 = vld [vmem:[%s1 + $0x9c] sm:$0xf]
  %v55 = vld [vmem:[%s1 + $0xa0] sm:$0xf]
  %v56 = vld [vmem:[%s1 + $0xa4] sm:$0xf]
  %v57 = vld [vmem:[%s1 + $0xa8] sm:$0xf]
  %v58 = vld [vmem:[%s1 + $0xac] sm:$0xf]
  %v59 = vld [vmem:[%s1 + $0xb0] sm:$0xf]
  %v60 = vld [vmem:[%s1 + $0xb4] sm:$0xf]
  %v61 = vld [vmem:[%s1 + $0xb8] sm:$0xf]
  %v62 = vld [vmem:[%s1 + $0xbc] sm:$0xf]
  %v63 = vld [vmem:[%s1 + $0xc0] sm:$0xf]
  %v64 = vld [vmem:[%s1 + $0xc4] sm:$0xf]
  %v65 = vld [vmem:[%s1 + $0xc8] sm:$0xf]
  %v66 = vld [vmem:[%s1 + $0xcc] sm:$0xf]
  %v67 = vld [vmem:[%s1 + $0xd0] sm:$0xf]
  %v68 = vld [vmem:[%s1 + $0xd4] sm:$0xf]
  %v69 = vld [vmem:[%s1 + $0xd8] sm:$0xf]
  %v70 = vld [vmem:[%s1 + $0xdc] sm:$0xf]
  %v71 = vld [vmem:[%s1 + $0xe0] sm:$0xf]
  %v72 = vld [vmem:[%s1 + $0xe4] sm:$0xf]
  %v73 = vld [vmem:[%s1 + $0xe8] sm:$0xf]
  %v74 = vld [vmem:[%s1 + $0xec] sm:$0xf]
  %v75 = vld [vmem:[%s1 + $0xf0] sm:$0xf]
  %v76 = vld [vmem:[%s1 + $0xf4] sm:$0xf]
  %v77 = vld [vmem:[%s1 + $0xf8] sm:$0xf]
  %v78 = vld [vmem:[%s1 + $0xfc] sm:$0xf]
  %v79 = vld [vmem:[%s1 + $0x100] sm:$0xf]
  %v80 = vld [vmem:[%s1 + $0x104] sm:$0xf]
  %v81 = vld [vmem:[%s1 + $0x108] sm:$0xf]
  %v82 = vld [vmem:[%s1 + $0x10c] sm:$0xf]
  %v83 = vld [vmem:[%s1 + $0x110] sm:$0xf]
  %v84 = vld [vmem:[%s1 + $0x114] sm:$0xf]
  %v85 = vld [vmem:[%s1 + $0x118] sm:$0xf]
  %v86 = vld [vmem:[%s1 + $0x11c] sm:$0xf]
  %v87 = vld [vmem:[%s1 + $0x120] sm:$0xf]
  %v88 = vld [vmem:[%s1 + $0x124] sm:$0xf]
  %v89 = vld [vmem:[%s1 + $0x128] sm:$0xf]
  %v90 = vld [vmem:[%s1 + $0x12c] sm:$0xf]
  %v91 = vld [vmem:[%s1 + $0x130] sm:$0xf]
  %v92 = vld [vmem:[%s1 + $0x134] sm:$0xf]
  %v93 = vld [vmem:[%s1 + $0x138] sm:$0xf]
  %v94 = vld [vmem:[%s1 + $0x13c] sm:$0xf]
  %v95 = vld [vmem:[%s1 + $0x140] sm:$0xf]
  %v96 = vld [vmem:[%s1 + $0x144] sm:$0xf]
  %v97 = vld [vmem:[%s1 + $0x148] sm:$0xf]
  %v98 = vld [vmem:[%s1 + $0x14c] sm:$0xf]
  %v99 = vld [vmem:[%s1 + $0x150] sm:$0xf]
  %v100 = vld [vmem:[%s1 + $0x154] sm:$0xf]
  %v101 = vld [vmem:[%s1 + $0x158] sm:$0xf]
  %v102 = vld [vmem:[%s1 + $0x15c] sm:$0xf]
  %v103 = vld [vmem:[%s1 + $0x160] sm:$0xf]
  %v104 = vld [vmem:[%s1 + $0x164] sm:$0xf]
  %v105 = vld [vmem:[%s1 + $0x168] sm:$0xf]
  %v106 = vld [vmem:[%s1 + $0x16c] sm:$0xf]
  %v107 = vld [vmem:[%s1 + $0x170] sm:$0xf]
  %v108 = vld [vmem:[%s1 + $0x174] sm:$0xf]
  %v109 = vld [vmem:[%s1 + $0x178] sm:$0xf]
  %v110 = vld [vmem:[%s1 + $0x17c] sm:$0xf]
  %v111 = vld [vmem:[%s1 + $0x180] sm:$0xf]
  %v112 = vld [vmem:[%s1 + $0x184] sm:$0xf]
  %v113 = vld [vmem:[%s1 + $0x188] sm:$0xf]
  %v114 = vld [vmem:[%s1 + $0x18c] sm:$0xf]
  %v115 = vld [vmem:[%s1 + $0x190] sm:$0xf]
  %v116 = vld [vmem:[%s1 + $0x194] sm:$0xf]
  %v117 = vld [vmem:[%s1 + $0x198] sm:$0xf]
  %v118 = vld [vmem:[%s1 + $0x19c] sm:$0xf]
  %v119 = vld [vmem:[%s1 + $0x1a0] sm:$0xf]
  %v120 = vld [vmem:[%s1 + $0x1a4] sm:$0xf]
  %v121 = vld [vmem:[%s1 + $0x1a8] sm:$0xf]
  %v122 = vld [vmem:[%s1 + $0x1ac] sm:$0xf]
  %v123 = vld [vmem:[%s1 + $0x1b0] sm:$0xf]
  %v124 = vld [vmem:[%s1 + $0x1b4] sm:$0xf]
  %v125 = vld [vmem:[%s1 + $0x1b8] sm:$0xf]
  %v126 = vld [vmem:[%s1 + $0x1bc] sm:$0xf]
  %v127 = vld [vmem:[%s1 + $0x1c0] sm:$0xf]
  %v128 = vld [vmem:[%s1 + $0x1c4] sm:$0xf]
  %v129 = vld [vmem:[%s1 + $0x1c8] sm:$0xf]
  %v130 = vld [vmem:[%s1 + $0x1cc] sm:$0xf]
  %v131 = vld [vmem:[%s1 + $0x1d0] sm:$0xf]
  %v132 = vld [vmem:[%s1 + $0x1d4] sm:$0xf]
  %v133 = vld [vmem:[%s1 + $0x1d8] sm:$0xf]
  %v134 = vld [vmem:[%s1 + $0x1dc] sm:$0xf]
  %v135 = vld [vmem:[%s1 + $0x1e0] sm:$0xf]
  %v136 = vld [vmem:[%s1 + $0x1e4] sm:$0xf]
  %v137 = vld [vmem:[%s1 + $0x1e8] sm:$0xf]
  %v138 = vld [vmem:[%s1 + $0x1ec] sm:$0xf]
  %v139 = vld [vmem:[%s1 + $0x1f0] sm:$0xf]
  %v140 = vld [vmem:[%s0] sm:$0xff]
  %v141 = vld [vmem:[%s0 + $0x8] sm:$0xff]
  %v142 = vld [vmem:[%s0 + $0x10] sm:$0xff]
  %v143 = vld [vmem:[%s0 + $0x18] sm:$0xff]
  %v144 = vld [vmem:[%s0 + $0x20] sm:$0xff]
  %v145 = vld [vmem:[%s0 + $0x28] sm:$0xff]
  %v146 = vld [vmem:[%s0 + $0x30] sm:$0xff]
  %v147 = vld [vmem:[%s0 + $0x38] sm:$0xff]
  %v148 = vld [vmem:[%s0 + $0x40] sm:$0xff]
  %v149 = vld [vmem:[%s0 + $0x48] sm:$0xff]
  %v150 = vld [vmem:[%s0 + $0x50] sm:$0xff]
  %v151 = vld [vmem:[%s0 + $0x58] sm:$0xff]
  %v152 = vld [vmem:[%s0 + $0x60] sm:$0xff]
  %v153 = vld [vmem:[%s0 + $0x68] sm:$0xff]
  %v154 = vld [vmem:[%s0 + $0x70] sm:$0xff]
  %v155 = vld [vmem:[%s0 + $0x78] sm:$0xff]
  %v156 = vld [vmem:[%s0 + $0x80] sm:$0xff]
  %v157 = vld [vmem:[%s0 + $0x88] sm:$0xff]
  %v158 = vld [vmem:[%s0 + $0x90] sm:$0xff]
  %v159 = vld [vmem:[%s0 + $0x98] sm:$0xff]
  %v160 = vld [vmem:[%s0 + $0xa0] sm:$0xff]
  %v161 = vld [vmem:[%s0 + $0xa8] sm:$0xff]
  %v162 = vld [vmem:[%s0 + $0xb0] sm:$0xff]
  %v163 = vld [vmem:[%s0 + $0xb8] sm:$0xff]
  %v164 = vld [vmem:[%s0 + $0xc0] sm:$0x11]
  %v165 = vld [vmem:[%s0 + $0xc8] sm:$0x11]
  %v166 = vld [vmem:[%s0 + $0xd0] sm:$0x11]
  %v167 = vld [vmem:[%s0 + $0xd8] sm:$0x11]
  %v196 = vunpack.c.l.b16 %v140
  %v197 = vunpack.c.h.b16 %v140
  %v198 = vunpack.c.l.b16 %v141
  %v199 = vunpack.c.h.b16 %v141
  %v200 = vunpack.c.l.b16 %v142
  %v201 = vunpack.c.h.b16 %v142
  %v202 = vunpack.c.l.b16 %v143
  %v203 = vunpack.c.h.b16 %v143
  %v204 = vunpack.c.l.b16 %v144
  %v205 = vunpack.c.h.b16 %v144
  %v206 = vunpack.c.l.b16 %v145
  %v207 = vunpack.c.h.b16 %v145
  %v208 = vunpack.c.l.b16 %v146
  %v209 = vunpack.c.h.b16 %v146
  %v210 = vunpack.c.l.b16 %v147
  %v211 = vunpack.c.h.b16 %v147
  %v212 = vunpack.c.l.b16 %v148
  %v213 = vunpack.c.h.b16 %v148
  %v214 = vunpack.c.l.b16 %v149
  %v215 = vunpack.c.h.b16 %v149
  %v216 = vunpack.c.l.b16 %v150
  %v217 = vunpack.c.h.b16 %v150
  %v218 = vunpack.c.l.b16 %v151
  %v219 = vunpack.c.h.b16 %v151
  %v220 = vunpack.c.l.b16 %v152
  %v221 = vunpack.c.h.b16 %v152
  %v222 = vunpack.c.l.b16 %v153
  %v223 = vunpack.c.h.b16 %v153
  %v224 = vunpack.c.l.b16 %v154
  %v225 = vunpack.c.h.b16 %v154
  %v226 = vunpack.c.l.b16 %v155
  %v227 = vunpack.c.h.b16 %v155
  %v228 = vunpack.c.l.b16 %v156
  %v229 = vunpack.c.h.b16 %v156
  %v230 = vunpack.c.l.b16 %v157
  %v231 = vunpack.c.h.b16 %v157
  %v232 = vunpack.c.l.b16 %v158
  %v233 = vunpack.c.h.b16 %v158
  %v234 = vunpack.c.l.b16 %v159
  %v235 = vunpack.c.h.b16 %v159
  %v236 = vunpack.c.l.b16 %v160
  %v237 = vunpack.c.h.b16 %v160
  %v238 = vunpack.c.l.b16 %v161
  %v239 = vunpack.c.h.b16 %v161
  %v240 = vunpack.c.l.b16 %v162
  %v241 = vunpack.c.h.b16 %v162
  %v242 = vunpack.c.l.b16 %v163
  %v243 = vunpack.c.h.b16 %v163
  %v244 = vunpack.c.l.b16 %v164
  %v245 = vunpack.c.h.b16 %v164
  %v246 = vunpack.c.l.b16 %v165
  %v247 = vunpack.c.h.b16 %v165
  %v248 = vunpack.c.l.b16 %v166
  %v249 = vunpack.c.h.b16 %v166
  %v250 = vunpack.c.l.b16 %v167
  %v251 = vunpack.c.h.b16 %v167
  %v252 = vpack.c.b16 %v204, %v196
  %v253 = vpack.c.b16 %v205, %v197
  %v254 = vpack.c.b16 %v206, %v198
  %v255 = vpack.c.b16 %v207, %v199
  %v256 = vpack.c.b16 %v208, %v200
  %v257 = vpack.c.b16 %v209, %v201
  %v258 = vpack.c.b16 %v210, %v202
  %v259 = vpack.c.b16 %v211, %v203
  %v260 = vpack.c.b16 %v220, %v212
  %v261 = vpack.c.b16 %v221, %v213
  %v262 = vpack.c.b16 %v222, %v214
  %v263 = vpack.c.b16 %v223, %v215
  %v264 = vpack.c.b16 %v224, %v216
  %v265 = vpack.c.b16 %v225, %v217
  %v266 = vpack.c.b16 %v226, %v218
  %v267 = vpack.c.b16 %v227, %v219
  %v268 = vpack.c.b16 %v236, %v228
  %v269 = vpack.c.b16 %v237, %v229
  %v270 = vpack.c.b16 %v238, %v230
  %v271 = vpack.c.b16 %v239, %v231
  %v272 = vpack.c.b16 %v240, %v232
  %v273 = vpack.c.b16 %v241, %v233
  %v274 = vpack.c.b16 %v242, %v234
  %v275 = vpack.c.b16 %v243, %v235
  %v276 = vpack.c.b16 %v244, %v244
  %v277 = vpack.c.b16 %v245, %v245
  %v278 = vpack.c.b16 %v246, %v246
  %v279 = vpack.c.b16 %v247, %v247
  %v280 = vpack.c.b16 %v248, %v248
  %v281 = vpack.c.b16 %v249, %v249
  %v282 = vpack.c.b16 %v250, %v250
  %v283 = vpack.c.b16 %v251, %v251
  %v437 = vunpack.c.l.b16 %v15
  %v438 = vunpack.c.l.b16 %v16
  %v439 = vunpack.c.l.b16 %v17
  %v440 = vunpack.c.l.b16 %v18
  %v441 = vunpack.c.l.b16 %v19
  %v442 = vunpack.c.l.b16 %v20
  %v443 = vunpack.c.l.b16 %v21
  %v444 = vunpack.c.l.b16 %v22
  %v445 = vunpack.c.l.b16 %v23
  %v446 = vunpack.c.l.b16 %v24
  %v447 = vunpack.c.l.b16 %v25
  %v448 = vunpack.c.l.b16 %v26
  %v449 = vunpack.c.l.b16 %v27
  %v450 = vunpack.c.l.b16 %v28
  %v451 = vunpack.c.l.b16 %v29
  %v452 = vunpack.c.l.b16 %v30
  %v453 = vunpack.c.l.b16 %v31
  %v454 = vunpack.c.l.b16 %v32
  %v455 = vunpack.c.l.b16 %v33
  %v456 = vunpack.c.l.b16 %v34
  %v457 = vunpack.c.l.b16 %v35
  %v458 = vunpack.c.l.b16 %v36
  %v459 = vunpack.c.l.b16 %v37
  %v460 = vunpack.c.l.b16 %v38
  %v461 = vunpack.c.l.b16 %v39
  %v462 = vunpack.c.l.b16 %v40
  %v463 = vunpack.c.l.b16 %v41
  %v464 = vunpack.c.l.b16 %v42
  %v465 = vunpack.c.l.b16 %v43
  %v466 = vunpack.c.l.b16 %v44
  %v467 = vunpack.c.l.b16 %v45
  %v468 = vunpack.c.l.b16 %v46
  %v469 = vunpack.c.l.b16 %v47
  %v470 = vunpack.c.l.b16 %v48
  %v471 = vunpack.c.l.b16 %v49
  %v472 = vunpack.c.l.b16 %v50
  %v473 = vunpack.c.l.b16 %v51
  %v474 = vunpack.c.l.b16 %v52
  %v475 = vunpack.c.l.b16 %v53
  %v476 = vunpack.c.l.b16 %v54
  %v477 = vunpack.c.l.b16 %v55
  %v478 = vunpack.c.l.b16 %v56
  %v479 = vunpack.c.l.b16 %v57
  %v480 = vunpack.c.l.b16 %v58
  %v481 = vunpack.c.l.b16 %v59
  %v482 = vunpack.c.l.b16 %v60
  %v483 = vunpack.c.l.b16 %v61
  %v484 = vunpack.c.l.b16 %v62
  %v485 = vunpack.c.l.b16 %v63
  %v486 = vunpack.c.l.b16 %v64
  %v487 = vunpack.c.l.b16 %v65
  %v488 = vunpack.c.l.b16 %v66
  %v489 = vunpack.c.l.b16 %v67
  %v490 = vunpack.c.l.b16 %v68
  %v491 = vunpack.c.l.b16 %v69
  %v492 = vunpack.c.l.b16 %v70
  %v493 = vunpack.c.l.b16 %v71
  %v494 = vunpack.c.l.b16 %v72
  %v495 = vunpack.c.l.b16 %v73
  %v496 = vunpack.c.l.b16 %v74
  %v497 = vunpack.c.l.b16 %v75
  %v498 = vunpack.c.l.b16 %v76
  %v499 = vunpack.c.l.b16 %v77
  %v500 = vunpack.c.l.b16 %v78
  %v501 = vunpack.c.l.b16 %v79
  %v502 = vunpack.c.l.b16 %v80
  %v503 = vunpack.c.l.b16 %v81
  %v504 = vunpack.c.l.b16 %v82
  %v505 = vunpack.c.l.b16 %v83
  %v506 = vunpack.c.l.b16 %v84
  %v507 = vunpack.c.l.b16 %v85
  %v508 = vunpack.c.l.b16 %v86
  %v509 = vunpack.c.l.b16 %v87
  %v510 = vunpack.c.l.b16 %v88
  %v511 = vunpack.c.l.b16 %v89
  %v512 = vunpack.c.l.b16 %v90
  %v513 = vunpack.c.l.b16 %v91
  %v514 = vunpack.c.l.b16 %v92
  %v515 = vunpack.c.l.b16 %v93
  %v516 = vunpack.c.l.b16 %v94
  %v517 = vunpack.c.l.b16 %v95
  %v518 = vunpack.c.l.b16 %v96
  %v519 = vunpack.c.l.b16 %v97
  %v520 = vunpack.c.l.b16 %v98
  %v521 = vunpack.c.l.b16 %v99
  %v522 = vunpack.c.l.b16 %v100
  %v523 = vunpack.c.l.b16 %v101
  %v524 = vunpack.c.l.b16 %v102
  %v525 = vunpack.c.l.b16 %v103
  %v526 = vunpack.c.l.b16 %v104
  %v527 = vunpack.c.l.b16 %v105
  %v528 = vunpack.c.l.b16 %v106
  %v529 = vunpack.c.l.b16 %v107
  %v530 = vunpack.c.l.b16 %v108
  %v531 = vunpack.c.l.b16 %v109
  %v532 = vunpack.c.l.b16 %v110
  %v533 = vunpack.c.l.b16 %v111
  %v534 = vunpack.c.l.b16 %v112
  %v535 = vunpack.c.l.b16 %v113
  %v536 = vunpack.c.l.b16 %v114
  %v537 = vunpack.c.l.b16 %v115
  %v538 = vunpack.c.l.b16 %v116
  %v539 = vunpack.c.l.b16 %v117
  %v540 = vunpack.c.l.b16 %v118
  %v541 = vunpack.c.l.b16 %v119
  %v542 = vunpack.c.l.b16 %v120
  %v543 = vunpack.c.l.b16 %v121
  %v544 = vunpack.c.l.b16 %v122
  %v545 = vunpack.c.l.b16 %v123
  %v546 = vunpack.c.l.b16 %v124
  %v547 = vunpack.c.l.b16 %v125
  %v548 = vunpack.c.l.b16 %v126
  %v549 = vunpack.c.l.b16 %v127
  %v550 = vunpack.c.l.b16 %v128
  %v551 = vunpack.c.l.b16 %v129
  %v552 = vunpack.c.l.b16 %v130
  %v553 = vunpack.c.l.b16 %v131
  %v554 = vunpack.c.l.b16 %v132
  %v555 = vunpack.c.l.b16 %v133
  %v556 = vunpack.c.l.b16 %v134
  %v557 = vunpack.c.l.b16 %v135
  %v558 = vunpack.c.l.b16 %v136
  %v559 = vunpack.c.l.b16 %v137
  %v560 = vunpack.c.l.b16 %v138
  %v561 = vunpack.c.l.b16 %v139
  %v562 = vpack.c.b16 %v438, %v437
  %v563 = vpack.c.b16 %v440, %v439
  %v564 = vpack.c.b16 %v442, %v441
  %v565 = vpack.c.b16 %v444, %v443
  %v566 = vpack.c.b16 %v446, %v445
  %v567 = vpack.c.b16 %v448, %v447
  %v568 = vpack.c.b16 %v450, %v449
  %v569 = vpack.c.b16 %v452, %v451
  %v570 = vpack.c.b16 %v454, %v453
  %v571 = vpack.c.b16 %v456, %v455
  %v572 = vpack.c.b16 %v458, %v457
  %v573 = vpack.c.b16 %v460, %v459
  %v574 = vpack.c.b16 %v462, %v461
  %v575 = vpack.c.b16 %v464, %v463
  %v576 = vpack.c.b16 %v466, %v465
  %v577 = vpack.c.b16 %v468, %v467
  %v578 = vpack.c.b16 %v470, %v469
  %v579 = vpack.c.b16 %v472, %v471
  %v580 = vpack.c.b16 %v474, %v473
  %v581 = vpack.c.b16 %v476, %v475
  %v582 = vpack.c.b16 %v478, %v477
  %v583 = vpack.c.b16 %v480, %v479
  %v584 = vpack.c.b16 %v482, %v481
  %v585 = vpack.c.b16 %v484, %v483
  %v586 = vpack.c.b16 %v486, %v485
  %v587 = vpack.c.b16 %v488, %v487
  %v588 = vpack.c.b16 %v490, %v489
  %v589 = vpack.c.b16 %v492, %v491
  %v590 = vpack.c.b16 %v494, %v493
  %v591 = vpack.c.b16 %v496, %v495
  %v592 = vpack.c.b16 %v498, %v497
  %v593 = vpack.c.b16 %v500, %v499
  %v594 = vpack.c.b16 %v502, %v501
  %v595 = vpack.c.b16 %v504, %v503
  %v596 = vpack.c.b16 %v506, %v505
  %v597 = vpack.c.b16 %v508, %v507
  %v598 = vpack.c.b16 %v510, %v509
  %v599 = vpack.c.b16 %v512, %v511
  %v600 = vpack.c.b16 %v514, %v513
  %v601 = vpack.c.b16 %v516, %v515
  %v602 = vpack.c.b16 %v518, %v517
  %v603 = vpack.c.b16 %v520, %v519
  %v604 = vpack.c.b16 %v522, %v521
  %v605 = vpack.c.b16 %v524, %v523
  %v606 = vpack.c.b16 %v526, %v525
  %v607 = vpack.c.b16 %v528, %v527
  %v608 = vpack.c.b16 %v530, %v529
  %v609 = vpack.c.b16 %v532, %v531
  %v610 = vpack.c.b16 %v534, %v533
  %v611 = vpack.c.b16 %v536, %v535
  %v612 = vpack.c.b16 %v538, %v537
  %v613 = vpack.c.b16 %v540, %v539
  %v614 = vpack.c.b16 %v542, %v541
  %v615 = vpack.c.b16 %v544, %v543
  %v616 = vpack.c.b16 %v546, %v545
  %v617 = vpack.c.b16 %v548, %v547
  %v618 = vpack.c.b16 %v550, %v549
  %v619 = vpack.c.b16 %v552, %v551
  %v620 = vpack.c.b16 %v554, %v553
  %v621 = vpack.c.b16 %v556, %v555
  %v622 = vpack.c.b16 %v558, %v557
  %v623 = vpack.c.b16 %v560, %v559
  %v624 = vpack.c.b16 %v561, %v561
  %vm687 = vcmask 850944
  %v689 = vsel %vm687, %v259, 0
  %v692 = vsel %vm687, %v267, 0
  %v695 = vsel %vm687, %v275, 0
  %v698 = vsel %vm687, %v283, 0
  %vm700 = vcmask 1043456
  %v702 = vsel %vm700, %v624, 0
  %704 = vmatprep.subr.bf16.mxu0 0
  %705 = vmatpush1.bf16.msra.mxu0 %v562
  %706 = vmatprep.subr.bf16.mxu0 0
  %707 = vmatpush1.bf16.msra.mxu0 %v563
  %708 = vmatprep.subr.bf16.mxu0 0
  %709 = vmatpush1.bf16.msra.mxu0 %v564
  %710 = vmatprep.subr.bf16.mxu0 0
  %711 = vmatpush1.bf16.msra.mxu0 %v565
  %712 = vmatprep.subr.bf16.mxu0 0
  %713 = vmatpush1.bf16.msra.mxu0 %v566
  %714 = vmatprep.subr.bf16.mxu0 0
  %715 = vmatpush1.bf16.msra.mxu0 %v567
  %716 = vmatprep.subr.bf16.mxu0 0
  %717 = vmatpush1.bf16.msra.mxu0 %v568
  %718 = vmatprep.subr.bf16.mxu0 0
  %719 = vmatpush1.bf16.msra.mxu0 %v569
  %720 = vmatprep.subr.bf16.mxu0 0
  %721 = vmatpush1.bf16.msra.mxu0 %v570
  %722 = vmatprep.subr.bf16.mxu0 0
  %723 = vmatpush1.bf16.msra.mxu0 %v571
  %724 = vmatprep.subr.bf16.mxu0 0
  %725 = vmatpush1.bf16.msra.mxu0 %v572
  %726 = vmatprep.subr.bf16.mxu0 0
  %727 = vmatpush1.bf16.msra.mxu0 %v573
  %728 = vmatprep.subr.bf16.mxu0 0
  %729 = vmatpush1.bf16.msra.mxu0 %v574
  %730 = vmatprep.subr.bf16.mxu0 0
  %731 = vmatpush1.bf16.msra.mxu0 %v575
  %732 = vmatprep.subr.bf16.mxu0 0
  %733 = vmatpush1.bf16.msra.mxu0 %v576
  %734 = vmatprep.subr.bf16.mxu0 0
  %735 = vmatpush1.bf16.msra.mxu0 %v577
  %736 = vmatprep.mubr.bf16.mxu0 %v253
  %737 = vmatmul.mubr.bf16.gmra.mrb[0].mxu0 %v252
  %v738 = vpop.f32.mrb[0].mxu0
  %v739 = vadd.f32 0.0, %v738
  %v740 = vpop.f32.mrb[0].mxu0
  %v741 = vpop.f32.mrb[0].mxu0
  %v742 = vadd.f32 0.0, %v741
  %v743 = vpop.f32.mrb[0].mxu0
  %744 = vmatprep.mubr.bf16.mxu0 %v261
  %745 = vmatmul.mubr.bf16.gmra.mrb[0].mxu0 %v260
  %v746 = vpop.f32.mrb[0].mxu0
  %v747 = vadd.f32 0.0, %v746
  %v748 = vpop.f32.mrb[0].mxu0
  %v749 = vpop.f32.mrb[0].mxu0
  %v750 = vadd.f32 0.0, %v749
  %v751 = vpop.f32.mrb[0].mxu0
  %752 = vmatprep.mubr.bf16.mxu0 %v269
  %753 = vmatmul.mubr.bf16.gmra.mrb[0].mxu0 %v268
  %v754 = vpop.f32.mrb[0].mxu0
  %v755 = vadd.f32 0.0, %v754
  %v756 = vpop.f32.mrb[0].mxu0
  %v757 = vpop.f32.mrb[0].mxu0
  %v758 = vadd.f32 0.0, %v757
  %v759 = vpop.f32.mrb[0].mxu0
  %760 = vmatprep.mubr.bf16.mxu0 %v277
  %761 = vmatmul.mubr.bf16.gmra.mrb[0].mxu0 %v276
  %v762 = vpop.f32.mrb[0].mxu0
  %v763 = vadd.f32 0.0, %v762
  %v764 = vpop.f32.mrb[0].mxu0
  %v765 = vpop.f32.mrb[0].mxu0
  %v766 = vpop.f32.mrb[0].mxu0
  %767 = vdwg.mxu0
  %768 = vmatprep.subr.bf16.mxu0 0
  %769 = vmatpush1.bf16.msra.mxu0 %v578
  %770 = vmatprep.subr.bf16.mxu0 0
  %771 = vmatpush1.bf16.msra.mxu0 %v579
  %772 = vmatprep.subr.bf16.mxu0 0
  %773 = vmatpush1.bf16.msra.mxu0 %v580
  %774 = vmatprep.subr.bf16.mxu0 0
  %775 = vmatpush1.bf16.msra.mxu0 %v581
  %776 = vmatprep.subr.bf16.mxu0 0
  %777 = vmatpush1.bf16.msra.mxu0 %v582
  %778 = vmatprep.subr.bf16.mxu0 0
  %779 = vmatpush1.bf16.msra.mxu0 %v583
  %780 = vmatprep.subr.bf16.mxu0 0
  %781 = vmatpush1.bf16.msra.mxu0 %v584
  %782 = vmatprep.subr.bf16.mxu0 0
  %783 = vmatpush1.bf16.msra.mxu0 %v585
  %784 = vmatprep.subr.bf16.mxu0 0
  %785 = vmatpush1.bf16.msra.mxu0 %v586
  %786 = vmatprep.subr.bf16.mxu0 0
  %787 = vmatpush1.bf16.msra.mxu0 %v587
  %788 = vmatprep.subr.bf16.mxu0 0
  %789 = vmatpush1.bf16.msra.mxu0 %v588
  %790 = vmatprep.subr.bf16.mxu0 0
  %791 = vmatpush1.bf16.msra.mxu0 %v589
  %792 = vmatprep.subr.bf16.mxu0 0
  %793 = vmatpush1.bf16.msra.mxu0 %v590
  %794 = vmatprep.subr.bf16.mxu0 0
  %795 = vmatpush1.bf16.msra.mxu0 %v591
  %796 = vmatprep.subr.bf16.mxu0 0
  %797 = vmatpush1.bf16.msra.mxu0 %v592
  %798 = vmatprep.subr.bf16.mxu0 0
  %799 = vmatpush1.bf16.msra.mxu0 %v593
  %800 = vmatprep.mubr.bf16.mxu0 %v255
  %801 = vmatmul.mubr.bf16.gmra.mrb[0].mxu0 %v254
  %v802 = vpop.f32.mrb[0].mxu0
  %v803 = vadd.f32 %v739, %v802
  %v804 = vpop.f32.mrb[0].mxu0
  %v805 = vpop.f32.mrb[0].mxu0
  %v806 = vadd.f32 %v742, %v805
  %v807 = vpop.f32.mrb[0].mxu0
  %808 = vmatprep.mubr.bf16.mxu0 %v263
  %809 = vmatmul.mubr.bf16.gmra.mrb[0].mxu0 %v262
  %v810 = vpop.f32.mrb[0].mxu0
  %v811 = vadd.f32 %v747, %v810
  %v812 = vpop.f32.mrb[0].mxu0
  %v813 = vpop.f32.mrb[0].mxu0
  %v814 = vadd.f32 %v750, %v813
  %v815 = vpop.f32.mrb[0].mxu0
  %816 = vmatprep.mubr.bf16.mxu0 %v271
  %817 = vmatmul.mubr.bf16.gmra.mrb[0].mxu0 %v270
  %v818 = vpop.f32.mrb[0].mxu0
  %v819 = vadd.f32 %v755, %v818
  %v820 = vpop.f32.mrb[0].mxu0
  %v821 = vpop.f32.mrb[0].mxu0
  %v822 = vadd.f32 %v758, %v821
  %v823 = vpop.f32.mrb[0].mxu0
  %824 = vmatprep.mubr.bf16.mxu0 %v279
  %825 = vmatmul.mubr.bf16.gmra.mrb[0].mxu0 %v278
  %v826 = vpop.f32.mrb[0].mxu0
  %v827 = vadd.f32 %v763, %v826
  %v828 = vpop.f32.mrb[0].mxu0
  %v829 = vpop.f32.mrb[0].mxu0
  %v830 = vpop.f32.mrb[0].mxu0
  %831 = vdwg.mxu0
  %832 = vmatprep.subr.bf16.mxu0 0
  %833 = vmatpush1.bf16.msra.mxu0 %v594
  %834 = vmatprep.subr.bf16.mxu0 0
  %835 = vmatpush1.bf16.msra.mxu0 %v595
  %836 = vmatprep.subr.bf16.mxu0 0
  %837 = vmatpush1.bf16.msra.mxu0 %v596
  %838 = vmatprep.subr.bf16.mxu0 0
  %839 = vmatpush1.bf16.msra.mxu0 %v597
  %840 = vmatprep.subr.bf16.mxu0 0
  %841 = vmatpush1.bf16.msra.mxu0 %v598
  %842 = vmatprep.subr.bf16.mxu0 0
  %843 = vmatpush1.bf16.msra.mxu0 %v599
  %844 = vmatprep.subr.bf16.mxu0 0
  %845 = vmatpush1.bf16.msra.mxu0 %v600
  %846 = vmatprep.subr.bf16.mxu0 0
  %847 = vmatpush1.bf16.msra.mxu0 %v601
  %848 = vmatprep.subr.bf16.mxu0 0
  %849 = vmatpush1.bf16.msra.mxu0 %v602
  %850 = vmatprep.subr.bf16.mxu0 0
  %851 = vmatpush1.bf16.msra.mxu0 %v603
  %852 = vmatprep.subr.bf16.mxu0 0
  %853 = vmatpush1.bf16.msra.mxu0 %v604
  %854 = vmatprep.subr.bf16.mxu0 0
  %855 = vmatpush1.bf16.msra.mxu0 %v605
  %856 = vmatprep.subr.bf16.mxu0 0
  %857 = vmatpush1.bf16.msra.mxu0 %v606
  %858 = vmatprep.subr.bf16.mxu0 0
  %859 = vmatpush1.bf16.msra.mxu0 %v607
  %860 = vmatprep.subr.bf16.mxu0 0
  %861 = vmatpush1.bf16.msra.mxu0 %v608
  %862 = vmatprep.subr.bf16.mxu0 0
  %863 = vmatpush1.bf16.msra.mxu0 %v609
  %864 = vmatprep.mubr.bf16.mxu0 %v257
  %865 = vmatmul.mubr.bf16.gmra.mrb[0].mxu0 %v256
  %v866 = vpop.f32.mrb[0].mxu0
  %v867 = vadd.f32 %v803, %v866
  %v868 = vpop.f32.mrb[0].mxu0
  %v869 = vpop.f32.mrb[0].mxu0
  %v870 = vadd.f32 %v806, %v869
  %v871 = vpop.f32.mrb[0].mxu0
  %872 = vmatprep.mubr.bf16.mxu0 %v265
  %873 = vmatmul.mubr.bf16.gmra.mrb[0].mxu0 %v264
  %v874 = vpop.f32.mrb[0].mxu0
  %v875 = vadd.f32 %v811, %v874
  %v876 = vpop.f32.mrb[0].mxu0
  %v877 = vpop.f32.mrb[0].mxu0
  %v878 = vadd.f32 %v814, %v877
  %v879 = vpop.f32.mrb[0].mxu0
  %880 = vmatprep.mubr.bf16.mxu0 %v273
  %881 = vmatmul.mubr.bf16.gmra.mrb[0].mxu0 %v272
  %v882 = vpop.f32.mrb[0].mxu0
  %v883 = vadd.f32 %v819, %v882
  %v884 = vpop.f32.mrb[0].mxu0
  %v885 = vpop.f32.mrb[0].mxu0
  %v886 = vadd.f32 %v822, %v885
  %v887 = vpop.f32.mrb[0].mxu0
  %888 = vmatprep.mubr.bf16.mxu0 %v281
  %889 = vmatmul.mubr.bf16.gmra.mrb[0].mxu0 %v280
  %v890 = vpop.f32.mrb[0].mxu0
  %v891 = vadd.f32 %v827, %v890
  %v892 = vpop.f32.mrb[0].mxu0
  %v893 = vpop.f32.mrb[0].mxu0
  %v894 = vpop.f32.mrb[0].mxu0
  %895 = vdwg.mxu0
  %896 = vmatprep.subr.bf16.mxu0 0
  %897 = vmatpush1.bf16.msra.mxu0 %v610
  %898 = vmatprep.subr.bf16.mxu0 0
  %899 = vmatpush1.bf16.msra.mxu0 %v611
  %900 = vmatprep.subr.bf16.mxu0 0
  %901 = vmatpush1.bf16.msra.mxu0 %v612
  %902 = vmatprep.subr.bf16.mxu0 0
  %903 = vmatpush1.bf16.msra.mxu0 %v613
  %904 = vmatprep.subr.bf16.mxu0 0
  %905 = vmatpush1.bf16.msra.mxu0 %v614
  %906 = vmatprep.subr.bf16.mxu0 0
  %907 = vmatpush1.bf16.msra.mxu0 %v615
  %908 = vmatprep.subr.bf16.mxu0 0
  %909 = vmatpush1.bf16.msra.mxu0 %v616
  %910 = vmatprep.subr.bf16.mxu0 0
  %911 = vmatpush1.bf16.msra.mxu0 %v617
  %912 = vmatprep.subr.bf16.mxu0 0
  %913 = vmatpush1.bf16.msra.mxu0 %v618
  %914 = vmatprep.subr.bf16.mxu0 0
  %915 = vmatpush1.bf16.msra.mxu0 %v619
  %916 = vmatprep.subr.bf16.mxu0 0
  %917 = vmatpush1.bf16.msra.mxu0 %v620
  %918 = vmatprep.subr.bf16.mxu0 0
  %919 = vmatpush1.bf16.msra.mxu0 %v621
  %920 = vmatprep.subr.bf16.mxu0 0
  %921 = vmatpush1.bf16.msra.mxu0 %v622
  %922 = vmatprep.subr.bf16.mxu0 0
  %923 = vmatpush1.bf16.msra.mxu0 %v623
  %924 = vmatprep.subr.bf16.mxu0 0
  %925 = vmatpush1.bf16.msra.mxu0 %v702
  %926 = vmatprep.subr.bf16.mxu0 0
  %927 = vmatpush1.bf16.msra.mxu0 0
  %928 = vmatprep.mubr.bf16.mxu0 %v689
  %929 = vmatmul.mubr.bf16.gmra.mrb[0].mxu0 %v258
  %v930 = vpop.f32.mrb[0].mxu0
  %v931 = vadd.f32 %v867, %v930
  %v932 = vpop.f32.mrb[0].mxu0
  %v933 = vpop.f32.mrb[0].mxu0
  %v934 = vadd.f32 %v870, %v933
  %v935 = vpop.f32.mrb[0].mxu0
  %936 = vmatprep.mubr.bf16.mxu0 %v692
  %937 = vmatmul.mubr.bf16.gmra.mrb[0].mxu0 %v266
  %v938 = vpop.f32.mrb[0].mxu0
  %v939 = vadd.f32 %v875, %v938
  %v940 = vpop.f32.mrb[0].mxu0
  %v941 = vpop.f32.mrb[0].mxu0
  %v942 = vadd.f32 %v878, %v941
  %v943 = vpop.f32.mrb[0].mxu0
  %944 = vmatprep.mubr.bf16.mxu0 %v695
  %945 = vmatmul.mubr.bf16.gmra.mrb[0].mxu0 %v274
  %v946 = vpop.f32.mrb[0].mxu0
  %v947 = vadd.f32 %v883, %v946
  %v948 = vpop.f32.mrb[0].mxu0
  %v949 = vpop.f32.mrb[0].mxu0
  %v950 = vadd.f32 %v886, %v949
  %v951 = vpop.f32.mrb[0].mxu0
  %952 = vmatprep.mubr.bf16.mxu0 %v698
  %953 = vmatmul.mubr.bf16.gmra.mrb[0].mxu0 %v282
  %v954 = vpop.f32.mrb[0].mxu0
  %v955 = vadd.f32 %v891, %v954
  %v956 = vpop.f32.mrb[0].mxu0
  %v957 = vpop.f32.mrb[0].mxu0
  %v958 = vpop.f32.mrb[0].mxu0
  %959 = vdwg.mxu0
  %s960 = scalar_lea.vmem %s0, 224
  %v961 = vld [vmem:[%s960] sm:$0xff]
  %v962 = vld [vmem:[%s960 + $0x8] sm:$0xff]
  %v963 = vld [vmem:[%s960 + $0x10] sm:$0xff]
  %v964 = vld [vmem:[%s960 + $0x18] sm:$0xff]
  %v965 = vld [vmem:[%s960 + $0x20] sm:$0xff]
  %v966 = vld [vmem:[%s960 + $0x28] sm:$0xff]
  %v967 = vld [vmem:[%s960 + $0x30] sm:$0xff]
  %v968 = vld [vmem:[%s960 + $0x38] sm:$0xff]
  %v969 = vld [vmem:[%s960 + $0x40] sm:$0xff]
  %v970 = vld [vmem:[%s960 + $0x48] sm:$0xff]
  %v971 = vld [vmem:[%s960 + $0x50] sm:$0xff]
  %v972 = vld [vmem:[%s960 + $0x58] sm:$0xff]
  %v973 = vld [vmem:[%s960 + $0x60] sm:$0xff]
  %v974 = vld [vmem:[%s960 + $0x68] sm:$0xff]
  %v975 = vld [vmem:[%s960 + $0x70] sm:$0xff]
  %v976 = vld [vmem:[%s960 + $0x78] sm:$0xff]
  %v977 = vld [vmem:[%s960 + $0x80] sm:$0xff]
  %v978 = vld [vmem:[%s960 + $0x88] sm:$0xff]
  %v979 = vld [vmem:[%s960 + $0x90] sm:$0xff]
  %v980 = vld [vmem:[%s960 + $0x98] sm:$0xff]
  %v981 = vld [vmem:[%s960 + $0xa0] sm:$0xff]
  %v982 = vld [vmem:[%s960 + $0xa8] sm:$0xff]
  %v983 = vld [vmem:[%s960 + $0xb0] sm:$0xff]
  %v984 = vld [vmem:[%s960 + $0xb8] sm:$0xff]
  %v985 = vld [vmem:[%s960 + $0xc0] sm:$0x11]
  %v986 = vld [vmem:[%s960 + $0xc8] sm:$0x11]
  %v987 = vld [vmem:[%s960 + $0xd0] sm:$0x11]
  %v988 = vld [vmem:[%s960 + $0xd8] sm:$0x11]
  %v1017 = vunpack.c.l.b16 %v961
  %v1018 = vunpack.c.h.b16 %v961
  %v1019 = vunpack.c.l.b16 %v962
  %v1020 = vunpack.c.h.b16 %v962
  %v1021 = vunpack.c.l.b16 %v963
  %v1022 = vunpack.c.h.b16 %v963
  %v1023 = vunpack.c.l.b16 %v964
  %v1024 = vunpack.c.h.b16 %v964
  %v1025 = vunpack.c.l.b16 %v965
  %v1026 = vunpack.c.h.b16 %v965
  %v1027 = vunpack.c.l.b16 %v966
  %v1028 = vunpack.c.h.b16 %v966
  %v1029 = vunpack.c.l.b16 %v967
  %v1030 = vunpack.c.h.b16 %v967
  %v1031 = vunpack.c.l.b16 %v968
  %v1032 = vunpack.c.h.b16 %v968
  %v1033 = vunpack.c.l.b16 %v969
  %v1034 = vunpack.c.h.b16 %v969
  %v1035 = vunpack.c.l.b16 %v970
  %v1036 = vunpack.c.h.b16 %v970
  %v1037 = vunpack.c.l.b16 %v971
  %v1038 = vunpack.c.h.b16 %v971
  %v1039 = vunpack.c.l.b16 %v972
  %v1040 = vunpack.c.h.b16 %v972
  %v1041 = vunpack.c.l.b16 %v973
  %v1042 = vunpack.c.h.b16 %v973
  %v1043 = vunpack.c.l.b16 %v974
  %v1044 = vunpack.c.h.b16 %v974
  %v1045 = vunpack.c.l.b16 %v975
  %v1046 = vunpack.c.h.b16 %v975
  %v1047 = vunpack.c.l.b16 %v976
  %v1048 = vunpack.c.h.b16 %v976
  %v1049 = vunpack.c.l.b16 %v977
  %v1050 = vunpack.c.h.b16 %v977
  %v1051 = vunpack.c.l.b16 %v978
  %v1052 = vunpack.c.h.b16 %v978
  %v1053 = vunpack.c.l.b16 %v979
  %v1054 = vunpack.c.h.b16 %v979
  %v1055 = vunpack.c.l.b16 %v980
  %v1056 = vunpack.c.h.b16 %v980
  %v1057 = vunpack.c.l.b16 %v981
  %v1058 = vunpack.c.h.b16 %v981
  %v1059 = vunpack.c.l.b16 %v982
  %v1060 = vunpack.c.h.b16 %v982
  %v1061 = vunpack.c.l.b16 %v983
  %v1062 = vunpack.c.h.b16 %v983
  %v1063 = vunpack.c.l.b16 %v984
  %v1064 = vunpack.c.h.b16 %v984
  %v1065 = vunpack.c.l.b16 %v985
  %v1066 = vunpack.c.h.b16 %v985
  %v1067 = vunpack.c.l.b16 %v986
  %v1068 = vunpack.c.h.b16 %v986
  %v1069 = vunpack.c.l.b16 %v987
  %v1070 = vunpack.c.h.b16 %v987
  %v1071 = vunpack.c.l.b16 %v988
  %v1072 = vunpack.c.h.b16 %v988
  %v1073 = vpack.c.b16 %v1025, %v1017
  %v1074 = vpack.c.b16 %v1026, %v1018
  %v1075 = vpack.c.b16 %v1027, %v1019
  %v1076 = vpack.c.b16 %v1028, %v1020
  %v1077 = vpack.c.b16 %v1029, %v1021
  %v1078 = vpack.c.b16 %v1030, %v1022
  %v1079 = vpack.c.b16 %v1031, %v1023
  %v1080 = vpack.c.b16 %v1032, %v1024
  %v1081 = vpack.c.b16 %v1041, %v1033
  %v1082 = vpack.c.b16 %v1042, %v1034
  %v1083 = vpack.c.b16 %v1043, %v1035
  %v1084 = vpack.c.b16 %v1044, %v1036
  %v1085 = vpack.c.b16 %v1045, %v1037
  %v1086 = vpack.c.b16 %v1046, %v1038
  %v1087 = vpack.c.b16 %v1047, %v1039
  %v1088 = vpack.c.b16 %v1048, %v1040
  %v1089 = vpack.c.b16 %v1057, %v1049
  %v1090 = vpack.c.b16 %v1058, %v1050
  %v1091 = vpack.c.b16 %v1059, %v1051
  %v1092 = vpack.c.b16 %v1060, %v1052
  %v1093 = vpack.c.b16 %v1061, %v1053
  %v1094 = vpack.c.b16 %v1062, %v1054
  %v1095 = vpack.c.b16 %v1063, %v1055
  %v1096 = vpack.c.b16 %v1064, %v1056
  %v1097 = vpack.c.b16 %v1065, %v1065
  %v1098 = vpack.c.b16 %v1066, %v1066
  %v1099 = vpack.c.b16 %v1067, %v1067
  %v1100 = vpack.c.b16 %v1068, %v1068
  %v1101 = vpack.c.b16 %v1069, %v1069
  %v1102 = vpack.c.b16 %v1070, %v1070
  %v1103 = vpack.c.b16 %v1071, %v1071
  %v1104 = vpack.c.b16 %v1072, %v1072
  %v1134 = vsel %vm687, %v1080, 0
  %v1137 = vsel %vm687, %v1088, 0
  %v1140 = vsel %vm687, %v1096, 0
  %v1143 = vsel %vm687, %v1104, 0
  %1145 = vmatprep.subr.bf16.mxu0 0
  %1146 = vmatpush1.bf16.msra.mxu0 %v562
  %1147 = vmatprep.subr.bf16.mxu0 0
  %1148 = vmatpush1.bf16.msra.mxu0 %v563
  %1149 = vmatprep.subr.bf16.mxu0 0
  %1150 = vmatpush1.bf16.msra.mxu0 %v564
  %1151 = vmatprep.subr.bf16.mxu0 0
  %1152 = vmatpush1.bf16.msra.mxu0 %v565
  %1153 = vmatprep.subr.bf16.mxu0 0
  %1154 = vmatpush1.bf16.msra.mxu0 %v566
  %1155 = vmatprep.subr.bf16.mxu0 0
  %1156 = vmatpush1.bf16.msra.mxu0 %v567
  %1157 = vmatprep.subr.bf16.mxu0 0
  %1158 = vmatpush1.bf16.msra.mxu0 %v568
  %1159 = vmatprep.subr.bf16.mxu0 0
  %1160 = vmatpush1.bf16.msra.mxu0 %v569
  %1161 = vmatprep.subr.bf16.mxu0 0
  %1162 = vmatpush1.bf16.msra.mxu0 %v570
  %1163 = vmatprep.subr.bf16.mxu0 0
  %1164 = vmatpush1.bf16.msra.mxu0 %v571
  %1165 = vmatprep.subr.bf16.mxu0 0
  %1166 = vmatpush1.bf16.msra.mxu0 %v572
  %1167 = vmatprep.subr.bf16.mxu0 0
  %1168 = vmatpush1.bf16.msra.mxu0 %v573
  %1169 = vmatprep.subr.bf16.mxu0 0
  %1170 = vmatpush1.bf16.msra.mxu0 %v574
  %1171 = vmatprep.subr.bf16.mxu0 0
  %1172 = vmatpush1.bf16.msra.mxu0 %v575
  %1173 = vmatprep.subr.bf16.mxu0 0
  %1174 = vmatpush1.bf16.msra.mxu0 %v576
  %1175 = vmatprep.subr.bf16.mxu0 0
  %1176 = vmatpush1.bf16.msra.mxu0 %v577
  %1177 = vmatprep.mubr.bf16.mxu0 %v1074
  %1178 = vmatmul.mubr.bf16.gmra.mrb[0].mxu0 %v1073
  %v1179 = vpop.f32.mrb[0].mxu0
  %v1180 = vadd.f32 0.0, %v1179
  %v1181 = vpop.f32.mrb[0].mxu0
  %v1182 = vpop.f32.mrb[0].mxu0
  %v1183 = vadd.f32 0.0, %v1182
  %v1184 = vpop.f32.mrb[0].mxu0
  %1185 = vmatprep.mubr.bf16.mxu0 %v1082
  %1186 = vmatmul.mubr.bf16.gmra.mrb[0].mxu0 %v1081
  %v1187 = vpop.f32.mrb[0].mxu0
  %v1188 = vadd.f32 0.0, %v1187
  %v1189 = vpop.f32.mrb[0].mxu0
  %v1190 = vpop.f32.mrb[0].mxu0
  %v1191 = vadd.f32 0.0, %v1190
  %v1192 = vpop.f32.mrb[0].mxu0
  %1193 = vmatprep.mubr.bf16.mxu0 %v1090
  %1194 = vmatmul.mubr.bf16.gmra.mrb[0].mxu0 %v1089
  %v1195 = vpop.f32.mrb[0].mxu0
  %v1196 = vadd.f32 0.0, %v1195
  %v1197 = vpop.f32.mrb[0].mxu0
  %v1198 = vpop.f32.mrb[0].mxu0
  %v1199 = vadd.f32 0.0, %v1198
  %v1200 = vpop.f32.mrb[0].mxu0
  %1201 = vmatprep.mubr.bf16.mxu0 %v1098
  %1202 = vmatmul.mubr.bf16.gmra.mrb[0].mxu0 %v1097
  %v1203 = vpop.f32.mrb[0].mxu0
  %v1204 = vadd.f32 0.0, %v1203
  %v1205 = vpop.f32.mrb[0].mxu0
  %v1206 = vpop.f32.mrb[0].mxu0
  %v1207 = vpop.f32.mrb[0].mxu0
  %1208 = vdwg.mxu0
  %1209 = vmatprep.subr.bf16.mxu0 0
  %1210 = vmatpush1.bf16.msra.mxu0 %v578
  %1211 = vmatprep.subr.bf16.mxu0 0
  %1212 = vmatpush1.bf16.msra.mxu0 %v579
  %1213 = vmatprep.subr.bf16.mxu0 0
  %1214 = vmatpush1.bf16.msra.mxu0 %v580
  %1215 = vmatprep.subr.bf16.mxu0 0
  %1216 = vmatpush1.bf16.msra.mxu0 %v581
  %1217 = vmatprep.subr.bf16.mxu0 0
  %1218 = vmatpush1.bf16.msra.mxu0 %v582
  %1219 = vmatprep.subr.bf16.mxu0 0
  %1220 = vmatpush1.bf16.msra.mxu0 %v583
  %1221 = vmatprep.subr.bf16.mxu0 0
  %1222 = vmatpush1.bf16.msra.mxu0 %v584
  %1223 = vmatprep.subr.bf16.mxu0 0
  %1224 = vmatpush1.bf16.msra.mxu0 %v585
  %1225 = vmatprep.subr.bf16.mxu0 0
  %1226 = vmatpush1.bf16.msra.mxu0 %v586
  %1227 = vmatprep.subr.bf16.mxu0 0
  %1228 = vmatpush1.bf16.msra.mxu0 %v587
  %1229 = vmatprep.subr.bf16.mxu0 0
  %1230 = vmatpush1.bf16.msra.mxu0 %v588
  %1231 = vmatprep.subr.bf16.mxu0 0
  %1232 = vmatpush1.bf16.msra.mxu0 %v589
  %1233 = vmatprep.subr.bf16.mxu0 0
  %1234 = vmatpush1.bf16.msra.mxu0 %v590
  %1235 = vmatprep.subr.bf16.mxu0 0
  %1236 = vmatpush1.bf16.msra.mxu0 %v591
  %1237 = vmatprep.subr.bf16.mxu0 0
  %1238 = vmatpush1.bf16.msra.mxu0 %v592
  %1239 = vmatprep.subr.bf16.mxu0 0
  %1240 = vmatpush1.bf16.msra.mxu0 %v593
  %1241 = vmatprep.mubr.bf16.mxu0 %v1076
  %1242 = vmatmul.mubr.bf16.gmra.mrb[0].mxu0 %v1075
  %v1243 = vpop.f32.mrb[0].mxu0
  %v1244 = vadd.f32 %v1180, %v1243
  %v1245 = vpop.f32.mrb[0].mxu0
  %v1246 = vpop.f32.mrb[0].mxu0
  %v1247 = vadd.f32 %v1183, %v1246
  %v1248 = vpop.f32.mrb[0].mxu0
  %1249 = vmatprep.mubr.bf16.mxu0 %v1084
  %1250 = vmatmul.mubr.bf16.gmra.mrb[0].mxu0 %v1083
  %v1251 = vpop.f32.mrb[0].mxu0
  %v1252 = vadd.f32 %v1188, %v1251
  %v1253 = vpop.f32.mrb[0].mxu0
  %v1254 = vpop.f32.mrb[0].mxu0
  %v1255 = vadd.f32 %v1191, %v1254
  %v1256 = vpop.f32.mrb[0].mxu0
  %1257 = vmatprep.mubr.bf16.mxu0 %v1092
  %1258 = vmatmul.mubr.bf16.gmra.mrb[0].mxu0 %v1091
  %v1259 = vpop.f32.mrb[0].mxu0
  %v1260 = vadd.f32 %v1196, %v1259
  %v1261 = vpop.f32.mrb[0].mxu0
  %v1262 = vpop.f32.mrb[0].mxu0
  %v1263 = vadd.f32 %v1199, %v1262
  %v1264 = vpop.f32.mrb[0].mxu0
  %1265 = vmatprep.mubr.bf16.mxu0 %v1100
  %1266 = vmatmul.mubr.bf16.gmra.mrb[0].mxu0 %v1099
  %v1267 = vpop.f32.mrb[0].mxu0
  %v1268 = vadd.f32 %v1204, %v1267
  %v1269 = vpop.f32.mrb[0].mxu0
  %v1270 = vpop.f32.mrb[0].mxu0
  %v1271 = vpop.f32.mrb[0].mxu0
  %1272 = vdwg.mxu0
  %1273 = vmatprep.subr.bf16.mxu0 0
  %1274 = vmatpush1.bf16.msra.mxu0 %v594
  %1275 = vmatprep.subr.bf16.mxu0 0
  %1276 = vmatpush1.bf16.msra.mxu0 %v595
  %1277 = vmatprep.subr.bf16.mxu0 0
  %1278 = vmatpush1.bf16.msra.mxu0 %v596
  %1279 = vmatprep.subr.bf16.mxu0 0
  %1280 = vmatpush1.bf16.msra.mxu0 %v597
  %1281 = vmatprep.subr.bf16.mxu0 0
  %1282 = vmatpush1.bf16.msra.mxu0 %v598
  %1283 = vmatprep.subr.bf16.mxu0 0
  %1284 = vmatpush1.bf16.msra.mxu0 %v599
  %1285 = vmatprep.subr.bf16.mxu0 0
  %1286 = vmatpush1.bf16.msra.mxu0 %v600
  %1287 = vmatprep.subr.bf16.mxu0 0
  %1288 = vmatpush1.bf16.msra.mxu0 %v601
  %1289 = vmatprep.subr.bf16.mxu0 0
  %1290 = vmatpush1.bf16.msra.mxu0 %v602
  %1291 = vmatprep.subr.bf16.mxu0 0
  %1292 = vmatpush1.bf16.msra.mxu0 %v603
  %1293 = vmatprep.subr.bf16.mxu0 0
  %1294 = vmatpush1.bf16.msra.mxu0 %v604
  %1295 = vmatprep.subr.bf16.mxu0 0
  %1296 = vmatpush1.bf16.msra.mxu0 %v605
  %1297 = vmatprep.subr.bf16.mxu0 0
  %1298 = vmatpush1.bf16.msra.mxu0 %v606
  %1299 = vmatprep.subr.bf16.mxu0 0
  %1300 = vmatpush1.bf16.msra.mxu0 %v607
  %1301 = vmatprep.subr.bf16.mxu0 0
  %1302 = vmatpush1.bf16.msra.mxu0 %v608
  %1303 = vmatprep.subr.bf16.mxu0 0
  %1304 = vmatpush1.bf16.msra.mxu0 %v609
  %1305 = vmatprep.mubr.bf16.mxu0 %v1078
  %1306 = vmatmul.mubr.bf16.gmra.mrb[0].mxu0 %v1077
  %v1307 = vpop.f32.mrb[0].mxu0
  %v1308 = vadd.f32 %v1244, %v1307
  %v1309 = vpop.f32.mrb[0].mxu0
  %v1310 = vpop.f32.mrb[0].mxu0
  %v1311 = vadd.f32 %v1247, %v1310
  %v1312 = vpop.f32.mrb[0].mxu0
  %1313 = vmatprep.mubr.bf16.mxu0 %v1086
  %1314 = vmatmul.mubr.bf16.gmra.mrb[0].mxu0 %v1085
  %v1315 = vpop.f32.mrb[0].mxu0
  %v1316 = vadd.f32 %v1252, %v1315
  %v1317 = vpop.f32.mrb[0].mxu0
  %v1318 = vpop.f32.mrb[0].mxu0
  %v1319 = vadd.f32 %v1255, %v1318
  %v1320 = vpop.f32.mrb[0].mxu0
  %1321 = vmatprep.mubr.bf16.mxu0 %v1094
  %1322 = vmatmul.mubr.bf16.gmra.mrb[0].mxu0 %v1093
  %v1323 = vpop.f32.mrb[0].mxu0
  %v1324 = vadd.f32 %v1260, %v1323
  %v1325 = vpop.f32.mrb[0].mxu0
  %v1326 = vpop.f32.mrb[0].mxu0
  %v1327 = vadd.f32 %v1263, %v1326
  %v1328 = vpop.f32.mrb[0].mxu0
  %1329 = vmatprep.mubr.bf16.mxu0 %v1102
  %1330 = vmatmul.mubr.bf16.gmra.mrb[0].mxu0 %v1101
  %v1331 = vpop.f32.mrb[0].mxu0
  %v1332 = vadd.f32 %v1268, %v1331
  %v1333 = vpop.f32.mrb[0].mxu0
  %v1334 = vpop.f32.mrb[0].mxu0
  %v1335 = vpop.f32.mrb[0].mxu0
  %1336 = vdwg.mxu0
  %1337 = vmatprep.subr.bf16.mxu0 0
  %1338 = vmatpush1.bf16.msra.mxu0 %v610
  %1339 = vmatprep.subr.bf16.mxu0 0
  %1340 = vmatpush1.bf16.msra.mxu0 %v611
  %1341 = vmatprep.subr.bf16.mxu0 0
  %1342 = vmatpush1.bf16.msra.mxu0 %v612
  %1343 = vmatprep.subr.bf16.mxu0 0
  %1344 = vmatpush1.bf16.msra.mxu0 %v613
  %1345 = vmatprep.subr.bf16.mxu0 0
  %1346 = vmatpush1.bf16.msra.mxu0 %v614
  %1347 = vmatprep.subr.bf16.mxu0 0
  %1348 = vmatpush1.bf16.msra.mxu0 %v615
  %1349 = vmatprep.subr.bf16.mxu0 0
  %1350 = vmatpush1.bf16.msra.mxu0 %v616
  %1351 = vmatprep.subr.bf16.mxu0 0
  %1352 = vmatpush1.bf16.msra.mxu0 %v617
  %1353 = vmatprep.subr.bf16.mxu0 0
  %1354 = vmatpush1.bf16.msra.mxu0 %v618
  %1355 = vmatprep.subr.bf16.mxu0 0
  %1356 = vmatpush1.bf16.msra.mxu0 %v619
  %1357 = vmatprep.subr.bf16.mxu0 0
  %1358 = vmatpush1.bf16.msra.mxu0 %v620
  %1359 = vmatprep.subr.bf16.mxu0 0
  %1360 = vmatpush1.bf16.msra.mxu0 %v621
  %1361 = vmatprep.subr.bf16.mxu0 0
  %1362 = vmatpush1.bf16.msra.mxu0 %v622
  %1363 = vmatprep.subr.bf16.mxu0 0
  %1364 = vmatpush1.bf16.msra.mxu0 %v623
  %1365 = vmatprep.subr.bf16.mxu0 0
  %1366 = vmatpush1.bf16.msra.mxu0 %v702
  %1367 = vmatprep.subr.bf16.mxu0 0
  %1368 = vmatpush1.bf16.msra.mxu0 0
  %1369 = vmatprep.mubr.bf16.mxu0 %v1134
  %1370 = vmatmul.mubr.bf16.gmra.mrb[0].mxu0 %v1079
  %v1371 = vpop.f32.mrb[0].mxu0
  %v1372 = vadd.f32 %v1308, %v1371
  %v1373 = vpop.f32.mrb[0].mxu0
  %v1374 = vpop.f32.mrb[0].mxu0
  %v1375 = vadd.f32 %v1311, %v1374
  %v1376 = vpop.f32.mrb[0].mxu0
  %1377 = vmatprep.mubr.bf16.mxu0 %v1137
  %1378 = vmatmul.mubr.bf16.gmra.mrb[0].mxu0 %v1087
  %v1379 = vpop.f32.mrb[0].mxu0
  %v1380 = vadd.f32 %v1316, %v1379
  %v1381 = vpop.f32.mrb[0].mxu0
  %v1382 = vpop.f32.mrb[0].mxu0
  %v1383 = vadd.f32 %v1319, %v1382
  %v1384 = vpop.f32.mrb[0].mxu0
  %1385 = vmatprep.mubr.bf16.mxu0 %v1140
  %1386 = vmatmul.mubr.bf16.gmra.mrb[0].mxu0 %v1095
  %v1387 = vpop.f32.mrb[0].mxu0
  %v1388 = vadd.f32 %v1324, %v1387
  %v1389 = vpop.f32.mrb[0].mxu0
  %v1390 = vpop.f32.mrb[0].mxu0
  %v1391 = vadd.f32 %v1327, %v1390
  %v1392 = vpop.f32.mrb[0].mxu0
  %1393 = vmatprep.mubr.bf16.mxu0 %v1143
  %1394 = vmatmul.mubr.bf16.gmra.mrb[0].mxu0 %v1103
  %v1395 = vpop.f32.mrb[0].mxu0
  %v1396 = vadd.f32 %v1332, %v1395
  %v1397 = vpop.f32.mrb[0].mxu0
  %v1398 = vpop.f32.mrb[0].mxu0
  %v1399 = vpop.f32.mrb[0].mxu0
  %1400 = vdwg.mxu0
  %v1401 = vmax.f32 %v931, %v1372
  %v1402 = vmax.f32 %v934, %v1375
  %v1403 = vmax.f32 %v939, %v1380
  %v1404 = vmax.f32 %v942, %v1383
  %v1405 = vmax.f32 %v947, %v1388
  %v1406 = vmax.f32 %v950, %v1391
  %v1407 = vmax.f32 %v955, %v1396
  %s1408 = scalar_lea.vmem %s0, 448
  %v1409 = vld [vmem:[%s1408] sm:$0xff]
  %v1410 = vld [vmem:[%s1408 + $0x8] sm:$0xff]
  %v1411 = vld [vmem:[%s1408 + $0x10] sm:$0xff]
  %v1412 = vld [vmem:[%s1408 + $0x18] sm:$0xff]
  %v1413 = vld [vmem:[%s1408 + $0x20] sm:$0xff]
  %v1414 = vld [vmem:[%s1408 + $0x28] sm:$0xff]
  %v1415 = vld [vmem:[%s1408 + $0x30] sm:$0xff]
  %v1416 = vld [vmem:[%s1408 + $0x38] sm:$0xff]
  %v1417 = vld [vmem:[%s1408 + $0x40] sm:$0xff]
  %v1418 = vld [vmem:[%s1408 + $0x48] sm:$0xff]
  %v1419 = vld [vmem:[%s1408 + $0x50] sm:$0xff]
  %v1420 = vld [vmem:[%s1408 + $0x58] sm:$0xff]
  %v1421 = vld [vmem:[%s1408 + $0x60] sm:$0xff]
  %v1422 = vld [vmem:[%s1408 + $0x68] sm:$0xff]
  %v1423 = vld [vmem:[%s1408 + $0x70] sm:$0xff]
  %v1424 = vld [vmem:[%s1408 + $0x78] sm:$0xff]
  %v1425 = vld [vmem:[%s1408 + $0x80] sm:$0xff]
  %v1426 = vld [vmem:[%s1408 + $0x88] sm:$0xff]
  %v1427 = vld [vmem:[%s1408 + $0x90] sm:$0xff]
  %v1428 = vld [vmem:[%s1408 + $0x98] sm:$0xff]
  %v1429 = vld [vmem:[%s1408 + $0xa0] sm:$0xff]
  %v1430 = vld [vmem:[%s1408 + $0xa8] sm:$0xff]
  %v1431 = vld [vmem:[%s1408 + $0xb0] sm:$0xff]
  %v1432 = vld [vmem:[%s1408 + $0xb8] sm:$0xff]
  %v1433 = vld [vmem:[%s1408 + $0xc0] sm:$0x11]
  %v1434 = vld [vmem:[%s1408 + $0xc8] sm:$0x11]
  %v1435 = vld [vmem:[%s1408 + $0xd0] sm:$0x11]
  %v1436 = vld [vmem:[%s1408 + $0xd8] sm:$0x11]
  %v1465 = vunpack.c.l.b16 %v1409
  %v1466 = vunpack.c.h.b16 %v1409
  %v1467 = vunpack.c.l.b16 %v1410
  %v1468 = vunpack.c.h.b16 %v1410
  %v1469 = vunpack.c.l.b16 %v1411
  %v1470 = vunpack.c.h.b16 %v1411
  %v1471 = vunpack.c.l.b16 %v1412
  %v1472 = vunpack.c.h.b16 %v1412
  %v1473 = vunpack.c.l.b16 %v1413
  %v1474 = vunpack.c.h.b16 %v1413
  %v1475 = vunpack.c.l.b16 %v1414
  %v1476 = vunpack.c.h.b16 %v1414
  %v1477 = vunpack.c.l.b16 %v1415
  %v1478 = vunpack.c.h.b16 %v1415
  %v1479 = vunpack.c.l.b16 %v1416
  %v1480 = vunpack.c.h.b16 %v1416
  %v1481 = vunpack.c.l.b16 %v1417
  %v1482 = vunpack.c.h.b16 %v1417
  %v1483 = vunpack.c.l.b16 %v1418
  %v1484 = vunpack.c.h.b16 %v1418
  %v1485 = vunpack.c.l.b16 %v1419
  %v1486 = vunpack.c.h.b16 %v1419
  %v1487 = vunpack.c.l.b16 %v1420
  %v1488 = vunpack.c.h.b16 %v1420
  %v1489 = vunpack.c.l.b16 %v1421
  %v1490 = vunpack.c.h.b16 %v1421
  %v1491 = vunpack.c.l.b16 %v1422
  %v1492 = vunpack.c.h.b16 %v1422
  %v1493 = vunpack.c.l.b16 %v1423
  %v1494 = vunpack.c.h.b16 %v1423
  %v1495 = vunpack.c.l.b16 %v1424
  %v1496 = vunpack.c.h.b16 %v1424
  %v1497 = vunpack.c.l.b16 %v1425
  %v1498 = vunpack.c.h.b16 %v1425
  %v1499 = vunpack.c.l.b16 %v1426
  %v1500 = vunpack.c.h.b16 %v1426
  %v1501 = vunpack.c.l.b16 %v1427
  %v1502 = vunpack.c.h.b16 %v1427
  %v1503 = vunpack.c.l.b16 %v1428
  %v1504 = vunpack.c.h.b16 %v1428
  %v1505 = vunpack.c.l.b16 %v1429
  %v1506 = vunpack.c.h.b16 %v1429
  %v1507 = vunpack.c.l.b16 %v1430
  %v1508 = vunpack.c.h.b16 %v1430
  %v1509 = vunpack.c.l.b16 %v1431
  %v1510 = vunpack.c.h.b16 %v1431
  %v1511 = vunpack.c.l.b16 %v1432
  %v1512 = vunpack.c.h.b16 %v1432
  %v1513 = vunpack.c.l.b16 %v1433
  %v1514 = vunpack.c.h.b16 %v1433
  %v1515 = vunpack.c.l.b16 %v1434
  %v1516 = vunpack.c.h.b16 %v1434
  %v1517 = vunpack.c.l.b16 %v1435
  %v1518 = vunpack.c.h.b16 %v1435
  %v1519 = vunpack.c.l.b16 %v1436
  %v1520 = vunpack.c.h.b16 %v1436
  %v1521 = vpack.c.b16 %v1473, %v1465
  %v1522 = vpack.c.b16 %v1474, %v1466
  %v1523 = vpack.c.b16 %v1475, %v1467
  %v1524 = vpack.c.b16 %v1476, %v1468
  %v1525 = vpack.c.b16 %v1477, %v1469
  %v1526 = vpack.c.b16 %v1478, %v1470
  %v1527 = vpack.c.b16 %v1479, %v1471
  %v1528 = vpack.c.b16 %v1480, %v1472
  %v1529 = vpack.c.b16 %v1489, %v1481
  %v1530 = vpack.c.b16 %v1490, %v1482
  %v1531 = vpack.c.b16 %v1491, %v1483
  %v1532 = vpack.c.b16 %v1492, %v1484
  %v1533 = vpack.c.b16 %v1493, %v1485
  %v1534 = vpack.c.b16 %v1494, %v1486
  %v1535 = vpack.c.b16 %v1495, %v1487
  %v1536 = vpack.c.b16 %v1496, %v1488
  %v1537 = vpack.c.b16 %v1505, %v1497
  %v1538 = vpack.c.b16 %v1506, %v1498
  %v1539 = vpack.c.b16 %v1507, %v1499
  %v1540 = vpack.c.b16 %v1508, %v1500
  %v1541 = vpack.c.b16 %v1509, %v1501
  %v1542 = vpack.c.b16 %v1510, %v1502
  %v1543 = vpack.c.b16 %v1511, %v1503
  %v1544 = vpack.c.b16 %v1512, %v1504
  %v1545 = vpack.c.b16 %v1513, %v1513
  %v1546 = vpack.c.b16 %v1514, %v1514
  %v1547 = vpack.c.b16 %v1515, %v1515
  %v1548 = vpack.c.b16 %v1516, %v1516
  %v1549 = vpack.c.b16 %v1517, %v1517
  %v1550 = vpack.c.b16 %v1518, %v1518
  %v1551 = vpack.c.b16 %v1519, %v1519
  %v1552 = vpack.c.b16 %v1520, %v1520
  %v1582 = vsel %vm687, %v1528, 0
  %v1585 = vsel %vm687, %v1536, 0
  %v1588 = vsel %vm687, %v1544, 0
  %v1591 = vsel %vm687, %v1552, 0
  %1593 = vmatprep.subr.bf16.mxu0 0
  %1594 = vmatpush1.bf16.msra.mxu0 %v562
  %1595 = vmatprep.subr.bf16.mxu0 0
  %1596 = vmatpush1.bf16.msra.mxu0 %v563
  %1597 = vmatprep.subr.bf16.mxu0 0
  %1598 = vmatpush1.bf16.msra.mxu0 %v564
  %1599 = vmatprep.subr.bf16.mxu0 0
  %1600 = vmatpush1.bf16.msra.mxu0 %v565
  %1601 = vmatprep.subr.bf16.mxu0 0
  %1602 = vmatpush1.bf16.msra.mxu0 %v566
  %1603 = vmatprep.subr.bf16.mxu0 0
  %1604 = vmatpush1.bf16.msra.mxu0 %v567
  %1605 = vmatprep.subr.bf16.mxu0 0
  %1606 = vmatpush1.bf16.msra.mxu0 %v568
  %1607 = vmatprep.subr.bf16.mxu0 0
  %1608 = vmatpush1.bf16.msra.mxu0 %v569
  %1609 = vmatprep.subr.bf16.mxu0 0
  %1610 = vmatpush1.bf16.msra.mxu0 %v570
  %1611 = vmatprep.subr.bf16.mxu0 0
  %1612 = vmatpush1.bf16.msra.mxu0 %v571
  %1613 = vmatprep.subr.bf16.mxu0 0
  %1614 = vmatpush1.bf16.msra.mxu0 %v572
  %1615 = vmatprep.subr.bf16.mxu0 0
  %1616 = vmatpush1.bf16.msra.mxu0 %v573
  %1617 = vmatprep.subr.bf16.mxu0 0
  %1618 = vmatpush1.bf16.msra.mxu0 %v574
  %1619 = vmatprep.subr.bf16.mxu0 0
  %1620 = vmatpush1.bf16.msra.mxu0 %v575
  %1621 = vmatprep.subr.bf16.mxu0 0
  %1622 = vmatpush1.bf16.msra.mxu0 %v576
  %1623 = vmatprep.subr.bf16.mxu0 0
  %1624 = vmatpush1.bf16.msra.mxu0 %v577
  %1625 = vmatprep.mubr.bf16.mxu0 %v1522
  %1626 = vmatmul.mubr.bf16.gmra.mrb[0].mxu0 %v1521
  %v1627 = vpop.f32.mrb[0].mxu0
  %v1628 = vadd.f32 0.0, %v1627
  %v1629 = vpop.f32.mrb[0].mxu0
  %v1630 = vpop.f32.mrb[0].mxu0
  %v1631 = vadd.f32 0.0, %v1630
  %v1632 = vpop.f32.mrb[0].mxu0
  %1633 = vmatprep.mubr.bf16.mxu0 %v1530
  %1634 = vmatmul.mubr.bf16.gmra.mrb[0].mxu0 %v1529
  %v1635 = vpop.f32.mrb[0].mxu0
  %v1636 = vadd.f32 0.0, %v1635
  %v1637 = vpop.f32.mrb[0].mxu0
  %v1638 = vpop.f32.mrb[0].mxu0
  %v1639 = vadd.f32 0.0, %v1638
  %v1640 = vpop.f32.mrb[0].mxu0
  %1641 = vmatprep.mubr.bf16.mxu0 %v1538
  %1642 = vmatmul.mubr.bf16.gmra.mrb[0].mxu0 %v1537
  %v1643 = vpop.f32.mrb[0].mxu0
  %v1644 = vadd.f32 0.0, %v1643
  %v1645 = vpop.f32.mrb[0].mxu0
  %v1646 = vpop.f32.mrb[0].mxu0
  %v1647 = vadd.f32 0.0, %v1646
  %v1648 = vpop.f32.mrb[0].mxu0
  %1649 = vmatprep.mubr.bf16.mxu0 %v1546
  %1650 = vmatmul.mubr.bf16.gmra.mrb[0].mxu0 %v1545
  %v1651 = vpop.f32.mrb[0].mxu0
  %v1652 = vadd.f32 0.0, %v1651
  %v1653 = vpop.f32.mrb[0].mxu0
  %v1654 = vpop.f32.mrb[0].mxu0
  %v1655 = vpop.f32.mrb[0].mxu0
  %1656 = vdwg.mxu0
  %1657 = vmatprep.subr.bf16.mxu0 0
  %1658 = vmatpush1.bf16.msra.mxu0 %v578
  %1659 = vmatprep.subr.bf16.mxu0 0
  %1660 = vmatpush1.bf16.msra.mxu0 %v579
  %1661 = vmatprep.subr.bf16.mxu0 0
  %1662 = vmatpush1.bf16.msra.mxu0 %v580
  %1663 = vmatprep.subr.bf16.mxu0 0
  %1664 = vmatpush1.bf16.msra.mxu0 %v581
  %1665 = vmatprep.subr.bf16.mxu0 0
  %1666 = vmatpush1.bf16.msra.mxu0 %v582
  %1667 = vmatprep.subr.bf16.mxu0 0
  %1668 = vmatpush1.bf16.msra.mxu0 %v583
  %1669 = vmatprep.subr.bf16.mxu0 0
  %1670 = vmatpush1.bf16.msra.mxu0 %v584
  %1671 = vmatprep.subr.bf16.mxu0 0
  %1672 = vmatpush1.bf16.msra.mxu0 %v585
  %1673 = vmatprep.subr.bf16.mxu0 0
  %1674 = vmatpush1.bf16.msra.mxu0 %v586
  %1675 = vmatprep.subr.bf16.mxu0 0
  %1676 = vmatpush1.bf16.msra.mxu0 %v587
  %1677 = vmatprep.subr.bf16.mxu0 0
  %1678 = vmatpush1.bf16.msra.mxu0 %v588
  %1679 = vmatprep.subr.bf16.mxu0 0
  %1680 = vmatpush1.bf16.msra.mxu0 %v589
  %1681 = vmatprep.subr.bf16.mxu0 0
  %1682 = vmatpush1.bf16.msra.mxu0 %v590
  %1683 = vmatprep.subr.bf16.mxu0 0
  %1684 = vmatpush1.bf16.msra.mxu0 %v591
  %1685 = vmatprep.subr.bf16.mxu0 0
  %1686 = vmatpush1.bf16.msra.mxu0 %v592
  %1687 = vmatprep.subr.bf16.mxu0 0
  %1688 = vmatpush1.bf16.msra.mxu0 %v593
  %1689 = vmatprep.mubr.bf16.mxu0 %v1524
  %1690 = vmatmul.mubr.bf16.gmra.mrb[0].mxu0 %v1523
  %v1691 = vpop.f32.mrb[0].mxu0
  %v1692 = vadd.f32 %v1628, %v1691
  %v1693 = vpop.f32.mrb[0].mxu0
  %v1694 = vpop.f32.mrb[0].mxu0
  %v1695 = vadd.f32 %v1631, %v1694
  %v1696 = vpop.f32.mrb[0].mxu0
  %1697 = vmatprep.mubr.bf16.mxu0 %v1532
  %1698 = vmatmul.mubr.bf16.gmra.mrb[0].mxu0 %v1531
  %v1699 = vpop.f32.mrb[0].mxu0
  %v1700 = vadd.f32 %v1636, %v1699
  %v1701 = vpop.f32.mrb[0].mxu0
  %v1702 = vpop.f32.mrb[0].mxu0
  %v1703 = vadd.f32 %v1639, %v1702
  %v1704 = vpop.f32.mrb[0].mxu0
  %1705 = vmatprep.mubr.bf16.mxu0 %v1540
  %1706 = vmatmul.mubr.bf16.gmra.mrb[0].mxu0 %v1539
  %v1707 = vpop.f32.mrb[0].mxu0
  %v1708 = vadd.f32 %v1644, %v1707
  %v1709 = vpop.f32.mrb[0].mxu0
  %v1710 = vpop.f32.mrb[0].mxu0
  %v1711 = vadd.f32 %v1647, %v1710
  %v1712 = vpop.f32.mrb[0].mxu0
  %1713 = vmatprep.mubr.bf16.mxu0 %v1548
  %1714 = vmatmul.mubr.bf16.gmra.mrb[0].mxu0 %v1547
  %v1715 = vpop.f32.mrb[0].mxu0
  %v1716 = vadd.f32 %v1652, %v1715
  %v1717 = vpop.f32.mrb[0].mxu0
  %v1718 = vpop.f32.mrb[0].mxu0
  %v1719 = vpop.f32.mrb[0].mxu0
  %1720 = vdwg.mxu0
  %1721 = vmatprep.subr.bf16.mxu0 0
  %1722 = vmatpush1.bf16.msra.mxu0 %v594
  %1723 = vmatprep.subr.bf16.mxu0 0
  %1724 = vmatpush1.bf16.msra.mxu0 %v595
  %1725 = vmatprep.subr.bf16.mxu0 0
  %1726 = vmatpush1.bf16.msra.mxu0 %v596
  %1727 = vmatprep.subr.bf16.mxu0 0
  %1728 = vmatpush1.bf16.msra.mxu0 %v597
  %1729 = vmatprep.subr.bf16.mxu0 0
  %1730 = vmatpush1.bf16.msra.mxu0 %v598
  %1731 = vmatprep.subr.bf16.mxu0 0
  %1732 = vmatpush1.bf16.msra.mxu0 %v599
  %1733 = vmatprep.subr.bf16.mxu0 0
  %1734 = vmatpush1.bf16.msra.mxu0 %v600
  %1735 = vmatprep.subr.bf16.mxu0 0
  %1736 = vmatpush1.bf16.msra.mxu0 %v601
  %1737 = vmatprep.subr.bf16.mxu0 0
  %1738 = vmatpush1.bf16.msra.mxu0 %v602
  %1739 = vmatprep.subr.bf16.mxu0 0
  %1740 = vmatpush1.bf16.msra.mxu0 %v603
  %1741 = vmatprep.subr.bf16.mxu0 0
  %1742 = vmatpush1.bf16.msra.mxu0 %v604
  %1743 = vmatprep.subr.bf16.mxu0 0
  %1744 = vmatpush1.bf16.msra.mxu0 %v605
  %1745 = vmatprep.subr.bf16.mxu0 0
  %1746 = vmatpush1.bf16.msra.mxu0 %v606
  %1747 = vmatprep.subr.bf16.mxu0 0
  %1748 = vmatpush1.bf16.msra.mxu0 %v607
  %1749 = vmatprep.subr.bf16.mxu0 0
  %1750 = vmatpush1.bf16.msra.mxu0 %v608
  %1751 = vmatprep.subr.bf16.mxu0 0
  %1752 = vmatpush1.bf16.msra.mxu0 %v609
  %1753 = vmatprep.mubr.bf16.mxu0 %v1526
  %1754 = vmatmul.mubr.bf16.gmra.mrb[0].mxu0 %v1525
  %v1755 = vpop.f32.mrb[0].mxu0
  %v1756 = vadd.f32 %v1692, %v1755
  %v1757 = vpop.f32.mrb[0].mxu0
  %v1758 = vpop.f32.mrb[0].mxu0
  %v1759 = vadd.f32 %v1695, %v1758
  %v1760 = vpop.f32.mrb[0].mxu0
  %1761 = vmatprep.mubr.bf16.mxu0 %v1534
  %1762 = vmatmul.mubr.bf16.gmra.mrb[0].mxu0 %v1533
  %v1763 = vpop.f32.mrb[0].mxu0
  %v1764 = vadd.f32 %v1700, %v1763
  %v1765 = vpop.f32.mrb[0].mxu0
  %v1766 = vpop.f32.mrb[0].mxu0
  %v1767 = vadd.f32 %v1703, %v1766
  %v1768 = vpop.f32.mrb[0].mxu0
  %1769 = vmatprep.mubr.bf16.mxu0 %v1542
  %1770 = vmatmul.mubr.bf16.gmra.mrb[0].mxu0 %v1541
  %v1771 = vpop.f32.mrb[0].mxu0
  %v1772 = vadd.f32 %v1708, %v1771
  %v1773 = vpop.f32.mrb[0].mxu0
  %v1774 = vpop.f32.mrb[0].mxu0
  %v1775 = vadd.f32 %v1711, %v1774
  %v1776 = vpop.f32.mrb[0].mxu0
  %1777 = vmatprep.mubr.bf16.mxu0 %v1550
  %1778 = vmatmul.mubr.bf16.gmra.mrb[0].mxu0 %v1549
  %v1779 = vpop.f32.mrb[0].mxu0
  %v1780 = vadd.f32 %v1716, %v1779
  %v1781 = vpop.f32.mrb[0].mxu0
  %v1782 = vpop.f32.mrb[0].mxu0
  %v1783 = vpop.f32.mrb[0].mxu0
  %1784 = vdwg.mxu0
  %1785 = vmatprep.subr.bf16.mxu0 0
  %1786 = vmatpush1.bf16.msra.mxu0 %v610
  %1787 = vmatprep.subr.bf16.mxu0 0
  %1788 = vmatpush1.bf16.msra.mxu0 %v611
  %1789 = vmatprep.subr.bf16.mxu0 0
  %1790 = vmatpush1.bf16.msra.mxu0 %v612
  %1791 = vmatprep.subr.bf16.mxu0 0
  %1792 = vmatpush1.bf16.msra.mxu0 %v613
  %1793 = vmatprep.subr.bf16.mxu0 0
  %1794 = vmatpush1.bf16.msra.mxu0 %v614
  %1795 = vmatprep.subr.bf16.mxu0 0
  %1796 = vmatpush1.bf16.msra.mxu0 %v615
  %1797 = vmatprep.subr.bf16.mxu0 0
  %1798 = vmatpush1.bf16.msra.mxu0 %v616
  %1799 = vmatprep.subr.bf16.mxu0 0
  %1800 = vmatpush1.bf16.msra.mxu0 %v617
  %1801 = vmatprep.subr.bf16.mxu0 0
  %1802 = vmatpush1.bf16.msra.mxu0 %v618
  %1803 = vmatprep.subr.bf16.mxu0 0
  %1804 = vmatpush1.bf16.msra.mxu0 %v619
  %1805 = vmatprep.subr.bf16.mxu0 0
  %1806 = vmatpush1.bf16.msra.mxu0 %v620
  %1807 = vmatprep.subr.bf16.mxu0 0
  %1808 = vmatpush1.bf16.msra.mxu0 %v621
  %1809 = vmatprep.subr.bf16.mxu0 0
  %1810 = vmatpush1.bf16.msra.mxu0 %v622
  %1811 = vmatprep.subr.bf16.mxu0 0
  %1812 = vmatpush1.bf16.msra.mxu0 %v623
  %1813 = vmatprep.subr.bf16.mxu0 0
  %1814 = vmatpush1.bf16.msra.mxu0 %v702
  %1815 = vmatprep.subr.bf16.mxu0 0
  %1816 = vmatpush1.bf16.msra.mxu0 0
  %1817 = vmatprep.mubr.bf16.mxu0 %v1582
  %1818 = vmatmul.mubr.bf16.gmra.mrb[0].mxu0 %v1527
  %v1819 = vpop.f32.mrb[0].mxu0
  %v1820 = vadd.f32 %v1756, %v1819
  %v1821 = vpop.f32.mrb[0].mxu0
  %v1822 = vpop.f32.mrb[0].mxu0
  %v1823 = vadd.f32 %v1759, %v1822
  %v1824 = vpop.f32.mrb[0].mxu0
  %1825 = vmatprep.mubr.bf16.mxu0 %v1585
  %1826 = vmatmul.mubr.bf16.gmra.mrb[0].mxu0 %v1535
  %v1827 = vpop.f32.mrb[0].mxu0
  %v1828 = vadd.f32 %v1764, %v1827
  %v1829 = vpop.f32.mrb[0].mxu0
  %v1830 = vpop.f32.mrb[0].mxu0
  %v1831 = vadd.f32 %v1767, %v1830
  %v1832 = vpop.f32.mrb[0].mxu0
  %1833 = vmatprep.mubr.bf16.mxu0 %v1588
  %1834 = vmatmul.mubr.bf16.gmra.mrb[0].mxu0 %v1543
  %v1835 = vpop.f32.mrb[0].mxu0
  %v1836 = vadd.f32 %v1772, %v1835
  %v1837 = vpop.f32.mrb[0].mxu0
  %v1838 = vpop.f32.mrb[0].mxu0
  %v1839 = vadd.f32 %v1775, %v1838
  %v1840 = vpop.f32.mrb[0].mxu0
  %1841 = vmatprep.mubr.bf16.mxu0 %v1591
  %1842 = vmatmul.mubr.bf16.gmra.mrb[0].mxu0 %v1551
  %v1843 = vpop.f32.mrb[0].mxu0
  %v1844 = vadd.f32 %v1780, %v1843
  %v1845 = vpop.f32.mrb[0].mxu0
  %v1846 = vpop.f32.mrb[0].mxu0
  %v1847 = vpop.f32.mrb[0].mxu0
  %1848 = vdwg.mxu0
  %v1849 = vmax.f32 %v1401, %v1820
  %v1850 = vmax.f32 %v1402, %v1823
  %v1851 = vmax.f32 %v1403, %v1828
  %v1852 = vmax.f32 %v1404, %v1831
  %v1853 = vmax.f32 %v1405, %v1836
  %v1854 = vmax.f32 %v1406, %v1839
  %v1855 = vmax.f32 %v1407, %v1844
  %s1856 = scalar_lea.vmem %s0, 672
  %v1857 = vld [vmem:[%s1856] sm:$0xff]
  %v1858 = vld [vmem:[%s1856 + $0x8] sm:$0xff]
  %v1859 = vld [vmem:[%s1856 + $0x10] sm:$0xff]
  %v1860 = vld [vmem:[%s1856 + $0x18] sm:$0xff]
  %v1861 = vld [vmem:[%s1856 + $0x20] sm:$0xff]
  %v1862 = vld [vmem:[%s1856 + $0x28] sm:$0xff]
  %v1863 = vld [vmem:[%s1856 + $0x30] sm:$0xff]
  %v1864 = vld [vmem:[%s1856 + $0x38] sm:$0xff]
  %v1865 = vld [vmem:[%s1856 + $0x40] sm:$0xff]
  %v1866 = vld [vmem:[%s1856 + $0x48] sm:$0xff]
  %v1867 = vld [vmem:[%s1856 + $0x50] sm:$0xff]
  %v1868 = vld [vmem:[%s1856 + $0x58] sm:$0xff]
  %v1869 = vld [vmem:[%s1856 + $0x60] sm:$0xff]
  %v1870 = vld [vmem:[%s1856 + $0x68] sm:$0xff]
  %v1871 = vld [vmem:[%s1856 + $0x70] sm:$0xff]
  %v1872 = vld [vmem:[%s1856 + $0x78] sm:$0xff]
  %v1873 = vld [vmem:[%s1856 + $0x80] sm:$0xff]
  %v1874 = vld [vmem:[%s1856 + $0x88] sm:$0xff]
  %v1875 = vld [vmem:[%s1856 + $0x90] sm:$0xff]
  %v1876 = vld [vmem:[%s1856 + $0x98] sm:$0xff]
  %v1877 = vld [vmem:[%s1856 + $0xa0] sm:$0xff]
  %v1878 = vld [vmem:[%s1856 + $0xa8] sm:$0xff]
  %v1879 = vld [vmem:[%s1856 + $0xb0] sm:$0xff]
  %v1880 = vld [vmem:[%s1856 + $0xb8] sm:$0xff]
  %v1881 = vld [vmem:[%s1856 + $0xc0] sm:$0x11]
  %v1882 = vld [vmem:[%s1856 + $0xc8] sm:$0x11]
  %v1883 = vld [vmem:[%s1856 + $0xd0] sm:$0x11]
  %v1884 = vld [vmem:[%s1856 + $0xd8] sm:$0x11]
  %v1913 = vunpack.c.l.b16 %v1857
  %v1914 = vunpack.c.h.b16 %v1857
  %v1915 = vunpack.c.l.b16 %v1858
  %v1916 = vunpack.c.h.b16 %v1858
  %v1917 = vunpack.c.l.b16 %v1859
  %v1918 = vunpack.c.h.b16 %v1859
  %v1919 = vunpack.c.l.b16 %v1860
  %v1920 = vunpack.c.h.b16 %v1860
  %v1921 = vunpack.c.l.b16 %v1861
  %v1922 = vunpack.c.h.b16 %v1861
  %v1923 = vunpack.c.l.b16 %v1862
  %v1924 = vunpack.c.h.b16 %v1862
  %v1925 = vunpack.c.l.b16 %v1863
  %v1926 = vunpack.c.h.b16 %v1863
  %v1927 = vunpack.c.l.b16 %v1864
  %v1928 = vunpack.c.h.b16 %v1864
  %v1929 = vunpack.c.l.b16 %v1865
  %v1930 = vunpack.c.h.b16 %v1865
  %v1931 = vunpack.c.l.b16 %v1866
  %v1932 = vunpack.c.h.b16 %v1866
  %v1933 = vunpack.c.l.b16 %v1867
  %v1934 = vunpack.c.h.b16 %v1867
  %v1935 = vunpack.c.l.b16 %v1868
  %v1936 = vunpack.c.h.b16 %v1868
  %v1937 = vunpack.c.l.b16 %v1869
  %v1938 = vunpack.c.h.b16 %v1869
  %v1939 = vunpack.c.l.b16 %v1870
  %v1940 = vunpack.c.h.b16 %v1870
  %v1941 = vunpack.c.l.b16 %v1871
  %v1942 = vunpack.c.h.b16 %v1871
  %v1943 = vunpack.c.l.b16 %v1872
  %v1944 = vunpack.c.h.b16 %v1872
  %v1945 = vunpack.c.l.b16 %v1873
  %v1946 = vunpack.c.h.b16 %v1873
  %v1947 = vunpack.c.l.b16 %v1874
  %v1948 = vunpack.c.h.b16 %v1874
  %v1949 = vunpack.c.l.b16 %v1875
  %v1950 = vunpack.c.h.b16 %v1875
  %v1951 = vunpack.c.l.b16 %v1876
  %v1952 = vunpack.c.h.b16 %v1876
  %v1953 = vunpack.c.l.b16 %v1877
  %v1954 = vunpack.c.h.b16 %v1877
  %v1955 = vunpack.c.l.b16 %v1878
  %v1956 = vunpack.c.h.b16 %v1878
  %v1957 = vunpack.c.l.b16 %v1879
  %v1958 = vunpack.c.h.b16 %v1879
  %v1959 = vunpack.c.l.b16 %v1880
  %v1960 = vunpack.c.h.b16 %v1880
  %v1961 = vunpack.c.l.b16 %v1881
  %v1962 = vunpack.c.h.b16 %v1881
  %v1963 = vunpack.c.l.b16 %v1882
  %v1964 = vunpack.c.h.b16 %v1882
  %v1965 = vunpack.c.l.b16 %v1883
  %v1966 = vunpack.c.h.b16 %v1883
  %v1967 = vunpack.c.l.b16 %v1884
  %v1968 = vunpack.c.h.b16 %v1884
  %v1969 = vpack.c.b16 %v1921, %v1913
  %v1970 = vpack.c.b16 %v1922, %v1914
  %v1971 = vpack.c.b16 %v1923, %v1915
  %v1972 = vpack.c.b16 %v1924, %v1916
  %v1973 = vpack.c.b16 %v1925, %v1917
  %v1974 = vpack.c.b16 %v1926, %v1918
  %v1975 = vpack.c.b16 %v1927, %v1919
  %v1976 = vpack.c.b16 %v1928, %v1920
  %v1977 = vpack.c.b16 %v1937, %v1929
  %v1978 = vpack.c.b16 %v1938, %v1930
  %v1979 = vpack.c.b16 %v1939, %v1931
  %v1980 = vpack.c.b16 %v1940, %v1932
  %v1981 = vpack.c.b16 %v1941, %v1933
  %v1982 = vpack.c.b16 %v1942, %v1934
  %v1983 = vpack.c.b16 %v1943, %v1935
  %v1984 = vpack.c.b16 %v1944, %v1936
  %v1985 = vpack.c.b16 %v1953, %v1945
  %v1986 = vpack.c.b16 %v1954, %v1946
  %v1987 = vpack.c.b16 %v1955, %v1947
  %v1988 = vpack.c.b16 %v1956, %v1948
  %v1989 = vpack.c.b16 %v1957, %v1949
  %v1990 = vpack.c.b16 %v1958, %v1950
  %v1991 = vpack.c.b16 %v1959, %v1951
  %v1992 = vpack.c.b16 %v1960, %v1952
  %v1993 = vpack.c.b16 %v1961, %v1961
  %v1994 = vpack.c.b16 %v1962, %v1962
  %v1995 = vpack.c.b16 %v1963, %v1963
  %v1996 = vpack.c.b16 %v1964, %v1964
  %v1997 = vpack.c.b16 %v1965, %v1965
  %v1998 = vpack.c.b16 %v1966, %v1966
  %v1999 = vpack.c.b16 %v1967, %v1967
  %v2000 = vpack.c.b16 %v1968, %v1968
  %v2030 = vsel %vm687, %v1976, 0
  %v2033 = vsel %vm687, %v1984, 0
  %v2036 = vsel %vm687, %v1992, 0
  %v2039 = vsel %vm687, %v2000, 0
  %2041 = vmatprep.subr.bf16.mxu0 0
  %2042 = vmatpush1.bf16.msra.mxu0 %v562
  %2043 = vmatprep.subr.bf16.mxu0 0
  %2044 = vmatpush1.bf16.msra.mxu0 %v563
  %2045 = vmatprep.subr.bf16.mxu0 0
  %2046 = vmatpush1.bf16.msra.mxu0 %v564
  %2047 = vmatprep.subr.bf16.mxu0 0
  %2048 = vmatpush1.bf16.msra.mxu0 %v565
  %2049 = vmatprep.subr.bf16.mxu0 0
  %2050 = vmatpush1.bf16.msra.mxu0 %v566
  %2051 = vmatprep.subr.bf16.mxu0 0
  %2052 = vmatpush1.bf16.msra.mxu0 %v567
  %2053 = vmatprep.subr.bf16.mxu0 0
  %2054 = vmatpush1.bf16.msra.mxu0 %v568
  %2055 = vmatprep.subr.bf16.mxu0 0
  %2056 = vmatpush1.bf16.msra.mxu0 %v569
  %2057 = vmatprep.subr.bf16.mxu0 0
  %2058 = vmatpush1.bf16.msra.mxu0 %v570
  %2059 = vmatprep.subr.bf16.mxu0 0
  %2060 = vmatpush1.bf16.msra.mxu0 %v571
  %2061 = vmatprep.subr.bf16.mxu0 0
  %2062 = vmatpush1.bf16.msra.mxu0 %v572
  %2063 = vmatprep.subr.bf16.mxu0 0
  %2064 = vmatpush1.bf16.msra.mxu0 %v573
  %2065 = vmatprep.subr.bf16.mxu0 0
  %2066 = vmatpush1.bf16.msra.mxu0 %v574
  %2067 = vmatprep.subr.bf16.mxu0 0
  %2068 = vmatpush1.bf16.msra.mxu0 %v575
  %2069 = vmatprep.subr.bf16.mxu0 0
  %2070 = vmatpush1.bf16.msra.mxu0 %v576
  %2071 = vmatprep.subr.bf16.mxu0 0
  %2072 = vmatpush1.bf16.msra.mxu0 %v577
  %2073 = vmatprep.mubr.bf16.mxu0 %v1970
  %2074 = vmatmul.mubr.bf16.gmra.mrb[0].mxu0 %v1969
  %v2075 = vpop.f32.mrb[0].mxu0
  %v2076 = vadd.f32 0.0, %v2075
  %v2077 = vpop.f32.mrb[0].mxu0
  %v2078 = vpop.f32.mrb[0].mxu0
  %v2079 = vadd.f32 0.0, %v2078
  %v2080 = vpop.f32.mrb[0].mxu0
  %2081 = vmatprep.mubr.bf16.mxu0 %v1978
  %2082 = vmatmul.mubr.bf16.gmra.mrb[0].mxu0 %v1977
  %v2083 = vpop.f32.mrb[0].mxu0
  %v2084 = vadd.f32 0.0, %v2083
  %v2085 = vpop.f32.mrb[0].mxu0
  %v2086 = vpop.f32.mrb[0].mxu0
  %v2087 = vadd.f32 0.0, %v2086
  %v2088 = vpop.f32.mrb[0].mxu0
  %2089 = vmatprep.mubr.bf16.mxu0 %v1986
  %2090 = vmatmul.mubr.bf16.gmra.mrb[0].mxu0 %v1985
  %v2091 = vpop.f32.mrb[0].mxu0
  %v2092 = vadd.f32 0.0, %v2091
  %v2093 = vpop.f32.mrb[0].mxu0
  %v2094 = vpop.f32.mrb[0].mxu0
  %v2095 = vadd.f32 0.0, %v2094
  %v2096 = vpop.f32.mrb[0].mxu0
  %2097 = vmatprep.mubr.bf16.mxu0 %v1994
  %2098 = vmatmul.mubr.bf16.gmra.mrb[0].mxu0 %v1993
  %v2099 = vpop.f32.mrb[0].mxu0
  %v2100 = vadd.f32 0.0, %v2099
  %v2101 = vpop.f32.mrb[0].mxu0
  %v2102 = vpop.f32.mrb[0].mxu0
  %v2103 = vpop.f32.mrb[0].mxu0
  %2104 = vdwg.mxu0
  %2105 = vmatprep.subr.bf16.mxu0 0
  %2106 = vmatpush1.bf16.msra.mxu0 %v578
  %2107 = vmatprep.subr.bf16.mxu0 0
  %2108 = vmatpush1.bf16.msra.mxu0 %v579
  %2109 = vmatprep.subr.bf16.mxu0 0
  %2110 = vmatpush1.bf16.msra.mxu0 %v580
  %2111 = vmatprep.subr.bf16.mxu0 0
  %2112 = vmatpush1.bf16.msra.mxu0 %v581
  %2113 = vmatprep.subr.bf16.mxu0 0
  %2114 = vmatpush1.bf16.msra.mxu0 %v582
  %2115 = vmatprep.subr.bf16.mxu0 0
  %2116 = vmatpush1.bf16.msra.mxu0 %v583
  %2117 = vmatprep.subr.bf16.mxu0 0
  %2118 = vmatpush1.bf16.msra.mxu0 %v584
  %2119 = vmatprep.subr.bf16.mxu0 0
  %2120 = vmatpush1.bf16.msra.mxu0 %v585
  %2121 = vmatprep.subr.bf16.mxu0 0
  %2122 = vmatpush1.bf16.msra.mxu0 %v586
  %2123 = vmatprep.subr.bf16.mxu0 0
  %2124 = vmatpush1.bf16.msra.mxu0 %v587
  %2125 = vmatprep.subr.bf16.mxu0 0
  %2126 = vmatpush1.bf16.msra.mxu0 %v588
  %2127 = vmatprep.subr.bf16.mxu0 0
  %2128 = vmatpush1.bf16.msra.mxu0 %v589
  %2129 = vmatprep.subr.bf16.mxu0 0
  %2130 = vmatpush1.bf16.msra.mxu0 %v590
  %2131 = vmatprep.subr.bf16.mxu0 0
  %2132 = vmatpush1.bf16.msra.mxu0 %v591
  %2133 = vmatprep.subr.bf16.mxu0 0
  %2134 = vmatpush1.bf16.msra.mxu0 %v592
  %2135 = vmatprep.subr.bf16.mxu0 0
  %2136 = vmatpush1.bf16.msra.mxu0 %v593
  %2137 = vmatprep.mubr.bf16.mxu0 %v1972
  %2138 = vmatmul.mubr.bf16.gmra.mrb[0].mxu0 %v1971
  %v2139 = vpop.f32.mrb[0].mxu0
  %v2140 = vadd.f32 %v2076, %v2139
  %v2141 = vpop.f32.mrb[0].mxu0
  %v2142 = vpop.f32.mrb[0].mxu0
  %v2143 = vadd.f32 %v2079, %v2142
  %v2144 = vpop.f32.mrb[0].mxu0
  %2145 = vmatprep.mubr.bf16.mxu0 %v1980
  %2146 = vmatmul.mubr.bf16.gmra.mrb[0].mxu0 %v1979
  %v2147 = vpop.f32.mrb[0].mxu0
  %v2148 = vadd.f32 %v2084, %v2147
  %v2149 = vpop.f32.mrb[0].mxu0
  %v2150 = vpop.f32.mrb[0].mxu0
  %v2151 = vadd.f32 %v2087, %v2150
  %v2152 = vpop.f32.mrb[0].mxu0
  %2153 = vmatprep.mubr.bf16.mxu0 %v1988
  %2154 = vmatmul.mubr.bf16.gmra.mrb[0].mxu0 %v1987
  %v2155 = vpop.f32.mrb[0].mxu0
  %v2156 = vadd.f32 %v2092, %v2155
  %v2157 = vpop.f32.mrb[0].mxu0
  %v2158 = vpop.f32.mrb[0].mxu0
  %v2159 = vadd.f32 %v2095, %v2158
  %v2160 = vpop.f32.mrb[0].mxu0
  %2161 = vmatprep.mubr.bf16.mxu0 %v1996
  %2162 = vmatmul.mubr.bf16.gmra.mrb[0].mxu0 %v1995
  %v2163 = vpop.f32.mrb[0].mxu0
  %v2164 = vadd.f32 %v2100, %v2163
  %v2165 = vpop.f32.mrb[0].mxu0
  %v2166 = vpop.f32.mrb[0].mxu0
  %v2167 = vpop.f32.mrb[0].mxu0
  %2168 = vdwg.mxu0
  %2169 = vmatprep.subr.bf16.mxu0 0
  %2170 = vmatpush1.bf16.msra.mxu0 %v594
  %2171 = vmatprep.subr.bf16.mxu0 0
  %2172 = vmatpush1.bf16.msra.mxu0 %v595
  %2173 = vmatprep.subr.bf16.mxu0 0
  %2174 = vmatpush1.bf16.msra.mxu0 %v596
  %2175 = vmatprep.subr.bf16.mxu0 0
  %2176 = vmatpush1.bf16.msra.mxu0 %v597
  %2177 = vmatprep.subr.bf16.mxu0 0
  %2178 = vmatpush1.bf16.msra.mxu0 %v598
  %2179 = vmatprep.subr.bf16.mxu0 0
  %2180 = vmatpush1.bf16.msra.mxu0 %v599
  %2181 = vmatprep.subr.bf16.mxu0 0
  %2182 = vmatpush1.bf16.msra.mxu0 %v600
  %2183 = vmatprep.subr.bf16.mxu0 0
  %2184 = vmatpush1.bf16.msra.mxu0 %v601
  %2185 = vmatprep.subr.bf16.mxu0 0
  %2186 = vmatpush1.bf16.msra.mxu0 %v602
  %2187 = vmatprep.subr.bf16.mxu0 0
  %2188 = vmatpush1.bf16.msra.mxu0 %v603
  %2189 = vmatprep.subr.bf16.mxu0 0
  %2190 = vmatpush1.bf16.msra.mxu0 %v604
  %2191 = vmatprep.subr.bf16.mxu0 0
  %2192 = vmatpush1.bf16.msra.mxu0 %v605
  %2193 = vmatprep.subr.bf16.mxu0 0
  %2194 = vmatpush1.bf16.msra.mxu0 %v606
  %2195 = vmatprep.subr.bf16.mxu0 0
  %2196 = vmatpush1.bf16.msra.mxu0 %v607
  %2197 = vmatprep.subr.bf16.mxu0 0
  %2198 = vmatpush1.bf16.msra.mxu0 %v608
  %2199 = vmatprep.subr.bf16.mxu0 0
  %2200 = vmatpush1.bf16.msra.mxu0 %v609
  %2201 = vmatprep.mubr.bf16.mxu0 %v1974
  %2202 = vmatmul.mubr.bf16.gmra.mrb[0].mxu0 %v1973
  %v2203 = vpop.f32.mrb[0].mxu0
  %v2204 = vadd.f32 %v2140, %v2203
  %v2205 = vpop.f32.mrb[0].mxu0
  %v2206 = vpop.f32.mrb[0].mxu0
  %v2207 = vadd.f32 %v2143, %v2206
  %v2208 = vpop.f32.mrb[0].mxu0
  %2209 = vmatprep.mubr.bf16.mxu0 %v1982
  %2210 = vmatmul.mubr.bf16.gmra.mrb[0].mxu0 %v1981
  %v2211 = vpop.f32.mrb[0].mxu0
  %v2212 = vadd.f32 %v2148, %v2211
  %v2213 = vpop.f32.mrb[0].mxu0
  %v2214 = vpop.f32.mrb[0].mxu0
  %v2215 = vadd.f32 %v2151, %v2214
  %v2216 = vpop.f32.mrb[0].mxu0
  %2217 = vmatprep.mubr.bf16.mxu0 %v1990
  %2218 = vmatmul.mubr.bf16.gmra.mrb[0].mxu0 %v1989
  %v2219 = vpop.f32.mrb[0].mxu0
  %v2220 = vadd.f32 %v2156, %v2219
  %v2221 = vpop.f32.mrb[0].mxu0
  %v2222 = vpop.f32.mrb[0].mxu0
  %v2223 = vadd.f32 %v2159, %v2222
  %v2224 = vpop.f32.mrb[0].mxu0
  %2225 = vmatprep.mubr.bf16.mxu0 %v1998
  %2226 = vmatmul.mubr.bf16.gmra.mrb[0].mxu0 %v1997
  %v2227 = vpop.f32.mrb[0].mxu0
  %v2228 = vadd.f32 %v2164, %v2227
  %v2229 = vpop.f32.mrb[0].mxu0
  %v2230 = vpop.f32.mrb[0].mxu0
  %v2231 = vpop.f32.mrb[0].mxu0
  %2232 = vdwg.mxu0
  %2233 = vmatprep.subr.bf16.mxu0 0
  %2234 = vmatpush1.bf16.msra.mxu0 %v610
  %2235 = vmatprep.subr.bf16.mxu0 0
  %2236 = vmatpush1.bf16.msra.mxu0 %v611
  %2237 = vmatprep.subr.bf16.mxu0 0
  %2238 = vmatpush1.bf16.msra.mxu0 %v612
  %2239 = vmatprep.subr.bf16.mxu0 0
  %2240 = vmatpush1.bf16.msra.mxu0 %v613
  %2241 = vmatprep.subr.bf16.mxu0 0
  %2242 = vmatpush1.bf16.msra.mxu0 %v614
  %2243 = vmatprep.subr.bf16.mxu0 0
  %2244 = vmatpush1.bf16.msra.mxu0 %v615
  %2245 = vmatprep.subr.bf16.mxu0 0
  %2246 = vmatpush1.bf16.msra.mxu0 %v616
  %2247 = vmatprep.subr.bf16.mxu0 0
  %2248 = vmatpush1.bf16.msra.mxu0 %v617
  %2249 = vmatprep.subr.bf16.mxu0 0
  %2250 = vmatpush1.bf16.msra.mxu0 %v618
  %2251 = vmatprep.subr.bf16.mxu0 0
  %2252 = vmatpush1.bf16.msra.mxu0 %v619
  %2253 = vmatprep.subr.bf16.mxu0 0
  %2254 = vmatpush1.bf16.msra.mxu0 %v620
  %2255 = vmatprep.subr.bf16.mxu0 0
  %2256 = vmatpush1.bf16.msra.mxu0 %v621
  %2257 = vmatprep.subr.bf16.mxu0 0
  %2258 = vmatpush1.bf16.msra.mxu0 %v622
  %2259 = vmatprep.subr.bf16.mxu0 0
  %2260 = vmatpush1.bf16.msra.mxu0 %v623
  %2261 = vmatprep.subr.bf16.mxu0 0
  %2262 = vmatpush1.bf16.msra.mxu0 %v702
  %2263 = vmatprep.subr.bf16.mxu0 0
  %2264 = vmatpush1.bf16.msra.mxu0 0
  %2265 = vmatprep.mubr.bf16.mxu0 %v2030
  %2266 = vmatmul.mubr.bf16.gmra.mrb[0].mxu0 %v1975
  %v2267 = vpop.f32.mrb[0].mxu0
  %v2268 = vadd.f32 %v2204, %v2267
  %v2269 = vpop.f32.mrb[0].mxu0
  %v2270 = vpop.f32.mrb[0].mxu0
  %v2271 = vadd.f32 %v2207, %v2270
  %v2272 = vpop.f32.mrb[0].mxu0
  %2273 = vmatprep.mubr.bf16.mxu0 %v2033
  %2274 = vmatmul.mubr.bf16.gmra.mrb[0].mxu0 %v1983
  %v2275 = vpop.f32.mrb[0].mxu0
  %v2276 = vadd.f32 %v2212, %v2275
  %v2277 = vpop.f32.mrb[0].mxu0
  %v2278 = vpop.f32.mrb[0].mxu0
  %v2279 = vadd.f32 %v2215, %v2278
  %v2280 = vpop.f32.mrb[0].mxu0
  %2281 = vmatprep.mubr.bf16.mxu0 %v2036
  %2282 = vmatmul.mubr.bf16.gmra.mrb[0].mxu0 %v1991
  %v2283 = vpop.f32.mrb[0].mxu0
  %v2284 = vadd.f32 %v2220, %v2283
  %v2285 = vpop.f32.mrb[0].mxu0
  %v2286 = vpop.f32.mrb[0].mxu0
  %v2287 = vadd.f32 %v2223, %v2286
  %v2288 = vpop.f32.mrb[0].mxu0
  %2289 = vmatprep.mubr.bf16.mxu0 %v2039
  %2290 = vmatmul.mubr.bf16.gmra.mrb[0].mxu0 %v1999
  %v2291 = vpop.f32.mrb[0].mxu0
  %v2292 = vadd.f32 %v2228, %v2291
  %v2293 = vpop.f32.mrb[0].mxu0
  %v2294 = vpop.f32.mrb[0].mxu0
  %v2295 = vpop.f32.mrb[0].mxu0
  %2296 = vdwg.mxu0
  %v2297 = vmax.f32 %v1849, %v2268
  %v2298 = vmax.f32 %v1850, %v2271
  %v2299 = vmax.f32 %v1851, %v2276
  %v2300 = vmax.f32 %v1852, %v2279
  %v2301 = vmax.f32 %v1853, %v2284
  %v2302 = vmax.f32 %v1854, %v2287
  %v2303 = vmax.f32 %v1855, %v2292
  %v2304 = vld [vmem:[%s2] sm:$0x1]
  %v2306 = vlaneseq
  %v2307 = vshrl.u32 %v2306, 7
  %v2308 = vsub.s32 0, %v2307
  %v2309 = vrot.slane %v2304, %v2308
  %v2311 = vadd.f32 %v2297, %v2309
  %v2312 = vadd.f32 %v2298, %v2309
  %v2313 = vadd.f32 %v2299, %v2309
  %v2314 = vadd.f32 %v2300, %v2309
  %v2315 = vadd.f32 %v2301, %v2309
  %v2316 = vadd.f32 %v2302, %v2309
  %v2317 = vadd.f32 %v2303, %v2309
  %v2318 = vmax.f32 %v2311, 0.0
  %v2319 = vmax.f32 %v2312, 0.0
  %v2320 = vmax.f32 %v2313, 0.0
  %v2321 = vmax.f32 %v2314, 0.0
  %v2322 = vmax.f32 %v2315, 0.0
  %v2323 = vmax.f32 %v2316, 0.0
  %v2324 = vmax.f32 %v2317, 0.0
  %v2325 = vpack.c.bf16 %v2319, %v2318
  %v2326 = vpack.c.bf16 %v2321, %v2320
  %v2327 = vpack.c.bf16 %v2323, %v2322
  %v2328 = vpack.c.bf16 %v2324, %v2324
  %v2333 = vunpack.c.l.b16 %v2325
  %v2334 = vunpack.c.h.b16 %v2325
  %v2335 = vunpack.c.l.b16 %v2326
  %v2336 = vunpack.c.h.b16 %v2326
  %v2337 = vunpack.c.l.b16 %v2327
  %v2338 = vunpack.c.h.b16 %v2327
  %v2339 = vunpack.c.l.b16 %v2328
  %v2340 = vpack.c.b16 %v2333, %v2333
  %v2341 = vpack.c.b16 %v2334, %v2334
  %v2342 = vpack.c.b16 %v2335, %v2335
  %v2343 = vpack.c.b16 %v2336, %v2336
  %v2344 = vpack.c.b16 %v2337, %v2337
  %v2345 = vpack.c.b16 %v2338, %v2338
  %v2346 = vpack.c.b16 %v2339, %v2339
  %2354 = vst [vmem:[%s3] sm:$0xf] %v2340
  %2355 = vst [vmem:[%s3 + $0x4] sm:$0xf] %v2341
  %2356 = vst [vmem:[%s3 + $0x8] sm:$0xf] %v2342
  %2357 = vst [vmem:[%s3 + $0xc] sm:$0xf] %v2343
  %2358 = vst [vmem:[%s3 + $0x10] sm:$0xf] %v2344
  %2359 = vst [vmem:[%s3 + $0x14] sm:$0xf] %v2345
  %2360 = vst [vmem:[%s3 + $0x18] sm:$0x1] %v2346
  // Predicated region
  $region14: #{hebbcnn_forward.4} parent=0 // pred_check
    _
  $region15: #{hebbcnn_forward.4} parent=0 // pred_check_branch
    %2362 = sbr.rel (0) target = $region17
  $region16: #{hebbcnn_forward.4} parent=0 // pred_region
    _
  $region17: #{hebbcnn_forward.4} parent=0 // pred_fallthru
    _
  // Predicated region
  $region18: #{hebbcnn_forward.4} parent=0 // pred_check
    _
  $region19: #{hebbcnn_forward.4} parent=0 // pred_check_branch
    %2364 = sbr.rel (0) target = $region21
  $region20: #{hebbcnn_forward.4} parent=0 // pred_region
    _
  $region21: #{hebbcnn_forward.4} parent=0 // pred_fallthru
    _

// kernel: hebbcnn_forward.5
$region0: #{hebbcnn_forward.5}
  #allocation0 [shape = 'u32[]', space=smem, size = 0x4, offset = 0x4, fixed_abs, tag = 'smem constant byte address 0x4 - core index']
  #allocation1 [shape = 'u32[144,128]{1,0:T(1,128)}', space=vmem, size = 0x12000, scoped, tag = 'internal scratch']
  %s0 = inlined_call_operand.vmem [shape: bf16[2,3200], index: 0, kind: input, shape index: {}]
  %s1 = inlined_call_operand.vmem [shape: bf16[3200,512], index: 1, kind: input, shape index: {}]
  %s2 = inlined_call_operand.vmem [shape: f32[1,512], index: 2, kind: input, shape index: {}]
  %s3 = inlined_call_operand.vmem [shape: bf16[512,128], index: 3, kind: input, shape index: {}]
  %s4 = inlined_call_operand.vmem [shape: f32[1,128], index: 4, kind: input, shape index: {}]
  %s5 = inlined_call_operand.hbm [shape: f32[2,128], index: 5, kind: output, shape index: {}]
  %s6 = sld [smem:[#allocation0]]
  $region30: #{hebbcnn_forward.5} parent=0
    _
  %s8 = ssub.s32 1, %s6
  %s9 = scalar_select 0, %s8, %s6
  $region1: #{hebbcnn_forward.5} parent=0
    #allocation2 [shape = 'u8[1024]{0}', space=vmem, size = 0x400, scoped, tag = 'output window, operand 0, single buffered']
    #allocation3 [shape = 's32[1]{0}', space=sflag, size = 0x4, scoped, tag = 'scoped memory for hebbcnn_forward.5']
    %10 = vsyncpa [#allocation3], 0
    // Predicated region
    $region2: #{hebbcnn_forward.5} parent=1 // pred_check
      _
    $region3: #{hebbcnn_forward.5} parent=1 // pred_check_branch
      %12 = sbr.rel (0) target = $region5
    $region4: #{hebbcnn_forward.5} parent=1 // pred_region
      _
    $region5: #{hebbcnn_forward.5} parent=1 // pred_fallthru
      _
    // Predicated region
    $region6: #{hebbcnn_forward.5} parent=1 // pred_check
      _
    $region7: #{hebbcnn_forward.5} parent=1 // pred_check_branch
      %14 = sbr.rel (0) target = $region9
    $region8: #{hebbcnn_forward.5} parent=1 // pred_region
      _
    $region9: #{hebbcnn_forward.5} parent=1 // pred_fallthru
      _
    // Predicated region
    $region10: #{hebbcnn_forward.5} parent=1 // pred_check
      _
    $region11: #{hebbcnn_forward.5} parent=1 // pred_check_branch
      %16 = sbr.rel (0) target = $region13
    $region12: #{hebbcnn_forward.5} parent=1 // pred_region
      _
    $region13: #{hebbcnn_forward.5} parent=1 // pred_fallthru
      _
    // Predicated region
    $region14: #{hebbcnn_forward.5} parent=1 // pred_check
      _
    $region15: #{hebbcnn_forward.5} parent=1 // pred_check_branch
      %18 = sbr.rel (0) target = $region17
    $region16: #{hebbcnn_forward.5} parent=1 // pred_region
      _
    $region17: #{hebbcnn_forward.5} parent=1 // pred_fallthru
      _
    // Predicated region
    $region18: #{hebbcnn_forward.5} parent=1 // pred_check
      _
    $region19: #{hebbcnn_forward.5} parent=1 // pred_check_branch
      %20 = sbr.rel (0) target = $region21
    $region20: #{hebbcnn_forward.5} parent=1 // pred_region
      _
    $region21: #{hebbcnn_forward.5} parent=1 // pred_fallthru
      _
    %v22 = vld [vmem:[%s0] sm:$0xff]
    %v23 = vld [vmem:[%s0 + $0x8] sm:$0xff]
    %v24 = vld [vmem:[%s0 + $0x10] sm:$0xff]
    %v25 = vld [vmem:[%s0 + $0x18] sm:$0x1]
    %v26 = vld [vmem:[%s1] sm:$0xff]
    %v27 = vld [vmem:[%s1 + $0x8] sm:$0xff]
    %v28 = vld [vmem:[%s1 + $0x10] sm:$0xff]
    %v29 = vld [vmem:[%s1 + $0x18] sm:$0xff]
    %v30 = vld [vmem:[%s1 + $0x20] sm:$0xff]
    %v31 = vld [vmem:[%s1 + $0x28] sm:$0xff]
    %v32 = vld [vmem:[%s1 + $0x30] sm:$0xff]
    %v33 = vld [vmem:[%s1 + $0x38] sm:$0xff]
    %v34 = vld [vmem:[%s1 + $0x40] sm:$0xff]
    %v35 = vld [vmem:[%s1 + $0x48] sm:$0xff]
    %v36 = vld [vmem:[%s1 + $0x50] sm:$0xff]
    %v37 = vld [vmem:[%s1 + $0x58] sm:$0xff]
    %v38 = vld [vmem:[%s1 + $0x60] sm:$0xff]
    %v39 = vld [vmem:[%s1 + $0x68] sm:$0xff]
    %v40 = vld [vmem:[%s1 + $0x70] sm:$0xff]
    %v41 = vld [vmem:[%s1 + $0x78] sm:$0xff]
    %v42 = vld [vmem:[%s1 + $0x80] sm:$0xff]
    %v43 = vld [vmem:[%s1 + $0x88] sm:$0xff]
    %v44 = vld [vmem:[%s1 + $0x90] sm:$0xff]
    %v45 = vld [vmem:[%s1 + $0x98] sm:$0xff]
    %v46 = vld [vmem:[%s1 + $0xa0] sm:$0xff]
    %v47 = vld [vmem:[%s1 + $0xa8] sm:$0xff]
    %v48 = vld [vmem:[%s1 + $0xb0] sm:$0xff]
    %v49 = vld [vmem:[%s1 + $0xb8] sm:$0xff]
    %v50 = vld [vmem:[%s1 + $0xc0] sm:$0xff]
    %v51 = vld [vmem:[%s1 + $0xc8] sm:$0xff]
    %v52 = vld [vmem:[%s1 + $0xd0] sm:$0xff]
    %v53 = vld [vmem:[%s1 + $0xd8] sm:$0xff]
    %v54 = vld [vmem:[%s1 + $0xe0] sm:$0xff]
    %v55 = vld [vmem:[%s1 + $0xe8] sm:$0xff]
    %v56 = vld [vmem:[%s1 + $0xf0] sm:$0xff]
    %v57 = vld [vmem:[%s1 + $0xf8] sm:$0xff]
    %v58 = vld [vmem:[%s1 + $0x100] sm:$0xff]
    %v59 = vld [vmem:[%s1 + $0x108] sm:$0xff]
    %v60 = vld [vmem:[%s1 + $0x110] sm:$0xff]
    %v61 = vld [vmem:[%s1 + $0x118] sm:$0xff]
    %v62 = vld [vmem:[%s1 + $0x120] sm:$0xff]
    %v63 = vld [vmem:[%s1 + $0x128] sm:$0xff]
    %v64 = vld [vmem:[%s1 + $0x130] sm:$0xff]
    %v65 = vld [vmem:[%s1 + $0x138] sm:$0xff]
    %v66 = vld [vmem:[%s1 + $0x140] sm:$0xff]
    %v67 = vld [vmem:[%s1 + $0x148] sm:$0xff]
    %v68 = vld [vmem:[%s1 + $0x150] sm:$0xff]
    %v69 = vld [vmem:[%s1 + $0x158] sm:$0xff]
    %v70 = vld [vmem:[%s1 + $0x160] sm:$0xff]
    %v71 = vld [vmem:[%s1 + $0x168] sm:$0xff]
    %v72 = vld [vmem:[%s1 + $0x170] sm:$0xff]
    %v73 = vld [vmem:[%s1 + $0x178] sm:$0xff]
    %v74 = vld [vmem:[%s1 + $0x180] sm:$0xff]
    %v75 = vld [vmem:[%s1 + $0x188] sm:$0xff]
    %v76 = vld [vmem:[%s1 + $0x190] sm:$0xff]
    %v77 = vld [vmem:[%s1 + $0x198] sm:$0xff]
    %v78 = vld [vmem:[%s1 + $0x1a0] sm:$0xff]
    %v79 = vld [vmem:[%s1 + $0x1a8] sm:$0xff]
    %v80 = vld [vmem:[%s1 + $0x1b0] sm:$0xff]
    %v81 = vld [vmem:[%s1 + $0x1b8] sm:$0xff]
    %v82 = vld [vmem:[%s1 + $0x1c0] sm:$0xff]
    %v83 = vld [vmem:[%s1 + $0x1c8] sm:$0xff]
    %v84 = vld [vmem:[%s1 + $0x1d0] sm:$0xff]
    %v85 = vld [vmem:[%s1 + $0x1d8] sm:$0xff]
    %v86 = vld [vmem:[%s1 + $0x1e0] sm:$0xff]
    %v87 = vld [vmem:[%s1 + $0x1e8] sm:$0xff]
    %v88 = vld [vmem:[%s1 + $0x1f0] sm:$0xff]
    %v89 = vld [vmem:[%s1 + $0x1f8] sm:$0xff]
    %v90 = vld [vmem:[%s1 + $0x200] sm:$0xff]
    %v91 = vld [vmem:[%s1 + $0x208] sm:$0xff]
    %v92 = vld [vmem:[%s1 + $0x210] sm:$0xff]
    %v93 = vld [vmem:[%s1 + $0x218] sm:$0xff]
    %v94 = vld [vmem:[%s1 + $0x220] sm:$0xff]
    %v95 = vld [vmem:[%s1 + $0x228] sm:$0xff]
    %v96 = vld [vmem:[%s1 + $0x230] sm:$0xff]
    %v97 = vld [vmem:[%s1 + $0x238] sm:$0xff]
    %v98 = vld [vmem:[%s1 + $0x240] sm:$0xff]
    %v99 = vld [vmem:[%s1 + $0x248] sm:$0xff]
    %v100 = vld [vmem:[%s1 + $0x250] sm:$0xff]
    %v101 = vld [vmem:[%s1 + $0x258] sm:$0xff]
    %v102 = vld [vmem:[%s1 + $0x260] sm:$0xff]
    %v103 = vld [vmem:[%s1 + $0x268] sm:$0xff]
    %v104 = vld [vmem:[%s1 + $0x270] sm:$0xff]
    %v105 = vld [vmem:[%s1 + $0x278] sm:$0xff]
    %v106 = vld [vmem:[%s1 + $0x280] sm:$0xff]
    %v107 = vld [vmem:[%s1 + $0x288] sm:$0xff]
    %v108 = vld [vmem:[%s1 + $0x290] sm:$0xff]
    %v109 = vld [vmem:[%s1 + $0x298] sm:$0xff]
    %v110 = vld [vmem:[%s1 + $0x2a0] sm:$0xff]
    %v111 = vld [vmem:[%s1 + $0x2a8] sm:$0xff]
    %v112 = vld [vmem:[%s1 + $0x2b0] sm:$0xff]
    %v113 = vld [vmem:[%s1 + $0x2b8] sm:$0xff]
    %v114 = vld [vmem:[%s1 + $0x2c0] sm:$0xff]
    %v115 = vld [vmem:[%s1 + $0x2c8] sm:$0xff]
    %v116 = vld [vmem:[%s1 + $0x2d0] sm:$0xff]
    %v117 = vld [vmem:[%s1 + $0x2d8] sm:$0xff]
    %v118 = vld [vmem:[%s1 + $0x2e0] sm:$0xff]
    %v119 = vld [vmem:[%s1 + $0x2e8] sm:$0xff]
    %v120 = vld [vmem:[%s1 + $0x2f0] sm:$0xff]
    %v121 = vld [vmem:[%s1 + $0x2f8] sm:$0xff]
    %v122 = vld [vmem:[%s1 + $0x300] sm:$0xff]
    %v123 = vld [vmem:[%s1 + $0x308] sm:$0xff]
    %v124 = vld [vmem:[%s1 + $0x310] sm:$0xff]
    %v125 = vld [vmem:[%s1 + $0x318] sm:$0xff]
    %v126 = vld [vmem:[%s1 + $0x320] sm:$0xff]
    %v127 = vld [vmem:[%s1 + $0x328] sm:$0xff]
    %v128 = vld [vmem:[%s1 + $0x330] sm:$0xff]
    %v129 = vld [vmem:[%s1 + $0x338] sm:$0xff]
    %v130 = vld [vmem:[%s1 + $0x340] sm:$0xff]
    %v131 = vld [vmem:[%s1 + $0x348] sm:$0xff]
    %v132 = vld [vmem:[%s1 + $0x350] sm:$0xff]
    %v133 = vld [vmem:[%s1 + $0x358] sm:$0xff]
    %v134 = vld [vmem:[%s1 + $0x360] sm:$0xff]
    %v135 = vld [vmem:[%s1 + $0x368] sm:$0xff]
    %v136 = vld [vmem:[%s1 + $0x370] sm:$0xff]
    %v137 = vld [vmem:[%s1 + $0x378] sm:$0xff]
    %v138 = vld [vmem:[%s1 + $0x380] sm:$0xff]
    %v139 = vld [vmem:[%s1 + $0x388] sm:$0xff]
    %v140 = vld [vmem:[%s1 + $0x390] sm:$0xff]
    %v141 = vld [vmem:[%s1 + $0x398] sm:$0xff]
    %v142 = vld [vmem:[%s1 + $0x3a0] sm:$0xff]
    %v143 = vld [vmem:[%s1 + $0x3a8] sm:$0xff]
    %v144 = vld [vmem:[%s1 + $0x3b0] sm:$0xff]
    %v145 = vld [vmem:[%s1 + $0x3b8] sm:$0xff]
    %v146 = vld [vmem:[%s1 + $0x3c0] sm:$0xff]
    %v147 = vld [vmem:[%s1 + $0x3c8] sm:$0xff]
    %v148 = vld [vmem:[%s1 + $0x3d0] sm:$0xff]
    %v149 = vld [vmem:[%s1 + $0x3d8] sm:$0xff]
    %v150 = vld [vmem:[%s1 + $0x3e0] sm:$0xff]
    %v151 = vld [vmem:[%s1 + $0x3e8] sm:$0xff]
    %v152 = vld [vmem:[%s1 + $0x3f0] sm:$0xff]
    %v153 = vld [vmem:[%s1 + $0x3f8] sm:$0xff]
    %v154 = vld [vmem:[%s1 + $0x400] sm:$0xff]
    %v155 = vld [vmem:[%s1 + $0x408] sm:$0xff]
    %v156 = vld [vmem:[%s1 + $0x410] sm:$0xff]
    %v157 = vld [vmem:[%s1 + $0x418] sm:$0xff]
    %v158 = vld [vmem:[%s1 + $0x420] sm:$0xff]
    %v159 = vld [vmem:[%s1 + $0x428] sm:$0xff]
    %v160 = vld [vmem:[%s1 + $0x430] sm:$0xff]
    %v161 = vld [vmem:[%s1 + $0x438] sm:$0xff]
    %v162 = vld [vmem:[%s1 + $0x440] sm:$0xff]
    %v163 = vld [vmem:[%s1 + $0x448] sm:$0xff]
    %v164 = vld [vmem:[%s1 + $0x450] sm:$0xff]
    %v165 = vld [vmem:[%s1 + $0x458] sm:$0xff]
    %v166 = vld [vmem:[%s1 + $0x460] sm:$0xff]
    %v167 = vld [vmem:[%s1 + $0x468] sm:$0xff]
    %v168 = vld [vmem:[%s1 + $0x470] sm:$0xff]
    %v169 = vld [vmem:[%s1 + $0x478] sm:$0xff]
    %v170 = vld [vmem:[%s1 + $0x480] sm:$0xff]
    %v171 = vld [vmem:[%s1 + $0x488] sm:$0xff]
    %v172 = vld [vmem:[%s1 + $0x490] sm:$0xff]
    %v173 = vld [vmem:[%s1 + $0x498] sm:$0xff]
    %v174 = vld [vmem:[%s1 + $0x4a0] sm:$0xff]
    %v175 = vld [vmem:[%s1 + $0x4a8] sm:$0xff]
    %v176 = vld [vmem:[%s1 + $0x4b0] sm:$0xff]
    %v177 = vld [vmem:[%s1 + $0x4b8] sm:$0xff]
    %v178 = vld [vmem:[%s1 + $0x4c0] sm:$0xff]
    %v179 = vld [vmem:[%s1 + $0x4c8] sm:$0xff]
    %v180 = vld [vmem:[%s1 + $0x4d0] sm:$0xff]
    %v181 = vld [vmem:[%s1 + $0x4d8] sm:$0xff]
    %v182 = vld [vmem:[%s1 + $0x4e0] sm:$0xff]
    %v183 = vld [vmem:[%s1 + $0x4e8] sm:$0xff]
    %v184 = vld [vmem:[%s1 + $0x4f0] sm:$0xff]
    %v185 = vld [vmem:[%s1 + $0x4f8] sm:$0xff]
    %v186 = vld [vmem:[%s1 + $0x500] sm:$0xff]
    %v187 = vld [vmem:[%s1 + $0x508] sm:$0xff]
    %v188 = vld [vmem:[%s1 + $0x510] sm:$0xff]
    %v189 = vld [vmem:[%s1 + $0x518] sm:$0xff]
    %v190 = vld [vmem:[%s1 + $0x520] sm:$0xff]
    %v191 = vld [vmem:[%s1 + $0x528] sm:$0xff]
    %v192 = vld [vmem:[%s1 + $0x530] sm:$0xff]
    %v193 = vld [vmem:[%s1 + $0x538] sm:$0xff]
    %v194 = vld [vmem:[%s1 + $0x540] sm:$0xff]
    %v195 = vld [vmem:[%s1 + $0x548] sm:$0xff]
    %v196 = vld [vmem:[%s1 + $0x550] sm:$0xff]
    %v197 = vld [vmem:[%s1 + $0x558] sm:$0xff]
    %v198 = vld [vmem:[%s1 + $0x560] sm:$0xff]
    %v199 = vld [vmem:[%s1 + $0x568] sm:$0xff]
    %v200 = vld [vmem:[%s1 + $0x570] sm:$0xff]
    %v201 = vld [vmem:[%s1 + $0x578] sm:$0xff]
    %v202 = vld [vmem:[%s1 + $0x580] sm:$0xff]
    %v203 = vld [vmem:[%s1 + $0x588] sm:$0xff]
    %v204 = vld [vmem:[%s1 + $0x590] sm:$0xff]
    %v205 = vld [vmem:[%s1 + $0x598] sm:$0xff]
    %v206 = vld [vmem:[%s1 + $0x5a0] sm:$0xff]
    %v207 = vld [vmem:[%s1 + $0x5a8] sm:$0xff]
    %v208 = vld [vmem:[%s1 + $0x5b0] sm:$0xff]
    %v209 = vld [vmem:[%s1 + $0x5b8] sm:$0xff]
    %v210 = vld [vmem:[%s1 + $0x5c0] sm:$0xff]
    %v211 = vld [vmem:[%s1 + $0x5c8] sm:$0xff]
    %v212 = vld [vmem:[%s1 + $0x5d0] sm:$0xff]
    %v213 = vld [vmem:[%s1 + $0x5d8] sm:$0xff]
    %v214 = vld [vmem:[%s1 + $0x5e0] sm:$0xff]
    %v215 = vld [vmem:[%s1 + $0x5e8] sm:$0xff]
    %v216 = vld [vmem:[%s1 + $0x5f0] sm:$0xff]
    %v217 = vld [vmem:[%s1 + $0x5f8] sm:$0xff]
    %v218 = vld [vmem:[%s1 + $0x600] sm:$0xff]
    %v219 = vld [vmem:[%s1 + $0x608] sm:$0xff]
    %v220 = vld [vmem:[%s1 + $0x610] sm:$0xff]
    %v221 = vld [vmem:[%s1 + $0x618] sm:$0xff]
    %v222 = vld [vmem:[%s1 + $0x620] sm:$0xff]
    %v223 = vld [vmem:[%s1 + $0x628] sm:$0xff]
    %v224 = vld [vmem:[%s1 + $0x630] sm:$0xff]
    %v225 = vld [vmem:[%s1 + $0x638] sm:$0xff]
    %v226 = vld [vmem:[%s1 + $0x640] sm:$0xff]
    %v227 = vld [vmem:[%s1 + $0x648] sm:$0xff]
    %v228 = vld [vmem:[%s1 + $0x650] sm:$0xff]
    %v229 = vld [vmem:[%s1 + $0x658] sm:$0xff]
    %v230 = vld [vmem:[%s1 + $0x660] sm:$0xff]
    %v231 = vld [vmem:[%s1 + $0x668] sm:$0xff]
    %v232 = vld [vmem:[%s1 + $0x670] sm:$0xff]
    %v233 = vld [vmem:[%s1 + $0x678] sm:$0xff]
    %v234 = vld [vmem:[%s1 + $0x680] sm:$0xff]
    %v235 = vld [vmem:[%s1 + $0x688] sm:$0xff]
    %v236 = vld [vmem:[%s1 + $0x690] sm:$0xff]
    %v237 = vld [vmem:[%s1 + $0x698] sm:$0xff]
    %v238 = vld [vmem:[%s1 + $0x6a0] sm:$0xff]
    %v239 = vld [vmem:[%s1 + $0x6a8] sm:$0xff]
    %v240 = vld [vmem:[%s1 + $0x6b0] sm:$0xff]
    %v241 = vld [vmem:[%s1 + $0x6b8] sm:$0xff]
    %v242 = vld [vmem:[%s1 + $0x6c0] sm:$0xff]
    %v243 = vld [vmem:[%s1 + $0x6c8] sm:$0xff]
    %v244 = vld [vmem:[%s1 + $0x6d0] sm:$0xff]
    %v245 = vld [vmem:[%s1 + $0x6d8] sm:$0xff]
    %v246 = vld [vmem:[%s1 + $0x6e0] sm:$0xff]
    %v247 = vld [vmem:[%s1 + $0x6e8] sm:$0xff]
    %v248 = vld [vmem:[%s1 + $0x6f0] sm:$0xff]
    %v249 = vld [vmem:[%s1 + $0x6f8] sm:$0xff]
    %v250 = vld [vmem:[%s1 + $0x700] sm:$0xff]
    %v251 = vld [vmem:[%s1 + $0x708] sm:$0xff]
    %v252 = vld [vmem:[%s1 + $0x710] sm:$0xff]
    %v253 = vld [vmem:[%s1 + $0x718] sm:$0xff]
    %v254 = vld [vmem:[%s1 + $0x720] sm:$0xff]
    %v255 = vld [vmem:[%s1 + $0x728] sm:$0xff]
    %v256 = vld [vmem:[%s1 + $0x730] sm:$0xff]
    %v257 = vld [vmem:[%s1 + $0x738] sm:$0xff]
    %v258 = vld [vmem:[%s1 + $0x740] sm:$0xff]
    %v259 = vld [vmem:[%s1 + $0x748] sm:$0xff]
    %v260 = vld [vmem:[%s1 + $0x750] sm:$0xff]
    %v261 = vld [vmem:[%s1 + $0x758] sm:$0xff]
    %v262 = vld [vmem:[%s1 + $0x760] sm:$0xff]
    %v263 = vld [vmem:[%s1 + $0x768] sm:$0xff]
    %v264 = vld [vmem:[%s1 + $0x770] sm:$0xff]
    %v265 = vld [vmem:[%s1 + $0x778] sm:$0xff]
    %v266 = vld [vmem:[%s1 + $0x780] sm:$0xff]
    %v267 = vld [vmem:[%s1 + $0x788] sm:$0xff]
    %v268 = vld [vmem:[%s1 + $0x790] sm:$0xff]
    %v269 = vld [vmem:[%s1 + $0x798] sm:$0xff]
    %v270 = vld [vmem:[%s1 + $0x7a0] sm:$0xff]
    %v271 = vld [vmem:[%s1 + $0x7a8] sm:$0xff]
    %v272 = vld [vmem:[%s1 + $0x7b0] sm:$0xff]
    %v273 = vld [vmem:[%s1 + $0x7b8] sm:$0xff]
    %v274 = vld [vmem:[%s1 + $0x7c0] sm:$0xff]
    %v275 = vld [vmem:[%s1 + $0x7c8] sm:$0xff]
    %v276 = vld [vmem:[%s1 + $0x7d0] sm:$0xff]
    %v277 = vld [vmem:[%s1 + $0x7d8] sm:$0xff]
    %v278 = vld [vmem:[%s1 + $0x7e0] sm:$0xff]
    %v279 = vld [vmem:[%s1 + $0x7e8] sm:$0xff]
    %v280 = vld [vmem:[%s1 + $0x7f0] sm:$0xff]
    %v281 = vld [vmem:[%s1 + $0x7f8] sm:$0xff]
    %v282 = vld [vmem:[%s1 + $0x800] sm:$0xff]
    %v283 = vld [vmem:[%s1 + $0x808] sm:$0xff]
    %v284 = vld [vmem:[%s1 + $0x810] sm:$0xff]
    %v285 = vld [vmem:[%s1 + $0x818] sm:$0xff]
    %v286 = vld [vmem:[%s1 + $0x820] sm:$0xff]
    %v287 = vld [vmem:[%s1 + $0x828] sm:$0xff]
    %v288 = vld [vmem:[%s1 + $0x830] sm:$0xff]
    %v289 = vld [vmem:[%s1 + $0x838] sm:$0xff]
    %v290 = vld [vmem:[%s1 + $0x840] sm:$0xff]
    %v291 = vld [vmem:[%s1 + $0x848] sm:$0xff]
    %v292 = vld [vmem:[%s1 + $0x850] sm:$0xff]
    %v293 = vld [vmem:[%s1 + $0x858] sm:$0xff]
    %v294 = vld [vmem:[%s1 + $0x860] sm:$0xff]
    %v295 = vld [vmem:[%s1 + $0x868] sm:$0xff]
    %v296 = vld [vmem:[%s1 + $0x870] sm:$0xff]
    %v297 = vld [vmem:[%s1 + $0x878] sm:$0xff]
    %v298 = vld [vmem:[%s1 + $0x880] sm:$0xff]
    %v299 = vld [vmem:[%s1 + $0x888] sm:$0xff]
    %v300 = vld [vmem:[%s1 + $0x890] sm:$0xff]
    %v301 = vld [vmem:[%s1 + $0x898] sm:$0xff]
    %v302 = vld [vmem:[%s1 + $0x8a0] sm:$0xff]
    %v303 = vld [vmem:[%s1 + $0x8a8] sm:$0xff]
    %v304 = vld [vmem:[%s1 + $0x8b0] sm:$0xff]
    %v305 = vld [vmem:[%s1 + $0x8b8] sm:$0xff]
    %v306 = vld [vmem:[%s1 + $0x8c0] sm:$0xff]
    %v307 = vld [vmem:[%s1 + $0x8c8] sm:$0xff]
    %v308 = vld [vmem:[%s1 + $0x8d0] sm:$0xff]
    %v309 = vld [vmem:[%s1 + $0x8d8] sm:$0xff]
    %v310 = vld [vmem:[%s1 + $0x8e0] sm:$0xff]
    %v311 = vld [vmem:[%s1 + $0x8e8] sm:$0xff]
    %v312 = vld [vmem:[%s1 + $0x8f0] sm:$0xff]
    %v313 = vld [vmem:[%s1 + $0x8f8] sm:$0xff]
    %v314 = vld [vmem:[%s1 + $0x900] sm:$0xff]
    %v315 = vld [vmem:[%s1 + $0x908] sm:$0xff]
    %v316 = vld [vmem:[%s1 + $0x910] sm:$0xff]
    %v317 = vld [vmem:[%s1 + $0x918] sm:$0xff]
    %v318 = vld [vmem:[%s1 + $0x920] sm:$0xff]
    %v319 = vld [vmem:[%s1 + $0x928] sm:$0xff]
    %v320 = vld [vmem:[%s1 + $0x930] sm:$0xff]
    %v321 = vld [vmem:[%s1 + $0x938] sm:$0xff]
    %v322 = vld [vmem:[%s1 + $0x940] sm:$0xff]
    %v323 = vld [vmem:[%s1 + $0x948] sm:$0xff]
    %v324 = vld [vmem:[%s1 + $0x950] sm:$0xff]
    %v325 = vld [vmem:[%s1 + $0x958] sm:$0xff]
    %v326 = vld [vmem:[%s1 + $0x960] sm:$0xff]
    %v327 = vld [vmem:[%s1 + $0x968] sm:$0xff]
    %v328 = vld [vmem:[%s1 + $0x970] sm:$0xff]
    %v329 = vld [vmem:[%s1 + $0x978] sm:$0xff]
    %v330 = vld [vmem:[%s1 + $0x980] sm:$0xff]
    %v331 = vld [vmem:[%s1 + $0x988] sm:$0xff]
    %v332 = vld [vmem:[%s1 + $0x990] sm:$0xff]
    %v333 = vld [vmem:[%s1 + $0x998] sm:$0xff]
    %v334 = vld [vmem:[%s1 + $0x9a0] sm:$0xff]
    %v335 = vld [vmem:[%s1 + $0x9a8] sm:$0xff]
    %v336 = vld [vmem:[%s1 + $0x9b0] sm:$0xff]
    %v337 = vld [vmem:[%s1 + $0x9b8] sm:$0xff]
    %v338 = vld [vmem:[%s1 + $0x9c0] sm:$0xff]
    %v339 = vld [vmem:[%s1 + $0x9c8] sm:$0xff]
    %v340 = vld [vmem:[%s1 + $0x9d0] sm:$0xff]
    %v341 = vld [vmem:[%s1 + $0x9d8] sm:$0xff]
    %v342 = vld [vmem:[%s1 + $0x9e0] sm:$0xff]
    %v343 = vld [vmem:[%s1 + $0x9e8] sm:$0xff]
    %v344 = vld [vmem:[%s1 + $0x9f0] sm:$0xff]
    %v345 = vld [vmem:[%s1 + $0x9f8] sm:$0xff]
    %v346 = vld [vmem:[%s1 + $0xa00] sm:$0xff]
    %v347 = vld [vmem:[%s1 + $0xa08] sm:$0xff]
    %v348 = vld [vmem:[%s1 + $0xa10] sm:$0xff]
    %v349 = vld [vmem:[%s1 + $0xa18] sm:$0xff]
    %v350 = vld [vmem:[%s1 + $0xa20] sm:$0xff]
    %v351 = vld [vmem:[%s1 + $0xa28] sm:$0xff]
    %v352 = vld [vmem:[%s1 + $0xa30] sm:$0xff]
    %v353 = vld [vmem:[%s1 + $0xa38] sm:$0xff]
    %v354 = vld [vmem:[%s1 + $0xa40] sm:$0xff]
    %v355 = vld [vmem:[%s1 + $0xa48] sm:$0xff]
    %v356 = vld [vmem:[%s1 + $0xa50] sm:$0xff]
    %v357 = vld [vmem:[%s1 + $0xa58] sm:$0xff]
    %v358 = vld [vmem:[%s1 + $0xa60] sm:$0xff]
    %v359 = vld [vmem:[%s1 + $0xa68] sm:$0xff]
    %v360 = vld [vmem:[%s1 + $0xa70] sm:$0xff]
    %v361 = vld [vmem:[%s1 + $0xa78] sm:$0xff]
    %v362 = vld [vmem:[%s1 + $0xa80] sm:$0xff]
    %v363 = vld [vmem:[%s1 + $0xa88] sm:$0xff]
    %v364 = vld [vmem:[%s1 + $0xa90] sm:$0xff]
    %v365 = vld [vmem:[%s1 + $0xa98] sm:$0xff]
    %v366 = vld [vmem:[%s1 + $0xaa0] sm:$0xff]
    %v367 = vld [vmem:[%s1 + $0xaa8] sm:$0xff]
    %v368 = vld [vmem:[%s1 + $0xab0] sm:$0xff]
    %v369 = vld [vmem:[%s1 + $0xab8] sm:$0xff]
    %v370 = vld [vmem:[%s1 + $0xac0] sm:$0xff]
    %v371 = vld [vmem:[%s1 + $0xac8] sm:$0xff]
    %v372 = vld [vmem:[%s1 + $0xad0] sm:$0xff]
    %v373 = vld [vmem:[%s1 + $0xad8] sm:$0xff]
    %v374 = vld [vmem:[%s1 + $0xae0] sm:$0xff]
    %v375 = vld [vmem:[%s1 + $0xae8] sm:$0xff]
    %v376 = vld [vmem:[%s1 + $0xaf0] sm:$0xff]
    %v377 = vld [vmem:[%s1 + $0xaf8] sm:$0xff]
    %v378 = vld [vmem:[%s1 + $0xb00] sm:$0xff]
    %v379 = vld [vmem:[%s1 + $0xb08] sm:$0xff]
    %v380 = vld [vmem:[%s1 + $0xb10] sm:$0xff]
    %v381 = vld [vmem:[%s1 + $0xb18] sm:$0xff]
    %v382 = vld [vmem:[%s1 + $0xb20] sm:$0xff]
    %v383 = vld [vmem:[%s1 + $0xb28] sm:$0xff]
    %v384 = vld [vmem:[%s1 + $0xb30] sm:$0xff]
    %v385 = vld [vmem:[%s1 + $0xb38] sm:$0xff]
    %v386 = vld [vmem:[%s1 + $0xb40] sm:$0xff]
    %v387 = vld [vmem:[%s1 + $0xb48] sm:$0xff]
    %v388 = vld [vmem:[%s1 + $0xb50] sm:$0xff]
    %v389 = vld [vmem:[%s1 + $0xb58] sm:$0xff]
    %v390 = vld [vmem:[%s1 + $0xb60] sm:$0xff]
    %v391 = vld [vmem:[%s1 + $0xb68] sm:$0xff]
    %v392 = vld [vmem:[%s1 + $0xb70] sm:$0xff]
    %v393 = vld [vmem:[%s1 + $0xb78] sm:$0xff]
    %v394 = vld [vmem:[%s1 + $0xb80] sm:$0xff]
    %v395 = vld [vmem:[%s1 + $0xb88] sm:$0xff]
    %v396 = vld [vmem:[%s1 + $0xb90] sm:$0xff]
    %v397 = vld [vmem:[%s1 + $0xb98] sm:$0xff]
    %v398 = vld [vmem:[%s1 + $0xba0] sm:$0xff]
    %v399 = vld [vmem:[%s1 + $0xba8] sm:$0xff]
    %v400 = vld [vmem:[%s1 + $0xbb0] sm:$0xff]
    %v401 = vld [vmem:[%s1 + $0xbb8] sm:$0xff]
    %v402 = vld [vmem:[%s1 + $0xbc0] sm:$0xff]
    %v403 = vld [vmem:[%s1 + $0xbc8] sm:$0xff]
    %v404 = vld [vmem:[%s1 + $0xbd0] sm:$0xff]
    %v405 = vld [vmem:[%s1 + $0xbd8] sm:$0xff]
    %v406 = vld [vmem:[%s1 + $0xbe0] sm:$0xff]
    %v407 = vld [vmem:[%s1 + $0xbe8] sm:$0xff]
    %v408 = vld [vmem:[%s1 + $0xbf0] sm:$0xff]
    %v409 = vld [vmem:[%s1 + $0xbf8] sm:$0xff]
    %v410 = vld [vmem:[%s1 + $0xc00] sm:$0xff]
    %v411 = vld [vmem:[%s1 + $0xc08] sm:$0xff]
    %v412 = vld [vmem:[%s1 + $0xc10] sm:$0xff]
    %v413 = vld [vmem:[%s1 + $0xc18] sm:$0xff]
    %v414 = vld [vmem:[%s1 + $0xc20] sm:$0xff]
    %v415 = vld [vmem:[%s1 + $0xc28] sm:$0xff]
    %v416 = vld [vmem:[%s1 + $0xc30] sm:$0xff]
    %v417 = vld [vmem:[%s1 + $0xc38] sm:$0xff]
    %v418 = vld [vmem:[%s1 + $0xc40] sm:$0xff]
    %v419 = vld [vmem:[%s1 + $0xc48] sm:$0xff]
    %v420 = vld [vmem:[%s1 + $0xc50] sm:$0xff]
    %v421 = vld [vmem:[%s1 + $0xc58] sm:$0xff]
    %v422 = vld [vmem:[%s1 + $0xc60] sm:$0xff]
    %v423 = vld [vmem:[%s1 + $0xc68] sm:$0xff]
    %v424 = vld [vmem:[%s1 + $0xc70] sm:$0xff]
    %v425 = vld [vmem:[%s1 + $0xc78] sm:$0xff]
    %v426 = vld [vmem:[%s1 + $0xc80] sm:$0xff]
    %v427 = vld [vmem:[%s1 + $0xc88] sm:$0xff]
    %v428 = vld [vmem:[%s1 + $0xc90] sm:$0xff]
    %v429 = vld [vmem:[%s1 + $0xc98] sm:$0xff]
    %v430 = vld [vmem:[%s1 + $0xca0] sm:$0xff]
    %v431 = vld [vmem:[%s1 + $0xca8] sm:$0xff]
    %v432 = vld [vmem:[%s1 + $0xcb0] sm:$0xff]
    %v433 = vld [vmem:[%s1 + $0xcb8] sm:$0xff]
    %v434 = vld [vmem:[%s1 + $0xcc0] sm:$0xff]
    %v435 = vld [vmem:[%s1 + $0xcc8] sm:$0xff]
    %v436 = vld [vmem:[%s1 + $0xcd0] sm:$0xff]
    %v437 = vld [vmem:[%s1 + $0xcd8] sm:$0xff]
    %v438 = vld [vmem:[%s1 + $0xce0] sm:$0xff]
    %v439 = vld [vmem:[%s1 + $0xce8] sm:$0xff]
    %v440 = vld [vmem:[%s1 + $0xcf0] sm:$0xff]
    %v441 = vld [vmem:[%s1 + $0xcf8] sm:$0xff]
    %v442 = vld [vmem:[%s1 + $0xd00] sm:$0xff]
    %v443 = vld [vmem:[%s1 + $0xd08] sm:$0xff]
    %v444 = vld [vmem:[%s1 + $0xd10] sm:$0xff]
    %v445 = vld [vmem:[%s1 + $0xd18] sm:$0xff]
    %v446 = vld [vmem:[%s1 + $0xd20] sm:$0xff]
    %v447 = vld [vmem:[%s1 + $0xd28] sm:$0xff]
    %v448 = vld [vmem:[%s1 + $0xd30] sm:$0xff]
    %v449 = vld [vmem:[%s1 + $0xd38] sm:$0xff]
    %v450 = vld [vmem:[%s1 + $0xd40] sm:$0xff]
    %v451 = vld [vmem:[%s1 + $0xd48] sm:$0xff]
    %v452 = vld [vmem:[%s1 + $0xd50] sm:$0xff]
    %v453 = vld [vmem:[%s1 + $0xd58] sm:$0xff]
    %v454 = vld [vmem:[%s1 + $0xd60] sm:$0xff]
    %v455 = vld [vmem:[%s1 + $0xd68] sm:$0xff]
    %v456 = vld [vmem:[%s1 + $0xd70] sm:$0xff]
    %v457 = vld [vmem:[%s1 + $0xd78] sm:$0xff]
    %v458 = vld [vmem:[%s1 + $0xd80] sm:$0xff]
    %v459 = vld [vmem:[%s1 + $0xd88] sm:$0xff]
    %v460 = vld [vmem:[%s1 + $0xd90] sm:$0xff]
    %v461 = vld [vmem:[%s1 + $0xd98] sm:$0xff]
    %v462 = vld [vmem:[%s1 + $0xda0] sm:$0xff]
    %v463 = vld [vmem:[%s1 + $0xda8] sm:$0xff]
    %v464 = vld [vmem:[%s1 + $0xdb0] sm:$0xff]
    %v465 = vld [vmem:[%s1 + $0xdb8] sm:$0xff]
    %v466 = vld [vmem:[%s1 + $0xdc0] sm:$0xff]
    %v467 = vld [vmem:[%s1 + $0xdc8] sm:$0xff]
    %v468 = vld [vmem:[%s1 + $0xdd0] sm:$0xff]
    %v469 = vld [vmem:[%s1 + $0xdd8] sm:$0xff]
    %v470 = vld [vmem:[%s1 + $0xde0] sm:$0xff]
    %v471 = vld [vmem:[%s1 + $0xde8] sm:$0xff]
    %v472 = vld [vmem:[%s1 + $0xdf0] sm:$0xff]
    %v473 = vld [vmem:[%s1 + $0xdf8] sm:$0xff]
    %v474 = vld [vmem:[%s1 + $0xe00] sm:$0xff]
    %v475 = vld [vmem:[%s1 + $0xe08] sm:$0xff]
    %v476 = vld [vmem:[%s1 + $0xe10] sm:$0xff]
    %v477 = vld [vmem:[%s1 + $0xe18] sm:$0xff]
    %v478 = vld [vmem:[%s1 + $0xe20] sm:$0xff]
    %v479 = vld [vmem:[%s1 + $0xe28] sm:$0xff]
    %v480 = vld [vmem:[%s1 + $0xe30] sm:$0xff]
    %v481 = vld [vmem:[%s1 + $0xe38] sm:$0xff]
    %v482 = vld [vmem:[%s1 + $0xe40] sm:$0xff]
    %v483 = vld [vmem:[%s1 + $0xe48] sm:$0xff]
    %v484 = vld [vmem:[%s1 + $0xe50] sm:$0xff]
    %v485 = vld [vmem:[%s1 + $0xe58] sm:$0xff]
    %v486 = vld [vmem:[%s1 + $0xe60] sm:$0xff]
    %v487 = vld [vmem:[%s1 + $0xe68] sm:$0xff]
    %v488 = vld [vmem:[%s1 + $0xe70] sm:$0xff]
    %v489 = vld [vmem:[%s1 + $0xe78] sm:$0xff]
    %v490 = vld [vmem:[%s1 + $0xe80] sm:$0xff]
    %v491 = vld [vmem:[%s1 + $0xe88] sm:$0xff]
    %v492 = vld [vmem:[%s1 + $0xe90] sm:$0xff]
    %v493 = vld [vmem:[%s1 + $0xe98] sm:$0xff]
    %v494 = vld [vmem:[%s1 + $0xea0] sm:$0xff]
    %v495 = vld [vmem:[%s1 + $0xea8] sm:$0xff]
    %v496 = vld [vmem:[%s1 + $0xeb0] sm:$0xff]
    %v497 = vld [vmem:[%s1 + $0xeb8] sm:$0xff]
    %v498 = vld [vmem:[%s1 + $0xec0] sm:$0xff]
    %v499 = vld [vmem:[%s1 + $0xec8] sm:$0xff]
    %v500 = vld [vmem:[%s1 + $0xed0] sm:$0xff]
    %v501 = vld [vmem:[%s1 + $0xed8] sm:$0xff]
    %v502 = vld [vmem:[%s1 + $0xee0] sm:$0xff]
    %v503 = vld [vmem:[%s1 + $0xee8] sm:$0xff]
    %v504 = vld [vmem:[%s1 + $0xef0] sm:$0xff]
    %v505 = vld [vmem:[%s1 + $0xef8] sm:$0xff]
    %v506 = vld [vmem:[%s1 + $0xf00] sm:$0xff]
    %v507 = vld [vmem:[%s1 + $0xf08] sm:$0xff]
    %v508 = vld [vmem:[%s1 + $0xf10] sm:$0xff]
    %v509 = vld [vmem:[%s1 + $0xf18] sm:$0xff]
    %v510 = vld [vmem:[%s1 + $0xf20] sm:$0xff]
    %v511 = vld [vmem:[%s1 + $0xf28] sm:$0xff]
    %v512 = vld [vmem:[%s1 + $0xf30] sm:$0xff]
    %v513 = vld [vmem:[%s1 + $0xf38] sm:$0xff]
    %v514 = vld [vmem:[%s1 + $0xf40] sm:$0xff]
    %v515 = vld [vmem:[%s1 + $0xf48] sm:$0xff]
    %v516 = vld [vmem:[%s1 + $0xf50] sm:$0xff]
    %v517 = vld [vmem:[%s1 + $0xf58] sm:$0xff]
    %v518 = vld [vmem:[%s1 + $0xf60] sm:$0xff]
    %v519 = vld [vmem:[%s1 + $0xf68] sm:$0xff]
    %v520 = vld [vmem:[%s1 + $0xf70] sm:$0xff]
    %v521 = vld [vmem:[%s1 + $0xf78] sm:$0xff]
    %v522 = vld [vmem:[%s1 + $0xf80] sm:$0xff]
    %v523 = vld [vmem:[%s1 + $0xf88] sm:$0xff]
    %v524 = vld [vmem:[%s1 + $0xf90] sm:$0xff]
    %v525 = vld [vmem:[%s1 + $0xf98] sm:$0xff]
    %v526 = vld [vmem:[%s1 + $0xfa0] sm:$0xff]
    %v527 = vld [vmem:[%s1 + $0xfa8] sm:$0xff]
    %v528 = vld [vmem:[%s1 + $0xfb0] sm:$0xff]
    %v529 = vld [vmem:[%s1 + $0xfb8] sm:$0xff]
    %v530 = vld [vmem:[%s1 + $0xfc0] sm:$0xff]
    %v531 = vld [vmem:[%s1 + $0xfc8] sm:$0xff]
    %v532 = vld [vmem:[%s1 + $0xfd0] sm:$0xff]
    %v533 = vld [vmem:[%s1 + $0xfd8] sm:$0xff]
    %v534 = vld [vmem:[%s1 + $0xfe0] sm:$0xff]
    %v535 = vld [vmem:[%s1 + $0xfe8] sm:$0xff]
    %v536 = vld [vmem:[%s1 + $0xff0] sm:$0xff]
    %v537 = vld [vmem:[%s1 + $0xff8] sm:$0xff]
    %v538 = vld [vmem:[%s1 + $0x1000] sm:$0xff]
    %v539 = vld [vmem:[%s1 + $0x1008] sm:$0xff]
    %v540 = vld [vmem:[%s1 + $0x1010] sm:$0xff]
    %v541 = vld [vmem:[%s1 + $0x1018] sm:$0xff]
    %v542 = vld [vmem:[%s1 + $0x1020] sm:$0xff]
    %v543 = vld [vmem:[%s1 + $0x1028] sm:$0xff]
    %v544 = vld [vmem:[%s1 + $0x1030] sm:$0xff]
    %v545 = vld [vmem:[%s1 + $0x1038] sm:$0xff]
    %v546 = vld [vmem:[%s1 + $0x1040] sm:$0xff]
    %v547 = vld [vmem:[%s1 + $0x1048] sm:$0xff]
    %v548 = vld [vmem:[%s1 + $0x1050] sm:$0xff]
    %v549 = vld [vmem:[%s1 + $0x1058] sm:$0xff]
    %v550 = vld [vmem:[%s1 + $0x1060] sm:$0xff]
    %v551 = vld [vmem:[%s1 + $0x1068] sm:$0xff]
    %v552 = vld [vmem:[%s1 + $0x1070] sm:$0xff]
    %v553 = vld [vmem:[%s1 + $0x1078] sm:$0xff]
    %v554 = vld [vmem:[%s1 + $0x1080] sm:$0xff]
    %v555 = vld [vmem:[%s1 + $0x1088] sm:$0xff]
    %v556 = vld [vmem:[%s1 + $0x1090] sm:$0xff]
    %v557 = vld [vmem:[%s1 + $0x1098] sm:$0xff]
    %v558 = vld [vmem:[%s1 + $0x10a0] sm:$0xff]
    %v559 = vld [vmem:[%s1 + $0x10a8] sm:$0xff]
    %v560 = vld [vmem:[%s1 + $0x10b0] sm:$0xff]
    %v561 = vld [vmem:[%s1 + $0x10b8] sm:$0xff]
    %v562 = vld [vmem:[%s1 + $0x10c0] sm:$0xff]
    %v563 = vld [vmem:[%s1 + $0x10c8] sm:$0xff]
    %v564 = vld [vmem:[%s1 + $0x10d0] sm:$0xff]
    %v565 = vld [vmem:[%s1 + $0x10d8] sm:$0xff]
    %v566 = vld [vmem:[%s1 + $0x10e0] sm:$0xff]
    %v567 = vld [vmem:[%s1 + $0x10e8] sm:$0xff]
    %v568 = vld [vmem:[%s1 + $0x10f0] sm:$0xff]
    %v569 = vld [vmem:[%s1 + $0x10f8] sm:$0xff]
    %v570 = vld [vmem:[%s1 + $0x1100] sm:$0xff]
    %v571 = vld [vmem:[%s1 + $0x1108] sm:$0xff]
    %v572 = vld [vmem:[%s1 + $0x1110] sm:$0xff]
    %v573 = vld [vmem:[%s1 + $0x1118] sm:$0xff]
    %v574 = vld [vmem:[%s1 + $0x1120] sm:$0xff]
    %v575 = vld [vmem:[%s1 + $0x1128] sm:$0xff]
    %v576 = vld [vmem:[%s1 + $0x1130] sm:$0xff]
    %v577 = vld [vmem:[%s1 + $0x1138] sm:$0xff]
    %v578 = vld [vmem:[%s1 + $0x1140] sm:$0xff]
    %v579 = vld [vmem:[%s1 + $0x1148] sm:$0xff]
    %v580 = vld [vmem:[%s1 + $0x1150] sm:$0xff]
    %v581 = vld [vmem:[%s1 + $0x1158] sm:$0xff]
    %v582 = vld [vmem:[%s1 + $0x1160] sm:$0xff]
    %v583 = vld [vmem:[%s1 + $0x1168] sm:$0xff]
    %v584 = vld [vmem:[%s1 + $0x1170] sm:$0xff]
    %v585 = vld [vmem:[%s1 + $0x1178] sm:$0xff]
    %v586 = vld [vmem:[%s1 + $0x1180] sm:$0xff]
    %v587 = vld [vmem:[%s1 + $0x1188] sm:$0xff]
    %v588 = vld [vmem:[%s1 + $0x1190] sm:$0xff]
    %v589 = vld [vmem:[%s1 + $0x1198] sm:$0xff]
    %v590 = vld [vmem:[%s1 + $0x11a0] sm:$0xff]
    %v591 = vld [vmem:[%s1 + $0x11a8] sm:$0xff]
    %v592 = vld [vmem:[%s1 + $0x11b0] sm:$0xff]
    %v593 = vld [vmem:[%s1 + $0x11b8] sm:$0xff]
    %v594 = vld [vmem:[%s1 + $0x11c0] sm:$0xff]
    %v595 = vld [vmem:[%s1 + $0x11c8] sm:$0xff]
    %v596 = vld [vmem:[%s1 + $0x11d0] sm:$0xff]
    %v597 = vld [vmem:[%s1 + $0x11d8] sm:$0xff]
    %v598 = vld [vmem:[%s1 + $0x11e0] sm:$0xff]
    %v599 = vld [vmem:[%s1 + $0x11e8] sm:$0xff]
    %v600 = vld [vmem:[%s1 + $0x11f0] sm:$0xff]
    %v601 = vld [vmem:[%s1 + $0x11f8] sm:$0xff]
    %v602 = vld [vmem:[%s1 + $0x1200] sm:$0xff]
    %v603 = vld [vmem:[%s1 + $0x1208] sm:$0xff]
    %v604 = vld [vmem:[%s1 + $0x1210] sm:$0xff]
    %v605 = vld [vmem:[%s1 + $0x1218] sm:$0xff]
    %v606 = vld [vmem:[%s1 + $0x1220] sm:$0xff]
    %v607 = vld [vmem:[%s1 + $0x1228] sm:$0xff]
    %v608 = vld [vmem:[%s1 + $0x1230] sm:$0xff]
    %v609 = vld [vmem:[%s1 + $0x1238] sm:$0xff]
    %v610 = vld [vmem:[%s1 + $0x1240] sm:$0xff]
    %v611 = vld [vmem:[%s1 + $0x1248] sm:$0xff]
    %v612 = vld [vmem:[%s1 + $0x1250] sm:$0xff]
    %v613 = vld [vmem:[%s1 + $0x1258] sm:$0xff]
    %v614 = vld [vmem:[%s1 + $0x1260] sm:$0xff]
    %v615 = vld [vmem:[%s1 + $0x1268] sm:$0xff]
    %v616 = vld [vmem:[%s1 + $0x1270] sm:$0xff]
    %v617 = vld [vmem:[%s1 + $0x1278] sm:$0xff]
    %v618 = vld [vmem:[%s1 + $0x1280] sm:$0xff]
    %v619 = vld [vmem:[%s1 + $0x1288] sm:$0xff]
    %v620 = vld [vmem:[%s1 + $0x1290] sm:$0xff]
    %v621 = vld [vmem:[%s1 + $0x1298] sm:$0xff]
    %v622 = vld [vmem:[%s1 + $0x12a0] sm:$0xff]
    %v623 = vld [vmem:[%s1 + $0x12a8] sm:$0xff]
    %v624 = vld [vmem:[%s1 + $0x12b0] sm:$0xff]
    %v625 = vld [vmem:[%s1 + $0x12b8] sm:$0xff]
    %v626 = vld [vmem:[%s1 + $0x12c0] sm:$0xff]
    %v627 = vld [vmem:[%s1 + $0x12c8] sm:$0xff]
    %v628 = vld [vmem:[%s1 + $0x12d0] sm:$0xff]
    %v629 = vld [vmem:[%s1 + $0x12d8] sm:$0xff]
    %v630 = vld [vmem:[%s1 + $0x12e0] sm:$0xff]
    %v631 = vld [vmem:[%s1 + $0x12e8] sm:$0xff]
    %v632 = vld [vmem:[%s1 + $0x12f0] sm:$0xff]
    %v633 = vld [vmem:[%s1 + $0x12f8] sm:$0xff]
    %v634 = vld [vmem:[%s1 + $0x1300] sm:$0xff]
    %v635 = vld [vmem:[%s1 + $0x1308] sm:$0xff]
    %v636 = vld [vmem:[%s1 + $0x1310] sm:$0xff]
    %v637 = vld [vmem:[%s1 + $0x1318] sm:$0xff]
    %v638 = vld [vmem:[%s1 + $0x1320] sm:$0xff]
    %v639 = vld [vmem:[%s1 + $0x1328] sm:$0xff]
    %v640 = vld [vmem:[%s1 + $0x1330] sm:$0xff]
    %v641 = vld [vmem:[%s1 + $0x1338] sm:$0xff]
    %v642 = vld [vmem:[%s1 + $0x1340] sm:$0xff]
    %v643 = vld [vmem:[%s1 + $0x1348] sm:$0xff]
    %v644 = vld [vmem:[%s1 + $0x1350] sm:$0xff]
    %v645 = vld [vmem:[%s1 + $0x1358] sm:$0xff]
    %v646 = vld [vmem:[%s1 + $0x1360] sm:$0xff]
    %v647 = vld [vmem:[%s1 + $0x1368] sm:$0xff]
    %v648 = vld [vmem:[%s1 + $0x1370] sm:$0xff]
    %v649 = vld [vmem:[%s1 + $0x1378] sm:$0xff]
    %v650 = vld [vmem:[%s1 + $0x1380] sm:$0xff]
    %v651 = vld [vmem:[%s1 + $0x1388] sm:$0xff]
    %v652 = vld [vmem:[%s1 + $0x1390] sm:$0xff]
    %v653 = vld [vmem:[%s1 + $0x1398] sm:$0xff]
    %v654 = vld [vmem:[%s1 + $0x13a0] sm:$0xff]
    %v655 = vld [vmem:[%s1 + $0x13a8] sm:$0xff]
    %v656 = vld [vmem:[%s1 + $0x13b0] sm:$0xff]
    %v657 = vld [vmem:[%s1 + $0x13b8] sm:$0xff]
    %v658 = vld [vmem:[%s1 + $0x13c0] sm:$0xff]
    %v659 = vld [vmem:[%s1 + $0x13c8] sm:$0xff]
    %v660 = vld [vmem:[%s1 + $0x13d0] sm:$0xff]
    %v661 = vld [vmem:[%s1 + $0x13d8] sm:$0xff]
    %v662 = vld [vmem:[%s1 + $0x13e0] sm:$0xff]
    %v663 = vld [vmem:[%s1 + $0x13e8] sm:$0xff]
    %v664 = vld [vmem:[%s1 + $0x13f0] sm:$0xff]
    %v665 = vld [vmem:[%s1 + $0x13f8] sm:$0xff]
    %v666 = vld [vmem:[%s1 + $0x1400] sm:$0xff]
    %v667 = vld [vmem:[%s1 + $0x1408] sm:$0xff]
    %v668 = vld [vmem:[%s1 + $0x1410] sm:$0xff]
    %v669 = vld [vmem:[%s1 + $0x1418] sm:$0xff]
    %v670 = vld [vmem:[%s1 + $0x1420] sm:$0xff]
    %v671 = vld [vmem:[%s1 + $0x1428] sm:$0xff]
    %v672 = vld [vmem:[%s1 + $0x1430] sm:$0xff]
    %v673 = vld [vmem:[%s1 + $0x1438] sm:$0xff]
    %v674 = vld [vmem:[%s1 + $0x1440] sm:$0xff]
    %v675 = vld [vmem:[%s1 + $0x1448] sm:$0xff]
    %v676 = vld [vmem:[%s1 + $0x1450] sm:$0xff]
    %v677 = vld [vmem:[%s1 + $0x1458] sm:$0xff]
    %v678 = vld [vmem:[%s1 + $0x1460] sm:$0xff]
    %v679 = vld [vmem:[%s1 + $0x1468] sm:$0xff]
    %v680 = vld [vmem:[%s1 + $0x1470] sm:$0xff]
    %v681 = vld [vmem:[%s1 + $0x1478] sm:$0xff]
    %v682 = vld [vmem:[%s1 + $0x1480] sm:$0xff]
    %v683 = vld [vmem:[%s1 + $0x1488] sm:$0xff]
    %v684 = vld [vmem:[%s1 + $0x1490] sm:$0xff]
    %v685 = vld [vmem:[%s1 + $0x1498] sm:$0xff]
    %v686 = vld [vmem:[%s1 + $0x14a0] sm:$0xff]
    %v687 = vld [vmem:[%s1 + $0x14a8] sm:$0xff]
    %v688 = vld [vmem:[%s1 + $0x14b0] sm:$0xff]
    %v689 = vld [vmem:[%s1 + $0x14b8] sm:$0xff]
    %v690 = vld [vmem:[%s1 + $0x14c0] sm:$0xff]
    %v691 = vld [vmem:[%s1 + $0x14c8] sm:$0xff]
    %v692 = vld [vmem:[%s1 + $0x14d0] sm:$0xff]
    %v693 = vld [vmem:[%s1 + $0x14d8] sm:$0xff]
    %v694 = vld [vmem:[%s1 + $0x14e0] sm:$0xff]
    %v695 = vld [vmem:[%s1 + $0x14e8] sm:$0xff]
    %v696 = vld [vmem:[%s1 + $0x14f0] sm:$0xff]
    %v697 = vld [vmem:[%s1 + $0x14f8] sm:$0xff]
    %v698 = vld [vmem:[%s1 + $0x1500] sm:$0xff]
    %v699 = vld [vmem:[%s1 + $0x1508] sm:$0xff]
    %v700 = vld [vmem:[%s1 + $0x1510] sm:$0xff]
    %v701 = vld [vmem:[%s1 + $0x1518] sm:$0xff]
    %v702 = vld [vmem:[%s1 + $0x1520] sm:$0xff]
    %v703 = vld [vmem:[%s1 + $0x1528] sm:$0xff]
    %v704 = vld [vmem:[%s1 + $0x1530] sm:$0xff]
    %v705 = vld [vmem:[%s1 + $0x1538] sm:$0xff]
    %v706 = vld [vmem:[%s1 + $0x1540] sm:$0xff]
    %v707 = vld [vmem:[%s1 + $0x1548] sm:$0xff]
    %v708 = vld [vmem:[%s1 + $0x1550] sm:$0xff]
    %v709 = vld [vmem:[%s1 + $0x1558] sm:$0xff]
    %v710 = vld [vmem:[%s1 + $0x1560] sm:$0xff]
    %v711 = vld [vmem:[%s1 + $0x1568] sm:$0xff]
    %v712 = vld [vmem:[%s1 + $0x1570] sm:$0xff]
    %v713 = vld [vmem:[%s1 + $0x1578] sm:$0xff]
    %v714 = vld [vmem:[%s1 + $0x1580] sm:$0xff]
    %v715 = vld [vmem:[%s1 + $0x1588] sm:$0xff]
    %v716 = vld [vmem:[%s1 + $0x1590] sm:$0xff]
    %v717 = vld [vmem:[%s1 + $0x1598] sm:$0xff]
    %v718 = vld [vmem:[%s1 + $0x15a0] sm:$0xff]
    %v719 = vld [vmem:[%s1 + $0x15a8] sm:$0xff]
    %v720 = vld [vmem:[%s1 + $0x15b0] sm:$0xff]
    %v721 = vld [vmem:[%s1 + $0x15b8] sm:$0xff]
    %v722 = vld [vmem:[%s1 + $0x15c0] sm:$0xff]
    %v723 = vld [vmem:[%s1 + $0x15c8] sm:$0xff]
    %v724 = vld [vmem:[%s1 + $0x15d0] sm:$0xff]
    %v725 = vld [vmem:[%s1 + $0x15d8] sm:$0xff]
    %v726 = vld [vmem:[%s1 + $0x15e0] sm:$0xff]
    %v727 = vld [vmem:[%s1 + $0x15e8] sm:$0xff]
    %v728 = vld [vmem:[%s1 + $0x15f0] sm:$0xff]
    %v729 = vld [vmem:[%s1 + $0x15f8] sm:$0xff]
    %v730 = vld [vmem:[%s1 + $0x1600] sm:$0xff]
    %v731 = vld [vmem:[%s1 + $0x1608] sm:$0xff]
    %v732 = vld [vmem:[%s1 + $0x1610] sm:$0xff]
    %v733 = vld [vmem:[%s1 + $0x1618] sm:$0xff]
    %v734 = vld [vmem:[%s1 + $0x1620] sm:$0xff]
    %v735 = vld [vmem:[%s1 + $0x1628] sm:$0xff]
    %v736 = vld [vmem:[%s1 + $0x1630] sm:$0xff]
    %v737 = vld [vmem:[%s1 + $0x1638] sm:$0xff]
    %v738 = vld [vmem:[%s1 + $0x1640] sm:$0xff]
    %v739 = vld [vmem:[%s1 + $0x1648] sm:$0xff]
    %v740 = vld [vmem:[%s1 + $0x1650] sm:$0xff]
    %v741 = vld [vmem:[%s1 + $0x1658] sm:$0xff]
    %v742 = vld [vmem:[%s1 + $0x1660] sm:$0xff]
    %v743 = vld [vmem:[%s1 + $0x1668] sm:$0xff]
    %v744 = vld [vmem:[%s1 + $0x1670] sm:$0xff]
    %v745 = vld [vmem:[%s1 + $0x1678] sm:$0xff]
    %v746 = vld [vmem:[%s1 + $0x1680] sm:$0xff]
    %v747 = vld [vmem:[%s1 + $0x1688] sm:$0xff]
    %v748 = vld [vmem:[%s1 + $0x1690] sm:$0xff]
    %v749 = vld [vmem:[%s1 + $0x1698] sm:$0xff]
    %v750 = vld [vmem:[%s1 + $0x16a0] sm:$0xff]
    %v751 = vld [vmem:[%s1 + $0x16a8] sm:$0xff]
    %v752 = vld [vmem:[%s1 + $0x16b0] sm:$0xff]
    %v753 = vld [vmem:[%s1 + $0x16b8] sm:$0xff]
    %v754 = vld [vmem:[%s1 + $0x16c0] sm:$0xff]
    %v755 = vld [vmem:[%s1 + $0x16c8] sm:$0xff]
    %v756 = vld [vmem:[%s1 + $0x16d0] sm:$0xff]
    %v757 = vld [vmem:[%s1 + $0x16d8] sm:$0xff]
    %v758 = vld [vmem:[%s1 + $0x16e0] sm:$0xff]
    %v759 = vld [vmem:[%s1 + $0x16e8] sm:$0xff]
    %v760 = vld [vmem:[%s1 + $0x16f0] sm:$0xff]
    %v761 = vld [vmem:[%s1 + $0x16f8] sm:$0xff]
    %v762 = vld [vmem:[%s1 + $0x1700] sm:$0xff]
    %v763 = vld [vmem:[%s1 + $0x1708] sm:$0xff]
    %v764 = vld [vmem:[%s1 + $0x1710] sm:$0xff]
    %v765 = vld [vmem:[%s1 + $0x1718] sm:$0xff]
    %v766 = vld [vmem:[%s1 + $0x1720] sm:$0xff]
    %v767 = vld [vmem:[%s1 + $0x1728] sm:$0xff]
    %v768 = vld [vmem:[%s1 + $0x1730] sm:$0xff]
    %v769 = vld [vmem:[%s1 + $0x1738] sm:$0xff]
    %v770 = vld [vmem:[%s1 + $0x1740] sm:$0xff]
    %v771 = vld [vmem:[%s1 + $0x1748] sm:$0xff]
    %v772 = vld [vmem:[%s1 + $0x1750] sm:$0xff]
    %v773 = vld [vmem:[%s1 + $0x1758] sm:$0xff]
    %v774 = vld [vmem:[%s1 + $0x1760] sm:$0xff]
    %v775 = vld [vmem:[%s1 + $0x1768] sm:$0xff]
    %v776 = vld [vmem:[%s1 + $0x1770] sm:$0xff]
    %v777 = vld [vmem:[%s1 + $0x1778] sm:$0xff]
    %v778 = vld [vmem:[%s1 + $0x1780] sm:$0xff]
    %v779 = vld [vmem:[%s1 + $0x1788] sm:$0xff]
    %v780 = vld [vmem:[%s1 + $0x1790] sm:$0xff]
    %v781 = vld [vmem:[%s1 + $0x1798] sm:$0xff]
    %v782 = vld [vmem:[%s1 + $0x17a0] sm:$0xff]
    %v783 = vld [vmem:[%s1 + $0x17a8] sm:$0xff]
    %v784 = vld [vmem:[%s1 + $0x17b0] sm:$0xff]
    %v785 = vld [vmem:[%s1 + $0x17b8] sm:$0xff]
    %v786 = vld [vmem:[%s1 + $0x17c0] sm:$0xff]
    %v787 = vld [vmem:[%s1 + $0x17c8] sm:$0xff]
    %v788 = vld [vmem:[%s1 + $0x17d0] sm:$0xff]
    %v789 = vld [vmem:[%s1 + $0x17d8] sm:$0xff]
    %v790 = vld [vmem:[%s1 + $0x17e0] sm:$0xff]
    %v791 = vld [vmem:[%s1 + $0x17e8] sm:$0xff]
    %v792 = vld [vmem:[%s1 + $0x17f0] sm:$0xff]
    %v793 = vld [vmem:[%s1 + $0x17f8] sm:$0xff]
    %v794 = vld [vmem:[%s1 + $0x1800] sm:$0xff]
    %v795 = vld [vmem:[%s1 + $0x1808] sm:$0xff]
    %v796 = vld [vmem:[%s1 + $0x1810] sm:$0xff]
    %v797 = vld [vmem:[%s1 + $0x1818] sm:$0xff]
    %v798 = vld [vmem:[%s1 + $0x1820] sm:$0xff]
    %v799 = vld [vmem:[%s1 + $0x1828] sm:$0xff]
    %v800 = vld [vmem:[%s1 + $0x1830] sm:$0xff]
    %v801 = vld [vmem:[%s1 + $0x1838] sm:$0xff]
    %v802 = vld [vmem:[%s1 + $0x1840] sm:$0xff]
    %v803 = vld [vmem:[%s1 + $0x1848] sm:$0xff]
    %v804 = vld [vmem:[%s1 + $0x1850] sm:$0xff]
    %v805 = vld [vmem:[%s1 + $0x1858] sm:$0xff]
    %v806 = vld [vmem:[%s1 + $0x1860] sm:$0xff]
    %v807 = vld [vmem:[%s1 + $0x1868] sm:$0xff]
    %v808 = vld [vmem:[%s1 + $0x1870] sm:$0xff]
    %v809 = vld [vmem:[%s1 + $0x1878] sm:$0xff]
    %v810 = vld [vmem:[%s1 + $0x1880] sm:$0xff]
    %v811 = vld [vmem:[%s1 + $0x1888] sm:$0xff]
    %v812 = vld [vmem:[%s1 + $0x1890] sm:$0xff]
    %v813 = vld [vmem:[%s1 + $0x1898] sm:$0xff]
    %v814 = vld [vmem:[%s1 + $0x18a0] sm:$0xff]
    %v815 = vld [vmem:[%s1 + $0x18a8] sm:$0xff]
    %v816 = vld [vmem:[%s1 + $0x18b0] sm:$0xff]
    %v817 = vld [vmem:[%s1 + $0x18b8] sm:$0xff]
    %v818 = vld [vmem:[%s1 + $0x18c0] sm:$0xff]
    %v819 = vld [vmem:[%s1 + $0x18c8] sm:$0xff]
    %v820 = vld [vmem:[%s1 + $0x18d0] sm:$0xff]
    %v821 = vld [vmem:[%s1 + $0x18d8] sm:$0xff]
    %v822 = vld [vmem:[%s1 + $0x18e0] sm:$0xff]
    %v823 = vld [vmem:[%s1 + $0x18e8] sm:$0xff]
    %v824 = vld [vmem:[%s1 + $0x18f0] sm:$0xff]
    %v825 = vld [vmem:[%s1 + $0x18f8] sm:$0xff]
    %v826 = vld [vmem:[%s2] sm:$0xf]
    %v828 = vlaneseq
    %v829 = vshrl.u32 %v828, 7
    %v830 = vsub.s32 0, %v829
    %v831 = vrot.slane %v826, %v830
    %v832 = vlaneseq
    %v833 = vshrl.u32 %v832, 7
    %v834 = vsub.s32 1, %v833
    %v835 = vrot.slane %v826, %v834
    %v836 = vlaneseq
    %v837 = vshrl.u32 %v836, 7
    %v838 = vsub.s32 2, %v837
    %v839 = vrot.slane %v826, %v838
    %v840 = vlaneseq
    %v841 = vshrl.u32 %v840, 7
    %v842 = vsub.s32 3, %v841
    %v843 = vrot.slane %v826, %v842
    %v852 = vcombine.high %v22, %v22
    %v854 = vunpack.c.l.s4 1966171168
    %v855 = vunpack.c.0.s8 %v854
    %v856 = vlaneseq
    %v857 = vshrl.u32 %v856, 7
    %v858 = vsub.s32 %v855, %v857
    %v859 = vrot.slane %v22, %v858
    %v861 = vunpack.c.l.s4 1966171168
    %v862 = vunpack.c.0.s8 %v861
    %v863 = vlaneseq
    %v864 = vshrl.u32 %v863, 7
    %v865 = vsub.s32 %v862, %v864
    %v866 = vrot.slane %v852, %v865
    %v867 = vcombine.high %v859, %v859
    %v868 = vcombine.high %v866, %v866
    %v870 = vunpack.c.l.s4 1966171168
    %v871 = vunpack.c.0.s8 %v870
    %v872 = vlaneseq
    %v873 = vshrl.u32 %v872, 7
    %v874 = vsub.s32 %v871, %v873
    %v875 = vrot.slane %v859, %v874
    %v877 = vunpack.c.l.s4 1966171168
    %v878 = vunpack.c.0.s8 %v877
    %v879 = vlaneseq
    %v880 = vshrl.u32 %v879, 7
    %v881 = vsub.s32 %v878, %v880
    %v882 = vrot.slane %v866, %v881
    %v884 = vunpack.c.l.s4 1966171168
    %v885 = vunpack.c.0.s8 %v884
    %v886 = vlaneseq
    %v887 = vshrl.u32 %v886, 7
    %v888 = vsub.s32 %v885, %v887
    %v889 = vrot.slane %v867, %v888
    %v891 = vunpack.c.l.s4 1966171168
    %v892 = vunpack.c.0.s8 %v891
    %v893 = vlaneseq
    %v894 = vshrl.u32 %v893, 7
    %v895 = vsub.s32 %v892, %v894
    %v896 = vrot.slane %v868, %v895
    %v897 = vcombine.high %v875, %v875
    %v898 = vcombine.high %v882, %v882
    %v899 = vcombine.high %v889, %v889
    %v900 = vcombine.high %v896, %v896
    %v901 = vcombine.high %v23, %v23
    %v903 = vunpack.c.l.s4 1966171168
    %v904 = vunpack.c.0.s8 %v903
    %v905 = vlaneseq
    %v906 = vshrl.u32 %v905, 7
    %v907 = vsub.s32 %v904, %v906
    %v908 = vrot.slane %v23, %v907
    %v910 = vunpack.c.l.s4 1966171168
    %v911 = vunpack.c.0.s8 %v910
    %v912 = vlaneseq
    %v913 = vshrl.u32 %v912, 7
    %v914 = vsub.s32 %v911, %v913
    %v915 = vrot.slane %v901, %v914
    %v916 = vcombine.high %v908, %v908
    %v917 = vcombine.high %v915, %v915
    %v919 = vunpack.c.l.s4 1966171168
    %v920 = vunpack.c.0.s8 %v919
    %v921 = vlaneseq
    %v922 = vshrl.u32 %v921, 7
    %v923 = vsub.s32 %v920, %v922
    %v924 = vrot.slane %v908, %v923
    %v926 = vunpack.c.l.s4 1966171168
    %v927 = vunpack.c.0.s8 %v926
    %v928 = vlaneseq
    %v929 = vshrl.u32 %v928, 7
    %v930 = vsub.s32 %v927, %v929
    %v931 = vrot.slane %v915, %v930
    %v933 = vunpack.c.l.s4 1966171168
    %v934 = vunpack.c.0.s8 %v933
    %v935 = vlaneseq
    %v936 = vshrl.u32 %v935, 7
    %v937 = vsub.s32 %v934, %v936
    %v938 = vrot.slane %v916, %v937
    %v940 = vunpack.c.l.s4 1966171168
    %v941 = vunpack.c.0.s8 %v940
    %v942 = vlaneseq
    %v943 = vshrl.u32 %v942, 7
    %v944 = vsub.s32 %v941, %v943
    %v945 = vrot.slane %v917, %v944
    %v946 = vcombine.high %v924, %v924
    %v947 = vcombine.high %v931, %v931
    %v948 = vcombine.high %v938, %v938
    %v949 = vcombine.high %v945, %v945
    %v950 = vcombine.high %v24, %v24
    %v952 = vunpack.c.l.s4 1966171168
    %v953 = vunpack.c.0.s8 %v952
    %v954 = vlaneseq
    %v955 = vshrl.u32 %v954, 7
    %v956 = vsub.s32 %v953, %v955
    %v957 = vrot.slane %v24, %v956
    %v959 = vunpack.c.l.s4 1966171168
    %v960 = vunpack.c.0.s8 %v959
    %v961 = vlaneseq
    %v962 = vshrl.u32 %v961, 7
    %v963 = vsub.s32 %v960, %v962
    %v964 = vrot.slane %v950, %v963
    %v965 = vcombine.high %v957, %v957
    %v966 = vcombine.high %v964, %v964
    %v968 = vunpack.c.l.s4 1966171168
    %v969 = vunpack.c.0.s8 %v968
    %v970 = vlaneseq
    %v971 = vshrl.u32 %v970, 7
    %v972 = vsub.s32 %v969, %v971
    %v973 = vrot.slane %v957, %v972
    %v975 = vunpack.c.l.s4 1966171168
    %v976 = vunpack.c.0.s8 %v975
    %v977 = vlaneseq
    %v978 = vshrl.u32 %v977, 7
    %v979 = vsub.s32 %v976, %v978
    %v980 = vrot.slane %v964, %v979
    %v982 = vunpack.c.l.s4 1966171168
    %v983 = vunpack.c.0.s8 %v982
    %v984 = vlaneseq
    %v985 = vshrl.u32 %v984, 7
    %v986 = vsub.s32 %v983, %v985
    %v987 = vrot.slane %v965, %v986
    %v989 = vunpack.c.l.s4 1966171168
    %v990 = vunpack.c.0.s8 %v989
    %v991 = vlaneseq
    %v992 = vshrl.u32 %v991, 7
    %v993 = vsub.s32 %v990, %v992
    %v994 = vrot.slane %v966, %v993
    %v995 = vcombine.high %v973, %v973
    %v996 = vcombine.high %v980, %v980
    %v997 = vcombine.high %v987, %v987
    %v998 = vcombine.high %v994, %v994
    %v1000 = vunpack.c.l.s4 1966171168
    %v1001 = vunpack.c.0.s8 %v1000
    %v1002 = vlaneseq
    %v1003 = vshrl.u32 %v1002, 7
    %v1004 = vsub.s32 %v1001, %v1003
    %v1005 = vrot.slane %v25, %v1004
    %v1007 = vunpack.c.l.s4 1966171168
    %v1008 = vunpack.c.0.s8 %v1007
    %v1009 = vlaneseq
    %v1010 = vshrl.u32 %v1009, 7
    %v1011 = vsub.s32 %v1008, %v1010
    %v1012 = vrot.slane %v1005, %v1011
    %v1838 = vunpack.c.l.b16 %v26
    %v1839 = vunpack.c.h.b16 %v26
    %v1840 = vunpack.c.l.b16 %v27
    %v1841 = vunpack.c.h.b16 %v27
    %v1842 = vunpack.c.l.b16 %v28
    %v1843 = vunpack.c.h.b16 %v28
    %v1844 = vunpack.c.l.b16 %v29
    %v1845 = vunpack.c.h.b16 %v29
    %v1846 = vunpack.c.l.b16 %v30
    %v1847 = vunpack.c.h.b16 %v30
    %v1848 = vunpack.c.l.b16 %v31
    %v1849 = vunpack.c.h.b16 %v31
    %v1850 = vunpack.c.l.b16 %v32
    %v1851 = vunpack.c.h.b16 %v32
    %v1852 = vunpack.c.l.b16 %v33
    %v1853 = vunpack.c.h.b16 %v33
    %v1854 = vunpack.c.l.b16 %v34
    %v1855 = vunpack.c.h.b16 %v34
    %v1856 = vunpack.c.l.b16 %v35
    %v1857 = vunpack.c.h.b16 %v35
    %v1858 = vunpack.c.l.b16 %v36
    %v1859 = vunpack.c.h.b16 %v36
    %v1860 = vunpack.c.l.b16 %v37
    %v1861 = vunpack.c.h.b16 %v37
    %v1862 = vunpack.c.l.b16 %v38
    %v1863 = vunpack.c.h.b16 %v38
    %v1864 = vunpack.c.l.b16 %v39
    %v1865 = vunpack.c.h.b16 %v39
    %v1866 = vunpack.c.l.b16 %v40
    %v1867 = vunpack.c.h.b16 %v40
    %v1868 = vunpack.c.l.b16 %v41
    %v1869 = vunpack.c.h.b16 %v41
    %v1870 = vunpack.c.l.b16 %v42
    %v1871 = vunpack.c.h.b16 %v42
    %v1872 = vunpack.c.l.b16 %v43
    %v1873 = vunpack.c.h.b16 %v43
    %v1874 = vunpack.c.l.b16 %v44
    %v1875 = vunpack.c.h.b16 %v44
    %v1876 = vunpack.c.l.b16 %v45
    %v1877 = vunpack.c.h.b16 %v45
    %v1878 = vunpack.c.l.b16 %v46
    %v1879 = vunpack.c.h.b16 %v46
    %v1880 = vunpack.c.l.b16 %v47
    %v1881 = vunpack.c.h.b16 %v47
    %v1882 = vunpack.c.l.b16 %v48
    %v1883 = vunpack.c.h.b16 %v48
    %v1884 = vunpack.c.l.b16 %v49
    %v1885 = vunpack.c.h.b16 %v49
    %v1886 = vunpack.c.l.b16 %v50
    %v1887 = vunpack.c.h.b16 %v50
    %v1888 = vunpack.c.l.b16 %v51
    %v1889 = vunpack.c.h.b16 %v51
    %v1890 = vunpack.c.l.b16 %v52
    %v1891 = vunpack.c.h.b16 %v52
    %v1892 = vunpack.c.l.b16 %v53
    %v1893 = vunpack.c.h.b16 %v53
    %v1894 = vunpack.c.l.b16 %v54
    %v1895 = vunpack.c.h.b16 %v54
    %v1896 = vunpack.c.l.b16 %v55
    %v1897 = vunpack.c.h.b16 %v55
    %v1898 = vunpack.c.l.b16 %v56
    %v1899 = vunpack.c.h.b16 %v56
    %v1900 = vunpack.c.l.b16 %v57
    %v1901 = vunpack.c.h.b16 %v57
    %v1902 = vunpack.c.l.b16 %v58
    %v1903 = vunpack.c.h.b16 %v58
    %v1904 = vunpack.c.l.b16 %v59
    %v1905 = vunpack.c.h.b16 %v59
    %v1906 = vunpack.c.l.b16 %v60
    %v1907 = vunpack.c.h.b16 %v60
    %v1908 = vunpack.c.l.b16 %v61
    %v1909 = vunpack.c.h.b16 %v61
    %v1910 = vunpack.c.l.b16 %v62
    %v1911 = vunpack.c.h.b16 %v62
    %v1912 = vunpack.c.l.b16 %v63
    %v1913 = vunpack.c.h.b16 %v63
    %v1914 = vunpack.c.l.b16 %v64
    %v1915 = vunpack.c.h.b16 %v64
    %v1916 = vunpack.c.l.b16 %v65
    %v1917 = vunpack.c.h.b16 %v65
    %v1918 = vunpack.c.l.b16 %v66
    %v1919 = vunpack.c.h.b16 %v66
    %v1920 = vunpack.c.l.b16 %v67
    %v1921 = vunpack.c.h.b16 %v67
    %v1922 = vunpack.c.l.b16 %v68
    %v1923 = vunpack.c.h.b16 %v68
    %v1924 = vunpack.c.l.b16 %v69
    %v1925 = vunpack.c.h.b16 %v69
    %v1926 = vunpack.c.l.b16 %v70
    %v1927 = vunpack.c.h.b16 %v70
    %v1928 = vunpack.c.l.b16 %v71
    %v1929 = vunpack.c.h.b16 %v71
    %v1930 = vunpack.c.l.b16 %v72
    %v1931 = vunpack.c.h.b16 %v72
    %v1932 = vunpack.c.l.b16 %v73
    %v1933 = vunpack.c.h.b16 %v73
    %v1934 = vunpack.c.l.b16 %v74
    %v1935 = vunpack.c.h.b16 %v74
    %v1936 = vunpack.c.l.b16 %v75
    %v1937 = vunpack.c.h.b16 %v75
    %v1938 = vunpack.c.l.b16 %v76
    %v1939 = vunpack.c.h.b16 %v76
    %v1940 = vunpack.c.l.b16 %v77
    %v1941 = vunpack.c.h.b16 %v77
    %v1942 = vunpack.c.l.b16 %v78
    %v1943 = vunpack.c.h.b16 %v78
    %v1944 = vunpack.c.l.b16 %v79
    %v1945 = vunpack.c.h.b16 %v79
    %v1946 = vunpack.c.l.b16 %v80
    %v1947 = vunpack.c.h.b16 %v80
    %v1948 = vunpack.c.l.b16 %v81
    %v1949 = vunpack.c.h.b16 %v81
    %v1950 = vunpack.c.l.b16 %v82
    %v1951 = vunpack.c.h.b16 %v82
    %v1952 = vunpack.c.l.b16 %v83
    %v1953 = vunpack.c.h.b16 %v83
    %v1954 = vunpack.c.l.b16 %v84
    %v1955 = vunpack.c.h.b16 %v84
    %v1956 = vunpack.c.l.b16 %v85
    %v1957 = vunpack.c.h.b16 %v85
    %v1958 = vunpack.c.l.b16 %v86
    %v1959 = vunpack.c.h.b16 %v86
    %v1960 = vunpack.c.l.b16 %v87
    %v1961 = vunpack.c.h.b16 %v87
    %v1962 = vunpack.c.l.b16 %v88
    %v1963 = vunpack.c.h.b16 %v88
    %v1964 = vunpack.c.l.b16 %v89
    %v1965 = vunpack.c.h.b16 %v89
    %v1966 = vunpack.c.l.b16 %v90
    %v1967 = vunpack.c.h.b16 %v90
    %v1968 = vunpack.c.l.b16 %v91
    %v1969 = vunpack.c.h.b16 %v91
    %v1970 = vunpack.c.l.b16 %v92
    %v1971 = vunpack.c.h.b16 %v92
    %v1972 = vunpack.c.l.b16 %v93
    %v1973 = vunpack.c.h.b16 %v93
    %v1974 = vunpack.c.l.b16 %v94
    %v1975 = vunpack.c.h.b16 %v94
    %v1976 = vunpack.c.l.b16 %v95
    %v1977 = vunpack.c.h.b16 %v95
    %v1978 = vunpack.c.l.b16 %v96
    %v1979 = vunpack.c.h.b16 %v96
    %v1980 = vunpack.c.l.b16 %v97
    %v1981 = vunpack.c.h.b16 %v97
    %v1982 = vunpack.c.l.b16 %v98
    %v1983 = vunpack.c.h.b16 %v98
    %v1984 = vunpack.c.l.b16 %v99
    %v1985 = vunpack.c.h.b16 %v99
    %v1986 = vunpack.c.l.b16 %v100
    %v1987 = vunpack.c.h.b16 %v100
    %v1988 = vunpack.c.l.b16 %v101
    %v1989 = vunpack.c.h.b16 %v101
    %v1990 = vunpack.c.l.b16 %v102
    %v1991 = vunpack.c.h.b16 %v102
    %v1992 = vunpack.c.l.b16 %v103
    %v1993 = vunpack.c.h.b16 %v103
    %v1994 = vunpack.c.l.b16 %v104
    %v1995 = vunpack.c.h.b16 %v104
    %v1996 = vunpack.c.l.b16 %v105
    %v1997 = vunpack.c.h.b16 %v105
    %v1998 = vunpack.c.l.b16 %v106
    %v1999 = vunpack.c.h.b16 %v106
    %v2000 = vunpack.c.l.b16 %v107
    %v2001 = vunpack.c.h.b16 %v107
    %v2002 = vunpack.c.l.b16 %v108
    %v2003 = vunpack.c.h.b16 %v108
    %v2004 = vunpack.c.l.b16 %v109
    %v2005 = vunpack.c.h.b16 %v109
    %v2006 = vunpack.c.l.b16 %v110
    %v2007 = vunpack.c.h.b16 %v110
    %v2008 = vunpack.c.l.b16 %v111
    %v2009 = vunpack.c.h.b16 %v111
    %v2010 = vunpack.c.l.b16 %v112
    %v2011 = vunpack.c.h.b16 %v112
    %v2012 = vunpack.c.l.b16 %v113
    %v2013 = vunpack.c.h.b16 %v113
    %v2014 = vunpack.c.l.b16 %v114
    %v2015 = vunpack.c.h.b16 %v114
    %v2016 = vunpack.c.l.b16 %v115
    %v2017 = vunpack.c.h.b16 %v115
    %v2018 = vunpack.c.l.b16 %v116
    %v2019 = vunpack.c.h.b16 %v116
    %v2020 = vunpack.c.l.b16 %v117
    %v2021 = vunpack.c.h.b16 %v117
    %v2022 = vunpack.c.l.b16 %v118
    %v2023 = vunpack.c.h.b16 %v118
    %v2024 = vunpack.c.l.b16 %v119
    %v2025 = vunpack.c.h.b16 %v119
    %v2026 = vunpack.c.l.b16 %v120
    %v2027 = vunpack.c.h.b16 %v120
    %v2028 = vunpack.c.l.b16 %v121
    %v2029 = vunpack.c.h.b16 %v121
    %v2030 = vunpack.c.l.b16 %v122
    %v2031 = vunpack.c.h.b16 %v122
    %v2032 = vunpack.c.l.b16 %v123
    %v2033 = vunpack.c.h.b16 %v123
    %v2034 = vunpack.c.l.b16 %v124
    %v2035 = vunpack.c.h.b16 %v124
    %v2036 = vunpack.c.l.b16 %v125
    %v2037 = vunpack.c.h.b16 %v125
    %v2038 = vunpack.c.l.b16 %v126
    %v2039 = vunpack.c.h.b16 %v126
    %v2040 = vunpack.c.l.b16 %v127
    %v2041 = vunpack.c.h.b16 %v127
    %v2042 = vunpack.c.l.b16 %v128
    %v2043 = vunpack.c.h.b16 %v128
    %v2044 = vunpack.c.l.b16 %v129
    %v2045 = vunpack.c.h.b16 %v129
    %v2046 = vunpack.c.l.b16 %v130
    %v2047 = vunpack.c.h.b16 %v130
    %v2048 = vunpack.c.l.b16 %v131
    %v2049 = vunpack.c.h.b16 %v131
    %v2050 = vunpack.c.l.b16 %v132
    %v2051 = vunpack.c.h.b16 %v132
    %v2052 = vunpack.c.l.b16 %v133
    %v2053 = vunpack.c.h.b16 %v133
    %v2054 = vunpack.c.l.b16 %v134
    %v2055 = vunpack.c.h.b16 %v134
    %v2056 = vunpack.c.l.b16 %v135
    %v2057 = vunpack.c.h.b16 %v135
    %v2058 = vunpack.c.l.b16 %v136
    %v2059 = vunpack.c.h.b16 %v136
    %v2060 = vunpack.c.l.b16 %v137
    %v2061 = vunpack.c.h.b16 %v137
    %v2062 = vunpack.c.l.b16 %v138
    %v2063 = vunpack.c.h.b16 %v138
    %v2064 = vunpack.c.l.b16 %v139
    %v2065 = vunpack.c.h.b16 %v139
    %v2066 = vunpack.c.l.b16 %v140
    %v2067 = vunpack.c.h.b16 %v140
    %v2068 = vunpack.c.l.b16 %v141
    %v2069 = vunpack.c.h.b16 %v141
    %v2070 = vunpack.c.l.b16 %v142
    %v2071 = vunpack.c.h.b16 %v142
    %v2072 = vunpack.c.l.b16 %v143
    %v2073 = vunpack.c.h.b16 %v143
    %v2074 = vunpack.c.l.b16 %v144
    %v2075 = vunpack.c.h.b16 %v144
    %v2076 = vunpack.c.l.b16 %v145
    %v2077 = vunpack.c.h.b16 %v145
    %v2078 = vunpack.c.l.b16 %v146
    %v2079 = vunpack.c.h.b16 %v146
    %v2080 = vunpack.c.l.b16 %v147
    %v2081 = vunpack.c.h.b16 %v147
    %v2082 = vunpack.c.l.b16 %v148
    %v2083 = vunpack.c.h.b16 %v148
    %v2084 = vunpack.c.l.b16 %v149
    %v2085 = vunpack.c.h.b16 %v149
    %v2086 = vunpack.c.l.b16 %v150
    %v2087 = vunpack.c.h.b16 %v150
    %v2088 = vunpack.c.l.b16 %v151
    %v2089 = vunpack.c.h.b16 %v151
    %v2090 = vunpack.c.l.b16 %v152
    %v2091 = vunpack.c.h.b16 %v152
    %v2092 = vunpack.c.l.b16 %v153
    %v2093 = vunpack.c.h.b16 %v153
    %v2094 = vunpack.c.l.b16 %v154
    %v2095 = vunpack.c.h.b16 %v154
    %v2096 = vunpack.c.l.b16 %v155
    %v2097 = vunpack.c.h.b16 %v155
    %v2098 = vunpack.c.l.b16 %v156
    %v2099 = vunpack.c.h.b16 %v156
    %v2100 = vunpack.c.l.b16 %v157
    %v2101 = vunpack.c.h.b16 %v157
    %v2102 = vunpack.c.l.b16 %v158
    %v2103 = vunpack.c.h.b16 %v158
    %v2104 = vunpack.c.l.b16 %v159
    %v2105 = vunpack.c.h.b16 %v159
    %v2106 = vunpack.c.l.b16 %v160
    %v2107 = vunpack.c.h.b16 %v160
    %v2108 = vunpack.c.l.b16 %v161
    %v2109 = vunpack.c.h.b16 %v161
    %v2110 = vunpack.c.l.b16 %v162
    %v2111 = vunpack.c.h.b16 %v162
    %v2112 = vunpack.c.l.b16 %v163
    %v2113 = vunpack.c.h.b16 %v163
    %v2114 = vunpack.c.l.b16 %v164
    %v2115 = vunpack.c.h.b16 %v164
    %v2116 = vunpack.c.l.b16 %v165
    %v2117 = vunpack.c.h.b16 %v165
    %v2118 = vunpack.c.l.b16 %v166
    %v2119 = vunpack.c.h.b16 %v166
    %v2120 = vunpack.c.l.b16 %v167
    %v2121 = vunpack.c.h.b16 %v167
    %v2122 = vunpack.c.l.b16 %v168
    %v2123 = vunpack.c.h.b16 %v168
    %v2124 = vunpack.c.l.b16 %v169
    %v2125 = vunpack.c.h.b16 %v169
    %v2126 = vunpack.c.l.b16 %v170
    %v2127 = vunpack.c.h.b16 %v170
    %v2128 = vunpack.c.l.b16 %v171
    %v2129 = vunpack.c.h.b16 %v171
    %v2130 = vunpack.c.l.b16 %v172
    %v2131 = vunpack.c.h.b16 %v172
    %v2132 = vunpack.c.l.b16 %v173
    %v2133 = vunpack.c.h.b16 %v173
    %v2134 = vunpack.c.l.b16 %v174
    %v2135 = vunpack.c.h.b16 %v174
    %v2136 = vunpack.c.l.b16 %v175
    %v2137 = vunpack.c.h.b16 %v175
    %v2138 = vunpack.c.l.b16 %v176
    %v2139 = vunpack.c.h.b16 %v176
    %v2140 = vunpack.c.l.b16 %v177
    %v2141 = vunpack.c.h.b16 %v177
    %v2142 = vunpack.c.l.b16 %v178
    %v2143 = vunpack.c.h.b16 %v178
    %v2144 = vunpack.c.l.b16 %v179
    %v2145 = vunpack.c.h.b16 %v179
    %v2146 = vunpack.c.l.b16 %v180
    %v2147 = vunpack.c.h.b16 %v180
    %v2148 = vunpack.c.l.b16 %v181
    %v2149 = vunpack.c.h.b16 %v181
    %v2150 = vunpack.c.l.b16 %v182
    %v2151 = vunpack.c.h.b16 %v182
    %v2152 = vunpack.c.l.b16 %v183
    %v2153 = vunpack.c.h.b16 %v183
    %v2154 = vunpack.c.l.b16 %v184
    %v2155 = vunpack.c.h.b16 %v184
    %v2156 = vunpack.c.l.b16 %v185
    %v2157 = vunpack.c.h.b16 %v185
    %v2158 = vunpack.c.l.b16 %v186
    %v2159 = vunpack.c.h.b16 %v186
    %v2160 = vunpack.c.l.b16 %v187
    %v2161 = vunpack.c.h.b16 %v187
    %v2162 = vunpack.c.l.b16 %v188
    %v2163 = vunpack.c.h.b16 %v188
    %v2164 = vunpack.c.l.b16 %v189
    %v2165 = vunpack.c.h.b16 %v189
    %v2166 = vunpack.c.l.b16 %v190
    %v2167 = vunpack.c.h.b16 %v190
    %v2168 = vunpack.c.l.b16 %v191
    %v2169 = vunpack.c.h.b16 %v191
    %v2170 = vunpack.c.l.b16 %v192
    %v2171 = vunpack.c.h.b16 %v192
    %v2172 = vunpack.c.l.b16 %v193
    %v2173 = vunpack.c.h.b16 %v193
    %v2174 = vunpack.c.l.b16 %v194
    %v2175 = vunpack.c.h.b16 %v194
    %v2176 = vunpack.c.l.b16 %v195
    %v2177 = vunpack.c.h.b16 %v195
    %v2178 = vunpack.c.l.b16 %v196
    %v2179 = vunpack.c.h.b16 %v196
    %v2180 = vunpack.c.l.b16 %v197
    %v2181 = vunpack.c.h.b16 %v197
    %v2182 = vunpack.c.l.b16 %v198
    %v2183 = vunpack.c.h.b16 %v198
    %v2184 = vunpack.c.l.b16 %v199
    %v2185 = vunpack.c.h.b16 %v199
    %v2186 = vunpack.c.l.b16 %v200
    %v2187 = vunpack.c.h.b16 %v200
    %v2188 = vunpack.c.l.b16 %v201
    %v2189 = vunpack.c.h.b16 %v201
    %v2190 = vunpack.c.l.b16 %v202
    %v2191 = vunpack.c.h.b16 %v202
    %v2192 = vunpack.c.l.b16 %v203
    %v2193 = vunpack.c.h.b16 %v203
    %v2194 = vunpack.c.l.b16 %v204
    %v2195 = vunpack.c.h.b16 %v204
    %v2196 = vunpack.c.l.b16 %v205
    %v2197 = vunpack.c.h.b16 %v205
    %v2198 = vunpack.c.l.b16 %v206
    %v2199 = vunpack.c.h.b16 %v206
    %v2200 = vunpack.c.l.b16 %v207
    %v2201 = vunpack.c.h.b16 %v207
    %v2202 = vunpack.c.l.b16 %v208
    %v2203 = vunpack.c.h.b16 %v208
    %v2204 = vunpack.c.l.b16 %v209
    %v2205 = vunpack.c.h.b16 %v209
    %v2206 = vunpack.c.l.b16 %v210
    %v2207 = vunpack.c.h.b16 %v210
    %v2208 = vunpack.c.l.b16 %v211
    %v2209 = vunpack.c.h.b16 %v211
    %v2210 = vunpack.c.l.b16 %v212
    %v2211 = vunpack.c.h.b16 %v212
    %v2212 = vunpack.c.l.b16 %v213
    %v2213 = vunpack.c.h.b16 %v213
    %v2214 = vunpack.c.l.b16 %v214
    %v2215 = vunpack.c.h.b16 %v214
    %v2216 = vunpack.c.l.b16 %v215
    %v2217 = vunpack.c.h.b16 %v215
    %v2218 = vunpack.c.l.b16 %v216
    %v2219 = vunpack.c.h.b16 %v216
    %v2220 = vunpack.c.l.b16 %v217
    %v2221 = vunpack.c.h.b16 %v217
    %v2222 = vunpack.c.l.b16 %v218
    %v2223 = vunpack.c.h.b16 %v218
    %v2224 = vunpack.c.l.b16 %v219
    %v2225 = vunpack.c.h.b16 %v219
    %v2226 = vunpack.c.l.b16 %v220
    %v2227 = vunpack.c.h.b16 %v220
    %v2228 = vunpack.c.l.b16 %v221
    %v2229 = vunpack.c.h.b16 %v221
    %v2230 = vunpack.c.l.b16 %v222
    %v2231 = vunpack.c.h.b16 %v222
    %v2232 = vunpack.c.l.b16 %v223
    %v2233 = vunpack.c.h.b16 %v223
    %v2234 = vunpack.c.l.b16 %v224
    %v2235 = vunpack.c.h.b16 %v224
    %v2236 = vunpack.c.l.b16 %v225
    %v2237 = vunpack.c.h.b16 %v225
    %v2238 = vunpack.c.l.b16 %v226
    %v2239 = vunpack.c.h.b16 %v226
    %v2240 = vunpack.c.l.b16 %v227
    %v2241 = vunpack.c.h.b16 %v227
    %v2242 = vunpack.c.l.b16 %v228
    %v2243 = vunpack.c.h.b16 %v228
    %v2244 = vunpack.c.l.b16 %v229
    %v2245 = vunpack.c.h.b16 %v229
    %v2246 = vunpack.c.l.b16 %v230
    %v2247 = vunpack.c.h.b16 %v230
    %v2248 = vunpack.c.l.b16 %v231
    %v2249 = vunpack.c.h.b16 %v231
    %v2250 = vunpack.c.l.b16 %v232
    %v2251 = vunpack.c.h.b16 %v232
    %v2252 = vunpack.c.l.b16 %v233
    %v2253 = vunpack.c.h.b16 %v233
    %v2254 = vunpack.c.l.b16 %v234
    %v2255 = vunpack.c.h.b16 %v234
    %v2256 = vunpack.c.l.b16 %v235
    %v2257 = vunpack.c.h.b16 %v235
    %v2258 = vunpack.c.l.b16 %v236
    %v2259 = vunpack.c.h.b16 %v236
    %v2260 = vunpack.c.l.b16 %v237
    %v2261 = vunpack.c.h.b16 %v237
    %v2262 = vunpack.c.l.b16 %v238
    %v2263 = vunpack.c.h.b16 %v238
    %v2264 = vunpack.c.l.b16 %v239
    %v2265 = vunpack.c.h.b16 %v239
    %v2266 = vunpack.c.l.b16 %v240
    %v2267 = vunpack.c.h.b16 %v240
    %v2268 = vunpack.c.l.b16 %v241
    %v2269 = vunpack.c.h.b16 %v241
    %v2270 = vunpack.c.l.b16 %v242
    %v2271 = vunpack.c.h.b16 %v242
    %v2272 = vunpack.c.l.b16 %v243
    %v2273 = vunpack.c.h.b16 %v243
    %v2274 = vunpack.c.l.b16 %v244
    %v2275 = vunpack.c.h.b16 %v244
    %v2276 = vunpack.c.l.b16 %v245
    %v2277 = vunpack.c.h.b16 %v245
    %v2278 = vunpack.c.l.b16 %v246
    %v2279 = vunpack.c.h.b16 %v246
    %v2280 = vunpack.c.l.b16 %v247
    %v2281 = vunpack.c.h.b16 %v247
    %v2282 = vunpack.c.l.b16 %v248
    %v2283 = vunpack.c.h.b16 %v248
    %v2284 = vunpack.c.l.b16 %v249
    %v2285 = vunpack.c.h.b16 %v249
    %v2286 = vunpack.c.l.b16 %v250
    %v2287 = vunpack.c.h.b16 %v250
    %v2288 = vunpack.c.l.b16 %v251
    %v2289 = vunpack.c.h.b16 %v251
    %v2290 = vunpack.c.l.b16 %v252
    %v2291 = vunpack.c.h.b16 %v252
    %v2292 = vunpack.c.l.b16 %v253
    %v2293 = vunpack.c.h.b16 %v253
    %v2294 = vunpack.c.l.b16 %v254
    %v2295 = vunpack.c.h.b16 %v254
    %v2296 = vunpack.c.l.b16 %v255
    %v2297 = vunpack.c.h.b16 %v255
    %v2298 = vunpack.c.l.b16 %v256
    %v2299 = vunpack.c.h.b16 %v256
    %v2300 = vunpack.c.l.b16 %v257
    %v2301 = vunpack.c.h.b16 %v257
    %v2302 = vunpack.c.l.b16 %v258
    %v2303 = vunpack.c.h.b16 %v258
    %v2304 = vunpack.c.l.b16 %v259
    %v2305 = vunpack.c.h.b16 %v259
    %v2306 = vunpack.c.l.b16 %v260
    %v2307 = vunpack.c.h.b16 %v260
    %v2308 = vunpack.c.l.b16 %v261
    %v2309 = vunpack.c.h.b16 %v261
    %v2310 = vunpack.c.l.b16 %v262
    %v2311 = vunpack.c.h.b16 %v262
    %v2312 = vunpack.c.l.b16 %v263
    %v2313 = vunpack.c.h.b16 %v263
    %v2314 = vunpack.c.l.b16 %v264
    %v2315 = vunpack.c.h.b16 %v264
    %v2316 = vunpack.c.l.b16 %v265
    %v2317 = vunpack.c.h.b16 %v265
    %v2318 = vunpack.c.l.b16 %v266
    %v2319 = vunpack.c.h.b16 %v266
    %v2320 = vunpack.c.l.b16 %v267
    %v2321 = vunpack.c.h.b16 %v267
    %v2322 = vunpack.c.l.b16 %v268
    %v2323 = vunpack.c.h.b16 %v268
    %v2324 = vunpack.c.l.b16 %v269
    %v2325 = vunpack.c.h.b16 %v269
    %v2326 = vunpack.c.l.b16 %v270
    %v2327 = vunpack.c.h.b16 %v270
    %v2328 = vunpack.c.l.b16 %v271
    %v2329 = vunpack.c.h.b16 %v271
    %v2330 = vunpack.c.l.b16 %v272
    %v2331 = vunpack.c.h.b16 %v272
    %v2332 = vunpack.c.l.b16 %v273
    %v2333 = vunpack.c.h.b16 %v273
    %v2334 = vunpack.c.l.b16 %v274
    %v2335 = vunpack.c.h.b16 %v274
    %v2336 = vunpack.c.l.b16 %v275
    %v2337 = vunpack.c.h.b16 %v275
    %v2338 = vunpack.c.l.b16 %v276
    %v2339 = vunpack.c.h.b16 %v276
    %v2340 = vunpack.c.l.b16 %v277
    %v2341 = vunpack.c.h.b16 %v277
    %v2342 = vunpack.c.l.b16 %v278
    %v2343 = vunpack.c.h.b16 %v278
    %v2344 = vunpack.c.l.b16 %v279
    %v2345 = vunpack.c.h.b16 %v279
    %v2346 = vunpack.c.l.b16 %v280
    %v2347 = vunpack.c.h.b16 %v280
    %v2348 = vunpack.c.l.b16 %v281
    %v2349 = vunpack.c.h.b16 %v281
    %v2350 = vunpack.c.l.b16 %v282
    %v2351 = vunpack.c.h.b16 %v282
    %v2352 = vunpack.c.l.b16 %v283
    %v2353 = vunpack.c.h.b16 %v283
    %v2354 = vunpack.c.l.b16 %v284
    %v2355 = vunpack.c.h.b16 %v284
    %v2356 = vunpack.c.l.b16 %v285
    %v2357 = vunpack.c.h.b16 %v285
    %v2358 = vunpack.c.l.b16 %v286
    %v2359 = vunpack.c.h.b16 %v286
    %v2360 = vunpack.c.l.b16 %v287
    %v2361 = vunpack.c.h.b16 %v287
    %v2362 = vunpack.c.l.b16 %v288
    %v2363 = vunpack.c.h.b16 %v288
    %v2364 = vunpack.c.l.b16 %v289
    %v2365 = vunpack.c.h.b16 %v289
    %v2366 = vunpack.c.l.b16 %v290
    %v2367 = vunpack.c.h.b16 %v290
    %v2368 = vunpack.c.l.b16 %v291
    %v2369 = vunpack.c.h.b16 %v291
    %v2370 = vunpack.c.l.b16 %v292
    %v2371 = vunpack.c.h.b16 %v292
    %v2372 = vunpack.c.l.b16 %v293
    %v2373 = vunpack.c.h.b16 %v293
    %v2374 = vunpack.c.l.b16 %v294
    %v2375 = vunpack.c.h.b16 %v294
    %v2376 = vunpack.c.l.b16 %v295
    %v2377 = vunpack.c.h.b16 %v295
    %v2378 = vunpack.c.l.b16 %v296
    %v2379 = vunpack.c.h.b16 %v296
    %v2380 = vunpack.c.l.b16 %v297
    %v2381 = vunpack.c.h.b16 %v297
    %v2382 = vunpack.c.l.b16 %v298
    %v2383 = vunpack.c.h.b16 %v298
    %v2384 = vunpack.c.l.b16 %v299
    %v2385 = vunpack.c.h.b16 %v299
    %v2386 = vunpack.c.l.b16 %v300
    %v2387 = vunpack.c.h.b16 %v300
    %v2388 = vunpack.c.l.b16 %v301
    %v2389 = vunpack.c.h.b16 %v301
    %v2390 = vunpack.c.l.b16 %v302
    %v2391 = vunpack.c.h.b16 %v302
    %v2392 = vunpack.c.l.b16 %v303
    %v2393 = vunpack.c.h.b16 %v303
    %v2394 = vunpack.c.l.b16 %v304
    %v2395 = vunpack.c.h.b16 %v304
    %v2396 = vunpack.c.l.b16 %v305
    %v2397 = vunpack.c.h.b16 %v305
    %v2398 = vunpack.c.l.b16 %v306
    %v2399 = vunpack.c.h.b16 %v306
    %v2400 = vunpack.c.l.b16 %v307
    %v2401 = vunpack.c.h.b16 %v307
    %v2402 = vunpack.c.l.b16 %v308
    %v2403 = vunpack.c.h.b16 %v308
    %v2404 = vunpack.c.l.b16 %v309
    %v2405 = vunpack.c.h.b16 %v309
    %v2406 = vunpack.c.l.b16 %v310
    %v2407 = vunpack.c.h.b16 %v310
    %v2408 = vunpack.c.l.b16 %v311
    %v2409 = vunpack.c.h.b16 %v311
    %v2410 = vunpack.c.l.b16 %v312
    %v2411 = vunpack.c.h.b16 %v312
    %v2412 = vunpack.c.l.b16 %v313
    %v2413 = vunpack.c.h.b16 %v313
    %v2414 = vunpack.c.l.b16 %v314
    %v2415 = vunpack.c.h.b16 %v314
    %v2416 = vunpack.c.l.b16 %v315
    %v2417 = vunpack.c.h.b16 %v315
    %v2418 = vunpack.c.l.b16 %v316
    %v2419 = vunpack.c.h.b16 %v316
    %v2420 = vunpack.c.l.b16 %v317
    %v2421 = vunpack.c.h.b16 %v317
    %v2422 = vunpack.c.l.b16 %v318
    %v2423 = vunpack.c.h.b16 %v318
    %v2424 = vunpack.c.l.b16 %v319
    %v2425 = vunpack.c.h.b16 %v319
    %v2426 = vunpack.c.l.b16 %v320
    %v2427 = vunpack.c.h.b16 %v320
    %v2428 = vunpack.c.l.b16 %v321
    %v2429 = vunpack.c.h.b16 %v321
    %v2430 = vunpack.c.l.b16 %v322
    %v2431 = vunpack.c.h.b16 %v322
    %v2432 = vunpack.c.l.b16 %v323
    %v2433 = vunpack.c.h.b16 %v323
    %v2434 = vunpack.c.l.b16 %v324
    %v2435 = vunpack.c.h.b16 %v324
    %v2436 = vunpack.c.l.b16 %v325
    %v2437 = vunpack.c.h.b16 %v325
    %v2438 = vunpack.c.l.b16 %v326
    %v2439 = vunpack.c.h.b16 %v326
    %v2440 = vunpack.c.l.b16 %v327
    %v2441 = vunpack.c.h.b16 %v327
    %v2442 = vunpack.c.l.b16 %v328
    %v2443 = vunpack.c.h.b16 %v328
    %v2444 = vunpack.c.l.b16 %v329
    %v2445 = vunpack.c.h.b16 %v329
    %v2446 = vunpack.c.l.b16 %v330
    %v2447 = vunpack.c.h.b16 %v330
    %v2448 = vunpack.c.l.b16 %v331
    %v2449 = vunpack.c.h.b16 %v331
    %v2450 = vunpack.c.l.b16 %v332
    %v2451 = vunpack.c.h.b16 %v332
    %v2452 = vunpack.c.l.b16 %v333
    %v2453 = vunpack.c.h.b16 %v333
    %v2454 = vunpack.c.l.b16 %v334
    %v2455 = vunpack.c.h.b16 %v334
    %v2456 = vunpack.c.l.b16 %v335
    %v2457 = vunpack.c.h.b16 %v335
    %v2458 = vunpack.c.l.b16 %v336
    %v2459 = vunpack.c.h.b16 %v336
    %v2460 = vunpack.c.l.b16 %v337
    %v2461 = vunpack.c.h.b16 %v337
    %v2462 = vunpack.c.l.b16 %v338
    %v2463 = vunpack.c.h.b16 %v338
    %v2464 = vunpack.c.l.b16 %v339
    %v2465 = vunpack.c.h.b16 %v339
    %v2466 = vunpack.c.l.b16 %v340
    %v2467 = vunpack.c.h.b16 %v340
    %v2468 = vunpack.c.l.b16 %v341
    %v2469 = vunpack.c.h.b16 %v341
    %v2470 = vunpack.c.l.b16 %v342
    %v2471 = vunpack.c.h.b16 %v342
    %v2472 = vunpack.c.l.b16 %v343
    %v2473 = vunpack.c.h.b16 %v343
    %v2474 = vunpack.c.l.b16 %v344
    %v2475 = vunpack.c.h.b16 %v344
    %v2476 = vunpack.c.l.b16 %v345
    %v2477 = vunpack.c.h.b16 %v345
    %v2478 = vunpack.c.l.b16 %v346
    %v2479 = vunpack.c.h.b16 %v346
    %v2480 = vunpack.c.l.b16 %v347
    %v2481 = vunpack.c.h.b16 %v347
    %v2482 = vunpack.c.l.b16 %v348
    %v2483 = vunpack.c.h.b16 %v348
    %v2484 = vunpack.c.l.b16 %v349
    %v2485 = vunpack.c.h.b16 %v349
    %v2486 = vunpack.c.l.b16 %v350
    %v2487 = vunpack.c.h.b16 %v350
    %v2488 = vunpack.c.l.b16 %v351
    %v2489 = vunpack.c.h.b16 %v351
    %v2490 = vunpack.c.l.b16 %v352
    %v2491 = vunpack.c.h.b16 %v352
    %v2492 = vunpack.c.l.b16 %v353
    %v2493 = vunpack.c.h.b16 %v353
    %v2494 = vunpack.c.l.b16 %v354
    %v2495 = vunpack.c.h.b16 %v354
    %v2496 = vunpack.c.l.b16 %v355
    %v2497 = vunpack.c.h.b16 %v355
    %v2498 = vunpack.c.l.b16 %v356
    %v2499 = vunpack.c.h.b16 %v356
    %v2500 = vunpack.c.l.b16 %v357
    %v2501 = vunpack.c.h.b16 %v357
    %v2502 = vunpack.c.l.b16 %v358
    %v2503 = vunpack.c.h.b16 %v358
    %v2504 = vunpack.c.l.b16 %v359
    %v2505 = vunpack.c.h.b16 %v359
    %v2506 = vunpack.c.l.b16 %v360
    %v2507 = vunpack.c.h.b16 %v360
    %v2508 = vunpack.c.l.b16 %v361
    %v2509 = vunpack.c.h.b16 %v361
    %v2510 = vunpack.c.l.b16 %v362
    %v2511 = vunpack.c.h.b16 %v362
    %v2512 = vunpack.c.l.b16 %v363
    %v2513 = vunpack.c.h.b16 %v363
    %v2514 = vunpack.c.l.b16 %v364
    %v2515 = vunpack.c.h.b16 %v364
    %v2516 = vunpack.c.l.b16 %v365
    %v2517 = vunpack.c.h.b16 %v365
    %v2518 = vunpack.c.l.b16 %v366
    %v2519 = vunpack.c.h.b16 %v366
    %v2520 = vunpack.c.l.b16 %v367
    %v2521 = vunpack.c.h.b16 %v367
    %v2522 = vunpack.c.l.b16 %v368
    %v2523 = vunpack.c.h.b16 %v368
    %v2524 = vunpack.c.l.b16 %v369
    %v2525 = vunpack.c.h.b16 %v369
    %v2526 = vunpack.c.l.b16 %v370
    %v2527 = vunpack.c.h.b16 %v370
    %v2528 = vunpack.c.l.b16 %v371
    %v2529 = vunpack.c.h.b16 %v371
    %v2530 = vunpack.c.l.b16 %v372
    %v2531 = vunpack.c.h.b16 %v372
    %v2532 = vunpack.c.l.b16 %v373
    %v2533 = vunpack.c.h.b16 %v373
    %v2534 = vunpack.c.l.b16 %v374
    %v2535 = vunpack.c.h.b16 %v374
    %v2536 = vunpack.c.l.b16 %v375
    %v2537 = vunpack.c.h.b16 %v375
    %v2538 = vunpack.c.l.b16 %v376
    %v2539 = vunpack.c.h.b16 %v376
    %v2540 = vunpack.c.l.b16 %v377
    %v2541 = vunpack.c.h.b16 %v377
    %v2542 = vunpack.c.l.b16 %v378
    %v2543 = vunpack.c.h.b16 %v378
    %v2544 = vunpack.c.l.b16 %v379
    %v2545 = vunpack.c.h.b16 %v379
    %v2546 = vunpack.c.l.b16 %v380
    %v2547 = vunpack.c.h.b16 %v380
    %v2548 = vunpack.c.l.b16 %v381
    %v2549 = vunpack.c.h.b16 %v381
    %v2550 = vunpack.c.l.b16 %v382
    %v2551 = vunpack.c.h.b16 %v382
    %v2552 = vunpack.c.l.b16 %v383
    %v2553 = vunpack.c.h.b16 %v383
    %v2554 = vunpack.c.l.b16 %v384
    %v2555 = vunpack.c.h.b16 %v384
    %v2556 = vunpack.c.l.b16 %v385
    %v2557 = vunpack.c.h.b16 %v385
    %v2558 = vunpack.c.l.b16 %v386
    %v2559 = vunpack.c.h.b16 %v386
    %v2560 = vunpack.c.l.b16 %v387
    %v2561 = vunpack.c.h.b16 %v387
    %v2562 = vunpack.c.l.b16 %v388
    %v2563 = vunpack.c.h.b16 %v388
    %v2564 = vunpack.c.l.b16 %v389
    %v2565 = vunpack.c.h.b16 %v389
    %v2566 = vunpack.c.l.b16 %v390
    %v2567 = vunpack.c.h.b16 %v390
    %v2568 = vunpack.c.l.b16 %v391
    %v2569 = vunpack.c.h.b16 %v391
    %v2570 = vunpack.c.l.b16 %v392
    %v2571 = vunpack.c.h.b16 %v392
    %v2572 = vunpack.c.l.b16 %v393
    %v2573 = vunpack.c.h.b16 %v393
    %v2574 = vunpack.c.l.b16 %v394
    %v2575 = vunpack.c.h.b16 %v394
    %v2576 = vunpack.c.l.b16 %v395
    %v2577 = vunpack.c.h.b16 %v395
    %v2578 = vunpack.c.l.b16 %v396
    %v2579 = vunpack.c.h.b16 %v396
    %v2580 = vunpack.c.l.b16 %v397
    %v2581 = vunpack.c.h.b16 %v397
    %v2582 = vunpack.c.l.b16 %v398
    %v2583 = vunpack.c.h.b16 %v398
    %v2584 = vunpack.c.l.b16 %v399
    %v2585 = vunpack.c.h.b16 %v399
    %v2586 = vunpack.c.l.b16 %v400
    %v2587 = vunpack.c.h.b16 %v400
    %v2588 = vunpack.c.l.b16 %v401
    %v2589 = vunpack.c.h.b16 %v401
    %v2590 = vunpack.c.l.b16 %v402
    %v2591 = vunpack.c.h.b16 %v402
    %v2592 = vunpack.c.l.b16 %v403
    %v2593 = vunpack.c.h.b16 %v403
    %v2594 = vunpack.c.l.b16 %v404
    %v2595 = vunpack.c.h.b16 %v404
    %v2596 = vunpack.c.l.b16 %v405
    %v2597 = vunpack.c.h.b16 %v405
    %v2598 = vunpack.c.l.b16 %v406
    %v2599 = vunpack.c.h.b16 %v406
    %v2600 = vunpack.c.l.b16 %v407
    %v2601 = vunpack.c.h.b16 %v407
    %v2602 = vunpack.c.l.b16 %v408
    %v2603 = vunpack.c.h.b16 %v408
    %v2604 = vunpack.c.l.b16 %v409
    %v2605 = vunpack.c.h.b16 %v409
    %v2606 = vunpack.c.l.b16 %v410
    %v2607 = vunpack.c.h.b16 %v410
    %v2608 = vunpack.c.l.b16 %v411
    %v2609 = vunpack.c.h.b16 %v411
    %v2610 = vunpack.c.l.b16 %v412
    %v2611 = vunpack.c.h.b16 %v412
    %v2612 = vunpack.c.l.b16 %v413
    %v2613 = vunpack.c.h.b16 %v413
    %v2614 = vunpack.c.l.b16 %v414
    %v2615 = vunpack.c.h.b16 %v414
    %v2616 = vunpack.c.l.b16 %v415
    %v2617 = vunpack.c.h.b16 %v415
    %v2618 = vunpack.c.l.b16 %v416
    %v2619 = vunpack.c.h.b16 %v416
    %v2620 = vunpack.c.l.b16 %v417
    %v2621 = vunpack.c.h.b16 %v417
    %v2622 = vunpack.c.l.b16 %v418
    %v2623 = vunpack.c.h.b16 %v418
    %v2624 = vunpack.c.l.b16 %v419
    %v2625 = vunpack.c.h.b16 %v419
    %v2626 = vunpack.c.l.b16 %v420
    %v2627 = vunpack.c.h.b16 %v420
    %v2628 = vunpack.c.l.b16 %v421
    %v2629 = vunpack.c.h.b16 %v421
    %v2630 = vunpack.c.l.b16 %v422
    %v2631 = vunpack.c.h.b16 %v422
    %v2632 = vunpack.c.l.b16 %v423
    %v2633 = vunpack.c.h.b16 %v423
    %v2634 = vunpack.c.l.b16 %v424
    %v2635 = vunpack.c.h.b16 %v424
    %v2636 = vunpack.c.l.b16 %v425
    %v2637 = vunpack.c.h.b16 %v425
    %v2638 = vunpack.c.l.b16 %v426
    %v2639 = vunpack.c.h.b16 %v426
    %v2640 = vunpack.c.l.b16 %v427
    %v2641 = vunpack.c.h.b16 %v427
    %v2642 = vunpack.c.l.b16 %v428
    %v2643 = vunpack.c.h.b16 %v428
    %v2644 = vunpack.c.l.b16 %v429
    %v2645 = vunpack.c.h.b16 %v429
    %v2646 = vunpack.c.l.b16 %v430
    %v2647 = vunpack.c.h.b16 %v430
    %v2648 = vunpack.c.l.b16 %v431
    %v2649 = vunpack.c.h.b16 %v431
    %v2650 = vunpack.c.l.b16 %v432
    %v2651 = vunpack.c.h.b16 %v432
    %v2652 = vunpack.c.l.b16 %v433
    %v2653 = vunpack.c.h.b16 %v433
    %v2654 = vunpack.c.l.b16 %v434
    %v2655 = vunpack.c.h.b16 %v434
    %v2656 = vunpack.c.l.b16 %v435
    %v2657 = vunpack.c.h.b16 %v435
    %v2658 = vunpack.c.l.b16 %v436
    %v2659 = vunpack.c.h.b16 %v436
    %v2660 = vunpack.c.l.b16 %v437
    %v2661 = vunpack.c.h.b16 %v437
    %v2662 = vunpack.c.l.b16 %v438
    %v2663 = vunpack.c.h.b16 %v438
    %v2664 = vunpack.c.l.b16 %v439
    %v2665 = vunpack.c.h.b16 %v439
    %v2666 = vunpack.c.l.b16 %v440
    %v2667 = vunpack.c.h.b16 %v440
    %v2668 = vunpack.c.l.b16 %v441
    %v2669 = vunpack.c.h.b16 %v441
    %v2670 = vunpack.c.l.b16 %v442
    %v2671 = vunpack.c.h.b16 %v442
    %v2672 = vunpack.c.l.b16 %v443
    %v2673 = vunpack.c.h.b16 %v443
    %v2674 = vunpack.c.l.b16 %v444
    %v2675 = vunpack.c.h.b16 %v444
    %v2676 = vunpack.c.l.b16 %v445
    %v2677 = vunpack.c.h.b16 %v445
    %v2678 = vunpack.c.l.b16 %v446
    %v2679 = vunpack.c.h.b16 %v446
    %v2680 = vunpack.c.l.b16 %v447
    %v2681 = vunpack.c.h.b16 %v447
    %v2682 = vunpack.c.l.b16 %v448
    %v2683 = vunpack.c.h.b16 %v448
    %v2684 = vunpack.c.l.b16 %v449
    %v2685 = vunpack.c.h.b16 %v449
    %v2686 = vunpack.c.l.b16 %v450
    %v2687 = vunpack.c.h.b16 %v450
    %v2688 = vunpack.c.l.b16 %v451
    %v2689 = vunpack.c.h.b16 %v451
    %v2690 = vunpack.c.l.b16 %v452
    %v2691 = vunpack.c.h.b16 %v452
    %v2692 = vunpack.c.l.b16 %v453
    %v2693 = vunpack.c.h.b16 %v453
    %v2694 = vunpack.c.l.b16 %v454
    %v2695 = vunpack.c.h.b16 %v454
    %v2696 = vunpack.c.l.b16 %v455
    %v2697 = vunpack.c.h.b16 %v455
    %v2698 = vunpack.c.l.b16 %v456
    %v2699 = vunpack.c.h.b16 %v456
    %v2700 = vunpack.c.l.b16 %v457
    %v2701 = vunpack.c.h.b16 %v457
    %v2702 = vunpack.c.l.b16 %v458
    %v2703 = vunpack.c.h.b16 %v458
    %v2704 = vunpack.c.l.b16 %v459
    %v2705 = vunpack.c.h.b16 %v459
    %v2706 = vunpack.c.l.b16 %v460
    %v2707 = vunpack.c.h.b16 %v460
    %v2708 = vunpack.c.l.b16 %v461
    %v2709 = vunpack.c.h.b16 %v461
    %v2710 = vunpack.c.l.b16 %v462
    %v2711 = vunpack.c.h.b16 %v462
    %v2712 = vunpack.c.l.b16 %v463
    %v2713 = vunpack.c.h.b16 %v463
    %v2714 = vunpack.c.l.b16 %v464
    %v2715 = vunpack.c.h.b16 %v464
    %v2716 = vunpack.c.l.b16 %v465
    %v2717 = vunpack.c.h.b16 %v465
    %v2718 = vunpack.c.l.b16 %v466
    %v2719 = vunpack.c.h.b16 %v466
    %v2720 = vunpack.c.l.b16 %v467
    %v2721 = vunpack.c.h.b16 %v467
    %v2722 = vunpack.c.l.b16 %v468
    %v2723 = vunpack.c.h.b16 %v468
    %v2724 = vunpack.c.l.b16 %v469
    %v2725 = vunpack.c.h.b16 %v469
    %v2726 = vunpack.c.l.b16 %v470
    %v2727 = vunpack.c.h.b16 %v470
    %v2728 = vunpack.c.l.b16 %v471
    %v2729 = vunpack.c.h.b16 %v471
    %v2730 = vunpack.c.l.b16 %v472
    %v2731 = vunpack.c.h.b16 %v472
    %v2732 = vunpack.c.l.b16 %v473
    %v2733 = vunpack.c.h.b16 %v473
    %v2734 = vunpack.c.l.b16 %v474
    %v2735 = vunpack.c.h.b16 %v474
    %v2736 = vunpack.c.l.b16 %v475
    %v2737 = vunpack.c.h.b16 %v475
    %v2738 = vunpack.c.l.b16 %v476
    %v2739 = vunpack.c.h.b16 %v476
    %v2740 = vunpack.c.l.b16 %v477
    %v2741 = vunpack.c.h.b16 %v477
    %v2742 = vunpack.c.l.b16 %v478
    %v2743 = vunpack.c.h.b16 %v478
    %v2744 = vunpack.c.l.b16 %v479
    %v2745 = vunpack.c.h.b16 %v479
    %v2746 = vunpack.c.l.b16 %v480
    %v2747 = vunpack.c.h.b16 %v480
    %v2748 = vunpack.c.l.b16 %v481
    %v2749 = vunpack.c.h.b16 %v481
    %v2750 = vunpack.c.l.b16 %v482
    %v2751 = vunpack.c.h.b16 %v482
    %v2752 = vunpack.c.l.b16 %v483
    %v2753 = vunpack.c.h.b16 %v483
    %v2754 = vunpack.c.l.b16 %v484
    %v2755 = vunpack.c.h.b16 %v484
    %v2756 = vunpack.c.l.b16 %v485
    %v2757 = vunpack.c.h.b16 %v485
    %v2758 = vunpack.c.l.b16 %v486
    %v2759 = vunpack.c.h.b16 %v486
    %v2760 = vunpack.c.l.b16 %v487
    %v2761 = vunpack.c.h.b16 %v487
    %v2762 = vunpack.c.l.b16 %v488
    %v2763 = vunpack.c.h.b16 %v488
    %v2764 = vunpack.c.l.b16 %v489
    %v2765 = vunpack.c.h.b16 %v489
    %v2766 = vunpack.c.l.b16 %v490
    %v2767 = vunpack.c.h.b16 %v490
    %v2768 = vunpack.c.l.b16 %v491
    %v2769 = vunpack.c.h.b16 %v491
    %v2770 = vunpack.c.l.b16 %v492
    %v2771 = vunpack.c.h.b16 %v492
    %v2772 = vunpack.c.l.b16 %v493
    %v2773 = vunpack.c.h.b16 %v493
    %v2774 = vunpack.c.l.b16 %v494
    %v2775 = vunpack.c.h.b16 %v494
    %v2776 = vunpack.c.l.b16 %v495
    %v2777 = vunpack.c.h.b16 %v495
    %v2778 = vunpack.c.l.b16 %v496
    %v2779 = vunpack.c.h.b16 %v496
    %v2780 = vunpack.c.l.b16 %v497
    %v2781 = vunpack.c.h.b16 %v497
    %v2782 = vunpack.c.l.b16 %v498
    %v2783 = vunpack.c.h.b16 %v498
    %v2784 = vunpack.c.l.b16 %v499
    %v2785 = vunpack.c.h.b16 %v499
    %v2786 = vunpack.c.l.b16 %v500
    %v2787 = vunpack.c.h.b16 %v500
    %v2788 = vunpack.c.l.b16 %v501
    %v2789 = vunpack.c.h.b16 %v501
    %v2790 = vunpack.c.l.b16 %v502
    %v2791 = vunpack.c.h.b16 %v502
    %v2792 = vunpack.c.l.b16 %v503
    %v2793 = vunpack.c.h.b16 %v503
    %v2794 = vunpack.c.l.b16 %v504
    %v2795 = vunpack.c.h.b16 %v504
    %v2796 = vunpack.c.l.b16 %v505
    %v2797 = vunpack.c.h.b16 %v505
    %v2798 = vunpack.c.l.b16 %v506
    %v2799 = vunpack.c.h.b16 %v506
    %v2800 = vunpack.c.l.b16 %v507
    %v2801 = vunpack.c.h.b16 %v507
    %v2802 = vunpack.c.l.b16 %v508
    %v2803 = vunpack.c.h.b16 %v508
    %v2804 = vunpack.c.l.b16 %v509
    %v2805 = vunpack.c.h.b16 %v509
    %v2806 = vunpack.c.l.b16 %v510
    %v2807 = vunpack.c.h.b16 %v510
    %v2808 = vunpack.c.l.b16 %v511
    %v2809 = vunpack.c.h.b16 %v511
    %v2810 = vunpack.c.l.b16 %v512
    %v2811 = vunpack.c.h.b16 %v512
    %v2812 = vunpack.c.l.b16 %v513
    %v2813 = vunpack.c.h.b16 %v513
    %v2814 = vunpack.c.l.b16 %v514
    %v2815 = vunpack.c.h.b16 %v514
    %v2816 = vunpack.c.l.b16 %v515
    %v2817 = vunpack.c.h.b16 %v515
    %v2818 = vunpack.c.l.b16 %v516
    %v2819 = vunpack.c.h.b16 %v516
    %v2820 = vunpack.c.l.b16 %v517
    %v2821 = vunpack.c.h.b16 %v517
    %v2822 = vunpack.c.l.b16 %v518
    %v2823 = vunpack.c.h.b16 %v518
    %v2824 = vunpack.c.l.b16 %v519
    %v2825 = vunpack.c.h.b16 %v519
    %v2826 = vunpack.c.l.b16 %v520
    %v2827 = vunpack.c.h.b16 %v520
    %v2828 = vunpack.c.l.b16 %v521
    %v2829 = vunpack.c.h.b16 %v521
    %v2830 = vunpack.c.l.b16 %v522
    %v2831 = vunpack.c.h.b16 %v522
    %v2832 = vunpack.c.l.b16 %v523
    %v2833 = vunpack.c.h.b16 %v523
    %v2834 = vunpack.c.l.b16 %v524
    %v2835 = vunpack.c.h.b16 %v524
    %v2836 = vunpack.c.l.b16 %v525
    %v2837 = vunpack.c.h.b16 %v525
    %v2838 = vunpack.c.l.b16 %v526
    %v2839 = vunpack.c.h.b16 %v526
    %v2840 = vunpack.c.l.b16 %v527
    %v2841 = vunpack.c.h.b16 %v527
    %v2842 = vunpack.c.l.b16 %v528
    %v2843 = vunpack.c.h.b16 %v528
    %v2844 = vunpack.c.l.b16 %v529
    %v2845 = vunpack.c.h.b16 %v529
    %v2846 = vunpack.c.l.b16 %v530
    %v2847 = vunpack.c.h.b16 %v530
    %v2848 = vunpack.c.l.b16 %v531
    %v2849 = vunpack.c.h.b16 %v531
    %v2850 = vunpack.c.l.b16 %v532
    %v2851 = vunpack.c.h.b16 %v532
    %v2852 = vunpack.c.l.b16 %v533
    %v2853 = vunpack.c.h.b16 %v533
    %v2854 = vunpack.c.l.b16 %v534
    %v2855 = vunpack.c.h.b16 %v534
    %v2856 = vunpack.c.l.b16 %v535
    %v2857 = vunpack.c.h.b16 %v535
    %v2858 = vunpack.c.l.b16 %v536
    %v2859 = vunpack.c.h.b16 %v536
    %v2860 = vunpack.c.l.b16 %v537
    %v2861 = vunpack.c.h.b16 %v537
    %v2862 = vunpack.c.l.b16 %v538
    %v2863 = vunpack.c.h.b16 %v538
    %v2864 = vunpack.c.l.b16 %v539
    %v2865 = vunpack.c.h.b16 %v539
    %v2866 = vunpack.c.l.b16 %v540
    %v2867 = vunpack.c.h.b16 %v540
    %v2868 = vunpack.c.l.b16 %v541
    %v2869 = vunpack.c.h.b16 %v541
    %v2870 = vunpack.c.l.b16 %v542
    %v2871 = vunpack.c.h.b16 %v542
    %v2872 = vunpack.c.l.b16 %v543
    %v2873 = vunpack.c.h.b16 %v543
    %v2874 = vunpack.c.l.b16 %v544
    %v2875 = vunpack.c.h.b16 %v544
    %v2876 = vunpack.c.l.b16 %v545
    %v2877 = vunpack.c.h.b16 %v545
    %v2878 = vunpack.c.l.b16 %v546
    %v2879 = vunpack.c.h.b16 %v546
    %v2880 = vunpack.c.l.b16 %v547
    %v2881 = vunpack.c.h.b16 %v547
    %v2882 = vunpack.c.l.b16 %v548
    %v2883 = vunpack.c.h.b16 %v548
    %v2884 = vunpack.c.l.b16 %v549
    %v2885 = vunpack.c.h.b16 %v549
    %v2886 = vunpack.c.l.b16 %v550
    %v2887 = vunpack.c.h.b16 %v550
    %v2888 = vunpack.c.l.b16 %v551
    %v2889 = vunpack.c.h.b16 %v551
    %v2890 = vunpack.c.l.b16 %v552
    %v2891 = vunpack.c.h.b16 %v552
    %v2892 = vunpack.c.l.b16 %v553
    %v2893 = vunpack.c.h.b16 %v553
    %v2894 = vunpack.c.l.b16 %v554
    %v2895 = vunpack.c.h.b16 %v554
    %v2896 = vunpack.c.l.b16 %v555
    %v2897 = vunpack.c.h.b16 %v555
    %v2898 = vunpack.c.l.b16 %v556
    %v2899 = vunpack.c.h.b16 %v556
    %v2900 = vunpack.c.l.b16 %v557
    %v2901 = vunpack.c.h.b16 %v557
    %v2902 = vunpack.c.l.b16 %v558
    %v2903 = vunpack.c.h.b16 %v558
    %v2904 = vunpack.c.l.b16 %v559
    %v2905 = vunpack.c.h.b16 %v559
    %v2906 = vunpack.c.l.b16 %v560
    %v2907 = vunpack.c.h.b16 %v560
    %v2908 = vunpack.c.l.b16 %v561
    %v2909 = vunpack.c.h.b16 %v561
    %v2910 = vunpack.c.l.b16 %v562
    %v2911 = vunpack.c.h.b16 %v562
    %v2912 = vunpack.c.l.b16 %v563
    %v2913 = vunpack.c.h.b16 %v563
    %v2914 = vunpack.c.l.b16 %v564
    %v2915 = vunpack.c.h.b16 %v564
    %v2916 = vunpack.c.l.b16 %v565
    %v2917 = vunpack.c.h.b16 %v565
    %v2918 = vunpack.c.l.b16 %v566
    %v2919 = vunpack.c.h.b16 %v566
    %v2920 = vunpack.c.l.b16 %v567
    %v2921 = vunpack.c.h.b16 %v567
    %v2922 = vunpack.c.l.b16 %v568
    %v2923 = vunpack.c.h.b16 %v568
    %v2924 = vunpack.c.l.b16 %v569
    %v2925 = vunpack.c.h.b16 %v569
    %v2926 = vunpack.c.l.b16 %v570
    %v2927 = vunpack.c.h.b16 %v570
    %v2928 = vunpack.c.l.b16 %v571
    %v2929 = vunpack.c.h.b16 %v571
    %v2930 = vunpack.c.l.b16 %v572
    %v2931 = vunpack.c.h.b16 %v572
    %v2932 = vunpack.c.l.b16 %v573
    %v2933 = vunpack.c.h.b16 %v573
    %v2934 = vunpack.c.l.b16 %v574
    %v2935 = vunpack.c.h.b16 %v574
    %v2936 = vunpack.c.l.b16 %v575
    %v2937 = vunpack.c.h.b16 %v575
    %v2938 = vunpack.c.l.b16 %v576
    %v2939 = vunpack.c.h.b16 %v576
    %v2940 = vunpack.c.l.b16 %v577
    %v2941 = vunpack.c.h.b16 %v577
    %v2942 = vunpack.c.l.b16 %v578
    %v2943 = vunpack.c.h.b16 %v578
    %v2944 = vunpack.c.l.b16 %v579
    %v2945 = vunpack.c.h.b16 %v579
    %v2946 = vunpack.c.l.b16 %v580
    %v2947 = vunpack.c.h.b16 %v580
    %v2948 = vunpack.c.l.b16 %v581
    %v2949 = vunpack.c.h.b16 %v581
    %v2950 = vunpack.c.l.b16 %v582
    %v2951 = vunpack.c.h.b16 %v582
    %v2952 = vunpack.c.l.b16 %v583
    %v2953 = vunpack.c.h.b16 %v583
    %v2954 = vunpack.c.l.b16 %v584
    %v2955 = vunpack.c.h.b16 %v584
    %v2956 = vunpack.c.l.b16 %v585
    %v2957 = vunpack.c.h.b16 %v585
    %v2958 = vunpack.c.l.b16 %v586
    %v2959 = vunpack.c.h.b16 %v586
    %v2960 = vunpack.c.l.b16 %v587
    %v2961 = vunpack.c.h.b16 %v587
    %v2962 = vunpack.c.l.b16 %v588
    %v2963 = vunpack.c.h.b16 %v588
    %v2964 = vunpack.c.l.b16 %v589
    %v2965 = vunpack.c.h.b16 %v589
    %v2966 = vunpack.c.l.b16 %v590
    %v2967 = vunpack.c.h.b16 %v590
    %v2968 = vunpack.c.l.b16 %v591
    %v2969 = vunpack.c.h.b16 %v591
    %v2970 = vunpack.c.l.b16 %v592
    %v2971 = vunpack.c.h.b16 %v592
    %v2972 = vunpack.c.l.b16 %v593
    %v2973 = vunpack.c.h.b16 %v593
    %v2974 = vunpack.c.l.b16 %v594
    %v2975 = vunpack.c.h.b16 %v594
    %v2976 = vunpack.c.l.b16 %v595
    %v2977 = vunpack.c.h.b16 %v595
    %v2978 = vunpack.c.l.b16 %v596
    %v2979 = vunpack.c.h.b16 %v596
    %v2980 = vunpack.c.l.b16 %v597
    %v2981 = vunpack.c.h.b16 %v597
    %v2982 = vunpack.c.l.b16 %v598
    %v2983 = vunpack.c.h.b16 %v598
    %v2984 = vunpack.c.l.b16 %v599
    %v2985 = vunpack.c.h.b16 %v599
    %v2986 = vunpack.c.l.b16 %v600
    %v2987 = vunpack.c.h.b16 %v600
    %v2988 = vunpack.c.l.b16 %v601
    %v2989 = vunpack.c.h.b16 %v601
    %v2990 = vunpack.c.l.b16 %v602
    %v2991 = vunpack.c.h.b16 %v602
    %v2992 = vunpack.c.l.b16 %v603
    %v2993 = vunpack.c.h.b16 %v603
    %v2994 = vunpack.c.l.b16 %v604
    %v2995 = vunpack.c.h.b16 %v604
    %v2996 = vunpack.c.l.b16 %v605
    %v2997 = vunpack.c.h.b16 %v605
    %v2998 = vunpack.c.l.b16 %v606
    %v2999 = vunpack.c.h.b16 %v606
    %v3000 = vunpack.c.l.b16 %v607
    %v3001 = vunpack.c.h.b16 %v607
    %v3002 = vunpack.c.l.b16 %v608
    %v3003 = vunpack.c.h.b16 %v608
    %v3004 = vunpack.c.l.b16 %v609
    %v3005 = vunpack.c.h.b16 %v609
    %v3006 = vunpack.c.l.b16 %v610
    %v3007 = vunpack.c.h.b16 %v610
    %v3008 = vunpack.c.l.b16 %v611
    %v3009 = vunpack.c.h.b16 %v611
    %v3010 = vunpack.c.l.b16 %v612
    %v3011 = vunpack.c.h.b16 %v612
    %v3012 = vunpack.c.l.b16 %v613
    %v3013 = vunpack.c.h.b16 %v613
    %v3014 = vunpack.c.l.b16 %v614
    %v3015 = vunpack.c.h.b16 %v614
    %v3016 = vunpack.c.l.b16 %v615
    %v3017 = vunpack.c.h.b16 %v615
    %v3018 = vunpack.c.l.b16 %v616
    %v3019 = vunpack.c.h.b16 %v616
    %v3020 = vunpack.c.l.b16 %v617
    %v3021 = vunpack.c.h.b16 %v617
    %v3022 = vunpack.c.l.b16 %v618
    %v3023 = vunpack.c.h.b16 %v618
    %v3024 = vunpack.c.l.b16 %v619
    %v3025 = vunpack.c.h.b16 %v619
    %v3026 = vunpack.c.l.b16 %v620
    %v3027 = vunpack.c.h.b16 %v620
    %v3028 = vunpack.c.l.b16 %v621
    %v3029 = vunpack.c.h.b16 %v621
    %v3030 = vunpack.c.l.b16 %v622
    %v3031 = vunpack.c.h.b16 %v622
    %v3032 = vunpack.c.l.b16 %v623
    %v3033 = vunpack.c.h.b16 %v623
    %v3034 = vunpack.c.l.b16 %v624
    %v3035 = vunpack.c.h.b16 %v624
    %v3036 = vunpack.c.l.b16 %v625
    %v3037 = vunpack.c.h.b16 %v625
    %v3038 = vunpack.c.l.b16 %v626
    %v3039 = vunpack.c.h.b16 %v626
    %v3040 = vunpack.c.l.b16 %v627
    %v3041 = vunpack.c.h.b16 %v627
    %v3042 = vunpack.c.l.b16 %v628
    %v3043 = vunpack.c.h.b16 %v628
    %v3044 = vunpack.c.l.b16 %v629
    %v3045 = vunpack.c.h.b16 %v629
    %v3046 = vunpack.c.l.b16 %v630
    %v3047 = vunpack.c.h.b16 %v630
    %v3048 = vunpack.c.l.b16 %v631
    %v3049 = vunpack.c.h.b16 %v631
    %v3050 = vunpack.c.l.b16 %v632
    %v3051 = vunpack.c.h.b16 %v632
    %v3052 = vunpack.c.l.b16 %v633
    %v3053 = vunpack.c.h.b16 %v633
    %v3054 = vunpack.c.l.b16 %v634
    %v3055 = vunpack.c.h.b16 %v634
    %v3056 = vunpack.c.l.b16 %v635
    %v3057 = vunpack.c.h.b16 %v635
    %v3058 = vunpack.c.l.b16 %v636
    %v3059 = vunpack.c.h.b16 %v636
    %v3060 = vunpack.c.l.b16 %v637
    %v3061 = vunpack.c.h.b16 %v637
    %v3062 = vunpack.c.l.b16 %v638
    %v3063 = vunpack.c.h.b16 %v638
    %v3064 = vunpack.c.l.b16 %v639
    %v3065 = vunpack.c.h.b16 %v639
    %v3066 = vunpack.c.l.b16 %v640
    %v3067 = vunpack.c.h.b16 %v640
    %v3068 = vunpack.c.l.b16 %v641
    %v3069 = vunpack.c.h.b16 %v641
    %v3070 = vunpack.c.l.b16 %v642
    %v3071 = vunpack.c.h.b16 %v642
    %v3072 = vunpack.c.l.b16 %v643
    %v3073 = vunpack.c.h.b16 %v643
    %v3074 = vunpack.c.l.b16 %v644
    %v3075 = vunpack.c.h.b16 %v644
    %v3076 = vunpack.c.l.b16 %v645
    %v3077 = vunpack.c.h.b16 %v645
    %v3078 = vunpack.c.l.b16 %v646
    %v3079 = vunpack.c.h.b16 %v646
    %v3080 = vunpack.c.l.b16 %v647
    %v3081 = vunpack.c.h.b16 %v647
    %v3082 = vunpack.c.l.b16 %v648
    %v3083 = vunpack.c.h.b16 %v648
    %v3084 = vunpack.c.l.b16 %v649
    %v3085 = vunpack.c.h.b16 %v649
    %v3086 = vunpack.c.l.b16 %v650
    %v3087 = vunpack.c.h.b16 %v650
    %v3088 = vunpack.c.l.b16 %v651
    %v3089 = vunpack.c.h.b16 %v651
    %v3090 = vunpack.c.l.b16 %v652
    %v3091 = vunpack.c.h.b16 %v652
    %v3092 = vunpack.c.l.b16 %v653
    %v3093 = vunpack.c.h.b16 %v653
    %v3094 = vunpack.c.l.b16 %v654
    %v3095 = vunpack.c.h.b16 %v654
    %v3096 = vunpack.c.l.b16 %v655
    %v3097 = vunpack.c.h.b16 %v655
    %v3098 = vunpack.c.l.b16 %v656
    %v3099 = vunpack.c.h.b16 %v656
    %v3100 = vunpack.c.l.b16 %v657
    %v3101 = vunpack.c.h.b16 %v657
    %v3102 = vunpack.c.l.b16 %v658
    %v3103 = vunpack.c.h.b16 %v658
    %v3104 = vunpack.c.l.b16 %v659
    %v3105 = vunpack.c.h.b16 %v659
    %v3106 = vunpack.c.l.b16 %v660
    %v3107 = vunpack.c.h.b16 %v660
    %v3108 = vunpack.c.l.b16 %v661
    %v3109 = vunpack.c.h.b16 %v661
    %v3110 = vunpack.c.l.b16 %v662
    %v3111 = vunpack.c.h.b16 %v662
    %v3112 = vunpack.c.l.b16 %v663
    %v3113 = vunpack.c.h.b16 %v663
    %v3114 = vunpack.c.l.b16 %v664
    %v3115 = vunpack.c.h.b16 %v664
    %v3116 = vunpack.c.l.b16 %v665
    %v3117 = vunpack.c.h.b16 %v665
    %v3118 = vunpack.c.l.b16 %v666
    %v3119 = vunpack.c.h.b16 %v666
    %v3120 = vunpack.c.l.b16 %v667
    %v3121 = vunpack.c.h.b16 %v667
    %v3122 = vunpack.c.l.b16 %v668
    %v3123 = vunpack.c.h.b16 %v668
    %v3124 = vunpack.c.l.b16 %v669
    %v3125 = vunpack.c.h.b16 %v669
    %v3126 = vunpack.c.l.b16 %v670
    %v3127 = vunpack.c.h.b16 %v670
    %v3128 = vunpack.c.l.b16 %v671
    %v3129 = vunpack.c.h.b16 %v671
    %v3130 = vunpack.c.l.b16 %v672
    %v3131 = vunpack.c.h.b16 %v672
    %v3132 = vunpack.c.l.b16 %v673
    %v3133 = vunpack.c.h.b16 %v673
    %v3134 = vunpack.c.l.b16 %v674
    %v3135 = vunpack.c.h.b16 %v674
    %v3136 = vunpack.c.l.b16 %v675
    %v3137 = vunpack.c.h.b16 %v675
    %v3138 = vunpack.c.l.b16 %v676
    %v3139 = vunpack.c.h.b16 %v676
    %v3140 = vunpack.c.l.b16 %v677
    %v3141 = vunpack.c.h.b16 %v677
    %v3142 = vunpack.c.l.b16 %v678
    %v3143 = vunpack.c.h.b16 %v678
    %v3144 = vunpack.c.l.b16 %v679
    %v3145 = vunpack.c.h.b16 %v679
    %v3146 = vunpack.c.l.b16 %v680
    %v3147 = vunpack.c.h.b16 %v680
    %v3148 = vunpack.c.l.b16 %v681
    %v3149 = vunpack.c.h.b16 %v681
    %v3150 = vunpack.c.l.b16 %v682
    %v3151 = vunpack.c.h.b16 %v682
    %v3152 = vunpack.c.l.b16 %v683
    %v3153 = vunpack.c.h.b16 %v683
    %v3154 = vunpack.c.l.b16 %v684
    %v3155 = vunpack.c.h.b16 %v684
    %v3156 = vunpack.c.l.b16 %v685
    %v3157 = vunpack.c.h.b16 %v685
    %v3158 = vunpack.c.l.b16 %v686
    %v3159 = vunpack.c.h.b16 %v686
    %v3160 = vunpack.c.l.b16 %v687
    %v3161 = vunpack.c.h.b16 %v687
    %v3162 = vunpack.c.l.b16 %v688
    %v3163 = vunpack.c.h.b16 %v688
    %v3164 = vunpack.c.l.b16 %v689
    %v3165 = vunpack.c.h.b16 %v689
    %v3166 = vunpack.c.l.b16 %v690
    %v3167 = vunpack.c.h.b16 %v690
    %v3168 = vunpack.c.l.b16 %v691
    %v3169 = vunpack.c.h.b16 %v691
    %v3170 = vunpack.c.l.b16 %v692
    %v3171 = vunpack.c.h.b16 %v692
    %v3172 = vunpack.c.l.b16 %v693
    %v3173 = vunpack.c.h.b16 %v693
    %v3174 = vunpack.c.l.b16 %v694
    %v3175 = vunpack.c.h.b16 %v694
    %v3176 = vunpack.c.l.b16 %v695
    %v3177 = vunpack.c.h.b16 %v695
    %v3178 = vunpack.c.l.b16 %v696
    %v3179 = vunpack.c.h.b16 %v696
    %v3180 = vunpack.c.l.b16 %v697
    %v3181 = vunpack.c.h.b16 %v697
    %v3182 = vunpack.c.l.b16 %v698
    %v3183 = vunpack.c.h.b16 %v698
    %v3184 = vunpack.c.l.b16 %v699
    %v3185 = vunpack.c.h.b16 %v699
    %v3186 = vunpack.c.l.b16 %v700
    %v3187 = vunpack.c.h.b16 %v700
    %v3188 = vunpack.c.l.b16 %v701
    %v3189 = vunpack.c.h.b16 %v701
    %v3190 = vunpack.c.l.b16 %v702
    %v3191 = vunpack.c.h.b16 %v702
    %v3192 = vunpack.c.l.b16 %v703
    %v3193 = vunpack.c.h.b16 %v703
    %v3194 = vunpack.c.l.b16 %v704
    %v3195 = vunpack.c.h.b16 %v704
    %v3196 = vunpack.c.l.b16 %v705
    %v3197 = vunpack.c.h.b16 %v705
    %v3198 = vunpack.c.l.b16 %v706
    %v3199 = vunpack.c.h.b16 %v706
    %v3200 = vunpack.c.l.b16 %v707
    %v3201 = vunpack.c.h.b16 %v707
    %v3202 = vunpack.c.l.b16 %v708
    %v3203 = vunpack.c.h.b16 %v708
    %v3204 = vunpack.c.l.b16 %v709
    %v3205 = vunpack.c.h.b16 %v709
    %v3206 = vunpack.c.l.b16 %v710
    %v3207 = vunpack.c.h.b16 %v710
    %v3208 = vunpack.c.l.b16 %v711
    %v3209 = vunpack.c.h.b16 %v711
    %v3210 = vunpack.c.l.b16 %v712
    %v3211 = vunpack.c.h.b16 %v712
    %v3212 = vunpack.c.l.b16 %v713
    %v3213 = vunpack.c.h.b16 %v713
    %v3214 = vunpack.c.l.b16 %v714
    %v3215 = vunpack.c.h.b16 %v714
    %v3216 = vunpack.c.l.b16 %v715
    %v3217 = vunpack.c.h.b16 %v715
    %v3218 = vunpack.c.l.b16 %v716
    %v3219 = vunpack.c.h.b16 %v716
    %v3220 = vunpack.c.l.b16 %v717
    %v3221 = vunpack.c.h.b16 %v717
    %v3222 = vunpack.c.l.b16 %v718
    %v3223 = vunpack.c.h.b16 %v718
    %v3224 = vunpack.c.l.b16 %v719
    %v3225 = vunpack.c.h.b16 %v719
    %v3226 = vunpack.c.l.b16 %v720
    %v3227 = vunpack.c.h.b16 %v720
    %v3228 = vunpack.c.l.b16 %v721
    %v3229 = vunpack.c.h.b16 %v721
    %v3230 = vunpack.c.l.b16 %v722
    %v3231 = vunpack.c.h.b16 %v722
    %v3232 = vunpack.c.l.b16 %v723
    %v3233 = vunpack.c.h.b16 %v723
    %v3234 = vunpack.c.l.b16 %v724
    %v3235 = vunpack.c.h.b16 %v724
    %v3236 = vunpack.c.l.b16 %v725
    %v3237 = vunpack.c.h.b16 %v725
    %v3238 = vunpack.c.l.b16 %v726
    %v3239 = vunpack.c.h.b16 %v726
    %v3240 = vunpack.c.l.b16 %v727
    %v3241 = vunpack.c.h.b16 %v727
    %v3242 = vunpack.c.l.b16 %v728
    %v3243 = vunpack.c.h.b16 %v728
    %v3244 = vunpack.c.l.b16 %v729
    %v3245 = vunpack.c.h.b16 %v729
    %v3246 = vunpack.c.l.b16 %v730
    %v3247 = vunpack.c.h.b16 %v730
    %v3248 = vunpack.c.l.b16 %v731
    %v3249 = vunpack.c.h.b16 %v731
    %v3250 = vunpack.c.l.b16 %v732
    %v3251 = vunpack.c.h.b16 %v732
    %v3252 = vunpack.c.l.b16 %v733
    %v3253 = vunpack.c.h.b16 %v733
    %v3254 = vunpack.c.l.b16 %v734
    %v3255 = vunpack.c.h.b16 %v734
    %v3256 = vunpack.c.l.b16 %v735
    %v3257 = vunpack.c.h.b16 %v735
    %v3258 = vunpack.c.l.b16 %v736
    %v3259 = vunpack.c.h.b16 %v736
    %v3260 = vunpack.c.l.b16 %v737
    %v3261 = vunpack.c.h.b16 %v737
    %v3262 = vunpack.c.l.b16 %v738
    %v3263 = vunpack.c.h.b16 %v738
    %v3264 = vunpack.c.l.b16 %v739
    %v3265 = vunpack.c.h.b16 %v739
    %v3266 = vunpack.c.l.b16 %v740
    %v3267 = vunpack.c.h.b16 %v740
    %v3268 = vunpack.c.l.b16 %v741
    %v3269 = vunpack.c.h.b16 %v741
    %v3270 = vunpack.c.l.b16 %v742
    %v3271 = vunpack.c.h.b16 %v742
    %v3272 = vunpack.c.l.b16 %v743
    %v3273 = vunpack.c.h.b16 %v743
    %v3274 = vunpack.c.l.b16 %v744
    %v3275 = vunpack.c.h.b16 %v744
    %v3276 = vunpack.c.l.b16 %v745
    %v3277 = vunpack.c.h.b16 %v745
    %v3278 = vunpack.c.l.b16 %v746
    %v3279 = vunpack.c.h.b16 %v746
    %v3280 = vunpack.c.l.b16 %v747
    %v3281 = vunpack.c.h.b16 %v747
    %v3282 = vunpack.c.l.b16 %v748
    %v3283 = vunpack.c.h.b16 %v748
    %v3284 = vunpack.c.l.b16 %v749
    %v3285 = vunpack.c.h.b16 %v749
    %v3286 = vunpack.c.l.b16 %v750
    %v3287 = vunpack.c.h.b16 %v750
    %v3288 = vunpack.c.l.b16 %v751
    %v3289 = vunpack.c.h.b16 %v751
    %v3290 = vunpack.c.l.b16 %v752
    %v3291 = vunpack.c.h.b16 %v752
    %v3292 = vunpack.c.l.b16 %v753
    %v3293 = vunpack.c.h.b16 %v753
    %v3294 = vunpack.c.l.b16 %v754
    %v3295 = vunpack.c.h.b16 %v754
    %v3296 = vunpack.c.l.b16 %v755
    %v3297 = vunpack.c.h.b16 %v755
    %v3298 = vunpack.c.l.b16 %v756
    %v3299 = vunpack.c.h.b16 %v756
    %v3300 = vunpack.c.l.b16 %v757
    %v3301 = vunpack.c.h.b16 %v757
    %v3302 = vunpack.c.l.b16 %v758
    %v3303 = vunpack.c.h.b16 %v758
    %v3304 = vunpack.c.l.b16 %v759
    %v3305 = vunpack.c.h.b16 %v759
    %v3306 = vunpack.c.l.b16 %v760
    %v3307 = vunpack.c.h.b16 %v760
    %v3308 = vunpack.c.l.b16 %v761
    %v3309 = vunpack.c.h.b16 %v761
    %v3310 = vunpack.c.l.b16 %v762
    %v3311 = vunpack.c.h.b16 %v762
    %v3312 = vunpack.c.l.b16 %v763
    %v3313 = vunpack.c.h.b16 %v763
    %v3314 = vunpack.c.l.b16 %v764
    %v3315 = vunpack.c.h.b16 %v764
    %v3316 = vunpack.c.l.b16 %v765
    %v3317 = vunpack.c.h.b16 %v765
    %v3318 = vunpack.c.l.b16 %v766
    %v3319 = vunpack.c.h.b16 %v766
    %v3320 = vunpack.c.l.b16 %v767
    %v3321 = vunpack.c.h.b16 %v767
    %v3322 = vunpack.c.l.b16 %v768
    %v3323 = vunpack.c.h.b16 %v768
    %v3324 = vunpack.c.l.b16 %v769
    %v3325 = vunpack.c.h.b16 %v769
    %v3326 = vunpack.c.l.b16 %v770
    %v3327 = vunpack.c.h.b16 %v770
    %v3328 = vunpack.c.l.b16 %v771
    %v3329 = vunpack.c.h.b16 %v771
    %v3330 = vunpack.c.l.b16 %v772
    %v3331 = vunpack.c.h.b16 %v772
    %v3332 = vunpack.c.l.b16 %v773
    %v3333 = vunpack.c.h.b16 %v773
    %v3334 = vunpack.c.l.b16 %v774
    %v3335 = vunpack.c.h.b16 %v774
    %v3336 = vunpack.c.l.b16 %v775
    %v3337 = vunpack.c.h.b16 %v775
    %v3338 = vunpack.c.l.b16 %v776
    %v3339 = vunpack.c.h.b16 %v776
    %v3340 = vunpack.c.l.b16 %v777
    %v3341 = vunpack.c.h.b16 %v777
    %v3342 = vunpack.c.l.b16 %v778
    %v3343 = vunpack.c.h.b16 %v778
    %v3344 = vunpack.c.l.b16 %v779
    %v3345 = vunpack.c.h.b16 %v779
    %v3346 = vunpack.c.l.b16 %v780
    %v3347 = vunpack.c.h.b16 %v780
    %v3348 = vunpack.c.l.b16 %v781
    %v3349 = vunpack.c.h.b16 %v781
    %v3350 = vunpack.c.l.b16 %v782
    %v3351 = vunpack.c.h.b16 %v782
    %v3352 = vunpack.c.l.b16 %v783
    %v3353 = vunpack.c.h.b16 %v783
    %v3354 = vunpack.c.l.b16 %v784
    %v3355 = vunpack.c.h.b16 %v784
    %v3356 = vunpack.c.l.b16 %v785
    %v3357 = vunpack.c.h.b16 %v785
    %v3358 = vunpack.c.l.b16 %v786
    %v3359 = vunpack.c.h.b16 %v786
    %v3360 = vunpack.c.l.b16 %v787
    %v3361 = vunpack.c.h.b16 %v787
    %v3362 = vunpack.c.l.b16 %v788
    %v3363 = vunpack.c.h.b16 %v788
    %v3364 = vunpack.c.l.b16 %v789
    %v3365 = vunpack.c.h.b16 %v789
    %v3366 = vunpack.c.l.b16 %v790
    %v3367 = vunpack.c.h.b16 %v790
    %v3368 = vunpack.c.l.b16 %v791
    %v3369 = vunpack.c.h.b16 %v791
    %v3370 = vunpack.c.l.b16 %v792
    %v3371 = vunpack.c.h.b16 %v792
    %v3372 = vunpack.c.l.b16 %v793
    %v3373 = vunpack.c.h.b16 %v793
    %v3374 = vunpack.c.l.b16 %v794
    %v3375 = vunpack.c.h.b16 %v794
    %v3376 = vunpack.c.l.b16 %v795
    %v3377 = vunpack.c.h.b16 %v795
    %v3378 = vunpack.c.l.b16 %v796
    %v3379 = vunpack.c.h.b16 %v796
    %v3380 = vunpack.c.l.b16 %v797
    %v3381 = vunpack.c.h.b16 %v797
    %v3382 = vunpack.c.l.b16 %v798
    %v3383 = vunpack.c.h.b16 %v798
    %v3384 = vunpack.c.l.b16 %v799
    %v3385 = vunpack.c.h.b16 %v799
    %v3386 = vunpack.c.l.b16 %v800
    %v3387 = vunpack.c.h.b16 %v800
    %v3388 = vunpack.c.l.b16 %v801
    %v3389 = vunpack.c.h.b16 %v801
    %v3390 = vunpack.c.l.b16 %v802
    %v3391 = vunpack.c.h.b16 %v802
    %v3392 = vunpack.c.l.b16 %v803
    %v3393 = vunpack.c.h.b16 %v803
    %v3394 = vunpack.c.l.b16 %v804
    %v3395 = vunpack.c.h.b16 %v804
    %v3396 = vunpack.c.l.b16 %v805
    %v3397 = vunpack.c.h.b16 %v805
    %v3398 = vunpack.c.l.b16 %v806
    %v3399 = vunpack.c.h.b16 %v806
    %v3400 = vunpack.c.l.b16 %v807
    %v3401 = vunpack.c.h.b16 %v807
    %v3402 = vunpack.c.l.b16 %v808
    %v3403 = vunpack.c.h.b16 %v808
    %v3404 = vunpack.c.l.b16 %v809
    %v3405 = vunpack.c.h.b16 %v809
    %v3406 = vunpack.c.l.b16 %v810
    %v3407 = vunpack.c.h.b16 %v810
    %v3408 = vunpack.c.l.b16 %v811
    %v3409 = vunpack.c.h.b16 %v811
    %v3410 = vunpack.c.l.b16 %v812
    %v3411 = vunpack.c.h.b16 %v812
    %v3412 = vunpack.c.l.b16 %v813
    %v3413 = vunpack.c.h.b16 %v813
    %v3414 = vunpack.c.l.b16 %v814
    %v3415 = vunpack.c.h.b16 %v814
    %v3416 = vunpack.c.l.b16 %v815
    %v3417 = vunpack.c.h.b16 %v815
    %v3418 = vunpack.c.l.b16 %v816
    %v3419 = vunpack.c.h.b16 %v816
    %v3420 = vunpack.c.l.b16 %v817
    %v3421 = vunpack.c.h.b16 %v817
    %v3422 = vunpack.c.l.b16 %v818
    %v3423 = vunpack.c.h.b16 %v818
    %v3424 = vunpack.c.l.b16 %v819
    %v3425 = vunpack.c.h.b16 %v819
    %v3426 = vunpack.c.l.b16 %v820
    %v3427 = vunpack.c.h.b16 %v820
    %v3428 = vunpack.c.l.b16 %v821
    %v3429 = vunpack.c.h.b16 %v821
    %v3430 = vunpack.c.l.b16 %v822
    %v3431 = vunpack.c.h.b16 %v822
    %v3432 = vunpack.c.l.b16 %v823
    %v3433 = vunpack.c.h.b16 %v823
    %v3434 = vunpack.c.l.b16 %v824
    %v3435 = vunpack.c.h.b16 %v824
    %v3436 = vunpack.c.l.b16 %v825
    %v3437 = vunpack.c.h.b16 %v825
    %v3438 = vpack.c.b16 %v1842, %v1838
    %v3439 = vpack.c.b16 %v1843, %v1839
    %v3440 = vpack.c.b16 %v1844, %v1840
    %v3441 = vpack.c.b16 %v1845, %v1841
    %v3442 = vpack.c.b16 %v1850, %v1846
    %v3443 = vpack.c.b16 %v1851, %v1847
    %v3444 = vpack.c.b16 %v1852, %v1848
    %v3445 = vpack.c.b16 %v1853, %v1849
    %v3446 = vpack.c.b16 %v1858, %v1854
    %v3447 = vpack.c.b16 %v1859, %v1855
    %v3448 = vpack.c.b16 %v1860, %v1856
    %v3449 = vpack.c.b16 %v1861, %v1857
    %v3450 = vpack.c.b16 %v1866, %v1862
    %v3451 = vpack.c.b16 %v1867, %v1863
    %v3452 = vpack.c.b16 %v1868, %v1864
    %v3453 = vpack.c.b16 %v1869, %v1865
    %v3454 = vpack.c.b16 %v1874, %v1870
    %v3455 = vpack.c.b16 %v1875, %v1871
    %v3456 = vpack.c.b16 %v1876, %v1872
    %v3457 = vpack.c.b16 %v1877, %v1873
    %v3458 = vpack.c.b16 %v1882, %v1878
    %v3459 = vpack.c.b16 %v1883, %v1879
    %v3460 = vpack.c.b16 %v1884, %v1880
    %v3461 = vpack.c.b16 %v1885, %v1881
    %v3462 = vpack.c.b16 %v1890, %v1886
    %v3463 = vpack.c.b16 %v1891, %v1887
    %v3464 = vpack.c.b16 %v1892, %v1888
    %v3465 = vpack.c.b16 %v1893, %v1889
    %v3466 = vpack.c.b16 %v1898, %v1894
    %v3467 = vpack.c.b16 %v1899, %v1895
    %v3468 = vpack.c.b16 %v1900, %v1896
    %v3469 = vpack.c.b16 %v1901, %v1897
    %v3470 = vpack.c.b16 %v1906, %v1902
    %v3471 = vpack.c.b16 %v1907, %v1903
    %v3472 = vpack.c.b16 %v1908, %v1904
    %v3473 = vpack.c.b16 %v1909, %v1905
    %v3474 = vpack.c.b16 %v1914, %v1910
    %v3475 = vpack.c.b16 %v1915, %v1911
    %v3476 = vpack.c.b16 %v1916, %v1912
    %v3477 = vpack.c.b16 %v1917, %v1913
    %v3478 = vpack.c.b16 %v1922, %v1918
    %v3479 = vpack.c.b16 %v1923, %v1919
    %v3480 = vpack.c.b16 %v1924, %v1920
    %v3481 = vpack.c.b16 %v1925, %v1921
    %v3482 = vpack.c.b16 %v1930, %v1926
    %v3483 = vpack.c.b16 %v1931, %v1927
    %v3484 = vpack.c.b16 %v1932, %v1928
    %v3485 = vpack.c.b16 %v1933, %v1929
    %v3486 = vpack.c.b16 %v1938, %v1934
    %v3487 = vpack.c.b16 %v1939, %v1935
    %v3488 = vpack.c.b16 %v1940, %v1936
    %v3489 = vpack.c.b16 %v1941, %v1937
    %v3490 = vpack.c.b16 %v1946, %v1942
    %v3491 = vpack.c.b16 %v1947, %v1943
    %v3492 = vpack.c.b16 %v1948, %v1944
    %v3493 = vpack.c.b16 %v1949, %v1945
    %v3494 = vpack.c.b16 %v1954, %v1950
    %v3495 = vpack.c.b16 %v1955, %v1951
    %v3496 = vpack.c.b16 %v1956, %v1952
    %v3497 = vpack.c.b16 %v1957, %v1953
    %v3498 = vpack.c.b16 %v1962, %v1958
    %v3499 = vpack.c.b16 %v1963, %v1959
    %v3500 = vpack.c.b16 %v1964, %v1960
    %v3501 = vpack.c.b16 %v1965, %v1961
    %v3502 = vpack.c.b16 %v1970, %v1966
    %v3503 = vpack.c.b16 %v1971, %v1967
    %v3504 = vpack.c.b16 %v1972, %v1968
    %v3505 = vpack.c.b16 %v1973, %v1969
    %v3506 = vpack.c.b16 %v1978, %v1974
    %v3507 = vpack.c.b16 %v1979, %v1975
    %v3508 = vpack.c.b16 %v1980, %v1976
    %v3509 = vpack.c.b16 %v1981, %v1977
    %v3510 = vpack.c.b16 %v1986, %v1982
    %v3511 = vpack.c.b16 %v1987, %v1983
    %v3512 = vpack.c.b16 %v1988, %v1984
    %v3513 = vpack.c.b16 %v1989, %v1985
    %v3514 = vpack.c.b16 %v1994, %v1990
    %v3515 = vpack.c.b16 %v1995, %v1991
    %v3516 = vpack.c.b16 %v1996, %v1992
    %v3517 = vpack.c.b16 %v1997, %v1993
    %v3518 = vpack.c.b16 %v2002, %v1998
    %v3519 = vpack.c.b16 %v2003, %v1999
    %v3520 = vpack.c.b16 %v2004, %v2000
    %v3521 = vpack.c.b16 %v2005, %v2001
    %v3522 = vpack.c.b16 %v2010, %v2006
    %v3523 = vpack.c.b16 %v2011, %v2007
    %v3524 = vpack.c.b16 %v2012, %v2008
    %v3525 = vpack.c.b16 %v2013, %v2009
    %v3526 = vpack.c.b16 %v2018, %v2014
    %v3527 = vpack.c.b16 %v2019, %v2015
    %v3528 = vpack.c.b16 %v2020, %v2016
    %v3529 = vpack.c.b16 %v2021, %v2017
    %v3530 = vpack.c.b16 %v2026, %v2022
    %v3531 = vpack.c.b16 %v2027, %v2023
    %v3532 = vpack.c.b16 %v2028, %v2024
    %v3533 = vpack.c.b16 %v2029, %v2025
    %v3534 = vpack.c.b16 %v2034, %v2030
    %v3535 = vpack.c.b16 %v2035, %v2031
    %v3536 = vpack.c.b16 %v2036, %v2032
    %v3537 = vpack.c.b16 %v2037, %v2033
    %v3538 = vpack.c.b16 %v2042, %v2038
    %v3539 = vpack.c.b16 %v2043, %v2039
    %v3540 = vpack.c.b16 %v2044, %v2040
    %v3541 = vpack.c.b16 %v2045, %v2041
    %v3542 = vpack.c.b16 %v2050, %v2046
    %v3543 = vpack.c.b16 %v2051, %v2047
    %v3544 = vpack.c.b16 %v2052, %v2048
    %v3545 = vpack.c.b16 %v2053, %v2049
    %v3546 = vpack.c.b16 %v2058, %v2054
    %v3547 = vpack.c.b16 %v2059, %v2055
    %v3548 = vpack.c.b16 %v2060, %v2056
    %v3549 = vpack.c.b16 %v2061, %v2057
    %v3550 = vpack.c.b16 %v2066, %v2062
    %v3551 = vpack.c.b16 %v2067, %v2063
    %v3552 = vpack.c.b16 %v2068, %v2064
    %v3553 = vpack.c.b16 %v2069, %v2065
    %v3554 = vpack.c.b16 %v2074, %v2070
    %v3555 = vpack.c.b16 %v2075, %v2071
    %v3556 = vpack.c.b16 %v2076, %v2072
    %v3557 = vpack.c.b16 %v2077, %v2073
    %v3558 = vpack.c.b16 %v2082, %v2078
    %v3559 = vpack.c.b16 %v2083, %v2079
    %v3560 = vpack.c.b16 %v2084, %v2080
    %v3561 = vpack.c.b16 %v2085, %v2081
    %v3562 = vpack.c.b16 %v2090, %v2086
    %v3563 = vpack.c.b16 %v2091, %v2087
    %v3564 = vpack.c.b16 %v2092, %v2088
    %v3565 = vpack.c.b16 %v2093, %v2089
    %v3566 = vpack.c.b16 %v2098, %v2094
    %v3567 = vpack.c.b16 %v2099, %v2095
    %v3568 = vpack.c.b16 %v2100, %v2096
    %v3569 = vpack.c.b16 %v2101, %v2097
    %v3570 = vpack.c.b16 %v2106, %v2102
    %v3571 = vpack.c.b16 %v2107, %v2103
    %v3572 = vpack.c.b16 %v2108, %v2104
    %v3573 = vpack.c.b16 %v2109, %v2105
    %v3574 = vpack.c.b16 %v2114, %v2110
    %v3575 = vpack.c.b16 %v2115, %v2111
    %v3576 = vpack.c.b16 %v2116, %v2112
    %v3577 = vpack.c.b16 %v2117, %v2113
    %v3578 = vpack.c.b16 %v2122, %v2118
    %v3579 = vpack.c.b16 %v2123, %v2119
    %v3580 = vpack.c.b16 %v2124, %v2120
    %v3581 = vpack.c.b16 %v2125, %v2121
    %v3582 = vpack.c.b16 %v2130, %v2126
    %v3583 = vpack.c.b16 %v2131, %v2127
    %v3584 = vpack.c.b16 %v2132, %v2128
    %v3585 = vpack.c.b16 %v2133, %v2129
    %v3586 = vpack.c.b16 %v2138, %v2134
    %v3587 = vpack.c.b16 %v2139, %v2135
    %v3588 = vpack.c.b16 %v2140, %v2136
    %v3589 = vpack.c.b16 %v2141, %v2137
    %v3590 = vpack.c.b16 %v2146, %v2142
    %v3591 = vpack.c.b16 %v2147, %v2143
    %v3592 = vpack.c.b16 %v2148, %v2144
    %v3593 = vpack.c.b16 %v2149, %v2145
    %v3594 = vpack.c.b16 %v2154, %v2150
    %v3595 = vpack.c.b16 %v2155, %v2151
    %v3596 = vpack.c.b16 %v2156, %v2152
    %v3597 = vpack.c.b16 %v2157, %v2153
    %v3598 = vpack.c.b16 %v2162, %v2158
    %v3599 = vpack.c.b16 %v2163, %v2159
    %v3600 = vpack.c.b16 %v2164, %v2160
    %v3601 = vpack.c.b16 %v2165, %v2161
    %v3602 = vpack.c.b16 %v2170, %v2166
    %v3603 = vpack.c.b16 %v2171, %v2167
    %v3604 = vpack.c.b16 %v2172, %v2168
    %v3605 = vpack.c.b16 %v2173, %v2169
    %v3606 = vpack.c.b16 %v2178, %v2174
    %v3607 = vpack.c.b16 %v2179, %v2175
    %v3608 = vpack.c.b16 %v2180, %v2176
    %v3609 = vpack.c.b16 %v2181, %v2177
    %v3610 = vpack.c.b16 %v2186, %v2182
    %v3611 = vpack.c.b16 %v2187, %v2183
    %v3612 = vpack.c.b16 %v2188, %v2184
    %v3613 = vpack.c.b16 %v2189, %v2185
    %v3614 = vpack.c.b16 %v2194, %v2190
    %v3615 = vpack.c.b16 %v2195, %v2191
    %v3616 = vpack.c.b16 %v2196, %v2192
    %v3617 = vpack.c.b16 %v2197, %v2193
    %v3618 = vpack.c.b16 %v2202, %v2198
    %v3619 = vpack.c.b16 %v2203, %v2199
    %v3620 = vpack.c.b16 %v2204, %v2200
    %v3621 = vpack.c.b16 %v2205, %v2201
    %v3622 = vpack.c.b16 %v2210, %v2206
    %v3623 = vpack.c.b16 %v2211, %v2207
    %v3624 = vpack.c.b16 %v2212, %v2208
    %v3625 = vpack.c.b16 %v2213, %v2209
    %v3626 = vpack.c.b16 %v2218, %v2214
    %v3627 = vpack.c.b16 %v2219, %v2215
    %v3628 = vpack.c.b16 %v2220, %v2216
    %v3629 = vpack.c.b16 %v2221, %v2217
    %v3630 = vpack.c.b16 %v2226, %v2222
    %v3631 = vpack.c.b16 %v2227, %v2223
    %v3632 = vpack.c.b16 %v2228, %v2224
    %v3633 = vpack.c.b16 %v2229, %v2225
    %v3634 = vpack.c.b16 %v2234, %v2230
    %v3635 = vpack.c.b16 %v2235, %v2231
    %v3636 = vpack.c.b16 %v2236, %v2232
    %v3637 = vpack.c.b16 %v2237, %v2233
    %v3638 = vpack.c.b16 %v2242, %v2238
    %v3639 = vpack.c.b16 %v2243, %v2239
    %v3640 = vpack.c.b16 %v2244, %v2240
    %v3641 = vpack.c.b16 %v2245, %v2241
    %v3642 = vpack.c.b16 %v2250, %v2246
    %v3643 = vpack.c.b16 %v2251, %v2247
    %v3644 = vpack.c.b16 %v2252, %v2248
    %v3645 = vpack.c.b16 %v2253, %v2249
    %v3646 = vpack.c.b16 %v2258, %v2254
    %v3647 = vpack.c.b16 %v2259, %v2255
    %v3648 = vpack.c.b16 %v2260, %v2256
    %v3649 = vpack.c.b16 %v2261, %v2257
    %v3650 = vpack.c.b16 %v2266, %v2262
    %v3651 = vpack.c.b16 %v2267, %v2263
    %v3652 = vpack.c.b16 %v2268, %v2264
    %v3653 = vpack.c.b16 %v2269, %v2265
    %v3654 = vpack.c.b16 %v2274, %v2270
    %v3655 = vpack.c.b16 %v2275, %v2271
    %v3656 = vpack.c.b16 %v2276, %v2272
    %v3657 = vpack.c.b16 %v2277, %v2273
    %v3658 = vpack.c.b16 %v2282, %v2278
    %v3659 = vpack.c.b16 %v2283, %v2279
    %v3660 = vpack.c.b16 %v2284, %v2280
    %v3661 = vpack.c.b16 %v2285, %v2281
    %v3662 = vpack.c.b16 %v2290, %v2286
    %v3663 = vpack.c.b16 %v2291, %v2287
    %v3664 = vpack.c.b16 %v2292, %v2288
    %v3665 = vpack.c.b16 %v2293, %v2289
    %v3666 = vpack.c.b16 %v2298, %v2294
    %v3667 = vpack.c.b16 %v2299, %v2295
    %v3668 = vpack.c.b16 %v2300, %v2296
    %v3669 = vpack.c.b16 %v2301, %v2297
    %v3670 = vpack.c.b16 %v2306, %v2302
    %v3671 = vpack.c.b16 %v2307, %v2303
    %v3672 = vpack.c.b16 %v2308, %v2304
    %v3673 = vpack.c.b16 %v2309, %v2305
    %v3674 = vpack.c.b16 %v2314, %v2310
    %v3675 = vpack.c.b16 %v2315, %v2311
    %v3676 = vpack.c.b16 %v2316, %v2312
    %v3677 = vpack.c.b16 %v2317, %v2313
    %v3678 = vpack.c.b16 %v2322, %v2318
    %v3679 = vpack.c.b16 %v2323, %v2319
    %v3680 = vpack.c.b16 %v2324, %v2320
    %v3681 = vpack.c.b16 %v2325, %v2321
    %v3682 = vpack.c.b16 %v2330, %v2326
    %v3683 = vpack.c.b16 %v2331, %v2327
    %v3684 = vpack.c.b16 %v2332, %v2328
    %v3685 = vpack.c.b16 %v2333, %v2329
    %v3686 = vpack.c.b16 %v2338, %v2334
    %v3687 = vpack.c.b16 %v2339, %v2335
    %v3688 = vpack.c.b16 %v2340, %v2336
    %v3689 = vpack.c.b16 %v2341, %v2337
    %v3690 = vpack.c.b16 %v2346, %v2342
    %v3691 = vpack.c.b16 %v2347, %v2343
    %v3692 = vpack.c.b16 %v2348, %v2344
    %v3693 = vpack.c.b16 %v2349, %v2345
    %v3694 = vpack.c.b16 %v2354, %v2350
    %v3695 = vpack.c.b16 %v2355, %v2351
    %v3696 = vpack.c.b16 %v2356, %v2352
    %v3697 = vpack.c.b16 %v2357, %v2353
    %v3698 = vpack.c.b16 %v2362, %v2358
    %v3699 = vpack.c.b16 %v2363, %v2359
    %v3700 = vpack.c.b16 %v2364, %v2360
    %v3701 = vpack.c.b16 %v2365, %v2361
    %v3702 = vpack.c.b16 %v2370, %v2366
    %v3703 = vpack.c.b16 %v2371, %v2367
    %v3704 = vpack.c.b16 %v2372, %v2368
    %v3705 = vpack.c.b16 %v2373, %v2369
    %v3706 = vpack.c.b16 %v2378, %v2374
    %v3707 = vpack.c.b16 %v2379, %v2375
    %v3708 = vpack.c.b16 %v2380, %v2376
    %v3709 = vpack.c.b16 %v2381, %v2377
    %v3710 = vpack.c.b16 %v2386, %v2382
    %v3711 = vpack.c.b16 %v2387, %v2383
    %v3712 = vpack.c.b16 %v2388, %v2384
    %v3713 = vpack.c.b16 %v2389, %v2385
    %v3714 = vpack.c.b16 %v2394, %v2390
    %v3715 = vpack.c.b16 %v2395, %v2391
    %v3716 = vpack.c.b16 %v2396, %v2392
    %v3717 = vpack.c.b16 %v2397, %v2393
    %v3718 = vpack.c.b16 %v2402, %v2398
    %v3719 = vpack.c.b16 %v2403, %v2399
    %v3720 = vpack.c.b16 %v2404, %v2400
    %v3721 = vpack.c.b16 %v2405, %v2401
    %v3722 = vpack.c.b16 %v2410, %v2406
    %v3723 = vpack.c.b16 %v2411, %v2407
    %v3724 = vpack.c.b16 %v2412, %v2408
    %v3725 = vpack.c.b16 %v2413, %v2409
    %v3726 = vpack.c.b16 %v2418, %v2414
    %v3727 = vpack.c.b16 %v2419, %v2415
    %v3728 = vpack.c.b16 %v2420, %v2416
    %v3729 = vpack.c.b16 %v2421, %v2417
    %v3730 = vpack.c.b16 %v2426, %v2422
    %v3731 = vpack.c.b16 %v2427, %v2423
    %v3732 = vpack.c.b16 %v2428, %v2424
    %v3733 = vpack.c.b16 %v2429, %v2425
    %v3734 = vpack.c.b16 %v2434, %v2430
    %v3735 = vpack.c.b16 %v2435, %v2431
    %v3736 = vpack.c.b16 %v2436, %v2432
    %v3737 = vpack.c.b16 %v2437, %v2433
    %v3738 = vpack.c.b16 %v2442, %v2438
    %v3739 = vpack.c.b16 %v2443, %v2439
    %v3740 = vpack.c.b16 %v2444, %v2440
    %v3741 = vpack.c.b16 %v2445, %v2441
    %v3742 = vpack.c.b16 %v2450, %v2446
    %v3743 = vpack.c.b16 %v2451, %v2447
    %v3744 = vpack.c.b16 %v2452, %v2448
    %v3745 = vpack.c.b16 %v2453, %v2449
    %v3746 = vpack.c.b16 %v2458, %v2454
    %v3747 = vpack.c.b16 %v2459, %v2455
    %v3748 = vpack.c.b16 %v2460, %v2456
    %v3749 = vpack.c.b16 %v2461, %v2457
    %v3750 = vpack.c.b16 %v2466, %v2462
    %v3751 = vpack.c.b16 %v2467, %v2463
    %v3752 = vpack.c.b16 %v2468, %v2464
    %v3753 = vpack.c.b16 %v2469, %v2465
    %v3754 = vpack.c.b16 %v2474, %v2470
    %v3755 = vpack.c.b16 %v2475, %v2471
    %v3756 = vpack.c.b16 %v2476, %v2472
    %v3757 = vpack.c.b16 %v2477, %v2473
    %v3758 = vpack.c.b16 %v2482, %v2478
    %v3759 = vpack.c.b16 %v2483, %v2479
    %v3760 = vpack.c.b16 %v2484, %v2480
    %v3761 = vpack.c.b16 %v2485, %v2481
    %v3762 = vpack.c.b16 %v2490, %v2486
    %v3763 = vpack.c.b16 %v2491, %v2487
    %v3764 = vpack.c.b16 %v2492, %v2488
    %v3765 = vpack.c.b16 %v2493, %v2489
    %v3766 = vpack.c.b16 %v2498, %v2494
    %v3767 = vpack.c.b16 %v2499, %v2495
    %v3768 = vpack.c.b16 %v2500, %v2496
    %v3769 = vpack.c.b16 %v2501, %v2497
    %v3770 = vpack.c.b16 %v2506, %v2502
    %v3771 = vpack.c.b16 %v2507, %v2503
    %v3772 = vpack.c.b16 %v2508, %v2504
    %v3773 = vpack.c.b16 %v2509, %v2505
    %v3774 = vpack.c.b16 %v2514, %v2510
    %v3775 = vpack.c.b16 %v2515, %v2511
    %v3776 = vpack.c.b16 %v2516, %v2512
    %v3777 = vpack.c.b16 %v2517, %v2513
    %v3778 = vpack.c.b16 %v2522, %v2518
    %v3779 = vpack.c.b16 %v2523, %v2519
    %v3780 = vpack.c.b16 %v2524, %v2520
    %v3781 = vpack.c.b16 %v2525, %v2521
    %v3782 = vpack.c.b16 %v2530, %v2526
    %v3783 = vpack.c.b16 %v2531, %v2527
    %v3784 = vpack.c.b16 %v2532, %v2528
    %v3785 = vpack.c.b16 %v2533, %v2529
    %v3786 = vpack.c.b16 %v2538, %v2534
    %v3787 = vpack.c.b16 %v2539, %v2535
    %v3788 = vpack.c.b16 %v2540, %v2536
    %v3789 = vpack.c.b16 %v2541, %v2537
    %v3790 = vpack.c.b16 %v2546, %v2542
    %v3791 = vpack.c.b16 %v2547, %v2543
    %v3792 = vpack.c.b16 %v2548, %v2544
    %v3793 = vpack.c.b16 %v2549, %v2545
    %v3794 = vpack.c.b16 %v2554, %v2550
    %v3795 = vpack.c.b16 %v2555, %v2551
    %v3796 = vpack.c.b16 %v2556, %v2552
    %v3797 = vpack.c.b16 %v2557, %v2553
    %v3798 = vpack.c.b16 %v2562, %v2558
    %v3799 = vpack.c.b16 %v2563, %v2559
    %v3800 = vpack.c.b16 %v2564, %v2560
    %v3801 = vpack.c.b16 %v2565, %v2561
    %v3802 = vpack.c.b16 %v2570, %v2566
    %v3803 = vpack.c.b16 %v2571, %v2567
    %v3804 = vpack.c.b16 %v2572, %v2568
    %v3805 = vpack.c.b16 %v2573, %v2569
    %v3806 = vpack.c.b16 %v2578, %v2574
    %v3807 = vpack.c.b16 %v2579, %v2575
    %v3808 = vpack.c.b16 %v2580, %v2576
    %v3809 = vpack.c.b16 %v2581, %v2577
    %v3810 = vpack.c.b16 %v2586, %v2582
    %v3811 = vpack.c.b16 %v2587, %v2583
    %v3812 = vpack.c.b16 %v2588, %v2584
    %v3813 = vpack.c.b16 %v2589, %v2585
    %v3814 = vpack.c.b16 %v2594, %v2590
    %v3815 = vpack.c.b16 %v2595, %v2591
    %v3816 = vpack.c.b16 %v2596, %v2592
    %v3817 = vpack.c.b16 %v2597, %v2593
    %v3818 = vpack.c.b16 %v2602, %v2598
    %v3819 = vpack.c.b16 %v2603, %v2599
    %v3820 = vpack.c.b16 %v2604, %v2600
    %v3821 = vpack.c.b16 %v2605, %v2601
    %v3822 = vpack.c.b16 %v2610, %v2606
    %v3823 = vpack.c.b16 %v2611, %v2607
    %v3824 = vpack.c.b16 %v2612, %v2608
    %v3825 = vpack.c.b16 %v2613, %v2609
    %v3826 = vpack.c.b16 %v2618, %v2614
    %v3827 = vpack.c.b16 %v2619, %v2615
    %v3828 = vpack.c.b16 %v2620, %v2616
    %v3829 = vpack.c.b16 %v2621, %v2617
    %v3830 = vpack.c.b16 %v2626, %v2622
    %v3831 = vpack.c.b16 %v2627, %v2623
    %v3832 = vpack.c.b16 %v2628, %v2624
    %v3833 = vpack.c.b16 %v2629, %v2625
    %v3834 = vpack.c.b16 %v2634, %v2630
    %v3835 = vpack.c.b16 %v2635, %v2631
    %v3836 = vpack.c.b16 %v2636, %v2632
    %v3837 = vpack.c.b16 %v2637, %v2633
    %v3838 = vpack.c.b16 %v2642, %v2638
    %v3839 = vpack.c.b16 %v2643, %v2639
    %v3840 = vpack.c.b16 %v2644, %v2640
    %v3841 = vpack.c.b16 %v2645, %v2641
    %v3842 = vpack.c.b16 %v2650, %v2646
    %v3843 = vpack.c.b16 %v2651, %v2647
    %v3844 = vpack.c.b16 %v2652, %v2648
    %v3845 = vpack.c.b16 %v2653, %v2649
    %v3846 = vpack.c.b16 %v2658, %v2654
    %v3847 = vpack.c.b16 %v2659, %v2655
    %v3848 = vpack.c.b16 %v2660, %v2656
    %v3849 = vpack.c.b16 %v2661, %v2657
    %v3850 = vpack.c.b16 %v2666, %v2662
    %v3851 = vpack.c.b16 %v2667, %v2663
    %v3852 = vpack.c.b16 %v2668, %v2664
    %v3853 = vpack.c.b16 %v2669, %v2665
    %v3854 = vpack.c.b16 %v2674, %v2670
    %v3855 = vpack.c.b16 %v2675, %v2671
    %v3856 = vpack.c.b16 %v2676, %v2672
    %v3857 = vpack.c.b16 %v2677, %v2673
    %v3858 = vpack.c.b16 %v2682, %v2678
    %v3859 = vpack.c.b16 %v2683, %v2679
    %v3860 = vpack.c.b16 %v2684, %v2680
    %v3861 = vpack.c.b16 %v2685, %v2681
    %v3862 = vpack.c.b16 %v2690, %v2686
    %v3863 = vpack.c.b16 %v2691, %v2687
    %v3864 = vpack.c.b16 %v2692, %v2688
    %v3865 = vpack.c.b16 %v2693, %v2689
    %v3866 = vpack.c.b16 %v2698, %v2694
    %v3867 = vpack.c.b16 %v2699, %v2695
    %v3868 = vpack.c.b16 %v2700, %v2696
    %v3869 = vpack.c.b16 %v2701, %v2697
    %v3870 = vpack.c.b16 %v2706, %v2702
    %v3871 = vpack.c.b16 %v2707, %v2703
    %v3872 = vpack.c.b16 %v2708, %v2704
    %v3873 = vpack.c.b16 %v2709, %v2705
    %v3874 = vpack.c.b16 %v2714, %v2710
    %v3875 = vpack.c.b16 %v2715, %v2711
    %v3876 = vpack.c.b16 %v2716, %v2712
    %v3877 = vpack.c.b16 %v2717, %v2713
    %v3878 = vpack.c.b16 %v2722, %v2718
    %v3879 = vpack.c.b16 %v2723, %v2719
    %v3880 = vpack.c.b16 %v2724, %v2720
    %v3881 = vpack.c.b16 %v2725, %v2721
    %v3882 = vpack.c.b16 %v2730, %v2726
    %v3883 = vpack.c.b16 %v2731, %v2727
    %v3884 = vpack.c.b16 %v2732, %v2728
    %v3885 = vpack.c.b16 %v2733, %v2729
    %v3886 = vpack.c.b16 %v2738, %v2734
    %v3887 = vpack.c.b16 %v2739, %v2735
    %v3888 = vpack.c.b16 %v2740, %v2736
    %v3889 = vpack.c.b16 %v2741, %v2737
    %v3890 = vpack.c.b16 %v2746, %v2742
    %v3891 = vpack.c.b16 %v2747, %v2743
    %v3892 = vpack.c.b16 %v2748, %v2744
    %v3893 = vpack.c.b16 %v2749, %v2745
    %v3894 = vpack.c.b16 %v2754, %v2750
    %v3895 = vpack.c.b16 %v2755, %v2751
    %v3896 = vpack.c.b16 %v2756, %v2752
    %v3897 = vpack.c.b16 %v2757, %v2753
    %v3898 = vpack.c.b16 %v2762, %v2758
    %v3899 = vpack.c.b16 %v2763, %v2759
    %v3900 = vpack.c.b16 %v2764, %v2760
    %v3901 = vpack.c.b16 %v2765, %v2761
    %v3902 = vpack.c.b16 %v2770, %v2766
    %v3903 = vpack.c.b16 %v2771, %v2767
    %v3904 = vpack.c.b16 %v2772, %v2768
    %v3905 = vpack.c.b16 %v2773, %v2769
    %v3906 = vpack.c.b16 %v2778, %v2774
    %v3907 = vpack.c.b16 %v2779, %v2775
    %v3908 = vpack.c.b16 %v2780, %v2776
    %v3909 = vpack.c.b16 %v2781, %v2777
    %v3910 = vpack.c.b16 %v2786, %v2782
    %v3911 = vpack.c.b16 %v2787, %v2783
    %v3912 = vpack.c.b16 %v2788, %v2784
    %v3913 = vpack.c.b16 %v2789, %v2785
    %v3914 = vpack.c.b16 %v2794, %v2790
    %v3915 = vpack.c.b16 %v2795, %v2791
    %v3916 = vpack.c.b16 %v2796, %v2792
    %v3917 = vpack.c.b16 %v2797, %v2793
    %v3918 = vpack.c.b16 %v2802, %v2798
    %v3919 = vpack.c.b16 %v2803, %v2799
    %v3920 = vpack.c.b16 %v2804, %v2800
    %v3921 = vpack.c.b16 %v2805, %v2801
    %v3922 = vpack.c.b16 %v2810, %v2806
    %v3923 = vpack.c.b16 %v2811, %v2807
    %v3924 = vpack.c.b16 %v2812, %v2808
    %v3925 = vpack.c.b16 %v2813, %v2809
    %v3926 = vpack.c.b16 %v2818, %v2814
    %v3927 = vpack.c.b16 %v2819, %v2815
    %v3928 = vpack.c.b16 %v2820, %v2816
    %v3929 = vpack.c.b16 %v2821, %v2817
    %v3930 = vpack.c.b16 %v2826, %v2822
    %v3931 = vpack.c.b16 %v2827, %v2823
    %v3932 = vpack.c.b16 %v2828, %v2824
    %v3933 = vpack.c.b16 %v2829, %v2825
    %v3934 = vpack.c.b16 %v2834, %v2830
    %v3935 = vpack.c.b16 %v2835, %v2831
    %v3936 = vpack.c.b16 %v2836, %v2832
    %v3937 = vpack.c.b16 %v2837, %v2833
    %v3938 = vpack.c.b16 %v2842, %v2838
    %v3939 = vpack.c.b16 %v2843, %v2839
    %v3940 = vpack.c.b16 %v2844, %v2840
    %v3941 = vpack.c.b16 %v2845, %v2841
    %v3942 = vpack.c.b16 %v2850, %v2846
    %v3943 = vpack.c.b16 %v2851, %v2847
    %v3944 = vpack.c.b16 %v2852, %v2848
    %v3945 = vpack.c.b16 %v2853, %v2849
    %v3946 = vpack.c.b16 %v2858, %v2854
    %v3947 = vpack.c.b16 %v2859, %v2855
    %v3948 = vpack.c.b16 %v2860, %v2856
    %v3949 = vpack.c.b16 %v2861, %v2857
    %v3950 = vpack.c.b16 %v2866, %v2862
    %v3951 = vpack.c.b16 %v2867, %v2863
    %v3952 = vpack.c.b16 %v2868, %v2864
    %v3953 = vpack.c.b16 %v2869, %v2865
    %v3954 = vpack.c.b16 %v2874, %v2870
    %v3955 = vpack.c.b16 %v2875, %v2871
    %v3956 = vpack.c.b16 %v2876, %v2872
    %v3957 = vpack.c.b16 %v2877, %v2873
    %v3958 = vpack.c.b16 %v2882, %v2878
    %v3959 = vpack.c.b16 %v2883, %v2879
    %v3960 = vpack.c.b16 %v2884, %v2880
    %v3961 = vpack.c.b16 %v2885, %v2881
    %v3962 = vpack.c.b16 %v2890, %v2886
    %v3963 = vpack.c.b16 %v2891, %v2887
    %v3964 = vpack.c.b16 %v2892, %v2888
    %v3965 = vpack.c.b16 %v2893, %v2889
    %v3966 = vpack.c.b16 %v2898, %v2894
    %v3967 = vpack.c.b16 %v2899, %v2895
    %v3968 = vpack.c.b16 %v2900, %v2896
    %v3969 = vpack.c.b16 %v2901, %v2897
    %v3970 = vpack.c.b16 %v2906, %v2902
    %v3971 = vpack.c.b16 %v2907, %v2903
    %v3972 = vpack.c.b16 %v2908, %v2904
    %v3973 = vpack.c.b16 %v2909, %v2905
    %v3974 = vpack.c.b16 %v2914, %v2910
    %v3975 = vpack.c.b16 %v2915, %v2911
    %v3976 = vpack.c.b16 %v2916, %v2912
    %v3977 = vpack.c.b16 %v2917, %v2913
    %v3978 = vpack.c.b16 %v2922, %v2918
    %v3979 = vpack.c.b16 %v2923, %v2919
    %v3980 = vpack.c.b16 %v2924, %v2920
    %v3981 = vpack.c.b16 %v2925, %v2921
    %v3982 = vpack.c.b16 %v2930, %v2926
    %v3983 = vpack.c.b16 %v2931, %v2927
    %v3984 = vpack.c.b16 %v2932, %v2928
    %v3985 = vpack.c.b16 %v2933, %v2929
    %v3986 = vpack.c.b16 %v2938, %v2934
    %v3987 = vpack.c.b16 %v2939, %v2935
    %v3988 = vpack.c.b16 %v2940, %v2936
    %v3989 = vpack.c.b16 %v2941, %v2937
    %v3990 = vpack.c.b16 %v2946, %v2942
    %v3991 = vpack.c.b16 %v2947, %v2943
    %v3992 = vpack.c.b16 %v2948, %v2944
    %v3993 = vpack.c.b16 %v2949, %v2945
    %v3994 = vpack.c.b16 %v2954, %v2950
    %v3995 = vpack.c.b16 %v2955, %v2951
    %v3996 = vpack.c.b16 %v2956, %v2952
    %v3997 = vpack.c.b16 %v2957, %v2953
    %v3998 = vpack.c.b16 %v2962, %v2958
    %v3999 = vpack.c.b16 %v2963, %v2959
    %v4000 = vpack.c.b16 %v2964, %v2960
    %v4001 = vpack.c.b16 %v2965, %v2961
    %v4002 = vpack.c.b16 %v2970, %v2966
    %v4003 = vpack.c.b16 %v2971, %v2967
    %v4004 = vpack.c.b16 %v2972, %v2968
    %v4005 = vpack.c.b16 %v2973, %v2969
    %v4006 = vpack.c.b16 %v2978, %v2974
    %v4007 = vpack.c.b16 %v2979, %v2975
    %v4008 = vpack.c.b16 %v2980, %v2976
    %v4009 = vpack.c.b16 %v2981, %v2977
    %v4010 = vpack.c.b16 %v2986, %v2982
    %v4011 = vpack.c.b16 %v2987, %v2983
    %v4012 = vpack.c.b16 %v2988, %v2984
    %v4013 = vpack.c.b16 %v2989, %v2985
    %v4014 = vpack.c.b16 %v2994, %v2990
    %v4015 = vpack.c.b16 %v2995, %v2991
    %v4016 = vpack.c.b16 %v2996, %v2992
    %v4017 = vpack.c.b16 %v2997, %v2993
    %v4018 = vpack.c.b16 %v3002, %v2998
    %v4019 = vpack.c.b16 %v3003, %v2999
    %v4020 = vpack.c.b16 %v3004, %v3000
    %v4021 = vpack.c.b16 %v3005, %v3001
    %v4022 = vpack.c.b16 %v3010, %v3006
    %v4023 = vpack.c.b16 %v3011, %v3007
    %v4024 = vpack.c.b16 %v3012, %v3008
    %v4025 = vpack.c.b16 %v3013, %v3009
    %v4026 = vpack.c.b16 %v3018, %v3014
    %v4027 = vpack.c.b16 %v3019, %v3015
    %v4028 = vpack.c.b16 %v3020, %v3016
    %v4029 = vpack.c.b16 %v3021, %v3017
    %v4030 = vpack.c.b16 %v3026, %v3022
    %v4031 = vpack.c.b16 %v3027, %v3023
    %v4032 = vpack.c.b16 %v3028, %v3024
    %v4033 = vpack.c.b16 %v3029, %v3025
    %v4034 = vpack.c.b16 %v3034, %v3030
    %v4035 = vpack.c.b16 %v3035, %v3031
    %v4036 = vpack.c.b16 %v3036, %v3032
    %v4037 = vpack.c.b16 %v3037, %v3033
    %v4038 = vpack.c.b16 %v3042, %v3038
    %v4039 = vpack.c.b16 %v3043, %v3039
    %v4040 = vpack.c.b16 %v3044, %v3040
    %v4041 = vpack.c.b16 %v3045, %v3041
    %v4042 = vpack.c.b16 %v3050, %v3046
    %v4043 = vpack.c.b16 %v3051, %v3047
    %v4044 = vpack.c.b16 %v3052, %v3048
    %v4045 = vpack.c.b16 %v3053, %v3049
    %v4046 = vpack.c.b16 %v3058, %v3054
    %v4047 = vpack.c.b16 %v3059, %v3055
    %v4048 = vpack.c.b16 %v3060, %v3056
    %v4049 = vpack.c.b16 %v3061, %v3057
    %v4050 = vpack.c.b16 %v3066, %v3062
    %v4051 = vpack.c.b16 %v3067, %v3063
    %v4052 = vpack.c.b16 %v3068, %v3064
    %v4053 = vpack.c.b16 %v3069, %v3065
    %v4054 = vpack.c.b16 %v3074, %v3070
    %v4055 = vpack.c.b16 %v3075, %v3071
    %v4056 = vpack.c.b16 %v3076, %v3072
    %v4057 = vpack.c.b16 %v3077, %v3073
    %v4058 = vpack.c.b16 %v3082, %v3078
    %v4059 = vpack.c.b16 %v3083, %v3079
    %v4060 = vpack.c.b16 %v3084, %v3080
    %v4061 = vpack.c.b16 %v3085, %v3081
    %v4062 = vpack.c.b16 %v3090, %v3086
    %v4063 = vpack.c.b16 %v3091, %v3087
    %v4064 = vpack.c.b16 %v3092, %v3088
    %v4065 = vpack.c.b16 %v3093, %v3089
    %v4066 = vpack.c.b16 %v3098, %v3094
    %v4067 = vpack.c.b16 %v3099, %v3095
    %v4068 = vpack.c.b16 %v3100, %v3096
    %v4069 = vpack.c.b16 %v3101, %v3097
    %v4070 = vpack.c.b16 %v3106, %v3102
    %v4071 = vpack.c.b16 %v3107, %v3103
    %v4072 = vpack.c.b16 %v3108, %v3104
    %v4073 = vpack.c.b16 %v3109, %v3105
    %v4074 = vpack.c.b16 %v3114, %v3110
    %v4075 = vpack.c.b16 %v3115, %v3111
    %v4076 = vpack.c.b16 %v3116, %v3112
    %v4077 = vpack.c.b16 %v3117, %v3113
    %v4078 = vpack.c.b16 %v3122, %v3118
    %v4079 = vpack.c.b16 %v3123, %v3119
    %v4080 = vpack.c.b16 %v3124, %v3120
    %v4081 = vpack.c.b16 %v3125, %v3121
    %v4082 = vpack.c.b16 %v3130, %v3126
    %v4083 = vpack.c.b16 %v3131, %v3127
    %v4084 = vpack.c.b16 %v3132, %v3128
    %v4085 = vpack.c.b16 %v3133, %v3129
    %v4086 = vpack.c.b16 %v3138, %v3134
    %v4087 = vpack.c.b16 %v3139, %v3135
    %v4088 = vpack.c.b16 %v3140, %v3136
    %v4089 = vpack.c.b16 %v3141, %v3137
    %v4090 = vpack.c.b16 %v3146, %v3142
    %v4091 = vpack.c.b16 %v3147, %v3143
    %v4092 = vpack.c.b16 %v3148, %v3144
    %v4093 = vpack.c.b16 %v3149, %v3145
    %v4094 = vpack.c.b16 %v3154, %v3150
    %v4095 = vpack.c.b16 %v3155, %v3151
    %v4096 = vpack.c.b16 %v3156, %v3152
    %v4097 = vpack.c.b16 %v3157, %v3153
    %v4098 = vpack.c.b16 %v3162, %v3158
    %v4099 = vpack.c.b16 %v3163, %v3159
    %v4100 = vpack.c.b16 %v3164, %v3160
    %v4101 = vpack.c.b16 %v3165, %v3161
    %v4102 = vpack.c.b16 %v3170, %v3166
    %v4103 = vpack.c.b16 %v3171, %v3167
    %v4104 = vpack.c.b16 %v3172, %v3168
    %v4105 = vpack.c.b16 %v3173, %v3169
    %v4106 = vpack.c.b16 %v3178, %v3174
    %v4107 = vpack.c.b16 %v3179, %v3175
    %v4108 = vpack.c.b16 %v3180, %v3176
    %v4109 = vpack.c.b16 %v3181, %v3177
    %v4110 = vpack.c.b16 %v3186, %v3182
    %v4111 = vpack.c.b16 %v3187, %v3183
    %v4112 = vpack.c.b16 %v3188, %v3184
    %v4113 = vpack.c.b16 %v3189, %v3185
    %v4114 = vpack.c.b16 %v3194, %v3190
    %v4115 = vpack.c.b16 %v3195, %v3191
    %v4116 = vpack.c.b16 %v3196, %v3192
    %v4117 = vpack.c.b16 %v3197, %v3193
    %v4118 = vpack.c.b16 %v3202, %v3198
    %v4119 = vpack.c.b16 %v3203, %v3199
    %v4120 = vpack.c.b16 %v3204, %v3200
    %v4121 = vpack.c.b16 %v3205, %v3201
    %v4122 = vpack.c.b16 %v3210, %v3206
    %v4123 = vpack.c.b16 %v3211, %v3207
    %v4124 = vpack.c.b16 %v3212, %v3208
    %v4125 = vpack.c.b16 %v3213, %v3209
    %v4126 = vpack.c.b16 %v3218, %v3214
    %v4127 = vpack.c.b16 %v3219, %v3215
    %v4128 = vpack.c.b16 %v3220, %v3216
    %v4129 = vpack.c.b16 %v3221, %v3217
    %v4130 = vpack.c.b16 %v3226, %v3222
    %v4131 = vpack.c.b16 %v3227, %v3223
    %v4132 = vpack.c.b16 %v3228, %v3224
    %v4133 = vpack.c.b16 %v3229, %v3225
    %v4134 = vpack.c.b16 %v3234, %v3230
    %v4135 = vpack.c.b16 %v3235, %v3231
    %v4136 = vpack.c.b16 %v3236, %v3232
    %v4137 = vpack.c.b16 %v3237, %v3233
    %v4138 = vpack.c.b16 %v3242, %v3238
    %v4139 = vpack.c.b16 %v3243, %v3239
    %v4140 = vpack.c.b16 %v3244, %v3240
    %v4141 = vpack.c.b16 %v3245, %v3241
    %v4142 = vpack.c.b16 %v3250, %v3246
    %v4143 = vpack.c.b16 %v3251, %v3247
    %v4144 = vpack.c.b16 %v3252, %v3248
    %v4145 = vpack.c.b16 %v3253, %v3249
    %v4146 = vpack.c.b16 %v3258, %v3254
    %v4147 = vpack.c.b16 %v3259, %v3255
    %v4148 = vpack.c.b16 %v3260, %v3256
    %v4149 = vpack.c.b16 %v3261, %v3257
    %v4150 = vpack.c.b16 %v3266, %v3262
    %v4151 = vpack.c.b16 %v3267, %v3263
    %v4152 = vpack.c.b16 %v3268, %v3264
    %v4153 = vpack.c.b16 %v3269, %v3265
    %v4154 = vpack.c.b16 %v3274, %v3270
    %v4155 = vpack.c.b16 %v3275, %v3271
    %v4156 = vpack.c.b16 %v3276, %v3272
    %v4157 = vpack.c.b16 %v3277, %v3273
    %v4158 = vpack.c.b16 %v3282, %v3278
    %v4159 = vpack.c.b16 %v3283, %v3279
    %v4160 = vpack.c.b16 %v3284, %v3280
    %v4161 = vpack.c.b16 %v3285, %v3281
    %v4162 = vpack.c.b16 %v3290, %v3286
    %v4163 = vpack.c.b16 %v3291, %v3287
    %v4164 = vpack.c.b16 %v3292, %v3288
    %v4165 = vpack.c.b16 %v3293, %v3289
    %v4166 = vpack.c.b16 %v3298, %v3294
    %v4167 = vpack.c.b16 %v3299, %v3295
    %v4168 = vpack.c.b16 %v3300, %v3296
    %v4169 = vpack.c.b16 %v3301, %v3297
    %v4170 = vpack.c.b16 %v3306, %v3302
    %v4171 = vpack.c.b16 %v3307, %v3303
    %v4172 = vpack.c.b16 %v3308, %v3304
    %v4173 = vpack.c.b16 %v3309, %v3305
    %v4174 = vpack.c.b16 %v3314, %v3310
    %v4175 = vpack.c.b16 %v3315, %v3311
    %v4176 = vpack.c.b16 %v3316, %v3312
    %v4177 = vpack.c.b16 %v3317, %v3313
    %v4178 = vpack.c.b16 %v3322, %v3318
    %v4179 = vpack.c.b16 %v3323, %v3319
    %v4180 = vpack.c.b16 %v3324, %v3320
    %v4181 = vpack.c.b16 %v3325, %v3321
    %v4182 = vpack.c.b16 %v3330, %v3326
    %v4183 = vpack.c.b16 %v3331, %v3327
    %v4184 = vpack.c.b16 %v3332, %v3328
    %v4185 = vpack.c.b16 %v3333, %v3329
    %v4186 = vpack.c.b16 %v3338, %v3334
    %v4187 = vpack.c.b16 %v3339, %v3335
    %v4188 = vpack.c.b16 %v3340, %v3336
    %v4189 = vpack.c.b16 %v3341, %v3337
    %v4190 = vpack.c.b16 %v3346, %v3342
    %v4191 = vpack.c.b16 %v3347, %v3343
    %v4192 = vpack.c.b16 %v3348, %v3344
    %v4193 = vpack.c.b16 %v3349, %v3345
    %v4194 = vpack.c.b16 %v3354, %v3350
    %v4195 = vpack.c.b16 %v3355, %v3351
    %v4196 = vpack.c.b16 %v3356, %v3352
    %v4197 = vpack.c.b16 %v3357, %v3353
    %v4198 = vpack.c.b16 %v3362, %v3358
    %v4199 = vpack.c.b16 %v3363, %v3359
    %v4200 = vpack.c.b16 %v3364, %v3360
    %v4201 = vpack.c.b16 %v3365, %v3361
    %v4202 = vpack.c.b16 %v3370, %v3366
    %v4203 = vpack.c.b16 %v3371, %v3367
    %v4204 = vpack.c.b16 %v3372, %v3368
    %v4205 = vpack.c.b16 %v3373, %v3369
    %v4206 = vpack.c.b16 %v3378, %v3374
    %v4207 = vpack.c.b16 %v3379, %v3375
    %v4208 = vpack.c.b16 %v3380, %v3376
    %v4209 = vpack.c.b16 %v3381, %v3377
    %v4210 = vpack.c.b16 %v3386, %v3382
    %v4211 = vpack.c.b16 %v3387, %v3383
    %v4212 = vpack.c.b16 %v3388, %v3384
    %v4213 = vpack.c.b16 %v3389, %v3385
    %v4214 = vpack.c.b16 %v3394, %v3390
    %v4215 = vpack.c.b16 %v3395, %v3391
    %v4216 = vpack.c.b16 %v3396, %v3392
    %v4217 = vpack.c.b16 %v3397, %v3393
    %v4218 = vpack.c.b16 %v3402, %v3398
    %v4219 = vpack.c.b16 %v3403, %v3399
    %v4220 = vpack.c.b16 %v3404, %v3400
    %v4221 = vpack.c.b16 %v3405, %v3401
    %v4222 = vpack.c.b16 %v3410, %v3406
    %v4223 = vpack.c.b16 %v3411, %v3407
    %v4224 = vpack.c.b16 %v3412, %v3408
    %v4225 = vpack.c.b16 %v3413, %v3409
    %v4226 = vpack.c.b16 %v3418, %v3414
    %v4227 = vpack.c.b16 %v3419, %v3415
    %v4228 = vpack.c.b16 %v3420, %v3416
    %v4229 = vpack.c.b16 %v3421, %v3417
    %v4230 = vpack.c.b16 %v3426, %v3422
    %v4231 = vpack.c.b16 %v3427, %v3423
    %v4232 = vpack.c.b16 %v3428, %v3424
    %v4233 = vpack.c.b16 %v3429, %v3425
    %v4234 = vpack.c.b16 %v3434, %v3430
    %v4235 = vpack.c.b16 %v3435, %v3431
    %v4236 = vpack.c.b16 %v3436, %v3432
    %v4237 = vpack.c.b16 %v3437, %v3433
    %5038 = vmatprep.subr.bf16.mxu0 %v3439
    %5039 = vmatpush1.bf16.msra.mxu0 %v3438
    %5040 = vmatprep.subr.bf16.mxu0 %v3443
    %5041 = vmatpush1.bf16.msra.mxu0 %v3442
    %5042 = vmatprep.subr.bf16.mxu0 %v3447
    %5043 = vmatpush1.bf16.msra.mxu0 %v3446
    %5044 = vmatprep.subr.bf16.mxu0 %v3451
    %5045 = vmatpush1.bf16.msra.mxu0 %v3450
    %5046 = vmatprep.subr.bf16.mxu0 %v3455
    %5047 = vmatpush1.bf16.msra.mxu0 %v3454
    %5048 = vmatprep.subr.bf16.mxu0 %v3459
    %5049 = vmatpush1.bf16.msra.mxu0 %v3458
    %5050 = vmatprep.subr.bf16.mxu0 %v3463
    %5051 = vmatpush1.bf16.msra.mxu0 %v3462
    %5052 = vmatprep.subr.bf16.mxu0 %v3467
    %5053 = vmatpush1.bf16.msra.mxu0 %v3466
    %5054 = vmatprep.subr.bf16.mxu0 %v3471
    %5055 = vmatpush1.bf16.msra.mxu0 %v3470
    %5056 = vmatprep.subr.bf16.mxu0 %v3475
    %5057 = vmatpush1.bf16.msra.mxu0 %v3474
    %5058 = vmatprep.subr.bf16.mxu0 %v3479
    %5059 = vmatpush1.bf16.msra.mxu0 %v3478
    %5060 = vmatprep.subr.bf16.mxu0 %v3483
    %5061 = vmatpush1.bf16.msra.mxu0 %v3482
    %5062 = vmatprep.subr.bf16.mxu0 %v3487
    %5063 = vmatpush1.bf16.msra.mxu0 %v3486
    %5064 = vmatprep.subr.bf16.mxu0 %v3491
    %5065 = vmatpush1.bf16.msra.mxu0 %v3490
    %5066 = vmatprep.subr.bf16.mxu0 %v3495
    %5067 = vmatpush1.bf16.msra.mxu0 %v3494
    %5068 = vmatprep.subr.bf16.mxu0 %v3499
    %5069 = vmatpush1.bf16.msra.mxu0 %v3498
    %5070 = vmatprep.mubr.bf16.mxu0 %v889
    %5071 = vmatmul.mubr.bf16.gmra.mrb[0].mxu0 %v875
    %v5072 = vpop.f32.mrb[0].mxu0
    %v5073 = vadd.f32 %v831, %v5072
    %v5074 = vpop.f32.mrb[0].mxu0
    %v5075 = vadd.f32 %v835, %v5074
    %v5076 = vpop.f32.mrb[0].mxu0
    %v5077 = vpop.f32.mrb[0].mxu0
    %5078 = vdwg.mxu0
    %5079 = vmatprep.subr.bf16.mxu0 %v3503
    %5080 = vmatpush1.bf16.msra.mxu0 %v3502
    %5081 = vmatprep.subr.bf16.mxu0 %v3507
    %5082 = vmatpush1.bf16.msra.mxu0 %v3506
    %5083 = vmatprep.subr.bf16.mxu0 %v3511
    %5084 = vmatpush1.bf16.msra.mxu0 %v3510
    %5085 = vmatprep.subr.bf16.mxu0 %v3515
    %5086 = vmatpush1.bf16.msra.mxu0 %v3514
    %5087 = vmatprep.subr.bf16.mxu0 %v3519
    %5088 = vmatpush1.bf16.msra.mxu0 %v3518
    %5089 = vmatprep.subr.bf16.mxu0 %v3523
    %5090 = vmatpush1.bf16.msra.mxu0 %v3522
    %5091 = vmatprep.subr.bf16.mxu0 %v3527
    %5092 = vmatpush1.bf16.msra.mxu0 %v3526
    %5093 = vmatprep.subr.bf16.mxu0 %v3531
    %5094 = vmatpush1.bf16.msra.mxu0 %v3530
    %5095 = vmatprep.subr.bf16.mxu0 %v3535
    %5096 = vmatpush1.bf16.msra.mxu0 %v3534
    %5097 = vmatprep.subr.bf16.mxu0 %v3539
    %5098 = vmatpush1.bf16.msra.mxu0 %v3538
    %5099 = vmatprep.subr.bf16.mxu0 %v3543
    %5100 = vmatpush1.bf16.msra.mxu0 %v3542
    %5101 = vmatprep.subr.bf16.mxu0 %v3547
    %5102 = vmatpush1.bf16.msra.mxu0 %v3546
    %5103 = vmatprep.subr.bf16.mxu0 %v3551
    %5104 = vmatpush1.bf16.msra.mxu0 %v3550
    %5105 = vmatprep.subr.bf16.mxu0 %v3555
    %5106 = vmatpush1.bf16.msra.mxu0 %v3554
    %5107 = vmatprep.subr.bf16.mxu0 %v3559
    %5108 = vmatpush1.bf16.msra.mxu0 %v3558
    %5109 = vmatprep.subr.bf16.mxu0 %v3563
    %5110 = vmatpush1.bf16.msra.mxu0 %v3562
    %5111 = vmatprep.mubr.bf16.mxu0 %v899
    %5112 = vmatmul.mubr.bf16.gmra.mrb[0].mxu0 %v897
    %v5113 = vpop.f32.mrb[0].mxu0
    %v5114 = vadd.f32 %v5073, %v5113
    %v5115 = vpop.f32.mrb[0].mxu0
    %v5116 = vadd.f32 %v5075, %v5115
    %v5117 = vpop.f32.mrb[0].mxu0
    %v5118 = vpop.f32.mrb[0].mxu0
    %5119 = vdwg.mxu0
    %5120 = vmatprep.subr.bf16.mxu0 %v3567
    %5121 = vmatpush1.bf16.msra.mxu0 %v3566
    %5122 = vmatprep.subr.bf16.mxu0 %v3571
    %5123 = vmatpush1.bf16.msra.mxu0 %v3570
    %5124 = vmatprep.subr.bf16.mxu0 %v3575
    %5125 = vmatpush1.bf16.msra.mxu0 %v3574
    %5126 = vmatprep.subr.bf16.mxu0 %v3579
    %5127 = vmatpush1.bf16.msra.mxu0 %v3578
    %5128 = vmatprep.subr.bf16.mxu0 %v3583
    %5129 = vmatpush1.bf16.msra.mxu0 %v3582
    %5130 = vmatprep.subr.bf16.mxu0 %v3587
    %5131 = vmatpush1.bf16.msra.mxu0 %v3586
    %5132 = vmatprep.subr.bf16.mxu0 %v3591
    %5133 = vmatpush1.bf16.msra.mxu0 %v3590
    %5134 = vmatprep.subr.bf16.mxu0 %v3595
    %5135 = vmatpush1.bf16.msra.mxu0 %v3594
    %5136 = vmatprep.subr.bf16.mxu0 %v3599
    %5137 = vmatpush1.bf16.msra.mxu0 %v3598
    %5138 = vmatprep.subr.bf16.mxu0 %v3603
    %5139 = vmatpush1.bf16.msra.mxu0 %v3602
    %5140 = vmatprep.subr.bf16.mxu0 %v3607
    %5141 = vmatpush1.bf16.msra.mxu0 %v3606
    %5142 = vmatprep.subr.bf16.mxu0 %v3611
    %5143 = vmatpush1.bf16.msra.mxu0 %v3610
    %5144 = vmatprep.subr.bf16.mxu0 %v3615
    %5145 = vmatpush1.bf16.msra.mxu0 %v3614
    %5146 = vmatprep.subr.bf16.mxu0 %v3619
    %5147 = vmatpush1.bf16.msra.mxu0 %v3618
    %5148 = vmatprep.subr.bf16.mxu0 %v3623
    %5149 = vmatpush1.bf16.msra.mxu0 %v3622
    %5150 = vmatprep.subr.bf16.mxu0 %v3627
    %5151 = vmatpush1.bf16.msra.mxu0 %v3626
    %5152 = vmatprep.mubr.bf16.mxu0 %v896
    %5153 = vmatmul.mubr.bf16.gmra.mrb[0].mxu0 %v882
    %v5154 = vpop.f32.mrb[0].mxu0
    %v5155 = vadd.f32 %v5114, %v5154
    %v5156 = vpop.f32.mrb[0].mxu0
    %v5157 = vadd.f32 %v5116, %v5156
    %v5158 = vpop.f32.mrb[0].mxu0
    %v5159 = vpop.f32.mrb[0].mxu0
    %5160 = vdwg.mxu0
    %5161 = vmatprep.subr.bf16.mxu0 %v3631
    %5162 = vmatpush1.bf16.msra.mxu0 %v3630
    %5163 = vmatprep.subr.bf16.mxu0 %v3635
    %5164 = vmatpush1.bf16.msra.mxu0 %v3634
    %5165 = vmatprep.subr.bf16.mxu0 %v3639
    %5166 = vmatpush1.bf16.msra.mxu0 %v3638
    %5167 = vmatprep.subr.bf16.mxu0 %v3643
    %5168 = vmatpush1.bf16.msra.mxu0 %v3642
    %5169 = vmatprep.subr.bf16.mxu0 %v3647
    %5170 = vmatpush1.bf16.msra.mxu0 %v3646
    %5171 = vmatprep.subr.bf16.mxu0 %v3651
    %5172 = vmatpush1.bf16.msra.mxu0 %v3650
    %5173 = vmatprep.subr.bf16.mxu0 %v3655
    %5174 = vmatpush1.bf16.msra.mxu0 %v3654
    %5175 = vmatprep.subr.bf16.mxu0 %v3659
    %5176 = vmatpush1.bf16.msra.mxu0 %v3658
    %5177 = vmatprep.subr.bf16.mxu0 %v3663
    %5178 = vmatpush1.bf16.msra.mxu0 %v3662
    %5179 = vmatprep.subr.bf16.mxu0 %v3667
    %5180 = vmatpush1.bf16.msra.mxu0 %v3666
    %5181 = vmatprep.subr.bf16.mxu0 %v3671
    %5182 = vmatpush1.bf16.msra.mxu0 %v3670
    %5183 = vmatprep.subr.bf16.mxu0 %v3675
    %5184 = vmatpush1.bf16.msra.mxu0 %v3674
    %5185 = vmatprep.subr.bf16.mxu0 %v3679
    %5186 = vmatpush1.bf16.msra.mxu0 %v3678
    %5187 = vmatprep.subr.bf16.mxu0 %v3683
    %5188 = vmatpush1.bf16.msra.mxu0 %v3682
    %5189 = vmatprep.subr.bf16.mxu0 %v3687
    %5190 = vmatpush1.bf16.msra.mxu0 %v3686
    %5191 = vmatprep.subr.bf16.mxu0 %v3691
    %5192 = vmatpush1.bf16.msra.mxu0 %v3690
    %5193 = vmatprep.mubr.bf16.mxu0 %v900
    %5194 = vmatmul.mubr.bf16.gmra.mrb[0].mxu0 %v898
    %v5195 = vpop.f32.mrb[0].mxu0
    %v5196 = vadd.f32 %v5155, %v5195
    %v5197 = vpop.f32.mrb[0].mxu0
    %v5198 = vadd.f32 %v5157, %v5197
    %v5199 = vpop.f32.mrb[0].mxu0
    %v5200 = vpop.f32.mrb[0].mxu0
    %5201 = vdwg.mxu0
    %5202 = vmatprep.subr.bf16.mxu0 %v3695
    %5203 = vmatpush1.bf16.msra.mxu0 %v3694
    %5204 = vmatprep.subr.bf16.mxu0 %v3699
    %5205 = vmatpush1.bf16.msra.mxu0 %v3698
    %5206 = vmatprep.subr.bf16.mxu0 %v3703
    %5207 = vmatpush1.bf16.msra.mxu0 %v3702
    %5208 = vmatprep.subr.bf16.mxu0 %v3707
    %5209 = vmatpush1.bf16.msra.mxu0 %v3706
    %5210 = vmatprep.subr.bf16.mxu0 %v3711
    %5211 = vmatpush1.bf16.msra.mxu0 %v3710
    %5212 = vmatprep.subr.bf16.mxu0 %v3715
    %5213 = vmatpush1.bf16.msra.mxu0 %v3714
    %5214 = vmatprep.subr.bf16.mxu0 %v3719
    %5215 = vmatpush1.bf16.msra.mxu0 %v3718
    %5216 = vmatprep.subr.bf16.mxu0 %v3723
    %5217 = vmatpush1.bf16.msra.mxu0 %v3722
    %5218 = vmatprep.subr.bf16.mxu0 %v3727
    %5219 = vmatpush1.bf16.msra.mxu0 %v3726
    %5220 = vmatprep.subr.bf16.mxu0 %v3731
    %5221 = vmatpush1.bf16.msra.mxu0 %v3730
    %5222 = vmatprep.subr.bf16.mxu0 %v3735
    %5223 = vmatpush1.bf16.msra.mxu0 %v3734
    %5224 = vmatprep.subr.bf16.mxu0 %v3739
    %5225 = vmatpush1.bf16.msra.mxu0 %v3738
    %5226 = vmatprep.subr.bf16.mxu0 %v3743
    %5227 = vmatpush1.bf16.msra.mxu0 %v3742
    %5228 = vmatprep.subr.bf16.mxu0 %v3747
    %5229 = vmatpush1.bf16.msra.mxu0 %v3746
    %5230 = vmatprep.subr.bf16.mxu0 %v3751
    %5231 = vmatpush1.bf16.msra.mxu0 %v3750
    %5232 = vmatprep.subr.bf16.mxu0 %v3755
    %5233 = vmatpush1.bf16.msra.mxu0 %v3754
    %5234 = vmatprep.mubr.bf16.mxu0 %v938
    %5235 = vmatmul.mubr.bf16.gmra.mrb[0].mxu0 %v924
    %v5236 = vpop.f32.mrb[0].mxu0
    %v5237 = vadd.f32 %v5196, %v5236
    %v5238 = vpop.f32.mrb[0].mxu0
    %v5239 = vadd.f32 %v5198, %v5238
    %v5240 = vpop.f32.mrb[0].mxu0
    %v5241 = vpop.f32.mrb[0].mxu0
    %5242 = vdwg.mxu0
    %5243 = vmatprep.subr.bf16.mxu0 %v3759
    %5244 = vmatpush1.bf16.msra.mxu0 %v3758
    %5245 = vmatprep.subr.bf16.mxu0 %v3763
    %5246 = vmatpush1.bf16.msra.mxu0 %v3762
    %5247 = vmatprep.subr.bf16.mxu0 %v3767
    %5248 = vmatpush1.bf16.msra.mxu0 %v3766
    %5249 = vmatprep.subr.bf16.mxu0 %v3771
    %5250 = vmatpush1.bf16.msra.mxu0 %v3770
    %5251 = vmatprep.subr.bf16.mxu0 %v3775
    %5252 = vmatpush1.bf16.msra.mxu0 %v3774
    %5253 = vmatprep.subr.bf16.mxu0 %v3779
    %5254 = vmatpush1.bf16.msra.mxu0 %v3778
    %5255 = vmatprep.subr.bf16.mxu0 %v3783
    %5256 = vmatpush1.bf16.msra.mxu0 %v3782
    %5257 = vmatprep.subr.bf16.mxu0 %v3787
    %5258 = vmatpush1.bf16.msra.mxu0 %v3786
    %5259 = vmatprep.subr.bf16.mxu0 %v3791
    %5260 = vmatpush1.bf16.msra.mxu0 %v3790
    %5261 = vmatprep.subr.bf16.mxu0 %v3795
    %5262 = vmatpush1.bf16.msra.mxu0 %v3794
    %5263 = vmatprep.subr.bf16.mxu0 %v3799
    %5264 = vmatpush1.bf16.msra.mxu0 %v3798
    %5265 = vmatprep.subr.bf16.mxu0 %v3803
    %5266 = vmatpush1.bf16.msra.mxu0 %v3802
    %5267 = vmatprep.subr.bf16.mxu0 %v3807
    %5268 = vmatpush1.bf16.msra.mxu0 %v3806
    %5269 = vmatprep.subr.bf16.mxu0 %v3811
    %5270 = vmatpush1.bf16.msra.mxu0 %v3810
    %5271 = vmatprep.subr.bf16.mxu0 %v3815
    %5272 = vmatpush1.bf16.msra.mxu0 %v3814
    %5273 = vmatprep.subr.bf16.mxu0 %v3819
    %5274 = vmatpush1.bf16.msra.mxu0 %v3818
    %5275 = vmatprep.mubr.bf16.mxu0 %v948
    %5276 = vmatmul.mubr.bf16.gmra.mrb[0].mxu0 %v946
    %v5277 = vpop.f32.mrb[0].mxu0
    %v5278 = vadd.f32 %v5237, %v5277
    %v5279 = vpop.f32.mrb[0].mxu0
    %v5280 = vadd.f32 %v5239, %v5279
    %v5281 = vpop.f32.mrb[0].mxu0
    %v5282 = vpop.f32.mrb[0].mxu0
    %5283 = vdwg.mxu0
    %5284 = vmatprep.subr.bf16.mxu0 %v3823
    %5285 = vmatpush1.bf16.msra.mxu0 %v3822
    %5286 = vmatprep.subr.bf16.mxu0 %v3827
    %5287 = vmatpush1.bf16.msra.mxu0 %v3826
    %5288 = vmatprep.subr.bf16.mxu0 %v3831
    %5289 = vmatpush1.bf16.msra.mxu0 %v3830
    %5290 = vmatprep.subr.bf16.mxu0 %v3835
    %5291 = vmatpush1.bf16.msra.mxu0 %v3834
    %5292 = vmatprep.subr.bf16.mxu0 %v3839
    %5293 = vmatpush1.bf16.msra.mxu0 %v3838
    %5294 = vmatprep.subr.bf16.mxu0 %v3843
    %5295 = vmatpush1.bf16.msra.mxu0 %v3842
    %5296 = vmatprep.subr.bf16.mxu0 %v3847
    %5297 = vmatpush1.bf16.msra.mxu0 %v3846
    %5298 = vmatprep.subr.bf16.mxu0 %v3851
    %5299 = vmatpush1.bf16.msra.mxu0 %v3850
    %5300 = vmatprep.subr.bf16.mxu0 %v3855
    %5301 = vmatpush1.bf16.msra.mxu0 %v3854
    %5302 = vmatprep.subr.bf16.mxu0 %v3859
    %5303 = vmatpush1.bf16.msra.mxu0 %v3858
    %5304 = vmatprep.subr.bf16.mxu0 %v3863
    %5305 = vmatpush1.bf16.msra.mxu0 %v3862
    %5306 = vmatprep.subr.bf16.mxu0 %v3867
    %5307 = vmatpush1.bf16.msra.mxu0 %v3866
    %5308 = vmatprep.subr.bf16.mxu0 %v3871
    %5309 = vmatpush1.bf16.msra.mxu0 %v3870
    %5310 = vmatprep.subr.bf16.mxu0 %v3875
    %5311 = vmatpush1.bf16.msra.mxu0 %v3874
    %5312 = vmatprep.subr.bf16.mxu0 %v3879
    %5313 = vmatpush1.bf16.msra.mxu0 %v3878
    %5314 = vmatprep.subr.bf16.mxu0 %v3883
    %5315 = vmatpush1.bf16.msra.mxu0 %v3882
    %5316 = vmatprep.mubr.bf16.mxu0 %v945
    %5317 = vmatmul.mubr.bf16.gmra.mrb[0].mxu0 %v931
    %v5318 = vpop.f32.mrb[0].mxu0
    %v5319 = vadd.f32 %v5278, %v5318
    %v5320 = vpop.f32.mrb[0].mxu0
    %v5321 = vadd.f32 %v5280, %v5320
    %v5322 = vpop.f32.mrb[0].mxu0
    %v5323 = vpop.f32.mrb[0].mxu0
    %5324 = vdwg.mxu0
    %5325 = vmatprep.subr.bf16.mxu0 %v3887
    %5326 = vmatpush1.bf16.msra.mxu0 %v3886
    %5327 = vmatprep.subr.bf16.mxu0 %v3891
    %5328 = vmatpush1.bf16.msra.mxu0 %v3890
    %5329 = vmatprep.subr.bf16.mxu0 %v3895
    %5330 = vmatpush1.bf16.msra.mxu0 %v3894
    %5331 = vmatprep.subr.bf16.mxu0 %v3899
    %5332 = vmatpush1.bf16.msra.mxu0 %v3898
    %5333 = vmatprep.subr.bf16.mxu0 %v3903
    %5334 = vmatpush1.bf16.msra.mxu0 %v3902
    %5335 = vmatprep.subr.bf16.mxu0 %v3907
    %5336 = vmatpush1.bf16.msra.mxu0 %v3906
    %5337 = vmatprep.subr.bf16.mxu0 %v3911
    %5338 = vmatpush1.bf16.msra.mxu0 %v3910
    %5339 = vmatprep.subr.bf16.mxu0 %v3915
    %5340 = vmatpush1.bf16.msra.mxu0 %v3914
    %5341 = vmatprep.subr.bf16.mxu0 %v3919
    %5342 = vmatpush1.bf16.msra.mxu0 %v3918
    %5343 = vmatprep.subr.bf16.mxu0 %v3923
    %5344 = vmatpush1.bf16.msra.mxu0 %v3922
    %5345 = vmatprep.subr.bf16.mxu0 %v3927
    %5346 = vmatpush1.bf16.msra.mxu0 %v3926
    %5347 = vmatprep.subr.bf16.mxu0 %v3931
    %5348 = vmatpush1.bf16.msra.mxu0 %v3930
    %5349 = vmatprep.subr.bf16.mxu0 %v3935
    %5350 = vmatpush1.bf16.msra.mxu0 %v3934
    %5351 = vmatprep.subr.bf16.mxu0 %v3939
    %5352 = vmatpush1.bf16.msra.mxu0 %v3938
    %5353 = vmatprep.subr.bf16.mxu0 %v3943
    %5354 = vmatpush1.bf16.msra.mxu0 %v3942
    %5355 = vmatprep.subr.bf16.mxu0 %v3947
    %5356 = vmatpush1.bf16.msra.mxu0 %v3946
    %5357 = vmatprep.mubr.bf16.mxu0 %v949
    %5358 = vmatmul.mubr.bf16.gmra.mrb[0].mxu0 %v947
    %v5359 = vpop.f32.mrb[0].mxu0
    %v5360 = vadd.f32 %v5319, %v5359
    %v5361 = vpop.f32.mrb[0].mxu0
    %v5362 = vadd.f32 %v5321, %v5361
    %v5363 = vpop.f32.mrb[0].mxu0
    %v5364 = vpop.f32.mrb[0].mxu0
    %5365 = vdwg.mxu0
    %5366 = vmatprep.subr.bf16.mxu0 %v3951
    %5367 = vmatpush1.bf16.msra.mxu0 %v3950
    %5368 = vmatprep.subr.bf16.mxu0 %v3955
    %5369 = vmatpush1.bf16.msra.mxu0 %v3954
    %5370 = vmatprep.subr.bf16.mxu0 %v3959
    %5371 = vmatpush1.bf16.msra.mxu0 %v3958
    %5372 = vmatprep.subr.bf16.mxu0 %v3963
    %5373 = vmatpush1.bf16.msra.mxu0 %v3962
    %5374 = vmatprep.subr.bf16.mxu0 %v3967
    %5375 = vmatpush1.bf16.msra.mxu0 %v3966
    %5376 = vmatprep.subr.bf16.mxu0 %v3971
    %5377 = vmatpush1.bf16.msra.mxu0 %v3970
    %5378 = vmatprep.subr.bf16.mxu0 %v3975
    %5379 = vmatpush1.bf16.msra.mxu0 %v3974
    %5380 = vmatprep.subr.bf16.mxu0 %v3979
    %5381 = vmatpush1.bf16.msra.mxu0 %v3978
    %5382 = vmatprep.subr.bf16.mxu0 %v3983
    %5383 = vmatpush1.bf16.msra.mxu0 %v3982
    %5384 = vmatprep.subr.bf16.mxu0 %v3987
    %5385 = vmatpush1.bf16.msra.mxu0 %v3986
    %5386 = vmatprep.subr.bf16.mxu0 %v3991
    %5387 = vmatpush1.bf16.msra.mxu0 %v3990
    %5388 = vmatprep.subr.bf16.mxu0 %v3995
    %5389 = vmatpush1.bf16.msra.mxu0 %v3994
    %5390 = vmatprep.subr.bf16.mxu0 %v3999
    %5391 = vmatpush1.bf16.msra.mxu0 %v3998
    %5392 = vmatprep.subr.bf16.mxu0 %v4003
    %5393 = vmatpush1.bf16.msra.mxu0 %v4002
    %5394 = vmatprep.subr.bf16.mxu0 %v4007
    %5395 = vmatpush1.bf16.msra.mxu0 %v4006
    %5396 = vmatprep.subr.bf16.mxu0 %v4011
    %5397 = vmatpush1.bf16.msra.mxu0 %v4010
    %5398 = vmatprep.mubr.bf16.mxu0 %v987
    %5399 = vmatmul.mubr.bf16.gmra.mrb[0].mxu0 %v973
    %v5400 = vpop.f32.mrb[0].mxu0
    %v5401 = vadd.f32 %v5360, %v5400
    %v5402 = vpop.f32.mrb[0].mxu0
    %v5403 = vadd.f32 %v5362, %v5402
    %v5404 = vpop.f32.mrb[0].mxu0
    %v5405 = vpop.f32.mrb[0].mxu0
    %5406 = vdwg.mxu0
    %5407 = vmatprep.subr.bf16.mxu0 %v4015
    %5408 = vmatpush1.bf16.msra.mxu0 %v4014
    %5409 = vmatprep.subr.bf16.mxu0 %v4019
    %5410 = vmatpush1.bf16.msra.mxu0 %v4018
    %5411 = vmatprep.subr.bf16.mxu0 %v4023
    %5412 = vmatpush1.bf16.msra.mxu0 %v4022
    %5413 = vmatprep.subr.bf16.mxu0 %v4027
    %5414 = vmatpush1.bf16.msra.mxu0 %v4026
    %5415 = vmatprep.subr.bf16.mxu0 %v4031
    %5416 = vmatpush1.bf16.msra.mxu0 %v4030
    %5417 = vmatprep.subr.bf16.mxu0 %v4035
    %5418 = vmatpush1.bf16.msra.mxu0 %v4034
    %5419 = vmatprep.subr.bf16.mxu0 %v4039
    %5420 = vmatpush1.bf16.msra.mxu0 %v4038
    %5421 = vmatprep.subr.bf16.mxu0 %v4043
    %5422 = vmatpush1.bf16.msra.mxu0 %v4042
    %5423 = vmatprep.subr.bf16.mxu0 %v4047
    %5424 = vmatpush1.bf16.msra.mxu0 %v4046
    %5425 = vmatprep.subr.bf16.mxu0 %v4051
    %5426 = vmatpush1.bf16.msra.mxu0 %v4050
    %5427 = vmatprep.subr.bf16.mxu0 %v4055
    %5428 = vmatpush1.bf16.msra.mxu0 %v4054
    %5429 = vmatprep.subr.bf16.mxu0 %v4059
    %5430 = vmatpush1.bf16.msra.mxu0 %v4058
    %5431 = vmatprep.subr.bf16.mxu0 %v4063
    %5432 = vmatpush1.bf16.msra.mxu0 %v4062
    %5433 = vmatprep.subr.bf16.mxu0 %v4067
    %5434 = vmatpush1.bf16.msra.mxu0 %v4066
    %5435 = vmatprep.subr.bf16.mxu0 %v4071
    %5436 = vmatpush1.bf16.msra.mxu0 %v4070
    %5437 = vmatprep.subr.bf16.mxu0 %v4075
    %5438 = vmatpush1.bf16.msra.mxu0 %v4074
    %5439 = vmatprep.mubr.bf16.mxu0 %v997
    %5440 = vmatmul.mubr.bf16.gmra.mrb[0].mxu0 %v995
    %v5441 = vpop.f32.mrb[0].mxu0
    %v5442 = vadd.f32 %v5401, %v5441
    %v5443 = vpop.f32.mrb[0].mxu0
    %v5444 = vadd.f32 %v5403, %v5443
    %v5445 = vpop.f32.mrb[0].mxu0
    %v5446 = vpop.f32.mrb[0].mxu0
    %5447 = vdwg.mxu0
    %5448 = vmatprep.subr.bf16.mxu0 %v4079
    %5449 = vmatpush1.bf16.msra.mxu0 %v4078
    %5450 = vmatprep.subr.bf16.mxu0 %v4083
    %5451 = vmatpush1.bf16.msra.mxu0 %v4082
    %5452 = vmatprep.subr.bf16.mxu0 %v4087
    %5453 = vmatpush1.bf16.msra.mxu0 %v4086
    %5454 = vmatprep.subr.bf16.mxu0 %v4091
    %5455 = vmatpush1.bf16.msra.mxu0 %v4090
    %5456 = vmatprep.subr.bf16.mxu0 %v4095
    %5457 = vmatpush1.bf16.msra.mxu0 %v4094
    %5458 = vmatprep.subr.bf16.mxu0 %v4099
    %5459 = vmatpush1.bf16.msra.mxu0 %v4098
    %5460 = vmatprep.subr.bf16.mxu0 %v4103
    %5461 = vmatpush1.bf16.msra.mxu0 %v4102
    %5462 = vmatprep.subr.bf16.mxu0 %v4107
    %5463 = vmatpush1.bf16.msra.mxu0 %v4106
    %5464 = vmatprep.subr.bf16.mxu0 %v4111
    %5465 = vmatpush1.bf16.msra.mxu0 %v4110
    %5466 = vmatprep.subr.bf16.mxu0 %v4115
    %5467 = vmatpush1.bf16.msra.mxu0 %v4114
    %5468 = vmatprep.subr.bf16.mxu0 %v4119
    %5469 = vmatpush1.bf16.msra.mxu0 %v4118
    %5470 = vmatprep.subr.bf16.mxu0 %v4123
    %5471 = vmatpush1.bf16.msra.mxu0 %v4122
    %5472 = vmatprep.subr.bf16.mxu0 %v4127
    %5473 = vmatpush1.bf16.msra.mxu0 %v4126
    %5474 = vmatprep.subr.bf16.mxu0 %v4131
    %5475 = vmatpush1.bf16.msra.mxu0 %v4130
    %5476 = vmatprep.subr.bf16.mxu0 %v4135
    %5477 = vmatpush1.bf16.msra.mxu0 %v4134
    %5478 = vmatprep.subr.bf16.mxu0 %v4139
    %5479 = vmatpush1.bf16.msra.mxu0 %v4138
    %5480 = vmatprep.mubr.bf16.mxu0 %v994
    %5481 = vmatmul.mubr.bf16.gmra.mrb[0].mxu0 %v980
    %v5482 = vpop.f32.mrb[0].mxu0
    %v5483 = vadd.f32 %v5442, %v5482
    %v5484 = vpop.f32.mrb[0].mxu0
    %v5485 = vadd.f32 %v5444, %v5484
    %v5486 = vpop.f32.mrb[0].mxu0
    %v5487 = vpop.f32.mrb[0].mxu0
    %5488 = vdwg.mxu0
    %5489 = vmatprep.subr.bf16.mxu0 %v4143
    %5490 = vmatpush1.bf16.msra.mxu0 %v4142
    %5491 = vmatprep.subr.bf16.mxu0 %v4147
    %5492 = vmatpush1.bf16.msra.mxu0 %v4146
    %5493 = vmatprep.subr.bf16.mxu0 %v4151
    %5494 = vmatpush1.bf16.msra.mxu0 %v4150
    %5495 = vmatprep.subr.bf16.mxu0 %v4155
    %5496 = vmatpush1.bf16.msra.mxu0 %v4154
    %5497 = vmatprep.subr.bf16.mxu0 %v4159
    %5498 = vmatpush1.bf16.msra.mxu0 %v4158
    %5499 = vmatprep.subr.bf16.mxu0 %v4163
    %5500 = vmatpush1.bf16.msra.mxu0 %v4162
    %5501 = vmatprep.subr.bf16.mxu0 %v4167
    %5502 = vmatpush1.bf16.msra.mxu0 %v4166
    %5503 = vmatprep.subr.bf16.mxu0 %v4171
    %5504 = vmatpush1.bf16.msra.mxu0 %v4170
    %5505 = vmatprep.subr.bf16.mxu0 %v4175
    %5506 = vmatpush1.bf16.msra.mxu0 %v4174
    %5507 = vmatprep.subr.bf16.mxu0 %v4179
    %5508 = vmatpush1.bf16.msra.mxu0 %v4178
    %5509 = vmatprep.subr.bf16.mxu0 %v4183
    %5510 = vmatpush1.bf16.msra.mxu0 %v4182
    %5511 = vmatprep.subr.bf16.mxu0 %v4187
    %5512 = vmatpush1.bf16.msra.mxu0 %v4186
    %5513 = vmatprep.subr.bf16.mxu0 %v4191
    %5514 = vmatpush1.bf16.msra.mxu0 %v4190
    %5515 = vmatprep.subr.bf16.mxu0 %v4195
    %5516 = vmatpush1.bf16.msra.mxu0 %v4194
    %5517 = vmatprep.subr.bf16.mxu0 %v4199
    %5518 = vmatpush1.bf16.msra.mxu0 %v4198
    %5519 = vmatprep.subr.bf16.mxu0 %v4203
    %5520 = vmatpush1.bf16.msra.mxu0 %v4202
    %5521 = vmatprep.mubr.bf16.mxu0 %v998
    %5522 = vmatmul.mubr.bf16.gmra.mrb[0].mxu0 %v996
    %v5523 = vpop.f32.mrb[0].mxu0
    %v5524 = vadd.f32 %v5483, %v5523
    %v5525 = vpop.f32.mrb[0].mxu0
    %v5526 = vadd.f32 %v5485, %v5525
    %v5527 = vpop.f32.mrb[0].mxu0
    %v5528 = vpop.f32.mrb[0].mxu0
    %5529 = vdwg.mxu0
    %5530 = vmatprep.subr.bf16.mxu0 %v4207
    %5531 = vmatpush1.bf16.msra.mxu0 %v4206
    %5532 = vmatprep.subr.bf16.mxu0 %v4211
    %5533 = vmatpush1.bf16.msra.mxu0 %v4210
    %5534 = vmatprep.subr.bf16.mxu0 %v4215
    %5535 = vmatpush1.bf16.msra.mxu0 %v4214
    %5536 = vmatprep.subr.bf16.mxu0 %v4219
    %5537 = vmatpush1.bf16.msra.mxu0 %v4218
    %5538 = vmatprep.subr.bf16.mxu0 %v4223
    %5539 = vmatpush1.bf16.msra.mxu0 %v4222
    %5540 = vmatprep.subr.bf16.mxu0 %v4227
    %5541 = vmatpush1.bf16.msra.mxu0 %v4226
    %5542 = vmatprep.subr.bf16.mxu0 %v4231
    %5543 = vmatpush1.bf16.msra.mxu0 %v4230
    %5544 = vmatprep.subr.bf16.mxu0 %v4235
    %5545 = vmatpush1.bf16.msra.mxu0 %v4234
    %5546 = vmatprep.subr.bf16.mxu0 0
    %5547 = vmatpush1.bf16.msra.mxu0 0
    %5548 = vmatprep.subr.bf16.mxu0 0
    %5549 = vmatpush1.bf16.msra.mxu0 0
    %5550 = vmatprep.subr.bf16.mxu0 0
    %5551 = vmatpush1.bf16.msra.mxu0 0
    %5552 = vmatprep.subr.bf16.mxu0 0
    %5553 = vmatpush1.bf16.msra.mxu0 0
    %5554 = vmatprep.subr.bf16.mxu0 0
    %5555 = vmatpush1.bf16.msra.mxu0 0
    %5556 = vmatprep.subr.bf16.mxu0 0
    %5557 = vmatpush1.bf16.msra.mxu0 0
    %5558 = vmatprep.subr.bf16.mxu0 0
    %5559 = vmatpush1.bf16.msra.mxu0 0
    %5560 = vmatprep.subr.bf16.mxu0 0
    %5561 = vmatpush1.bf16.msra.mxu0 0
    %5562 = vmatprep.mubr.bf16.mxu0 0
    %5563 = vmatmul.mubr.bf16.gmra.mrb[0].mxu0 %v1012
    %v5564 = vpop.f32.mrb[0].mxu0
    %v5565 = vadd.f32 %v5524, %v5564
    %v5566 = vpop.f32.mrb[0].mxu0
    %v5567 = vadd.f32 %v5526, %v5566
    %v5568 = vpop.f32.mrb[0].mxu0
    %v5569 = vpop.f32.mrb[0].mxu0
    %5570 = vdwg.mxu0
    %5571 = vmatprep.subr.bf16.mxu0 %v3441
    %5572 = vmatpush1.bf16.msra.mxu0 %v3440
    %5573 = vmatprep.subr.bf16.mxu0 %v3445
    %5574 = vmatpush1.bf16.msra.mxu0 %v3444
    %5575 = vmatprep.subr.bf16.mxu0 %v3449
    %5576 = vmatpush1.bf16.msra.mxu0 %v3448
    %5577 = vmatprep.subr.bf16.mxu0 %v3453
    %5578 = vmatpush1.bf16.msra.mxu0 %v3452
    %5579 = vmatprep.subr.bf16.mxu0 %v3457
    %5580 = vmatpush1.bf16.msra.mxu0 %v3456
    %5581 = vmatprep.subr.bf16.mxu0 %v3461
    %5582 = vmatpush1.bf16.msra.mxu0 %v3460
    %5583 = vmatprep.subr.bf16.mxu0 %v3465
    %5584 = vmatpush1.bf16.msra.mxu0 %v3464
    %5585 = vmatprep.subr.bf16.mxu0 %v3469
    %5586 = vmatpush1.bf16.msra.mxu0 %v3468
    %5587 = vmatprep.subr.bf16.mxu0 %v3473
    %5588 = vmatpush1.bf16.msra.mxu0 %v3472
    %5589 = vmatprep.subr.bf16.mxu0 %v3477
    %5590 = vmatpush1.bf16.msra.mxu0 %v3476
    %5591 = vmatprep.subr.bf16.mxu0 %v3481
    %5592 = vmatpush1.bf16.msra.mxu0 %v3480
    %5593 = vmatprep.subr.bf16.mxu0 %v3485
    %5594 = vmatpush1.bf16.msra.mxu0 %v3484
    %5595 = vmatprep.subr.bf16.mxu0 %v3489
    %5596 = vmatpush1.bf16.msra.mxu0 %v3488
    %5597 = vmatprep.subr.bf16.mxu0 %v3493
    %5598 = vmatpush1.bf16.msra.mxu0 %v3492
    %5599 = vmatprep.subr.bf16.mxu0 %v3497
    %5600 = vmatpush1.bf16.msra.mxu0 %v3496
    %5601 = vmatprep.subr.bf16.mxu0 %v3501
    %5602 = vmatpush1.bf16.msra.mxu0 %v3500
    %5603 = vmatprep.mubr.bf16.mxu0 %v889
    %5604 = vmatmul.mubr.bf16.gmra.mrb[0].mxu0 %v875
    %v5605 = vpop.f32.mrb[0].mxu0
    %v5606 = vadd.f32 %v839, %v5605
    %v5607 = vpop.f32.mrb[0].mxu0
    %v5608 = vadd.f32 %v843, %v5607
    %v5609 = vpop.f32.mrb[0].mxu0
    %v5610 = vpop.f32.mrb[0].mxu0
    %5611 = vdwg.mxu0
    %5612 = vmatprep.subr.bf16.mxu0 %v3505
    %5613 = vmatpush1.bf16.msra.mxu0 %v3504
    %5614 = vmatprep.subr.bf16.mxu0 %v3509
    %5615 = vmatpush1.bf16.msra.mxu0 %v3508
    %5616 = vmatprep.subr.bf16.mxu0 %v3513
    %5617 = vmatpush1.bf16.msra.mxu0 %v3512
    %5618 = vmatprep.subr.bf16.mxu0 %v3517
    %5619 = vmatpush1.bf16.msra.mxu0 %v3516
    %5620 = vmatprep.subr.bf16.mxu0 %v3521
    %5621 = vmatpush1.bf16.msra.mxu0 %v3520
    %5622 = vmatprep.subr.bf16.mxu0 %v3525
    %5623 = vmatpush1.bf16.msra.mxu0 %v3524
    %5624 = vmatprep.subr.bf16.mxu0 %v3529
    %5625 = vmatpush1.bf16.msra.mxu0 %v3528
    %5626 = vmatprep.subr.bf16.mxu0 %v3533
    %5627 = vmatpush1.bf16.msra.mxu0 %v3532
    %5628 = vmatprep.subr.bf16.mxu0 %v3537
    %5629 = vmatpush1.bf16.msra.mxu0 %v3536
    %5630 = vmatprep.subr.bf16.mxu0 %v3541
    %5631 = vmatpush1.bf16.msra.mxu0 %v3540
    %5632 = vmatprep.subr.bf16.mxu0 %v3545
    %5633 = vmatpush1.bf16.msra.mxu0 %v3544
    %5634 = vmatprep.subr.bf16.mxu0 %v3549
    %5635 = vmatpush1.bf16.msra.mxu0 %v3548
    %5636 = vmatprep.subr.bf16.mxu0 %v3553
    %5637 = vmatpush1.bf16.msra.mxu0 %v3552
    %5638 = vmatprep.subr.bf16.mxu0 %v3557
    %5639 = vmatpush1.bf16.msra.mxu0 %v3556
    %5640 = vmatprep.subr.bf16.mxu0 %v3561
    %5641 = vmatpush1.bf16.msra.mxu0 %v3560
    %5642 = vmatprep.subr.bf16.mxu0 %v3565
    %5643 = vmatpush1.bf16.msra.mxu0 %v3564
    %5644 = vmatprep.mubr.bf16.mxu0 %v899
    %5645 = vmatmul.mubr.bf16.gmra.mrb[0].mxu0 %v897
    %v5646 = vpop.f32.mrb[0].mxu0
    %v5647 = vadd.f32 %v5606, %v5646
    %v5648 = vpop.f32.mrb[0].mxu0
    %v5649 = vadd.f32 %v5608, %v5648
    %v5650 = vpop.f32.mrb[0].mxu0
    %v5651 = vpop.f32.mrb[0].mxu0
    %5652 = vdwg.mxu0
    %5653 = vmatprep.subr.bf16.mxu0 %v3569
    %5654 = vmatpush1.bf16.msra.mxu0 %v3568
    %5655 = vmatprep.subr.bf16.mxu0 %v3573
    %5656 = vmatpush1.bf16.msra.mxu0 %v3572
    %5657 = vmatprep.subr.bf16.mxu0 %v3577
    %5658 = vmatpush1.bf16.msra.mxu0 %v3576
    %5659 = vmatprep.subr.bf16.mxu0 %v3581
    %5660 = vmatpush1.bf16.msra.mxu0 %v3580
    %5661 = vmatprep.subr.bf16.mxu0 %v3585
    %5662 = vmatpush1.bf16.msra.mxu0 %v3584
    %5663 = vmatprep.subr.bf16.mxu0 %v3589
    %5664 = vmatpush1.bf16.msra.mxu0 %v3588
    %5665 = vmatprep.subr.bf16.mxu0 %v3593
    %5666 = vmatpush1.bf16.msra.mxu0 %v3592
    %5667 = vmatprep.subr.bf16.mxu0 %v3597
    %5668 = vmatpush1.bf16.msra.mxu0 %v3596
    %5669 = vmatprep.subr.bf16.mxu0 %v3601
    %5670 = vmatpush1.bf16.msra.mxu0 %v3600
    %5671 = vmatprep.subr.bf16.mxu0 %v3605
    %5672 = vmatpush1.bf16.msra.mxu0 %v3604
    %5673 = vmatprep.subr.bf16.mxu0 %v3609
    %5674 = vmatpush1.bf16.msra.mxu0 %v3608
    %5675 = vmatprep.subr.bf16.mxu0 %v3613
    %5676 = vmatpush1.bf16.msra.mxu0 %v3612
    %5677 = vmatprep.subr.bf16.mxu0 %v3617
    %5678 = vmatpush1.bf16.msra.mxu0 %v3616
    %5679 = vmatprep.subr.bf16.mxu0 %v3621
    %5680 = vmatpush1.bf16.msra.mxu0 %v3620
    %5681 = vmatprep.subr.bf16.mxu0 %v3625
    %5682 = vmatpush1.bf16.msra.mxu0 %v3624
    %5683 = vmatprep.subr.bf16.mxu0 %v3629
    %5684 = vmatpush1.bf16.msra.mxu0 %v3628
    %5685 = vmatprep.mubr.bf16.mxu0 %v896
    %5686 = vmatmul.mubr.bf16.gmra.mrb[0].mxu0 %v882
    %v5687 = vpop.f32.mrb[0].mxu0
    %v5688 = vadd.f32 %v5647, %v5687
    %v5689 = vpop.f32.mrb[0].mxu0
    %v5690 = vadd.f32 %v5649, %v5689
    %v5691 = vpop.f32.mrb[0].mxu0
    %v5692 = vpop.f32.mrb[0].mxu0
    %5693 = vdwg.mxu0
    %5694 = vmatprep.subr.bf16.mxu0 %v3633
    %5695 = vmatpush1.bf16.msra.mxu0 %v3632
    %5696 = vmatprep.subr.bf16.mxu0 %v3637
    %5697 = vmatpush1.bf16.msra.mxu0 %v3636
    %5698 = vmatprep.subr.bf16.mxu0 %v3641
    %5699 = vmatpush1.bf16.msra.mxu0 %v3640
    %5700 = vmatprep.subr.bf16.mxu0 %v3645
    %5701 = vmatpush1.bf16.msra.mxu0 %v3644
    %5702 = vmatprep.subr.bf16.mxu0 %v3649
    %5703 = vmatpush1.bf16.msra.mxu0 %v3648
    %5704 = vmatprep.subr.bf16.mxu0 %v3653
    %5705 = vmatpush1.bf16.msra.mxu0 %v3652
    %5706 = vmatprep.subr.bf16.mxu0 %v3657
    %5707 = vmatpush1.bf16.msra.mxu0 %v3656
    %5708 = vmatprep.subr.bf16.mxu0 %v3661
    %5709 = vmatpush1.bf16.msra.mxu0 %v3660
    %5710 = vmatprep.subr.bf16.mxu0 %v3665
    %5711 = vmatpush1.bf16.msra.mxu0 %v3664
    %5712 = vmatprep.subr.bf16.mxu0 %v3669
    %5713 = vmatpush1.bf16.msra.mxu0 %v3668
    %5714 = vmatprep.subr.bf16.mxu0 %v3673
    %5715 = vmatpush1.bf16.msra.mxu0 %v3672
    %5716 = vmatprep.subr.bf16.mxu0 %v3677
    %5717 = vmatpush1.bf16.msra.mxu0 %v3676
    %5718 = vmatprep.subr.bf16.mxu0 %v3681
    %5719 = vmatpush1.bf16.msra.mxu0 %v3680
    %5720 = vmatprep.subr.bf16.mxu0 %v3685
    %5721 = vmatpush1.bf16.msra.mxu0 %v3684
    %5722 = vmatprep.subr.bf16.mxu0 %v3689
    %5723 = vmatpush1.bf16.msra.mxu0 %v3688
    %5724 = vmatprep.subr.bf16.mxu0 %v3693
    %5725 = vmatpush1.bf16.msra.mxu0 %v3692
    %5726 = vmatprep.mubr.bf16.mxu0 %v900
    %5727 = vmatmul.mubr.bf16.gmra.mrb[0].mxu0 %v898
    %v5728 = vpop.f32.mrb[0].mxu0
    %v5729 = vadd.f32 %v5688, %v5728
    %v5730 = vpop.f32.mrb[0].mxu0
    %v5731 = vadd.f32 %v5690, %v5730
    %v5732 = vpop.f32.mrb[0].mxu0
    %v5733 = vpop.f32.mrb[0].mxu0
    %5734 = vdwg.mxu0
    %5735 = vmatprep.subr.bf16.mxu0 %v3697
    %5736 = vmatpush1.bf16.msra.mxu0 %v3696
    %5737 = vmatprep.subr.bf16.mxu0 %v3701
    %5738 = vmatpush1.bf16.msra.mxu0 %v3700
    %5739 = vmatprep.subr.bf16.mxu0 %v3705
    %5740 = vmatpush1.bf16.msra.mxu0 %v3704
    %5741 = vmatprep.subr.bf16.mxu0 %v3709
    %5742 = vmatpush1.bf16.msra.mxu0 %v3708
    %5743 = vmatprep.subr.bf16.mxu0 %v3713
    %5744 = vmatpush1.bf16.msra.mxu0 %v3712
    %5745 = vmatprep.subr.bf16.mxu0 %v3717
    %5746 = vmatpush1.bf16.msra.mxu0 %v3716
    %5747 = vmatprep.subr.bf16.mxu0 %v3721
    %5748 = vmatpush1.bf16.msra.mxu0 %v3720
    %5749 = vmatprep.subr.bf16.mxu0 %v3725
    %5750 = vmatpush1.bf16.msra.mxu0 %v3724
    %5751 = vmatprep.subr.bf16.mxu0 %v3729
    %5752 = vmatpush1.bf16.msra.mxu0 %v3728
    %5753 = vmatprep.subr.bf16.mxu0 %v3733
    %5754 = vmatpush1.bf16.msra.mxu0 %v3732
    %5755 = vmatprep.subr.bf16.mxu0 %v3737
    %5756 = vmatpush1.bf16.msra.mxu0 %v3736
    %5757 = vmatprep.subr.bf16.mxu0 %v3741
    %5758 = vmatpush1.bf16.msra.mxu0 %v3740
    %5759 = vmatprep.subr.bf16.mxu0 %v3745
    %5760 = vmatpush1.bf16.msra.mxu0 %v3744
    %5761 = vmatprep.subr.bf16.mxu0 %v3749
    %5762 = vmatpush1.bf16.msra.mxu0 %v3748
    %5763 = vmatprep.subr.bf16.mxu0 %v3753
    %5764 = vmatpush1.bf16.msra.mxu0 %v3752
    %5765 = vmatprep.subr.bf16.mxu0 %v3757
    %5766 = vmatpush1.bf16.msra.mxu0 %v3756
    %5767 = vmatprep.mubr.bf16.mxu0 %v938
    %5768 = vmatmul.mubr.bf16.gmra.mrb[0].mxu0 %v924
    %v5769 = vpop.f32.mrb[0].mxu0
    %v5770 = vadd.f32 %v5729, %v5769
    %v5771 = vpop.f32.mrb[0].mxu0
    %v5772 = vadd.f32 %v5731, %v5771
    %v5773 = vpop.f32.mrb[0].mxu0
    %v5774 = vpop.f32.mrb[0].mxu0
    %5775 = vdwg.mxu0
    %5776 = vmatprep.subr.bf16.mxu0 %v3761
    %5777 = vmatpush1.bf16.msra.mxu0 %v3760
    %5778 = vmatprep.subr.bf16.mxu0 %v3765
    %5779 = vmatpush1.bf16.msra.mxu0 %v3764
    %5780 = vmatprep.subr.bf16.mxu0 %v3769
    %5781 = vmatpush1.bf16.msra.mxu0 %v3768
    %5782 = vmatprep.subr.bf16.mxu0 %v3773
    %5783 = vmatpush1.bf16.msra.mxu0 %v3772
    %5784 = vmatprep.subr.bf16.mxu0 %v3777
    %5785 = vmatpush1.bf16.msra.mxu0 %v3776
    %5786 = vmatprep.subr.bf16.mxu0 %v3781
    %5787 = vmatpush1.bf16.msra.mxu0 %v3780
    %5788 = vmatprep.subr.bf16.mxu0 %v3785
    %5789 = vmatpush1.bf16.msra.mxu0 %v3784
    %5790 = vmatprep.subr.bf16.mxu0 %v3789
    %5791 = vmatpush1.bf16.msra.mxu0 %v3788
    %5792 = vmatprep.subr.bf16.mxu0 %v3793
    %5793 = vmatpush1.bf16.msra.mxu0 %v3792
    %5794 = vmatprep.subr.bf16.mxu0 %v3797
    %5795 = vmatpush1.bf16.msra.mxu0 %v3796
    %5796 = vmatprep.subr.bf16.mxu0 %v3801
    %5797 = vmatpush1.bf16.msra.mxu0 %v3800
    %5798 = vmatprep.subr.bf16.mxu0 %v3805
    %5799 = vmatpush1.bf16.msra.mxu0 %v3804
    %5800 = vmatprep.subr.bf16.mxu0 %v3809
    %5801 = vmatpush1.bf16.msra.mxu0 %v3808
    %5802 = vmatprep.subr.bf16.mxu0 %v3813
    %5803 = vmatpush1.bf16.msra.mxu0 %v3812
    %5804 = vmatprep.subr.bf16.mxu0 %v3817
    %5805 = vmatpush1.bf16.msra.mxu0 %v3816
    %5806 = vmatprep.subr.bf16.mxu0 %v3821
    %5807 = vmatpush1.bf16.msra.mxu0 %v3820
    %5808 = vmatprep.mubr.bf16.mxu0 %v948
    %5809 = vmatmul.mubr.bf16.gmra.mrb[0].mxu0 %v946
    %v5810 = vpop.f32.mrb[0].mxu0
    %v5811 = vadd.f32 %v5770, %v5810
    %v5812 = vpop.f32.mrb[0].mxu0
    %v5813 = vadd.f32 %v5772, %v5812
    %v5814 = vpop.f32.mrb[0].mxu0
    %v5815 = vpop.f32.mrb[0].mxu0
    %5816 = vdwg.mxu0
    %5817 = vmatprep.subr.bf16.mxu0 %v3825
    %5818 = vmatpush1.bf16.msra.mxu0 %v3824
    %5819 = vmatprep.subr.bf16.mxu0 %v3829
    %5820 = vmatpush1.bf16.msra.mxu0 %v3828
    %5821 = vmatprep.subr.bf16.mxu0 %v3833
    %5822 = vmatpush1.bf16.msra.mxu0 %v3832
    %5823 = vmatprep.subr.bf16.mxu0 %v3837
    %5824 = vmatpush1.bf16.msra.mxu0 %v3836
    %5825 = vmatprep.subr.bf16.mxu0 %v3841
    %5826 = vmatpush1.bf16.msra.mxu0 %v3840
    %5827 = vmatprep.subr.bf16.mxu0 %v3845
    %5828 = vmatpush1.bf16.msra.mxu0 %v3844
    %5829 = vmatprep.subr.bf16.mxu0 %v3849
    %5830 = vmatpush1.bf16.msra.mxu0 %v3848
    %5831 = vmatprep.subr.bf16.mxu0 %v3853
    %5832 = vmatpush1.bf16.msra.mxu0 %v3852
    %5833 = vmatprep.subr.bf16.mxu0 %v3857
    %5834 = vmatpush1.bf16.msra.mxu0 %v3856
    %5835 = vmatprep.subr.bf16.mxu0 %v3861
    %5836 = vmatpush1.bf16.msra.mxu0 %v3860
    %5837 = vmatprep.subr.bf16.mxu0 %v3865
    %5838 = vmatpush1.bf16.msra.mxu0 %v3864
    %5839 = vmatprep.subr.bf16.mxu0 %v3869
    %5840 = vmatpush1.bf16.msra.mxu0 %v3868
    %5841 = vmatprep.subr.bf16.mxu0 %v3873
    %5842 = vmatpush1.bf16.msra.mxu0 %v3872
    %5843 = vmatprep.subr.bf16.mxu0 %v3877
    %5844 = vmatpush1.bf16.msra.mxu0 %v3876
    %5845 = vmatprep.subr.bf16.mxu0 %v3881
    %5846 = vmatpush1.bf16.msra.mxu0 %v3880
    %5847 = vmatprep.subr.bf16.mxu0 %v3885
    %5848 = vmatpush1.bf16.msra.mxu0 %v3884
    %5849 = vmatprep.mubr.bf16.mxu0 %v945
    %5850 = vmatmul.mubr.bf16.gmra.mrb[0].mxu0 %v931
    %v5851 = vpop.f32.mrb[0].mxu0
    %v5852 = vadd.f32 %v5811, %v5851
    %v5853 = vpop.f32.mrb[0].mxu0
    %v5854 = vadd.f32 %v5813, %v5853
    %v5855 = vpop.f32.mrb[0].mxu0
    %v5856 = vpop.f32.mrb[0].mxu0
    %5857 = vdwg.mxu0
    %5858 = vmatprep.subr.bf16.mxu0 %v3889
    %5859 = vmatpush1.bf16.msra.mxu0 %v3888
    %5860 = vmatprep.subr.bf16.mxu0 %v3893
    %5861 = vmatpush1.bf16.msra.mxu0 %v3892
    %5862 = vmatprep.subr.bf16.mxu0 %v3897
    %5863 = vmatpush1.bf16.msra.mxu0 %v3896
    %5864 = vmatprep.subr.bf16.mxu0 %v3901
    %5865 = vmatpush1.bf16.msra.mxu0 %v3900
    %5866 = vmatprep.subr.bf16.mxu0 %v3905
    %5867 = vmatpush1.bf16.msra.mxu0 %v3904
    %5868 = vmatprep.subr.bf16.mxu0 %v3909
    %5869 = vmatpush1.bf16.msra.mxu0 %v3908
    %5870 = vmatprep.subr.bf16.mxu0 %v3913
    %5871 = vmatpush1.bf16.msra.mxu0 %v3912
    %5872 = vmatprep.subr.bf16.mxu0 %v3917
    %5873 = vmatpush1.bf16.msra.mxu0 %v3916
    %5874 = vmatprep.subr.bf16.mxu0 %v3921
    %5875 = vmatpush1.bf16.msra.mxu0 %v3920
    %5876 = vmatprep.subr.bf16.mxu0 %v3925
    %5877 = vmatpush1.bf16.msra.mxu0 %v3924
    %5878 = vmatprep.subr.bf16.mxu0 %v3929
    %5879 = vmatpush1.bf16.msra.mxu0 %v3928
    %5880 = vmatprep.subr.bf16.mxu0 %v3933
    %5881 = vmatpush1.bf16.msra.mxu0 %v3932
    %5882 = vmatprep.subr.bf16.mxu0 %v3937
    %5883 = vmatpush1.bf16.msra.mxu0 %v3936
    %5884 = vmatprep.subr.bf16.mxu0 %v3941
    %5885 = vmatpush1.bf16.msra.mxu0 %v3940
    %5886 = vmatprep.subr.bf16.mxu0 %v3945
    %5887 = vmatpush1.bf16.msra.mxu0 %v3944
    %5888 = vmatprep.subr.bf16.mxu0 %v3949
    %5889 = vmatpush1.bf16.msra.mxu0 %v3948
    %5890 = vmatprep.mubr.bf16.mxu0 %v949
    %5891 = vmatmul.mubr.bf16.gmra.mrb[0].mxu0 %v947
    %v5892 = vpop.f32.mrb[0].mxu0
    %v5893 = vadd.f32 %v5852, %v5892
    %v5894 = vpop.f32.mrb[0].mxu0
    %v5895 = vadd.f32 %v5854, %v5894
    %v5896 = vpop.f32.mrb[0].mxu0
    %v5897 = vpop.f32.mrb[0].mxu0
    %5898 = vdwg.mxu0
    %5899 = vmatprep.subr.bf16.mxu0 %v3953
    %5900 = vmatpush1.bf16.msra.mxu0 %v3952
    %5901 = vmatprep.subr.bf16.mxu0 %v3957
    %5902 = vmatpush1.bf16.msra.mxu0 %v3956
    %5903 = vmatprep.subr.bf16.mxu0 %v3961
    %5904 = vmatpush1.bf16.msra.mxu0 %v3960
    %5905 = vmatprep.subr.bf16.mxu0 %v3965
    %5906 = vmatpush1.bf16.msra.mxu0 %v3964
    %5907 = vmatprep.subr.bf16.mxu0 %v3969
    %5908 = vmatpush1.bf16.msra.mxu0 %v3968
    %5909 = vmatprep.subr.bf16.mxu0 %v3973
    %5910 = vmatpush1.bf16.msra.mxu0 %v3972
    %5911 = vmatprep.subr.bf16.mxu0 %v3977
    %5912 = vmatpush1.bf16.msra.mxu0 %v3976
    %5913 = vmatprep.subr.bf16.mxu0 %v3981
    %5914 = vmatpush1.bf16.msra.mxu0 %v3980
    %5915 = vmatprep.subr.bf16.mxu0 %v3985
    %5916 = vmatpush1.bf16.msra.mxu0 %v3984
    %5917 = vmatprep.subr.bf16.mxu0 %v3989
    %5918 = vmatpush1.bf16.msra.mxu0 %v3988
    %5919 = vmatprep.subr.bf16.mxu0 %v3993
    %5920 = vmatpush1.bf16.msra.mxu0 %v3992
    %5921 = vmatprep.subr.bf16.mxu0 %v3997
    %5922 = vmatpush1.bf16.msra.mxu0 %v3996
    %5923 = vmatprep.subr.bf16.mxu0 %v4001
    %5924 = vmatpush1.bf16.msra.mxu0 %v4000
    %5925 = vmatprep.subr.bf16.mxu0 %v4005
    %5926 = vmatpush1.bf16.msra.mxu0 %v4004
    %5927 = vmatprep.subr.bf16.mxu0 %v4009
    %5928 = vmatpush1.bf16.msra.mxu0 %v4008
    %5929 = vmatprep.subr.bf16.mxu0 %v4013
    %5930 = vmatpush1.bf16.msra.mxu0 %v4012
    %5931 = vmatprep.mubr.bf16.mxu0 %v987
    %5932 = vmatmul.mubr.bf16.gmra.mrb[0].mxu0 %v973
    %v5933 = vpop.f32.mrb[0].mxu0
    %v5934 = vadd.f32 %v5893, %v5933
    %v5935 = vpop.f32.mrb[0].mxu0
    %v5936 = vadd.f32 %v5895, %v5935
    %v5937 = vpop.f32.mrb[0].mxu0
    %v5938 = vpop.f32.mrb[0].mxu0
    %5939 = vdwg.mxu0
    %5940 = vmatprep.subr.bf16.mxu0 %v4017
    %5941 = vmatpush1.bf16.msra.mxu0 %v4016
    %5942 = vmatprep.subr.bf16.mxu0 %v4021
    %5943 = vmatpush1.bf16.msra.mxu0 %v4020
    %5944 = vmatprep.subr.bf16.mxu0 %v4025
    %5945 = vmatpush1.bf16.msra.mxu0 %v4024
    %5946 = vmatprep.subr.bf16.mxu0 %v4029
    %5947 = vmatpush1.bf16.msra.mxu0 %v4028
    %5948 = vmatprep.subr.bf16.mxu0 %v4033
    %5949 = vmatpush1.bf16.msra.mxu0 %v4032
    %5950 = vmatprep.subr.bf16.mxu0 %v4037
    %5951 = vmatpush1.bf16.msra.mxu0 %v4036
    %5952 = vmatprep.subr.bf16.mxu0 %v4041
    %5953 = vmatpush1.bf16.msra.mxu0 %v4040
    %5954 = vmatprep.subr.bf16.mxu0 %v4045
    %5955 = vmatpush1.bf16.msra.mxu0 %v4044
    %5956 = vmatprep.subr.bf16.mxu0 %v4049
    %5957 = vmatpush1.bf16.msra.mxu0 %v4048
    %5958 = vmatprep.subr.bf16.mxu0 %v4053
    %5959 = vmatpush1.bf16.msra.mxu0 %v4052
    %5960 = vmatprep.subr.bf16.mxu0 %v4057
    %5961 = vmatpush1.bf16.msra.mxu0 %v4056
    %5962 = vmatprep.subr.bf16.mxu0 %v4061
    %5963 = vmatpush1.bf16.msra.mxu0 %v4060
    %5964 = vmatprep.subr.bf16.mxu0 %v4065
    %5965 = vmatpush1.bf16.msra.mxu0 %v4064
    %5966 = vmatprep.subr.bf16.mxu0 %v4069
    %5967 = vmatpush1.bf16.msra.mxu0 %v4068
    %5968 = vmatprep.subr.bf16.mxu0 %v4073
    %5969 = vmatpush1.bf16.msra.mxu0 %v4072
    %5970 = vmatprep.subr.bf16.mxu0 %v4077
    %5971 = vmatpush1.bf16.msra.mxu0 %v4076
    %5972 = vmatprep.mubr.bf16.mxu0 %v997
    %5973 = vmatmul.mubr.bf16.gmra.mrb[0].mxu0 %v995
    %v5974 = vpop.f32.mrb[0].mxu0
    %v5975 = vadd.f32 %v5934, %v5974
    %v5976 = vpop.f32.mrb[0].mxu0
    %v5977 = vadd.f32 %v5936, %v5976
    %v5978 = vpop.f32.mrb[0].mxu0
    %v5979 = vpop.f32.mrb[0].mxu0
    %5980 = vdwg.mxu0
    %5981 = vmatprep.subr.bf16.mxu0 %v4081
    %5982 = vmatpush1.bf16.msra.mxu0 %v4080
    %5983 = vmatprep.subr.bf16.mxu0 %v4085
    %5984 = vmatpush1.bf16.msra.mxu0 %v4084
    %5985 = vmatprep.subr.bf16.mxu0 %v4089
    %5986 = vmatpush1.bf16.msra.mxu0 %v4088
    %5987 = vmatprep.subr.bf16.mxu0 %v4093
    %5988 = vmatpush1.bf16.msra.mxu0 %v4092
    %5989 = vmatprep.subr.bf16.mxu0 %v4097
    %5990 = vmatpush1.bf16.msra.mxu0 %v4096
    %5991 = vmatprep.subr.bf16.mxu0 %v4101
    %5992 = vmatpush1.bf16.msra.mxu0 %v4100
    %5993 = vmatprep.subr.bf16.mxu0 %v4105
    %5994 = vmatpush1.bf16.msra.mxu0 %v4104
    %5995 = vmatprep.subr.bf16.mxu0 %v4109
    %5996 = vmatpush1.bf16.msra.mxu0 %v4108
    %5997 = vmatprep.subr.bf16.mxu0 %v4113
    %5998 = vmatpush1.bf16.msra.mxu0 %v4112
    %5999 = vmatprep.subr.bf16.mxu0 %v4117
    %6000 = vmatpush1.bf16.msra.mxu0 %v4116
    %6001 = vmatprep.subr.bf16.mxu0 %v4121
    %6002 = vmatpush1.bf16.msra.mxu0 %v4120
    %6003 = vmatprep.subr.bf16.mxu0 %v4125
    %6004 = vmatpush1.bf16.msra.mxu0 %v4124
    %6005 = vmatprep.subr.bf16.mxu0 %v4129
    %6006 = vmatpush1.bf16.msra.mxu0 %v4128
    %6007 = vmatprep.subr.bf16.mxu0 %v4133
    %6008 = vmatpush1.bf16.msra.mxu0 %v4132
    %6009 = vmatprep.subr.bf16.mxu0 %v4137
    %6010 = vmatpush1.bf16.msra.mxu0 %v4136
    %6011 = vmatprep.subr.bf16.mxu0 %v4141
    %6012 = vmatpush1.bf16.msra.mxu0 %v4140
    %6013 = vmatprep.mubr.bf16.mxu0 %v994
    %6014 = vmatmul.mubr.bf16.gmra.mrb[0].mxu0 %v980
    %v6015 = vpop.f32.mrb[0].mxu0
    %v6016 = vadd.f32 %v5975, %v6015
    %v6017 = vpop.f32.mrb[0].mxu0
    %v6018 = vadd.f32 %v5977, %v6017
    %v6019 = vpop.f32.mrb[0].mxu0
    %v6020 = vpop.f32.mrb[0].mxu0
    %6021 = vdwg.mxu0
    %6022 = vmatprep.subr.bf16.mxu0 %v4145
    %6023 = vmatpush1.bf16.msra.mxu0 %v4144
    %6024 = vmatprep.subr.bf16.mxu0 %v4149
    %6025 = vmatpush1.bf16.msra.mxu0 %v4148
    %6026 = vmatprep.subr.bf16.mxu0 %v4153
    %6027 = vmatpush1.bf16.msra.mxu0 %v4152
    %6028 = vmatprep.subr.bf16.mxu0 %v4157
    %6029 = vmatpush1.bf16.msra.mxu0 %v4156
    %6030 = vmatprep.subr.bf16.mxu0 %v4161
    %6031 = vmatpush1.bf16.msra.mxu0 %v4160
    %6032 = vmatprep.subr.bf16.mxu0 %v4165
    %6033 = vmatpush1.bf16.msra.mxu0 %v4164
    %6034 = vmatprep.subr.bf16.mxu0 %v4169
    %6035 = vmatpush1.bf16.msra.mxu0 %v4168
    %6036 = vmatprep.subr.bf16.mxu0 %v4173
    %6037 = vmatpush1.bf16.msra.mxu0 %v4172
    %6038 = vmatprep.subr.bf16.mxu0 %v4177
    %6039 = vmatpush1.bf16.msra.mxu0 %v4176
    %6040 = vmatprep.subr.bf16.mxu0 %v4181
    %6041 = vmatpush1.bf16.msra.mxu0 %v4180
    %6042 = vmatprep.subr.bf16.mxu0 %v4185
    %6043 = vmatpush1.bf16.msra.mxu0 %v4184
    %6044 = vmatprep.subr.bf16.mxu0 %v4189
    %6045 = vmatpush1.bf16.msra.mxu0 %v4188
    %6046 = vmatprep.subr.bf16.mxu0 %v4193
    %6047 = vmatpush1.bf16.msra.mxu0 %v4192
    %6048 = vmatprep.subr.bf16.mxu0 %v4197
    %6049 = vmatpush1.bf16.msra.mxu0 %v4196
    %6050 = vmatprep.subr.bf16.mxu0 %v4201
    %6051 = vmatpush1.bf16.msra.mxu0 %v4200
    %6052 = vmatprep.subr.bf16.mxu0 %v4205
    %6053 = vmatpush1.bf16.msra.mxu0 %v4204
    %6054 = vmatprep.mubr.bf16.mxu0 %v998
    %6055 = vmatmul.mubr.bf16.gmra.mrb[0].mxu0 %v996
    %v6056 = vpop.f32.mrb[0].mxu0
    %v6057 = vadd.f32 %v6016, %v6056
    %v6058 = vpop.f32.mrb[0].mxu0
    %v6059 = vadd.f32 %v6018, %v6058
    %v6060 = vpop.f32.mrb[0].mxu0
    %v6061 = vpop.f32.mrb[0].mxu0
    %6062 = vdwg.mxu0
    %6063 = vmatprep.subr.bf16.mxu0 %v4209
    %6064 = vmatpush1.bf16.msra.mxu0 %v4208
    %6065 = vmatprep.subr.bf16.mxu0 %v4213
    %6066 = vmatpush1.bf16.msra.mxu0 %v4212
    %6067 = vmatprep.subr.bf16.mxu0 %v4217
    %6068 = vmatpush1.bf16.msra.mxu0 %v4216
    %6069 = vmatprep.subr.bf16.mxu0 %v4221
    %6070 = vmatpush1.bf16.msra.mxu0 %v4220
    %6071 = vmatprep.subr.bf16.mxu0 %v4225
    %6072 = vmatpush1.bf16.msra.mxu0 %v4224
    %6073 = vmatprep.subr.bf16.mxu0 %v4229
    %6074 = vmatpush1.bf16.msra.mxu0 %v4228
    %6075 = vmatprep.subr.bf16.mxu0 %v4233
    %6076 = vmatpush1.bf16.msra.mxu0 %v4232
    %6077 = vmatprep.subr.bf16.mxu0 %v4237
    %6078 = vmatpush1.bf16.msra.mxu0 %v4236
    %6079 = vmatprep.subr.bf16.mxu0 0
    %6080 = vmatpush1.bf16.msra.mxu0 0
    %6081 = vmatprep.subr.bf16.mxu0 0
    %6082 = vmatpush1.bf16.msra.mxu0 0
    %6083 = vmatprep.subr.bf16.mxu0 0
    %6084 = vmatpush1.bf16.msra.mxu0 0
    %6085 = vmatprep.subr.bf16.mxu0 0
    %6086 = vmatpush1.bf16.msra.mxu0 0
    %6087 = vmatprep.subr.bf16.mxu0 0
    %6088 = vmatpush1.bf16.msra.mxu0 0
    %6089 = vmatprep.subr.bf16.mxu0 0
    %6090 = vmatpush1.bf16.msra.mxu0 0
    %6091 = vmatprep.subr.bf16.mxu0 0
    %6092 = vmatpush1.bf16.msra.mxu0 0
    %6093 = vmatprep.subr.bf16.mxu0 0
    %6094 = vmatpush1.bf16.msra.mxu0 0
    %6095 = vmatprep.mubr.bf16.mxu0 0
    %6096 = vmatmul.mubr.bf16.gmra.mrb[0].mxu0 %v1012
    %v6097 = vpop.f32.mrb[0].mxu0
    %v6098 = vadd.f32 %v6057, %v6097
    %v6099 = vpop.f32.mrb[0].mxu0
    %v6100 = vadd.f32 %v6059, %v6099
    %v6101 = vpop.f32.mrb[0].mxu0
    %v6102 = vpop.f32.mrb[0].mxu0
    %6103 = vdwg.mxu0
    %v6104 = vmax.f32 %v5565, 0.0
    %v6105 = vmax.f32 %v5567, 0.0
    %v6106 = vmax.f32 %v6098, 0.0
    %v6107 = vmax.f32 %v6100, 0.0
    %v6108 = vpack.c.bf16 %v6104, %v6104
    %v6109 = vpack.c.bf16 %v6105, %v6105
    %v6110 = vpack.c.bf16 %v6106, %v6106
    %v6111 = vpack.c.bf16 %v6107, %v6107
    %v6112 = vld [vmem:[%s3] sm:$0xf]
    %v6113 = vld [vmem:[%s3 + $0x4] sm:$0xf]
    %v6114 = vld [vmem:[%s3 + $0x8] sm:$0xf]
    %v6115 = vld [vmem:[%s3 + $0xc] sm:$0xf]
    %v6116 = vld [vmem:[%s3 + $0x10] sm:$0xf]
    %v6117 = vld [vmem:[%s3 + $0x14] sm:$0xf]
    %v6118 = vld [vmem:[%s3 + $0x18] sm:$0xf]
    %v6119 = vld [vmem:[%s3 + $0x1c] sm:$0xf]
    %v6120 = vld [vmem:[%s3 + $0x20] sm:$0xf]
    %v6121 = vld [vmem:[%s3 + $0x24] sm:$0xf]
    %v6122 = vld [vmem:[%s3 + $0x28] sm:$0xf]
    %v6123 = vld [vmem:[%s3 + $0x2c] sm:$0xf]
    %v6124 = vld [vmem:[%s3 + $0x30] sm:$0xf]
    %v6125 = vld [vmem:[%s3 + $0x34] sm:$0xf]
    %v6126 = vld [vmem:[%s3 + $0x38] sm:$0xf]
    %v6127 = vld [vmem:[%s3 + $0x3c] sm:$0xf]
    %v6128 = vld [vmem:[%s3 + $0x40] sm:$0xf]
    %v6129 = vld [vmem:[%s3 + $0x44] sm:$0xf]
    %v6130 = vld [vmem:[%s3 + $0x48] sm:$0xf]
    %v6131 = vld [vmem:[%s3 + $0x4c] sm:$0xf]
    %v6132 = vld [vmem:[%s3 + $0x50] sm:$0xf]
    %v6133 = vld [vmem:[%s3 + $0x54] sm:$0xf]
    %v6134 = vld [vmem:[%s3 + $0x58] sm:$0xf]
    %v6135 = vld [vmem:[%s3 + $0x5c] sm:$0xf]
    %v6136 = vld [vmem:[%s3 + $0x60] sm:$0xf]
    %v6137 = vld [vmem:[%s3 + $0x64] sm:$0xf]
    %v6138 = vld [vmem:[%s3 + $0x68] sm:$0xf]
    %v6139 = vld [vmem:[%s3 + $0x6c] sm:$0xf]
    %v6140 = vld [vmem:[%s3 + $0x70] sm:$0xf]
    %v6141 = vld [vmem:[%s3 + $0x74] sm:$0xf]
    %v6142 = vld [vmem:[%s3 + $0x78] sm:$0xf]
    %v6143 = vld [vmem:[%s3 + $0x7c] sm:$0xf]
    %v6144 = vld [vmem:[%s3 + $0x80] sm:$0xf]
    %v6145 = vld [vmem:[%s3 + $0x84] sm:$0xf]
    %v6146 = vld [vmem:[%s3 + $0x88] sm:$0xf]
    %v6147 = vld [vmem:[%s3 + $0x8c] sm:$0xf]
    %v6148 = vld [vmem:[%s3 + $0x90] sm:$0xf]
    %v6149 = vld [vmem:[%s3 + $0x94] sm:$0xf]
    %v6150 = vld [vmem:[%s3 + $0x98] sm:$0xf]
    %v6151 = vld [vmem:[%s3 + $0x9c] sm:$0xf]
    %v6152 = vld [vmem:[%s3 + $0xa0] sm:$0xf]
    %v6153 = vld [vmem:[%s3 + $0xa4] sm:$0xf]
    %v6154 = vld [vmem:[%s3 + $0xa8] sm:$0xf]
    %v6155 = vld [vmem:[%s3 + $0xac] sm:$0xf]
    %v6156 = vld [vmem:[%s3 + $0xb0] sm:$0xf]
    %v6157 = vld [vmem:[%s3 + $0xb4] sm:$0xf]
    %v6158 = vld [vmem:[%s3 + $0xb8] sm:$0xf]
    %v6159 = vld [vmem:[%s3 + $0xbc] sm:$0xf]
    %v6160 = vld [vmem:[%s3 + $0xc0] sm:$0xf]
    %v6161 = vld [vmem:[%s3 + $0xc4] sm:$0xf]
    %v6162 = vld [vmem:[%s3 + $0xc8] sm:$0xf]
    %v6163 = vld [vmem:[%s3 + $0xcc] sm:$0xf]
    %v6164 = vld [vmem:[%s3 + $0xd0] sm:$0xf]
    %v6165 = vld [vmem:[%s3 + $0xd4] sm:$0xf]
    %v6166 = vld [vmem:[%s3 + $0xd8] sm:$0xf]
    %v6167 = vld [vmem:[%s3 + $0xdc] sm:$0xf]
    %v6168 = vld [vmem:[%s3 + $0xe0] sm:$0xf]
    %v6169 = vld [vmem:[%s3 + $0xe4] sm:$0xf]
    %v6170 = vld [vmem:[%s3 + $0xe8] sm:$0xf]
    %v6171 = vld [vmem:[%s3 + $0xec] sm:$0xf]
    %v6172 = vld [vmem:[%s3 + $0xf0] sm:$0xf]
    %v6173 = vld [vmem:[%s3 + $0xf4] sm:$0xf]
    %v6174 = vld [vmem:[%s3 + $0xf8] sm:$0xf]
    %v6175 = vld [vmem:[%s3 + $0xfc] sm:$0xf]
    %v6176 = vld [vmem:[%s4] sm:$0x1]
    %v6178 = vlaneseq
    %v6179 = vshrl.u32 %v6178, 7
    %v6180 = vsub.s32 0, %v6179
    %v6181 = vrot.slane %v6176, %v6180
    %v6247 = vunpack.c.l.b16 %v6112
    %v6248 = vunpack.c.l.b16 %v6113
    %v6249 = vunpack.c.l.b16 %v6114
    %v6250 = vunpack.c.l.b16 %v6115
    %v6251 = vunpack.c.l.b16 %v6116
    %v6252 = vunpack.c.l.b16 %v6117
    %v6253 = vunpack.c.l.b16 %v6118
    %v6254 = vunpack.c.l.b16 %v6119
    %v6255 = vunpack.c.l.b16 %v6120
    %v6256 = vunpack.c.l.b16 %v6121
    %v6257 = vunpack.c.l.b16 %v6122
    %v6258 = vunpack.c.l.b16 %v6123
    %v6259 = vunpack.c.l.b16 %v6124
    %v6260 = vunpack.c.l.b16 %v6125
    %v6261 = vunpack.c.l.b16 %v6126
    %v6262 = vunpack.c.l.b16 %v6127
    %v6263 = vunpack.c.l.b16 %v6128
    %v6264 = vunpack.c.l.b16 %v6129
    %v6265 = vunpack.c.l.b16 %v6130
    %v6266 = vunpack.c.l.b16 %v6131
    %v6267 = vunpack.c.l.b16 %v6132
    %v6268 = vunpack.c.l.b16 %v6133
    %v6269 = vunpack.c.l.b16 %v6134
    %v6270 = vunpack.c.l.b16 %v6135
    %v6271 = vunpack.c.l.b16 %v6136
    %v6272 = vunpack.c.l.b16 %v6137
    %v6273 = vunpack.c.l.b16 %v6138
    %v6274 = vunpack.c.l.b16 %v6139
    %v6275 = vunpack.c.l.b16 %v6140
    %v6276 = vunpack.c.l.b16 %v6141
    %v6277 = vunpack.c.l.b16 %v6142
    %v6278 = vunpack.c.l.b16 %v6143
    %v6279 = vunpack.c.l.b16 %v6144
    %v6280 = vunpack.c.l.b16 %v6145
    %v6281 = vunpack.c.l.b16 %v6146
    %v6282 = vunpack.c.l.b16 %v6147
    %v6283 = vunpack.c.l.b16 %v6148
    %v6284 = vunpack.c.l.b16 %v6149
    %v6285 = vunpack.c.l.b16 %v6150
    %v6286 = vunpack.c.l.b16 %v6151
    %v6287 = vunpack.c.l.b16 %v6152
    %v6288 = vunpack.c.l.b16 %v6153
    %v6289 = vunpack.c.l.b16 %v6154
    %v6290 = vunpack.c.l.b16 %v6155
    %v6291 = vunpack.c.l.b16 %v6156
    %v6292 = vunpack.c.l.b16 %v6157
    %v6293 = vunpack.c.l.b16 %v6158
    %v6294 = vunpack.c.l.b16 %v6159
    %v6295 = vunpack.c.l.b16 %v6160
    %v6296 = vunpack.c.l.b16 %v6161
    %v6297 = vunpack.c.l.b16 %v6162
    %v6298 = vunpack.c.l.b16 %v6163
    %v6299 = vunpack.c.l.b16 %v6164
    %v6300 = vunpack.c.l.b16 %v6165
    %v6301 = vunpack.c.l.b16 %v6166
    %v6302 = vunpack.c.l.b16 %v6167
    %v6303 = vunpack.c.l.b16 %v6168
    %v6304 = vunpack.c.l.b16 %v6169
    %v6305 = vunpack.c.l.b16 %v6170
    %v6306 = vunpack.c.l.b16 %v6171
    %v6307 = vunpack.c.l.b16 %v6172
    %v6308 = vunpack.c.l.b16 %v6173
    %v6309 = vunpack.c.l.b16 %v6174
    %v6310 = vunpack.c.l.b16 %v6175
    %v6311 = vpack.c.b16 %v6248, %v6247
    %v6312 = vpack.c.b16 %v6250, %v6249
    %v6313 = vpack.c.b16 %v6252, %v6251
    %v6314 = vpack.c.b16 %v6254, %v6253
    %v6315 = vpack.c.b16 %v6256, %v6255
    %v6316 = vpack.c.b16 %v6258, %v6257
    %v6317 = vpack.c.b16 %v6260, %v6259
    %v6318 = vpack.c.b16 %v6262, %v6261
    %v6319 = vpack.c.b16 %v6264, %v6263
    %v6320 = vpack.c.b16 %v6266, %v6265
    %v6321 = vpack.c.b16 %v6268, %v6267
    %v6322 = vpack.c.b16 %v6270, %v6269
    %v6323 = vpack.c.b16 %v6272, %v6271
    %v6324 = vpack.c.b16 %v6274, %v6273
    %v6325 = vpack.c.b16 %v6276, %v6275
    %v6326 = vpack.c.b16 %v6278, %v6277
    %v6327 = vpack.c.b16 %v6280, %v6279
    %v6328 = vpack.c.b16 %v6282, %v6281
    %v6329 = vpack.c.b16 %v6284, %v6283
    %v6330 = vpack.c.b16 %v6286, %v6285
    %v6331 = vpack.c.b16 %v6288, %v6287
    %v6332 = vpack.c.b16 %v6290, %v6289
    %v6333 = vpack.c.b16 %v6292, %v6291
    %v6334 = vpack.c.b16 %v6294, %v6293
    %v6335 = vpack.c.b16 %v6296, %v6295
    %v6336 = vpack.c.b16 %v6298, %v6297
    %v6337 = vpack.c.b16 %v6300, %v6299
    %v6338 = vpack.c.b16 %v6302, %v6301
    %v6339 = vpack.c.b16 %v6304, %v6303
    %v6340 = vpack.c.b16 %v6306, %v6305
    %v6341 = vpack.c.b16 %v6308, %v6307
    %v6342 = vpack.c.b16 %v6310, %v6309
    %6375 = vmatprep.subr.bf16.mxu0 0
    %6376 = vmatpush1.bf16.msra.mxu0 %v6311
    %6377 = vmatprep.subr.bf16.mxu0 0
    %6378 = vmatpush1.bf16.msra.mxu0 %v6312
    %6379 = vmatprep.subr.bf16.mxu0 0
    %6380 = vmatpush1.bf16.msra.mxu0 %v6313
    %6381 = vmatprep.subr.bf16.mxu0 0
    %6382 = vmatpush1.bf16.msra.mxu0 %v6314
    %6383 = vmatprep.subr.bf16.mxu0 0
    %6384 = vmatpush1.bf16.msra.mxu0 %v6315
    %6385 = vmatprep.subr.bf16.mxu0 0
    %6386 = vmatpush1.bf16.msra.mxu0 %v6316
    %6387 = vmatprep.subr.bf16.mxu0 0
    %6388 = vmatpush1.bf16.msra.mxu0 %v6317
    %6389 = vmatprep.subr.bf16.mxu0 0
    %6390 = vmatpush1.bf16.msra.mxu0 %v6318
    %6391 = vmatprep.subr.bf16.mxu0 0
    %6392 = vmatpush1.bf16.msra.mxu0 %v6319
    %6393 = vmatprep.subr.bf16.mxu0 0
    %6394 = vmatpush1.bf16.msra.mxu0 %v6320
    %6395 = vmatprep.subr.bf16.mxu0 0
    %6396 = vmatpush1.bf16.msra.mxu0 %v6321
    %6397 = vmatprep.subr.bf16.mxu0 0
    %6398 = vmatpush1.bf16.msra.mxu0 %v6322
    %6399 = vmatprep.subr.bf16.mxu0 0
    %6400 = vmatpush1.bf16.msra.mxu0 %v6323
    %6401 = vmatprep.subr.bf16.mxu0 0
    %6402 = vmatpush1.bf16.msra.mxu0 %v6324
    %6403 = vmatprep.subr.bf16.mxu0 0
    %6404 = vmatpush1.bf16.msra.mxu0 %v6325
    %6405 = vmatprep.subr.bf16.mxu0 0
    %6406 = vmatpush1.bf16.msra.mxu0 %v6326
    %6407 = vmatprep.mubr.bf16.mxu0 %v6109
    %6408 = vmatmul.mubr.bf16.gmra.mrb[0].mxu0 %v6108
    %v6409 = vpop.f32.mrb[0].mxu0
    %v6410 = vadd.f32 %v6181, %v6409
    %v6411 = vpop.f32.mrb[0].mxu0
    %v6412 = vpop.f32.mrb[0].mxu0
    %v6413 = vpop.f32.mrb[0].mxu0
    %6414 = vdwg.mxu0
    %6415 = vmatprep.subr.bf16.mxu0 0
    %6416 = vmatpush1.bf16.msra.mxu0 %v6327
    %6417 = vmatprep.subr.bf16.mxu0 0
    %6418 = vmatpush1.bf16.msra.mxu0 %v6328
    %6419 = vmatprep.subr.bf16.mxu0 0
    %6420 = vmatpush1.bf16.msra.mxu0 %v6329
    %6421 = vmatprep.subr.bf16.mxu0 0
    %6422 = vmatpush1.bf16.msra.mxu0 %v6330
    %6423 = vmatprep.subr.bf16.mxu0 0
    %6424 = vmatpush1.bf16.msra.mxu0 %v6331
    %6425 = vmatprep.subr.bf16.mxu0 0
    %6426 = vmatpush1.bf16.msra.mxu0 %v6332
    %6427 = vmatprep.subr.bf16.mxu0 0
    %6428 = vmatpush1.bf16.msra.mxu0 %v6333
    %6429 = vmatprep.subr.bf16.mxu0 0
    %6430 = vmatpush1.bf16.msra.mxu0 %v6334
    %6431 = vmatprep.subr.bf16.mxu0 0
    %6432 = vmatpush1.bf16.msra.mxu0 %v6335
    %6433 = vmatprep.subr.bf16.mxu0 0
    %6434 = vmatpush1.bf16.msra.mxu0 %v6336
    %6435 = vmatprep.subr.bf16.mxu0 0
    %6436 = vmatpush1.bf16.msra.mxu0 %v6337
    %6437 = vmatprep.subr.bf16.mxu0 0
    %6438 = vmatpush1.bf16.msra.mxu0 %v6338
    %6439 = vmatprep.subr.bf16.mxu0 0
    %6440 = vmatpush1.bf16.msra.mxu0 %v6339
    %6441 = vmatprep.subr.bf16.mxu0 0
    %6442 = vmatpush1.bf16.msra.mxu0 %v6340
    %6443 = vmatprep.subr.bf16.mxu0 0
    %6444 = vmatpush1.bf16.msra.mxu0 %v6341
    %6445 = vmatprep.subr.bf16.mxu0 0
    %6446 = vmatpush1.bf16.msra.mxu0 %v6342
    %6447 = vmatprep.mubr.bf16.mxu0 %v6111
    %6448 = vmatmul.mubr.bf16.gmra.mrb[0].mxu0 %v6110
    %v6449 = vpop.f32.mrb[0].mxu0
    %v6450 = vadd.f32 %v6410, %v6449
    %v6451 = vpop.f32.mrb[0].mxu0
    %v6452 = vpop.f32.mrb[0].mxu0
    %v6453 = vpop.f32.mrb[0].mxu0
    %6454 = vdwg.mxu0
    %vm6455 = vcmask 1041408
    %v6456 = vsel %vm6455, %v6450, -inf
    %6457 = vmax.xlane.f32.xlu0 %v6456
    %v6458 = vpop.xlane.xlu0 %6457
    %v6459 = vsub.f32 %v6450, %v6458
    %v6460 = vmul.f32 %v6459, 1.442695
    %v6461 = vpow.pop %v6460
    %v6462 = vsel %vm6455, %v6461, 0.0
    %6463 = vadd.xlane.f32.xlu0 %v6462
    %v6464 = vpop.xlane.xlu0 %6463
    %v6465 = vlog2.pop %v6464
    %v6466 = vmul.f32 %v6465, 0.6931472
    %v6467 = vsub.f32 %v6459, %v6466
    %6468 = vst [vmem:[#allocation2] sm:$0x3] %v6467
    // Predicated region
    $region22: #{hebbcnn_forward.5} parent=1 // pred_check
      _
    $region23: #{hebbcnn_forward.5} parent=1 // pred_check_branch
      %6470 = sbr.rel (0) target = $region25
    $region24: #{hebbcnn_forward.5} parent=1 // pred_region
      %s6472 = ssub.s32 32, 32
      %6473 = vsyncadd [#allocation3], %s6472
      %s6475 = sshll.u32 [#allocation2], 4
      %s6476 = int_to_ptr.vmem [resolvable:$true] %s6475
      %6478 = dma.vmem_to_hbm [thread:$0]  %s6476, 32, %s5, [#allocation3]
    $region25: #{hebbcnn_forward.5} parent=1 // pred_fallthru
      _
    // Predicated region
    $region26: #{hebbcnn_forward.5} parent=1 // pred_check
      _
    $region27: #{hebbcnn_forward.5} parent=1 // pred_check_branch
      %6480 = sbr.rel (0) target = $region29
    $region28: #{hebbcnn_forward.5} parent=1 // pred_region
      %6481 = dma.done [#allocation3], 32
    $region29: #{hebbcnn_forward.5} parent=1 // pred_fallthru
      _
    %6482 = vsyncpa [#allocation3], 1

</llo_original>
